<compile_context>
chip_gen: v7x
topology: tpu7x:2x2x1
jax: 0.10.0
libtpu: 0.0.40
codegen_flags: <defaults>
</compile_context>

<pallas_src>
import jax
import jax.numpy as jnp
from jax.experimental import pallas as pl
from jax.experimental.pallas import tpu as pltpu

D_IN = 256
D_H1 = 512
D_H2 = 1024
D_OUT = 36 * 24 + 512       # 1376
D_OUT_PAD = 1408            # 11 * 128, lane-dense fc3 output


def _decoder_kernel(x_ref, w1_ref, b1_ref, w2_ref, b2_ref, w3_ref, b3_ref, o_ref):
    # Fused 3-layer MLP for one batch tile.  Weights (bf16, ~4.2 MB total)
    # stay VMEM-resident across grid steps (constant block index).
    x = x_ref[...]                                                     # (TB, 256) bf16
    h1 = jnp.dot(x, w1_ref[...], preferred_element_type=jnp.float32) + b1_ref[...]
    h1 = jnp.maximum(h1, 0.0)                                          # ReLU, f32
    h2 = jnp.dot(h1.astype(jnp.bfloat16), w2_ref[...],
                 preferred_element_type=jnp.float32) + b2_ref[...]
    h2 = jnp.maximum(h2, 0.0)                                          # ReLU, f32
    y = jnp.dot(h2.astype(jnp.bfloat16), w3_ref[...],
                preferred_element_type=jnp.float32) + b3_ref[...]
    o_ref[...] = y.astype(o_ref.dtype)                                 # (TB, 1408) f32


def _decoder_2d(x, params):
    """x: (N, 256) float32 -> (N, 1376) float32 via one fused pallas_call."""
    N = x.shape[0]
    w1, b1, w2, b2, w3, b3 = params

    # bf16 weights (MXU-native, halves HBM weight bytes); biases stay f32.
    w1b = w1.astype(jnp.bfloat16)
    w2b = w2.astype(jnp.bfloat16)
    # Zero-pad fc3 columns 1376 -> 1408 for a lane-dense matmul + output store.
    w3b = jnp.zeros((D_H2, D_OUT_PAD), jnp.bfloat16).at[:, :D_OUT].set(
        w3.astype(jnp.bfloat16))
    b3p = jnp.zeros((1, D_OUT_PAD), jnp.float32).at[:, :D_OUT].set(b3)

    # Batch tile: up to 256 rows per grid step, padded to a sublane multiple (>=8).
    TB = min(256, ((N + 7) // 8) * 8)
    N_pad = pl.cdiv(N, TB) * TB
    x_b = x.astype(jnp.bfloat16)
    if N_pad != N:
        x_b = jnp.zeros((N_pad, D_IN), jnp.bfloat16).at[:N, :].set(x_b)
    num_blocks = N_pad // TB

    def resident(shape):
        # Constant block index: the array is DMA'd once and kept in VMEM.
        return pl.BlockSpec(shape, lambda i: tuple(0 for _ in shape))

    out = pl.pallas_call(
        _decoder_kernel,
        out_shape=jax.ShapeDtypeStruct((N_pad, D_OUT_PAD), jnp.float32),
        grid_spec=pltpu.PrefetchScalarGridSpec(
            num_scalar_prefetch=0,
            grid=(num_blocks,),
            in_specs=[
                pl.BlockSpec((TB, D_IN), lambda i: (i, 0)),   # activations: tiled over batch
                resident((D_IN, D_H1)),                       # weights/biases: VMEM-resident
                resident((1, D_H1)),
                resident((D_H1, D_H2)),
                resident((1, D_H2)),
                resident((D_H2, D_OUT_PAD)),
                resident((1, D_OUT_PAD)),
            ],
            out_specs=pl.BlockSpec((TB, D_OUT_PAD), lambda i: (i, 0)),
        ),
        compiler_params=pltpu.CompilerParams(
            dimension_semantics=("parallel",),      # v7x: shard batch over both TCs
            vmem_limit_bytes=32 << 20,
        ),
    )(x_b, w1b, b1, w2b, b2, w3b, b3p)

    return out[:N, :D_OUT]


def decoder_forward(encoded_feature, params):
    """Matches Decoder.forward: Linear stack over last dim, then .squeeze(1).

    encoded_feature: (B, 1, 256) (typical), (B, S, 256), or (B, 256), float32.
    """
    x = encoded_feature
    if x.ndim == 3:
        B, S, _ = x.shape
        y = _decoder_2d(x.reshape(B * S, D_IN), params).reshape(B, S, D_OUT)
        if S == 1:                      # torch .squeeze(1) only drops size-1 dims
            y = jnp.squeeze(y, axis=1)
        return y
    return _decoder_2d(x, params)


def init_params(key):
    """Deterministic PyTorch-style init: U(-1/sqrt(fan_in), 1/sqrt(fan_in))."""
    ks = jax.random.split(key, 6)

    def linear(kw, kb, fan_in, fan_out):
        bound = 1.0 / jnp.sqrt(fan_in)
        w = jax.random.uniform(kw, (fan_in, fan_out), jnp.float32, -bound, bound)
        b = jax.random.uniform(kb, (1, fan_out), jnp.float32, -bound, bound)
        return w, b

    w1, b1 = linear(ks[0], ks[1], D_IN, D_H1)
    w2, b2 = linear(ks[2], ks[3], D_H1, D_H2)
    w3, b3 = linear(ks[4], ks[5], D_H2, D_OUT)
    return (w1, b1, w2, b2, w3, b3)


def decoder_reference(encoded_feature, params):
    """Pure-JAX reference using the same bf16-weight / f32-accumulate recipe."""
    w1, b1, w2, b2, w3, b3 = params
    x = encoded_feature
    if x.ndim == 3 and x.shape[1] == 1:
        x = jnp.squeeze(x, axis=1)

    bf = lambda a: a.astype(jnp.bfloat16).astype(jnp.float32)
    h1 = jnp.maximum(bf(x) @ bf(w1) + b1[0], 0.0)
    h2 = jnp.maximum(bf(h1) @ bf(w2) + b2[0], 0.0)
    y = bf(h2) @ bf(w3) + b3[0]
    return y


if __name__ == "__main__":
    key = jax.random.PRNGKey(0)
    k_in, k_par = jax.random.split(key)

    B = 2
    # matches the torch module's use of .squeeze(1): input is (B, 1, 256)
    encoded_feature = jax.random.normal(k_in, (B, 1, D_IN), jnp.float32)
    params = init_params(k_par)

    out = decoder_forward(encoded_feature, params)
    out = jax.block_until_ready(out)

    ref = decoder_reference(encoded_feature, params)
    assert out.shape == (B, D_OUT), out.shape
    assert jnp.allclose(out, ref, atol=2e-3, rtol=2e-3), "mismatch vs reference"

    print("KERNEL_OK")
</pallas_src>

<mosaic_0001>
module attributes {stable_mosaic.version = 11 : i64} {
  func.func @_decoder_kernel(%arg0: i32, %arg1: memref<8x256xbf16, #tpu.memory_space<vmem>>, %arg2: memref<256x512xbf16, #tpu.memory_space<vmem>>, %arg3: memref<1x512xf32, #tpu.memory_space<vmem>>, %arg4: memref<512x1024xbf16, #tpu.memory_space<vmem>>, %arg5: memref<1x1024xf32, #tpu.memory_space<vmem>>, %arg6: memref<1024x1408xbf16, #tpu.memory_space<vmem>>, %arg7: memref<1x1408xf32, #tpu.memory_space<vmem>>, %arg8: memref<8x1408xf32, #tpu.memory_space<vmem>>) attributes {dimension_semantics = [#tpu.dimension_semantics<parallel>], iteration_bounds = array<i64: 1>, scalar_prefetch = 0 : i64, scratch_operands = 0 : i64, tpu.core_type = #tpu.core_type<tc>, window_params = [{transform_indices = @transform_0, window_bounds = array<i64: 8, 256>}, {pipeline_mode = #tpu.pipeline_mode<synchronous>, transform_indices = @transform_1, window_bounds = array<i64: 256, 512>}, {pipeline_mode = #tpu.pipeline_mode<synchronous>, transform_indices = @transform_2, window_bounds = array<i64: 1, 512>}, {pipeline_mode = #tpu.pipeline_mode<synchronous>, transform_indices = @transform_3, window_bounds = array<i64: 512, 1024>}, {pipeline_mode = #tpu.pipeline_mode<synchronous>, transform_indices = @transform_4, window_bounds = array<i64: 1, 1024>}, {pipeline_mode = #tpu.pipeline_mode<synchronous>, transform_indices = @transform_5, window_bounds = array<i64: 1024, 1408>}, {pipeline_mode = #tpu.pipeline_mode<synchronous>, transform_indices = @transform_6, window_bounds = array<i64: 1, 1408>}, {transform_indices = @transform_7, window_bounds = array<i64: 8, 1408>}]} {
    %c0 = arith.constant 0 : index
    %c0_0 = arith.constant 0 : index
    %0 = vector.load %arg1[%c0, %c0_0] : memref<8x256xbf16, #tpu.memory_space<vmem>>, vector<8x256xbf16>
    %c0_1 = arith.constant 0 : index
    %c0_2 = arith.constant 0 : index
    %1 = vector.load %arg2[%c0_1, %c0_2] : memref<256x512xbf16, #tpu.memory_space<vmem>>, vector<256x512xbf16>
    %cst = arith.constant dense<0.000000e+00> : vector<8x512xf32>
    %2 = tpu.matmul %0, %1, %cst {dimension_numbers = #tpu.dot_dimension_numbers<[1], [0], [0], [1], [0, 0, 1, 1], [], []>} : vector<8x256xbf16>, vector<256x512xbf16>, vector<8x512xf32> -> vector<8x512xf32>
    %c0_3 = arith.constant 0 : index
    %c0_4 = arith.constant 0 : index
    %3 = vector.load %arg3[%c0_3, %c0_4] : memref<1x512xf32, #tpu.memory_space<vmem>>, vector<1x512xf32>
    %4 = vector.broadcast %3 : vector<1x512xf32> to vector<8x512xf32>
    %5 = arith.addf %2, %4 : vector<8x512xf32>
    %cst_5 = arith.constant 0.000000e+00 : f32
    %6 = vector.broadcast %cst_5 : f32 to vector<8x512xf32>
    %7 = arith.maximumf %5, %6 : vector<8x512xf32>
    %8 = arith.truncf %7 : vector<8x512xf32> to vector<8x512xbf16>
    %c0_6 = arith.constant 0 : index
    %c0_7 = arith.constant 0 : index
    %9 = vector.load %arg4[%c0_6, %c0_7] : memref<512x1024xbf16, #tpu.memory_space<vmem>>, vector<512x1024xbf16>
    %cst_8 = arith.constant dense<0.000000e+00> : vector<8x1024xf32>
    %10 = tpu.matmul %8, %9, %cst_8 {dimension_numbers = #tpu.dot_dimension_numbers<[1], [0], [0], [1], [0, 0, 1, 1], [], []>} : vector<8x512xbf16>, vector<512x1024xbf16>, vector<8x1024xf32> -> vector<8x1024xf32>
    %c0_9 = arith.constant 0 : index
    %c0_10 = arith.constant 0 : index
    %11 = vector.load %arg5[%c0_9, %c0_10] : memref<1x1024xf32, #tpu.memory_space<vmem>>, vector<1x1024xf32>
    %12 = vector.broadcast %11 : vector<1x1024xf32> to vector<8x1024xf32>
    %13 = arith.addf %10, %12 : vector<8x1024xf32>
    %cst_11 = arith.constant 0.000000e+00 : f32
    %14 = vector.broadcast %cst_11 : f32 to vector<8x1024xf32>
    %15 = arith.maximumf %13, %14 : vector<8x1024xf32>
    %16 = arith.truncf %15 : vector<8x1024xf32> to vector<8x1024xbf16>
    %c0_12 = arith.constant 0 : index
    %c0_13 = arith.constant 0 : index
    %17 = vector.load %arg6[%c0_12, %c0_13] : memref<1024x1408xbf16, #tpu.memory_space<vmem>>, vector<1024x1408xbf16>
    %cst_14 = arith.constant dense<0.000000e+00> : vector<8x1408xf32>
    %18 = tpu.matmul %16, %17, %cst_14 {dimension_numbers = #tpu.dot_dimension_numbers<[1], [0], [0], [1], [0, 0, 1, 1], [], []>} : vector<8x1024xbf16>, vector<1024x1408xbf16>, vector<8x1408xf32> -> vector<8x1408xf32>
    %c0_15 = arith.constant 0 : index
    %c0_16 = arith.constant 0 : index
    %19 = vector.load %arg7[%c0_15, %c0_16] : memref<1x1408xf32, #tpu.memory_space<vmem>>, vector<1x1408xf32>
    %20 = vector.broadcast %19 : vector<1x1408xf32> to vector<8x1408xf32>
    %21 = arith.addf %18, %20 : vector<8x1408xf32>
    %c0_17 = arith.constant 0 : index
    %c0_18 = arith.constant 0 : index
    %22 = vector.load %arg8[%c0_17, %c0_18] : memref<8x1408xf32, #tpu.memory_space<vmem>>, vector<8x1408xf32>
    tpu.vector_store %arg8[%c0_17, %c0_18], %21 {strides = array<i32>} : memref<8x1408xf32, #tpu.memory_space<vmem>>, vector<8x1408xf32>,
    return
  }
  func.func @transform_0(%arg0: i32) -> (i32, i32) {
    %c0_i32 = arith.constant 0 : i32
    %c0_i32_0 = arith.constant 0 : i32
    return %arg0, %c0_i32 : i32, i32
  }
  func.func @transform_1(%arg0: i32) -> (i32, i32) {
    %c0_i32 = arith.constant 0 : i32
    %c0_i32_0 = arith.constant 0 : i32
    %c0_i32_1 = arith.constant 0 : i32
    return %c0_i32, %c0_i32_0 : i32, i32
  }
  func.func @transform_2(%arg0: i32) -> (i32, i32) {
    %c0_i32 = arith.constant 0 : i32
    %c0_i32_0 = arith.constant 0 : i32
    %c0_i32_1 = arith.constant 0 : i32
    return %c0_i32, %c0_i32_0 : i32, i32
  }
  func.func @transform_3(%arg0: i32) -> (i32, i32) {
    %c0_i32 = arith.constant 0 : i32
    %c0_i32_0 = arith.constant 0 : i32
    %c0_i32_1 = arith.constant 0 : i32
    return %c0_i32, %c0_i32_0 : i32, i32
  }
  func.func @transform_4(%arg0: i32) -> (i32, i32) {
    %c0_i32 = arith.constant 0 : i32
    %c0_i32_0 = arith.constant 0 : i32
    %c0_i32_1 = arith.constant 0 : i32
    return %c0_i32, %c0_i32_0 : i32, i32
  }
  func.func @transform_5(%arg0: i32) -> (i32, i32) {
    %c0_i32 = arith.constant 0 : i32
    %c0_i32_0 = arith.constant 0 : i32
    %c0_i32_1 = arith.constant 0 : i32
    return %c0_i32, %c0_i32_0 : i32, i32
  }
  func.func @transform_6(%arg0: i32) -> (i32, i32) {
    %c0_i32 = arith.constant 0 : i32
    %c0_i32_0 = arith.constant 0 : i32
    %c0_i32_1 = arith.constant 0 : i32
    return %c0_i32, %c0_i32_0 : i32, i32
  }
  func.func @transform_7(%arg0: i32) -> (i32, i32) {
    %c0_i32 = arith.constant 0 : i32
    %c0_i32_0 = arith.constant 0 : i32
    return %arg0, %c0_i32 : i32, i32
  }
}

</mosaic_0001>

<llo_original>
// kernel: tpu_custom_call.1
$region0: #{tpu_custom_call.1}
  #allocation0 [shape = 'u32[]', space=smem, size = 0x4, offset = 0x4, fixed_abs, tag = 'smem constant byte address 0x4 - core index']
  #allocation1 [shape = 'u32[144,128]{1,0:T(1,128)}', space=vmem, size = 0x12000, scoped, tag = 'internal scratch']
  %s0 = inlined_call_operand.hbm [shape: bf16[8,256], index: 0, kind: input, shape index: {}]
  %s1 = inlined_call_operand.hbm [shape: bf16[256,512], index: 1, kind: input, shape index: {}]
  %s2 = inlined_call_operand.hbm [shape: f32[1,512], index: 2, kind: input, shape index: {}]
  %s3 = inlined_call_operand.hbm [shape: bf16[512,1024], index: 3, kind: input, shape index: {}]
  %s4 = inlined_call_operand.hbm [shape: f32[1,1024], index: 4, kind: input, shape index: {}]
  %s5 = inlined_call_operand.hbm [shape: bf16[1024,1408], index: 5, kind: input, shape index: {}]
  %s6 = inlined_call_operand.hbm [shape: f32[1,1408], index: 6, kind: input, shape index: {}]
  %s7 = inlined_call_operand.hbm [shape: f32[8,1408], index: 7, kind: output, shape index: {}]
  %s8 = sld [smem:[#allocation0]]
  $region66: #{tpu_custom_call.1} parent=0
    _
  %s10 = ssub.s32 1, %s8
  %s11 = scalar_select 0, %s10, %s8
  $region1: #{tpu_custom_call.1} parent=0
    #allocation2 [shape = 'u8[4096]{0}', space=vmem, size = 0x1000, scoped, tag = 'input window, operand 0, single buffered']
    #allocation3 [shape = 's32[1]{0}', space=sflag, size = 0x4, scoped, tag = 'scoped memory for tpu_custom_call.1']
    #allocation4 [shape = 's32[1]{0}', space=sflag, size = 0x4, scoped, tag = 'scoped memory for tpu_custom_call.1']
    #allocation5 [shape = 'u8[262144]{0}', space=vmem, size = 0x40000, scoped, tag = 'input window, operand 1, single buffered']
    #allocation6 [shape = 's32[1]{0}', space=sflag, size = 0x4, scoped, tag = 'scoped memory for tpu_custom_call.1']
    #allocation7 [shape = 'u8[2048]{0}', space=vmem, size = 0x800, scoped, tag = 'input window, operand 2, single buffered']
    #allocation8 [shape = 'u8[1048576]{0}', space=vmem, size = 0x100000, scoped, tag = 'input window, operand 3, single buffered']
    #allocation9 [shape = 's32[1]{0}', space=sflag, size = 0x4, scoped, tag = 'scoped memory for tpu_custom_call.1']
    #allocation10 [shape = 'u8[4096]{0}', space=vmem, size = 0x1000, scoped, tag = 'input window, operand 4, single buffered']
    #allocation11 [shape = 'u8[2883584]{0}', space=vmem, size = 0x2c0000, scoped, tag = 'input window, operand 5, single buffered']
    #allocation12 [shape = 's32[1]{0}', space=sflag, size = 0x4, scoped, tag = 'scoped memory for tpu_custom_call.1']
    #allocation13 [shape = 'u8[5632]{0}', space=vmem, size = 0x1800, scoped, tag = 'input window, operand 6, single buffered']
    #allocation14 [shape = 'u8[45056]{0}', space=vmem, size = 0xb000, scoped, tag = 'output window, operand 0, single buffered']
    %12 = vsyncpa [#allocation3], 0
    %13 = vsyncpa [#allocation6], 0
    %14 = vsyncpa [#allocation9], 0
    %15 = vsyncpa [#allocation12], 0
    %16 = vsyncpa [#allocation4], 0
    // Predicated region
    $region2: #{tpu_custom_call.1} parent=1 // pred_check
      _
    $region3: #{tpu_custom_call.1} parent=1 // pred_check_branch
      %18 = sbr.rel (0) target = $region5
    $region4: #{tpu_custom_call.1} parent=1 // pred_region
      %s20 = ssub.s32 128, 128
      %21 = vsyncadd [#allocation3], %s20
      %s23 = sshll.u32 [#allocation2], 4
      %s24 = int_to_ptr.vmem [resolvable:$true] %s23
      %26 = dma.hbm_to_vmem [thread:$0]  %s0, 128, %s24, [#allocation3]
    $region5: #{tpu_custom_call.1} parent=1 // pred_fallthru
      _
    // Predicated region
    $region6: #{tpu_custom_call.1} parent=1 // pred_check
      _
    $region7: #{tpu_custom_call.1} parent=1 // pred_check_branch
      %28 = sbr.rel (0) target = $region9
    $region8: #{tpu_custom_call.1} parent=1 // pred_region
      %s30 = ssub.s32 8192, 8192
      %31 = vsyncadd [#allocation6], %s30
      %s32 = sshll.u32 [#allocation5], 4
      %s33 = int_to_ptr.vmem [resolvable:$true] %s32
      %38 = dma.hbm_to_vmem [thread:$0]  %s1, 8192, %s33, [#allocation6], 256, 256, 16
    $region9: #{tpu_custom_call.1} parent=1 // pred_fallthru
      _
    // Predicated region
    $region10: #{tpu_custom_call.1} parent=1 // pred_check
      _
    $region11: #{tpu_custom_call.1} parent=1 // pred_check_branch
      %40 = sbr.rel (0) target = $region13
    $region12: #{tpu_custom_call.1} parent=1 // pred_region
      %s42 = ssub.s32 64, 64
      %43 = vsyncadd [#allocation6], %s42
      %s45 = sshll.u32 [#allocation7], 4
      %s46 = int_to_ptr.vmem [resolvable:$true] %s45
      %48 = dma.hbm_to_vmem [thread:$0]  %s2, 64, %s46, [#allocation6]
    $region13: #{tpu_custom_call.1} parent=1 // pred_fallthru
      _
    // Predicated region
    $region14: #{tpu_custom_call.1} parent=1 // pred_check
      _
    $region15: #{tpu_custom_call.1} parent=1 // pred_check_branch
      %50 = sbr.rel (0) target = $region17
    $region16: #{tpu_custom_call.1} parent=1 // pred_region
      %s52 = ssub.s32 32768, 32768
      %53 = vsyncadd [#allocation9], %s52
      %s54 = sshll.u32 [#allocation8], 4
      %s55 = int_to_ptr.vmem [resolvable:$true] %s54
      %60 = dma.hbm_to_vmem [thread:$0]  %s3, 32768, %s55, [#allocation9], 512, 512, 32
    $region17: #{tpu_custom_call.1} parent=1 // pred_fallthru
      _
    // Predicated region
    $region18: #{tpu_custom_call.1} parent=1 // pred_check
      _
    $region19: #{tpu_custom_call.1} parent=1 // pred_check_branch
      %62 = sbr.rel (0) target = $region21
    $region20: #{tpu_custom_call.1} parent=1 // pred_region
      %s64 = ssub.s32 128, 128
      %65 = vsyncadd [#allocation9], %s64
      %s67 = sshll.u32 [#allocation10], 4
      %s68 = int_to_ptr.vmem [resolvable:$true] %s67
      %70 = dma.hbm_to_vmem [thread:$0]  %s4, 128, %s68, [#allocation9]
    $region21: #{tpu_custom_call.1} parent=1 // pred_fallthru
      _
    // Predicated region
    $region22: #{tpu_custom_call.1} parent=1 // pred_check
      _
    $region23: #{tpu_custom_call.1} parent=1 // pred_check_branch
      %72 = sbr.rel (0) target = $region25
    $region24: #{tpu_custom_call.1} parent=1 // pred_region
      %s74 = ssub.s32 90112, 90112
      %75 = vsyncadd [#allocation12], %s74
      %s76 = sshll.u32 [#allocation11], 4
      %s77 = int_to_ptr.vmem [resolvable:$true] %s76
      %82 = dma.hbm_to_vmem [thread:$0]  %s5, 90112, %s77, [#allocation12], 704, 704, 44
    $region25: #{tpu_custom_call.1} parent=1 // pred_fallthru
      _
    // Predicated region
    $region26: #{tpu_custom_call.1} parent=1 // pred_check
      _
    $region27: #{tpu_custom_call.1} parent=1 // pred_check_branch
      %84 = sbr.rel (0) target = $region29
    $region28: #{tpu_custom_call.1} parent=1 // pred_region
      %s86 = ssub.s32 176, 176
      %87 = vsyncadd [#allocation12], %s86
      %s89 = sshll.u32 [#allocation13], 4
      %s90 = int_to_ptr.vmem [resolvable:$true] %s89
      %92 = dma.hbm_to_vmem [thread:$0]  %s6, 176, %s90, [#allocation12]
    $region29: #{tpu_custom_call.1} parent=1 // pred_fallthru
      _
    // Predicated region
    $region30: #{tpu_custom_call.1} parent=1 // pred_check
      _
    $region31: #{tpu_custom_call.1} parent=1 // pred_check_branch
      %94 = sbr.rel (0) target = $region33
    $region32: #{tpu_custom_call.1} parent=1 // pred_region
      %95 = dma.done [#allocation3], 128
    $region33: #{tpu_custom_call.1} parent=1 // pred_fallthru
      _
    // Predicated region
    $region34: #{tpu_custom_call.1} parent=1 // pred_check
      _
    $region35: #{tpu_custom_call.1} parent=1 // pred_check_branch
      %97 = sbr.rel (0) target = $region37
    $region36: #{tpu_custom_call.1} parent=1 // pred_region
      %98 = dma.done [#allocation6], 8192
    $region37: #{tpu_custom_call.1} parent=1 // pred_fallthru
      _
    // Predicated region
    $region38: #{tpu_custom_call.1} parent=1 // pred_check
      _
    $region39: #{tpu_custom_call.1} parent=1 // pred_check_branch
      %100 = sbr.rel (0) target = $region41
    $region40: #{tpu_custom_call.1} parent=1 // pred_region
      %101 = dma.done [#allocation6], 64
    $region41: #{tpu_custom_call.1} parent=1 // pred_fallthru
      _
    // Predicated region
    $region42: #{tpu_custom_call.1} parent=1 // pred_check
      _
    $region43: #{tpu_custom_call.1} parent=1 // pred_check_branch
      %103 = sbr.rel (0) target = $region45
    $region44: #{tpu_custom_call.1} parent=1 // pred_region
      %104 = dma.done [#allocation9], 32768
    $region45: #{tpu_custom_call.1} parent=1 // pred_fallthru
      _
    // Predicated region
    $region46: #{tpu_custom_call.1} parent=1 // pred_check
      _
    $region47: #{tpu_custom_call.1} parent=1 // pred_check_branch
      %106 = sbr.rel (0) target = $region49
    $region48: #{tpu_custom_call.1} parent=1 // pred_region
      %107 = dma.done [#allocation9], 128
    $region49: #{tpu_custom_call.1} parent=1 // pred_fallthru
      _
    // Predicated region
    $region50: #{tpu_custom_call.1} parent=1 // pred_check
      _
    $region51: #{tpu_custom_call.1} parent=1 // pred_check_branch
      %109 = sbr.rel (0) target = $region53
    $region52: #{tpu_custom_call.1} parent=1 // pred_region
      %110 = dma.done [#allocation12], 90112
    $region53: #{tpu_custom_call.1} parent=1 // pred_fallthru
      _
    // Predicated region
    $region54: #{tpu_custom_call.1} parent=1 // pred_check
      _
    $region55: #{tpu_custom_call.1} parent=1 // pred_check_branch
      %112 = sbr.rel (0) target = $region57
    $region56: #{tpu_custom_call.1} parent=1 // pred_region
      %113 = dma.done [#allocation12], 176
    $region57: #{tpu_custom_call.1} parent=1 // pred_fallthru
      _
    %v115 = vld [vmem:[#allocation2] sm:$0xff]
    %v116 = vld [vmem:[#allocation5] sm:$0xff]
    %v117 = vld [vmem:[#allocation5 + $0x8] sm:$0xff]
    %v118 = vld [vmem:[#allocation5 + $0x10] sm:$0xff]
    %v119 = vld [vmem:[#allocation5 + $0x18] sm:$0xff]
    %v120 = vld [vmem:[#allocation5 + $0x20] sm:$0xff]
    %v121 = vld [vmem:[#allocation5 + $0x28] sm:$0xff]
    %v122 = vld [vmem:[#allocation5 + $0x30] sm:$0xff]
    %v123 = vld [vmem:[#allocation5 + $0x38] sm:$0xff]
    %v124 = vld [vmem:[#allocation5 + $0x40] sm:$0xff]
    %v125 = vld [vmem:[#allocation5 + $0x48] sm:$0xff]
    %v126 = vld [vmem:[#allocation5 + $0x50] sm:$0xff]
    %v127 = vld [vmem:[#allocation5 + $0x58] sm:$0xff]
    %v128 = vld [vmem:[#allocation5 + $0x60] sm:$0xff]
    %v129 = vld [vmem:[#allocation5 + $0x68] sm:$0xff]
    %v130 = vld [vmem:[#allocation5 + $0x70] sm:$0xff]
    %v131 = vld [vmem:[#allocation5 + $0x78] sm:$0xff]
    %v132 = vld [vmem:[#allocation5 + $0x80] sm:$0xff]
    %v133 = vld [vmem:[#allocation5 + $0x88] sm:$0xff]
    %v134 = vld [vmem:[#allocation5 + $0x90] sm:$0xff]
    %v135 = vld [vmem:[#allocation5 + $0x98] sm:$0xff]
    %v136 = vld [vmem:[#allocation5 + $0xa0] sm:$0xff]
    %v137 = vld [vmem:[#allocation5 + $0xa8] sm:$0xff]
    %v138 = vld [vmem:[#allocation5 + $0xb0] sm:$0xff]
    %v139 = vld [vmem:[#allocation5 + $0xb8] sm:$0xff]
    %v140 = vld [vmem:[#allocation5 + $0xc0] sm:$0xff]
    %v141 = vld [vmem:[#allocation5 + $0xc8] sm:$0xff]
    %v142 = vld [vmem:[#allocation5 + $0xd0] sm:$0xff]
    %v143 = vld [vmem:[#allocation5 + $0xd8] sm:$0xff]
    %v144 = vld [vmem:[#allocation5 + $0xe0] sm:$0xff]
    %v145 = vld [vmem:[#allocation5 + $0xe8] sm:$0xff]
    %v146 = vld [vmem:[#allocation5 + $0xf0] sm:$0xff]
    %v147 = vld [vmem:[#allocation5 + $0xf8] sm:$0xff]
    %v148 = vld [vmem:[#allocation5 + $0x100] sm:$0xff]
    %v149 = vld [vmem:[#allocation5 + $0x108] sm:$0xff]
    %v150 = vld [vmem:[#allocation5 + $0x110] sm:$0xff]
    %v151 = vld [vmem:[#allocation5 + $0x118] sm:$0xff]
    %v152 = vld [vmem:[#allocation5 + $0x120] sm:$0xff]
    %v153 = vld [vmem:[#allocation5 + $0x128] sm:$0xff]
    %v154 = vld [vmem:[#allocation5 + $0x130] sm:$0xff]
    %v155 = vld [vmem:[#allocation5 + $0x138] sm:$0xff]
    %v156 = vld [vmem:[#allocation5 + $0x140] sm:$0xff]
    %v157 = vld [vmem:[#allocation5 + $0x148] sm:$0xff]
    %v158 = vld [vmem:[#allocation5 + $0x150] sm:$0xff]
    %v159 = vld [vmem:[#allocation5 + $0x158] sm:$0xff]
    %v160 = vld [vmem:[#allocation5 + $0x160] sm:$0xff]
    %v161 = vld [vmem:[#allocation5 + $0x168] sm:$0xff]
    %v162 = vld [vmem:[#allocation5 + $0x170] sm:$0xff]
    %v163 = vld [vmem:[#allocation5 + $0x178] sm:$0xff]
    %v164 = vld [vmem:[#allocation5 + $0x180] sm:$0xff]
    %v165 = vld [vmem:[#allocation5 + $0x188] sm:$0xff]
    %v166 = vld [vmem:[#allocation5 + $0x190] sm:$0xff]
    %v167 = vld [vmem:[#allocation5 + $0x198] sm:$0xff]
    %v168 = vld [vmem:[#allocation5 + $0x1a0] sm:$0xff]
    %v169 = vld [vmem:[#allocation5 + $0x1a8] sm:$0xff]
    %v170 = vld [vmem:[#allocation5 + $0x1b0] sm:$0xff]
    %v171 = vld [vmem:[#allocation5 + $0x1b8] sm:$0xff]
    %v172 = vld [vmem:[#allocation5 + $0x1c0] sm:$0xff]
    %v173 = vld [vmem:[#allocation5 + $0x1c8] sm:$0xff]
    %v174 = vld [vmem:[#allocation5 + $0x1d0] sm:$0xff]
    %v175 = vld [vmem:[#allocation5 + $0x1d8] sm:$0xff]
    %v176 = vld [vmem:[#allocation5 + $0x1e0] sm:$0xff]
    %v177 = vld [vmem:[#allocation5 + $0x1e8] sm:$0xff]
    %v178 = vld [vmem:[#allocation5 + $0x1f0] sm:$0xff]
    %v179 = vld [vmem:[#allocation5 + $0x1f8] sm:$0xff]
    %v180 = vld [vmem:[#allocation7] sm:$0xf]
    %v182 = vlaneseq
    %v183 = vshrl.u32 %v182, 7
    %v184 = vsub.s32 0, %v183
    %v185 = vrot.slane %v180, %v184
    %v186 = vlaneseq
    %v187 = vshrl.u32 %v186, 7
    %v188 = vsub.s32 1, %v187
    %v189 = vrot.slane %v180, %v188
    %v190 = vlaneseq
    %v191 = vshrl.u32 %v190, 7
    %v192 = vsub.s32 2, %v191
    %v193 = vrot.slane %v180, %v192
    %v194 = vlaneseq
    %v195 = vshrl.u32 %v194, 7
    %v196 = vsub.s32 3, %v195
    %v197 = vrot.slane %v180, %v196
    %v203 = vunpack.c.l.b16 %v115
    %v204 = vunpack.c.h.b16 %v115
    %v205 = vpack.c.b16 %v203, %v203
    %v206 = vpack.c.b16 %v204, %v204
    %v273 = vunpack.c.l.b16 %v116
    %v274 = vunpack.c.h.b16 %v116
    %v275 = vunpack.c.l.b16 %v117
    %v276 = vunpack.c.h.b16 %v117
    %v277 = vunpack.c.l.b16 %v118
    %v278 = vunpack.c.h.b16 %v118
    %v279 = vunpack.c.l.b16 %v119
    %v280 = vunpack.c.h.b16 %v119
    %v281 = vunpack.c.l.b16 %v120
    %v282 = vunpack.c.h.b16 %v120
    %v283 = vunpack.c.l.b16 %v121
    %v284 = vunpack.c.h.b16 %v121
    %v285 = vunpack.c.l.b16 %v122
    %v286 = vunpack.c.h.b16 %v122
    %v287 = vunpack.c.l.b16 %v123
    %v288 = vunpack.c.h.b16 %v123
    %v289 = vunpack.c.l.b16 %v124
    %v290 = vunpack.c.h.b16 %v124
    %v291 = vunpack.c.l.b16 %v125
    %v292 = vunpack.c.h.b16 %v125
    %v293 = vunpack.c.l.b16 %v126
    %v294 = vunpack.c.h.b16 %v126
    %v295 = vunpack.c.l.b16 %v127
    %v296 = vunpack.c.h.b16 %v127
    %v297 = vunpack.c.l.b16 %v128
    %v298 = vunpack.c.h.b16 %v128
    %v299 = vunpack.c.l.b16 %v129
    %v300 = vunpack.c.h.b16 %v129
    %v301 = vunpack.c.l.b16 %v130
    %v302 = vunpack.c.h.b16 %v130
    %v303 = vunpack.c.l.b16 %v131
    %v304 = vunpack.c.h.b16 %v131
    %v305 = vunpack.c.l.b16 %v132
    %v306 = vunpack.c.h.b16 %v132
    %v307 = vunpack.c.l.b16 %v133
    %v308 = vunpack.c.h.b16 %v133
    %v309 = vunpack.c.l.b16 %v134
    %v310 = vunpack.c.h.b16 %v134
    %v311 = vunpack.c.l.b16 %v135
    %v312 = vunpack.c.h.b16 %v135
    %v313 = vunpack.c.l.b16 %v136
    %v314 = vunpack.c.h.b16 %v136
    %v315 = vunpack.c.l.b16 %v137
    %v316 = vunpack.c.h.b16 %v137
    %v317 = vunpack.c.l.b16 %v138
    %v318 = vunpack.c.h.b16 %v138
    %v319 = vunpack.c.l.b16 %v139
    %v320 = vunpack.c.h.b16 %v139
    %v321 = vunpack.c.l.b16 %v140
    %v322 = vunpack.c.h.b16 %v140
    %v323 = vunpack.c.l.b16 %v141
    %v324 = vunpack.c.h.b16 %v141
    %v325 = vunpack.c.l.b16 %v142
    %v326 = vunpack.c.h.b16 %v142
    %v327 = vunpack.c.l.b16 %v143
    %v328 = vunpack.c.h.b16 %v143
    %v329 = vunpack.c.l.b16 %v144
    %v330 = vunpack.c.h.b16 %v144
    %v331 = vunpack.c.l.b16 %v145
    %v332 = vunpack.c.h.b16 %v145
    %v333 = vunpack.c.l.b16 %v146
    %v334 = vunpack.c.h.b16 %v146
    %v335 = vunpack.c.l.b16 %v147
    %v336 = vunpack.c.h.b16 %v147
    %v337 = vunpack.c.l.b16 %v148
    %v338 = vunpack.c.h.b16 %v148
    %v339 = vunpack.c.l.b16 %v149
    %v340 = vunpack.c.h.b16 %v149
    %v341 = vunpack.c.l.b16 %v150
    %v342 = vunpack.c.h.b16 %v150
    %v343 = vunpack.c.l.b16 %v151
    %v344 = vunpack.c.h.b16 %v151
    %v345 = vunpack.c.l.b16 %v152
    %v346 = vunpack.c.h.b16 %v152
    %v347 = vunpack.c.l.b16 %v153
    %v348 = vunpack.c.h.b16 %v153
    %v349 = vunpack.c.l.b16 %v154
    %v350 = vunpack.c.h.b16 %v154
    %v351 = vunpack.c.l.b16 %v155
    %v352 = vunpack.c.h.b16 %v155
    %v353 = vunpack.c.l.b16 %v156
    %v354 = vunpack.c.h.b16 %v156
    %v355 = vunpack.c.l.b16 %v157
    %v356 = vunpack.c.h.b16 %v157
    %v357 = vunpack.c.l.b16 %v158
    %v358 = vunpack.c.h.b16 %v158
    %v359 = vunpack.c.l.b16 %v159
    %v360 = vunpack.c.h.b16 %v159
    %v361 = vunpack.c.l.b16 %v160
    %v362 = vunpack.c.h.b16 %v160
    %v363 = vunpack.c.l.b16 %v161
    %v364 = vunpack.c.h.b16 %v161
    %v365 = vunpack.c.l.b16 %v162
    %v366 = vunpack.c.h.b16 %v162
    %v367 = vunpack.c.l.b16 %v163
    %v368 = vunpack.c.h.b16 %v163
    %v369 = vunpack.c.l.b16 %v164
    %v370 = vunpack.c.h.b16 %v164
    %v371 = vunpack.c.l.b16 %v165
    %v372 = vunpack.c.h.b16 %v165
    %v373 = vunpack.c.l.b16 %v166
    %v374 = vunpack.c.h.b16 %v166
    %v375 = vunpack.c.l.b16 %v167
    %v376 = vunpack.c.h.b16 %v167
    %v377 = vunpack.c.l.b16 %v168
    %v378 = vunpack.c.h.b16 %v168
    %v379 = vunpack.c.l.b16 %v169
    %v380 = vunpack.c.h.b16 %v169
    %v381 = vunpack.c.l.b16 %v170
    %v382 = vunpack.c.h.b16 %v170
    %v383 = vunpack.c.l.b16 %v171
    %v384 = vunpack.c.h.b16 %v171
    %v385 = vunpack.c.l.b16 %v172
    %v386 = vunpack.c.h.b16 %v172
    %v387 = vunpack.c.l.b16 %v173
    %v388 = vunpack.c.h.b16 %v173
    %v389 = vunpack.c.l.b16 %v174
    %v390 = vunpack.c.h.b16 %v174
    %v391 = vunpack.c.l.b16 %v175
    %v392 = vunpack.c.h.b16 %v175
    %v393 = vunpack.c.l.b16 %v176
    %v394 = vunpack.c.h.b16 %v176
    %v395 = vunpack.c.l.b16 %v177
    %v396 = vunpack.c.h.b16 %v177
    %v397 = vunpack.c.l.b16 %v178
    %v398 = vunpack.c.h.b16 %v178
    %v399 = vunpack.c.l.b16 %v179
    %v400 = vunpack.c.h.b16 %v179
    %v401 = vpack.c.b16 %v277, %v273
    %v402 = vpack.c.b16 %v278, %v274
    %v403 = vpack.c.b16 %v279, %v275
    %v404 = vpack.c.b16 %v280, %v276
    %v405 = vpack.c.b16 %v285, %v281
    %v406 = vpack.c.b16 %v286, %v282
    %v407 = vpack.c.b16 %v287, %v283
    %v408 = vpack.c.b16 %v288, %v284
    %v409 = vpack.c.b16 %v293, %v289
    %v410 = vpack.c.b16 %v294, %v290
    %v411 = vpack.c.b16 %v295, %v291
    %v412 = vpack.c.b16 %v296, %v292
    %v413 = vpack.c.b16 %v301, %v297
    %v414 = vpack.c.b16 %v302, %v298
    %v415 = vpack.c.b16 %v303, %v299
    %v416 = vpack.c.b16 %v304, %v300
    %v417 = vpack.c.b16 %v309, %v305
    %v418 = vpack.c.b16 %v310, %v306
    %v419 = vpack.c.b16 %v311, %v307
    %v420 = vpack.c.b16 %v312, %v308
    %v421 = vpack.c.b16 %v317, %v313
    %v422 = vpack.c.b16 %v318, %v314
    %v423 = vpack.c.b16 %v319, %v315
    %v424 = vpack.c.b16 %v320, %v316
    %v425 = vpack.c.b16 %v325, %v321
    %v426 = vpack.c.b16 %v326, %v322
    %v427 = vpack.c.b16 %v327, %v323
    %v428 = vpack.c.b16 %v328, %v324
    %v429 = vpack.c.b16 %v333, %v329
    %v430 = vpack.c.b16 %v334, %v330
    %v431 = vpack.c.b16 %v335, %v331
    %v432 = vpack.c.b16 %v336, %v332
    %v433 = vpack.c.b16 %v341, %v337
    %v434 = vpack.c.b16 %v342, %v338
    %v435 = vpack.c.b16 %v343, %v339
    %v436 = vpack.c.b16 %v344, %v340
    %v437 = vpack.c.b16 %v349, %v345
    %v438 = vpack.c.b16 %v350, %v346
    %v439 = vpack.c.b16 %v351, %v347
    %v440 = vpack.c.b16 %v352, %v348
    %v441 = vpack.c.b16 %v357, %v353
    %v442 = vpack.c.b16 %v358, %v354
    %v443 = vpack.c.b16 %v359, %v355
    %v444 = vpack.c.b16 %v360, %v356
    %v445 = vpack.c.b16 %v365, %v361
    %v446 = vpack.c.b16 %v366, %v362
    %v447 = vpack.c.b16 %v367, %v363
    %v448 = vpack.c.b16 %v368, %v364
    %v449 = vpack.c.b16 %v373, %v369
    %v450 = vpack.c.b16 %v374, %v370
    %v451 = vpack.c.b16 %v375, %v371
    %v452 = vpack.c.b16 %v376, %v372
    %v453 = vpack.c.b16 %v381, %v377
    %v454 = vpack.c.b16 %v382, %v378
    %v455 = vpack.c.b16 %v383, %v379
    %v456 = vpack.c.b16 %v384, %v380
    %v457 = vpack.c.b16 %v389, %v385
    %v458 = vpack.c.b16 %v390, %v386
    %v459 = vpack.c.b16 %v391, %v387
    %v460 = vpack.c.b16 %v392, %v388
    %v461 = vpack.c.b16 %v397, %v393
    %v462 = vpack.c.b16 %v398, %v394
    %v463 = vpack.c.b16 %v399, %v395
    %v464 = vpack.c.b16 %v400, %v396
    %529 = vmatprep.subr.bf16.mxu0 %v402
    %530 = vmatpush1.bf16.msra.mxu0 %v401
    %531 = vmatprep.subr.bf16.mxu0 %v406
    %532 = vmatpush1.bf16.msra.mxu0 %v405
    %533 = vmatprep.subr.bf16.mxu0 %v410
    %534 = vmatpush1.bf16.msra.mxu0 %v409
    %535 = vmatprep.subr.bf16.mxu0 %v414
    %536 = vmatpush1.bf16.msra.mxu0 %v413
    %537 = vmatprep.subr.bf16.mxu0 %v418
    %538 = vmatpush1.bf16.msra.mxu0 %v417
    %539 = vmatprep.subr.bf16.mxu0 %v422
    %540 = vmatpush1.bf16.msra.mxu0 %v421
    %541 = vmatprep.subr.bf16.mxu0 %v426
    %542 = vmatpush1.bf16.msra.mxu0 %v425
    %543 = vmatprep.subr.bf16.mxu0 %v430
    %544 = vmatpush1.bf16.msra.mxu0 %v429
    %545 = vmatprep.subr.bf16.mxu0 %v434
    %546 = vmatpush1.bf16.msra.mxu0 %v433
    %547 = vmatprep.subr.bf16.mxu0 %v438
    %548 = vmatpush1.bf16.msra.mxu0 %v437
    %549 = vmatprep.subr.bf16.mxu0 %v442
    %550 = vmatpush1.bf16.msra.mxu0 %v441
    %551 = vmatprep.subr.bf16.mxu0 %v446
    %552 = vmatpush1.bf16.msra.mxu0 %v445
    %553 = vmatprep.subr.bf16.mxu0 %v450
    %554 = vmatpush1.bf16.msra.mxu0 %v449
    %555 = vmatprep.subr.bf16.mxu0 %v454
    %556 = vmatpush1.bf16.msra.mxu0 %v453
    %557 = vmatprep.subr.bf16.mxu0 %v458
    %558 = vmatpush1.bf16.msra.mxu0 %v457
    %559 = vmatprep.subr.bf16.mxu0 %v462
    %560 = vmatpush1.bf16.msra.mxu0 %v461
    %561 = vmatprep.mubr.bf16.mxu0 %v206
    %562 = vmatmul.mubr.bf16.gmra.mrb[0].mxu0 %v205
    %v563 = vpop.f32.mrb[0].mxu0
    %v564 = vadd.f32 %v185, %v563
    %v565 = vpop.f32.mrb[0].mxu0
    %v566 = vadd.f32 %v189, %v565
    %v567 = vpop.f32.mrb[0].mxu0
    %v568 = vpop.f32.mrb[0].mxu0
    %569 = vdwg.mxu0
    %570 = vmatprep.subr.bf16.mxu0 %v404
    %571 = vmatpush1.bf16.msra.mxu0 %v403
    %572 = vmatprep.subr.bf16.mxu0 %v408
    %573 = vmatpush1.bf16.msra.mxu0 %v407
    %574 = vmatprep.subr.bf16.mxu0 %v412
    %575 = vmatpush1.bf16.msra.mxu0 %v411
    %576 = vmatprep.subr.bf16.mxu0 %v416
    %577 = vmatpush1.bf16.msra.mxu0 %v415
    %578 = vmatprep.subr.bf16.mxu0 %v420
    %579 = vmatpush1.bf16.msra.mxu0 %v419
    %580 = vmatprep.subr.bf16.mxu0 %v424
    %581 = vmatpush1.bf16.msra.mxu0 %v423
    %582 = vmatprep.subr.bf16.mxu0 %v428
    %583 = vmatpush1.bf16.msra.mxu0 %v427
    %584 = vmatprep.subr.bf16.mxu0 %v432
    %585 = vmatpush1.bf16.msra.mxu0 %v431
    %586 = vmatprep.subr.bf16.mxu0 %v436
    %587 = vmatpush1.bf16.msra.mxu0 %v435
    %588 = vmatprep.subr.bf16.mxu0 %v440
    %589 = vmatpush1.bf16.msra.mxu0 %v439
    %590 = vmatprep.subr.bf16.mxu0 %v444
    %591 = vmatpush1.bf16.msra.mxu0 %v443
    %592 = vmatprep.subr.bf16.mxu0 %v448
    %593 = vmatpush1.bf16.msra.mxu0 %v447
    %594 = vmatprep.subr.bf16.mxu0 %v452
    %595 = vmatpush1.bf16.msra.mxu0 %v451
    %596 = vmatprep.subr.bf16.mxu0 %v456
    %597 = vmatpush1.bf16.msra.mxu0 %v455
    %598 = vmatprep.subr.bf16.mxu0 %v460
    %599 = vmatpush1.bf16.msra.mxu0 %v459
    %600 = vmatprep.subr.bf16.mxu0 %v464
    %601 = vmatpush1.bf16.msra.mxu0 %v463
    %602 = vmatprep.mubr.bf16.mxu0 %v206
    %603 = vmatmul.mubr.bf16.gmra.mrb[0].mxu0 %v205
    %v604 = vpop.f32.mrb[0].mxu0
    %v605 = vadd.f32 %v193, %v604
    %v606 = vpop.f32.mrb[0].mxu0
    %v607 = vadd.f32 %v197, %v606
    %v608 = vpop.f32.mrb[0].mxu0
    %v609 = vpop.f32.mrb[0].mxu0
    %610 = vdwg.mxu0
    %v611 = vmax.f32 %v564, 0.0
    %v612 = vmax.f32 %v566, 0.0
    %v613 = vmax.f32 %v605, 0.0
    %v614 = vmax.f32 %v607, 0.0
    %v615 = vpack.c.bf16 %v611, %v611
    %v616 = vpack.c.bf16 %v612, %v612
    %v617 = vpack.c.bf16 %v613, %v613
    %v618 = vpack.c.bf16 %v614, %v614
    %v619 = vld [vmem:[#allocation8] sm:$0xff]
    %v620 = vld [vmem:[#allocation8 + $0x8] sm:$0xff]
    %v621 = vld [vmem:[#allocation8 + $0x10] sm:$0xff]
    %v622 = vld [vmem:[#allocation8 + $0x18] sm:$0xff]
    %v623 = vld [vmem:[#allocation8 + $0x20] sm:$0xff]
    %v624 = vld [vmem:[#allocation8 + $0x28] sm:$0xff]
    %v625 = vld [vmem:[#allocation8 + $0x30] sm:$0xff]
    %v626 = vld [vmem:[#allocation8 + $0x38] sm:$0xff]
    %v627 = vld [vmem:[#allocation8 + $0x40] sm:$0xff]
    %v628 = vld [vmem:[#allocation8 + $0x48] sm:$0xff]
    %v629 = vld [vmem:[#allocation8 + $0x50] sm:$0xff]
    %v630 = vld [vmem:[#allocation8 + $0x58] sm:$0xff]
    %v631 = vld [vmem:[#allocation8 + $0x60] sm:$0xff]
    %v632 = vld [vmem:[#allocation8 + $0x68] sm:$0xff]
    %v633 = vld [vmem:[#allocation8 + $0x70] sm:$0xff]
    %v634 = vld [vmem:[#allocation8 + $0x78] sm:$0xff]
    %v635 = vld [vmem:[#allocation8 + $0x80] sm:$0xff]
    %v636 = vld [vmem:[#allocation8 + $0x88] sm:$0xff]
    %v637 = vld [vmem:[#allocation8 + $0x90] sm:$0xff]
    %v638 = vld [vmem:[#allocation8 + $0x98] sm:$0xff]
    %v639 = vld [vmem:[#allocation8 + $0xa0] sm:$0xff]
    %v640 = vld [vmem:[#allocation8 + $0xa8] sm:$0xff]
    %v641 = vld [vmem:[#allocation8 + $0xb0] sm:$0xff]
    %v642 = vld [vmem:[#allocation8 + $0xb8] sm:$0xff]
    %v643 = vld [vmem:[#allocation8 + $0xc0] sm:$0xff]
    %v644 = vld [vmem:[#allocation8 + $0xc8] sm:$0xff]
    %v645 = vld [vmem:[#allocation8 + $0xd0] sm:$0xff]
    %v646 = vld [vmem:[#allocation8 + $0xd8] sm:$0xff]
    %v647 = vld [vmem:[#allocation8 + $0xe0] sm:$0xff]
    %v648 = vld [vmem:[#allocation8 + $0xe8] sm:$0xff]
    %v649 = vld [vmem:[#allocation8 + $0xf0] sm:$0xff]
    %v650 = vld [vmem:[#allocation8 + $0xf8] sm:$0xff]
    %v651 = vld [vmem:[#allocation8 + $0x100] sm:$0xff]
    %v652 = vld [vmem:[#allocation8 + $0x108] sm:$0xff]
    %v653 = vld [vmem:[#allocation8 + $0x110] sm:$0xff]
    %v654 = vld [vmem:[#allocation8 + $0x118] sm:$0xff]
    %v655 = vld [vmem:[#allocation8 + $0x120] sm:$0xff]
    %v656 = vld [vmem:[#allocation8 + $0x128] sm:$0xff]
    %v657 = vld [vmem:[#allocation8 + $0x130] sm:$0xff]
    %v658 = vld [vmem:[#allocation8 + $0x138] sm:$0xff]
    %v659 = vld [vmem:[#allocation8 + $0x140] sm:$0xff]
    %v660 = vld [vmem:[#allocation8 + $0x148] sm:$0xff]
    %v661 = vld [vmem:[#allocation8 + $0x150] sm:$0xff]
    %v662 = vld [vmem:[#allocation8 + $0x158] sm:$0xff]
    %v663 = vld [vmem:[#allocation8 + $0x160] sm:$0xff]
    %v664 = vld [vmem:[#allocation8 + $0x168] sm:$0xff]
    %v665 = vld [vmem:[#allocation8 + $0x170] sm:$0xff]
    %v666 = vld [vmem:[#allocation8 + $0x178] sm:$0xff]
    %v667 = vld [vmem:[#allocation8 + $0x180] sm:$0xff]
    %v668 = vld [vmem:[#allocation8 + $0x188] sm:$0xff]
    %v669 = vld [vmem:[#allocation8 + $0x190] sm:$0xff]
    %v670 = vld [vmem:[#allocation8 + $0x198] sm:$0xff]
    %v671 = vld [vmem:[#allocation8 + $0x1a0] sm:$0xff]
    %v672 = vld [vmem:[#allocation8 + $0x1a8] sm:$0xff]
    %v673 = vld [vmem:[#allocation8 + $0x1b0] sm:$0xff]
    %v674 = vld [vmem:[#allocation8 + $0x1b8] sm:$0xff]
    %v675 = vld [vmem:[#allocation8 + $0x1c0] sm:$0xff]
    %v676 = vld [vmem:[#allocation8 + $0x1c8] sm:$0xff]
    %v677 = vld [vmem:[#allocation8 + $0x1d0] sm:$0xff]
    %v678 = vld [vmem:[#allocation8 + $0x1d8] sm:$0xff]
    %v679 = vld [vmem:[#allocation8 + $0x1e0] sm:$0xff]
    %v680 = vld [vmem:[#allocation8 + $0x1e8] sm:$0xff]
    %v681 = vld [vmem:[#allocation8 + $0x1f0] sm:$0xff]
    %v682 = vld [vmem:[#allocation8 + $0x1f8] sm:$0xff]
    %v683 = vld [vmem:[#allocation8 + $0x200] sm:$0xff]
    %v684 = vld [vmem:[#allocation8 + $0x208] sm:$0xff]
    %v685 = vld [vmem:[#allocation8 + $0x210] sm:$0xff]
    %v686 = vld [vmem:[#allocation8 + $0x218] sm:$0xff]
    %v687 = vld [vmem:[#allocation8 + $0x220] sm:$0xff]
    %v688 = vld [vmem:[#allocation8 + $0x228] sm:$0xff]
    %v689 = vld [vmem:[#allocation8 + $0x230] sm:$0xff]
    %v690 = vld [vmem:[#allocation8 + $0x238] sm:$0xff]
    %v691 = vld [vmem:[#allocation8 + $0x240] sm:$0xff]
    %v692 = vld [vmem:[#allocation8 + $0x248] sm:$0xff]
    %v693 = vld [vmem:[#allocation8 + $0x250] sm:$0xff]
    %v694 = vld [vmem:[#allocation8 + $0x258] sm:$0xff]
    %v695 = vld [vmem:[#allocation8 + $0x260] sm:$0xff]
    %v696 = vld [vmem:[#allocation8 + $0x268] sm:$0xff]
    %v697 = vld [vmem:[#allocation8 + $0x270] sm:$0xff]
    %v698 = vld [vmem:[#allocation8 + $0x278] sm:$0xff]
    %v699 = vld [vmem:[#allocation8 + $0x280] sm:$0xff]
    %v700 = vld [vmem:[#allocation8 + $0x288] sm:$0xff]
    %v701 = vld [vmem:[#allocation8 + $0x290] sm:$0xff]
    %v702 = vld [vmem:[#allocation8 + $0x298] sm:$0xff]
    %v703 = vld [vmem:[#allocation8 + $0x2a0] sm:$0xff]
    %v704 = vld [vmem:[#allocation8 + $0x2a8] sm:$0xff]
    %v705 = vld [vmem:[#allocation8 + $0x2b0] sm:$0xff]
    %v706 = vld [vmem:[#allocation8 + $0x2b8] sm:$0xff]
    %v707 = vld [vmem:[#allocation8 + $0x2c0] sm:$0xff]
    %v708 = vld [vmem:[#allocation8 + $0x2c8] sm:$0xff]
    %v709 = vld [vmem:[#allocation8 + $0x2d0] sm:$0xff]
    %v710 = vld [vmem:[#allocation8 + $0x2d8] sm:$0xff]
    %v711 = vld [vmem:[#allocation8 + $0x2e0] sm:$0xff]
    %v712 = vld [vmem:[#allocation8 + $0x2e8] sm:$0xff]
    %v713 = vld [vmem:[#allocation8 + $0x2f0] sm:$0xff]
    %v714 = vld [vmem:[#allocation8 + $0x2f8] sm:$0xff]
    %v715 = vld [vmem:[#allocation8 + $0x300] sm:$0xff]
    %v716 = vld [vmem:[#allocation8 + $0x308] sm:$0xff]
    %v717 = vld [vmem:[#allocation8 + $0x310] sm:$0xff]
    %v718 = vld [vmem:[#allocation8 + $0x318] sm:$0xff]
    %v719 = vld [vmem:[#allocation8 + $0x320] sm:$0xff]
    %v720 = vld [vmem:[#allocation8 + $0x328] sm:$0xff]
    %v721 = vld [vmem:[#allocation8 + $0x330] sm:$0xff]
    %v722 = vld [vmem:[#allocation8 + $0x338] sm:$0xff]
    %v723 = vld [vmem:[#allocation8 + $0x340] sm:$0xff]
    %v724 = vld [vmem:[#allocation8 + $0x348] sm:$0xff]
    %v725 = vld [vmem:[#allocation8 + $0x350] sm:$0xff]
    %v726 = vld [vmem:[#allocation8 + $0x358] sm:$0xff]
    %v727 = vld [vmem:[#allocation8 + $0x360] sm:$0xff]
    %v728 = vld [vmem:[#allocation8 + $0x368] sm:$0xff]
    %v729 = vld [vmem:[#allocation8 + $0x370] sm:$0xff]
    %v730 = vld [vmem:[#allocation8 + $0x378] sm:$0xff]
    %v731 = vld [vmem:[#allocation8 + $0x380] sm:$0xff]
    %v732 = vld [vmem:[#allocation8 + $0x388] sm:$0xff]
    %v733 = vld [vmem:[#allocation8 + $0x390] sm:$0xff]
    %v734 = vld [vmem:[#allocation8 + $0x398] sm:$0xff]
    %v735 = vld [vmem:[#allocation8 + $0x3a0] sm:$0xff]
    %v736 = vld [vmem:[#allocation8 + $0x3a8] sm:$0xff]
    %v737 = vld [vmem:[#allocation8 + $0x3b0] sm:$0xff]
    %v738 = vld [vmem:[#allocation8 + $0x3b8] sm:$0xff]
    %v739 = vld [vmem:[#allocation8 + $0x3c0] sm:$0xff]
    %v740 = vld [vmem:[#allocation8 + $0x3c8] sm:$0xff]
    %v741 = vld [vmem:[#allocation8 + $0x3d0] sm:$0xff]
    %v742 = vld [vmem:[#allocation8 + $0x3d8] sm:$0xff]
    %v743 = vld [vmem:[#allocation8 + $0x3e0] sm:$0xff]
    %v744 = vld [vmem:[#allocation8 + $0x3e8] sm:$0xff]
    %v745 = vld [vmem:[#allocation8 + $0x3f0] sm:$0xff]
    %v746 = vld [vmem:[#allocation8 + $0x3f8] sm:$0xff]
    %v747 = vld [vmem:[#allocation8 + $0x400] sm:$0xff]
    %v748 = vld [vmem:[#allocation8 + $0x408] sm:$0xff]
    %v749 = vld [vmem:[#allocation8 + $0x410] sm:$0xff]
    %v750 = vld [vmem:[#allocation8 + $0x418] sm:$0xff]
    %v751 = vld [vmem:[#allocation8 + $0x420] sm:$0xff]
    %v752 = vld [vmem:[#allocation8 + $0x428] sm:$0xff]
    %v753 = vld [vmem:[#allocation8 + $0x430] sm:$0xff]
    %v754 = vld [vmem:[#allocation8 + $0x438] sm:$0xff]
    %v755 = vld [vmem:[#allocation8 + $0x440] sm:$0xff]
    %v756 = vld [vmem:[#allocation8 + $0x448] sm:$0xff]
    %v757 = vld [vmem:[#allocation8 + $0x450] sm:$0xff]
    %v758 = vld [vmem:[#allocation8 + $0x458] sm:$0xff]
    %v759 = vld [vmem:[#allocation8 + $0x460] sm:$0xff]
    %v760 = vld [vmem:[#allocation8 + $0x468] sm:$0xff]
    %v761 = vld [vmem:[#allocation8 + $0x470] sm:$0xff]
    %v762 = vld [vmem:[#allocation8 + $0x478] sm:$0xff]
    %v763 = vld [vmem:[#allocation8 + $0x480] sm:$0xff]
    %v764 = vld [vmem:[#allocation8 + $0x488] sm:$0xff]
    %v765 = vld [vmem:[#allocation8 + $0x490] sm:$0xff]
    %v766 = vld [vmem:[#allocation8 + $0x498] sm:$0xff]
    %v767 = vld [vmem:[#allocation8 + $0x4a0] sm:$0xff]
    %v768 = vld [vmem:[#allocation8 + $0x4a8] sm:$0xff]
    %v769 = vld [vmem:[#allocation8 + $0x4b0] sm:$0xff]
    %v770 = vld [vmem:[#allocation8 + $0x4b8] sm:$0xff]
    %v771 = vld [vmem:[#allocation8 + $0x4c0] sm:$0xff]
    %v772 = vld [vmem:[#allocation8 + $0x4c8] sm:$0xff]
    %v773 = vld [vmem:[#allocation8 + $0x4d0] sm:$0xff]
    %v774 = vld [vmem:[#allocation8 + $0x4d8] sm:$0xff]
    %v775 = vld [vmem:[#allocation8 + $0x4e0] sm:$0xff]
    %v776 = vld [vmem:[#allocation8 + $0x4e8] sm:$0xff]
    %v777 = vld [vmem:[#allocation8 + $0x4f0] sm:$0xff]
    %v778 = vld [vmem:[#allocation8 + $0x4f8] sm:$0xff]
    %v779 = vld [vmem:[#allocation8 + $0x500] sm:$0xff]
    %v780 = vld [vmem:[#allocation8 + $0x508] sm:$0xff]
    %v781 = vld [vmem:[#allocation8 + $0x510] sm:$0xff]
    %v782 = vld [vmem:[#allocation8 + $0x518] sm:$0xff]
    %v783 = vld [vmem:[#allocation8 + $0x520] sm:$0xff]
    %v784 = vld [vmem:[#allocation8 + $0x528] sm:$0xff]
    %v785 = vld [vmem:[#allocation8 + $0x530] sm:$0xff]
    %v786 = vld [vmem:[#allocation8 + $0x538] sm:$0xff]
    %v787 = vld [vmem:[#allocation8 + $0x540] sm:$0xff]
    %v788 = vld [vmem:[#allocation8 + $0x548] sm:$0xff]
    %v789 = vld [vmem:[#allocation8 + $0x550] sm:$0xff]
    %v790 = vld [vmem:[#allocation8 + $0x558] sm:$0xff]
    %v791 = vld [vmem:[#allocation8 + $0x560] sm:$0xff]
    %v792 = vld [vmem:[#allocation8 + $0x568] sm:$0xff]
    %v793 = vld [vmem:[#allocation8 + $0x570] sm:$0xff]
    %v794 = vld [vmem:[#allocation8 + $0x578] sm:$0xff]
    %v795 = vld [vmem:[#allocation8 + $0x580] sm:$0xff]
    %v796 = vld [vmem:[#allocation8 + $0x588] sm:$0xff]
    %v797 = vld [vmem:[#allocation8 + $0x590] sm:$0xff]
    %v798 = vld [vmem:[#allocation8 + $0x598] sm:$0xff]
    %v799 = vld [vmem:[#allocation8 + $0x5a0] sm:$0xff]
    %v800 = vld [vmem:[#allocation8 + $0x5a8] sm:$0xff]
    %v801 = vld [vmem:[#allocation8 + $0x5b0] sm:$0xff]
    %v802 = vld [vmem:[#allocation8 + $0x5b8] sm:$0xff]
    %v803 = vld [vmem:[#allocation8 + $0x5c0] sm:$0xff]
    %v804 = vld [vmem:[#allocation8 + $0x5c8] sm:$0xff]
    %v805 = vld [vmem:[#allocation8 + $0x5d0] sm:$0xff]
    %v806 = vld [vmem:[#allocation8 + $0x5d8] sm:$0xff]
    %v807 = vld [vmem:[#allocation8 + $0x5e0] sm:$0xff]
    %v808 = vld [vmem:[#allocation8 + $0x5e8] sm:$0xff]
    %v809 = vld [vmem:[#allocation8 + $0x5f0] sm:$0xff]
    %v810 = vld [vmem:[#allocation8 + $0x5f8] sm:$0xff]
    %v811 = vld [vmem:[#allocation8 + $0x600] sm:$0xff]
    %v812 = vld [vmem:[#allocation8 + $0x608] sm:$0xff]
    %v813 = vld [vmem:[#allocation8 + $0x610] sm:$0xff]
    %v814 = vld [vmem:[#allocation8 + $0x618] sm:$0xff]
    %v815 = vld [vmem:[#allocation8 + $0x620] sm:$0xff]
    %v816 = vld [vmem:[#allocation8 + $0x628] sm:$0xff]
    %v817 = vld [vmem:[#allocation8 + $0x630] sm:$0xff]
    %v818 = vld [vmem:[#allocation8 + $0x638] sm:$0xff]
    %v819 = vld [vmem:[#allocation8 + $0x640] sm:$0xff]
    %v820 = vld [vmem:[#allocation8 + $0x648] sm:$0xff]
    %v821 = vld [vmem:[#allocation8 + $0x650] sm:$0xff]
    %v822 = vld [vmem:[#allocation8 + $0x658] sm:$0xff]
    %v823 = vld [vmem:[#allocation8 + $0x660] sm:$0xff]
    %v824 = vld [vmem:[#allocation8 + $0x668] sm:$0xff]
    %v825 = vld [vmem:[#allocation8 + $0x670] sm:$0xff]
    %v826 = vld [vmem:[#allocation8 + $0x678] sm:$0xff]
    %v827 = vld [vmem:[#allocation8 + $0x680] sm:$0xff]
    %v828 = vld [vmem:[#allocation8 + $0x688] sm:$0xff]
    %v829 = vld [vmem:[#allocation8 + $0x690] sm:$0xff]
    %v830 = vld [vmem:[#allocation8 + $0x698] sm:$0xff]
    %v831 = vld [vmem:[#allocation8 + $0x6a0] sm:$0xff]
    %v832 = vld [vmem:[#allocation8 + $0x6a8] sm:$0xff]
    %v833 = vld [vmem:[#allocation8 + $0x6b0] sm:$0xff]
    %v834 = vld [vmem:[#allocation8 + $0x6b8] sm:$0xff]
    %v835 = vld [vmem:[#allocation8 + $0x6c0] sm:$0xff]
    %v836 = vld [vmem:[#allocation8 + $0x6c8] sm:$0xff]
    %v837 = vld [vmem:[#allocation8 + $0x6d0] sm:$0xff]
    %v838 = vld [vmem:[#allocation8 + $0x6d8] sm:$0xff]
    %v839 = vld [vmem:[#allocation8 + $0x6e0] sm:$0xff]
    %v840 = vld [vmem:[#allocation8 + $0x6e8] sm:$0xff]
    %v841 = vld [vmem:[#allocation8 + $0x6f0] sm:$0xff]
    %v842 = vld [vmem:[#allocation8 + $0x6f8] sm:$0xff]
    %v843 = vld [vmem:[#allocation8 + $0x700] sm:$0xff]
    %v844 = vld [vmem:[#allocation8 + $0x708] sm:$0xff]
    %v845 = vld [vmem:[#allocation8 + $0x710] sm:$0xff]
    %v846 = vld [vmem:[#allocation8 + $0x718] sm:$0xff]
    %v847 = vld [vmem:[#allocation8 + $0x720] sm:$0xff]
    %v848 = vld [vmem:[#allocation8 + $0x728] sm:$0xff]
    %v849 = vld [vmem:[#allocation8 + $0x730] sm:$0xff]
    %v850 = vld [vmem:[#allocation8 + $0x738] sm:$0xff]
    %v851 = vld [vmem:[#allocation8 + $0x740] sm:$0xff]
    %v852 = vld [vmem:[#allocation8 + $0x748] sm:$0xff]
    %v853 = vld [vmem:[#allocation8 + $0x750] sm:$0xff]
    %v854 = vld [vmem:[#allocation8 + $0x758] sm:$0xff]
    %v855 = vld [vmem:[#allocation8 + $0x760] sm:$0xff]
    %v856 = vld [vmem:[#allocation8 + $0x768] sm:$0xff]
    %v857 = vld [vmem:[#allocation8 + $0x770] sm:$0xff]
    %v858 = vld [vmem:[#allocation8 + $0x778] sm:$0xff]
    %v859 = vld [vmem:[#allocation8 + $0x780] sm:$0xff]
    %v860 = vld [vmem:[#allocation8 + $0x788] sm:$0xff]
    %v861 = vld [vmem:[#allocation8 + $0x790] sm:$0xff]
    %v862 = vld [vmem:[#allocation8 + $0x798] sm:$0xff]
    %v863 = vld [vmem:[#allocation8 + $0x7a0] sm:$0xff]
    %v864 = vld [vmem:[#allocation8 + $0x7a8] sm:$0xff]
    %v865 = vld [vmem:[#allocation8 + $0x7b0] sm:$0xff]
    %v866 = vld [vmem:[#allocation8 + $0x7b8] sm:$0xff]
    %v867 = vld [vmem:[#allocation8 + $0x7c0] sm:$0xff]
    %v868 = vld [vmem:[#allocation8 + $0x7c8] sm:$0xff]
    %v869 = vld [vmem:[#allocation8 + $0x7d0] sm:$0xff]
    %v870 = vld [vmem:[#allocation8 + $0x7d8] sm:$0xff]
    %v871 = vld [vmem:[#allocation8 + $0x7e0] sm:$0xff]
    %v872 = vld [vmem:[#allocation8 + $0x7e8] sm:$0xff]
    %v873 = vld [vmem:[#allocation8 + $0x7f0] sm:$0xff]
    %v874 = vld [vmem:[#allocation8 + $0x7f8] sm:$0xff]
    %v875 = vld [vmem:[#allocation10] sm:$0xff]
    %v877 = vlaneseq
    %v878 = vshrl.u32 %v877, 7
    %v879 = vsub.s32 0, %v878
    %v880 = vrot.slane %v875, %v879
    %v881 = vlaneseq
    %v882 = vshrl.u32 %v881, 7
    %v883 = vsub.s32 1, %v882
    %v884 = vrot.slane %v875, %v883
    %v885 = vlaneseq
    %v886 = vshrl.u32 %v885, 7
    %v887 = vsub.s32 2, %v886
    %v888 = vrot.slane %v875, %v887
    %v889 = vlaneseq
    %v890 = vshrl.u32 %v889, 7
    %v891 = vsub.s32 3, %v890
    %v892 = vrot.slane %v875, %v891
    %v893 = vlaneseq
    %v894 = vshrl.u32 %v893, 7
    %v895 = vsub.s32 4, %v894
    %v896 = vrot.slane %v875, %v895
    %v897 = vlaneseq
    %v898 = vshrl.u32 %v897, 7
    %v899 = vsub.s32 5, %v898
    %v900 = vrot.slane %v875, %v899
    %v901 = vlaneseq
    %v902 = vshrl.u32 %v901, 7
    %v903 = vsub.s32 6, %v902
    %v904 = vrot.slane %v875, %v903
    %v905 = vlaneseq
    %v906 = vshrl.u32 %v905, 7
    %v907 = vsub.s32 7, %v906
    %v908 = vrot.slane %v875, %v907
    %v1173 = vunpack.c.l.b16 %v619
    %v1174 = vunpack.c.h.b16 %v619
    %v1175 = vunpack.c.l.b16 %v620
    %v1176 = vunpack.c.h.b16 %v620
    %v1177 = vunpack.c.l.b16 %v621
    %v1178 = vunpack.c.h.b16 %v621
    %v1179 = vunpack.c.l.b16 %v622
    %v1180 = vunpack.c.h.b16 %v622
    %v1181 = vunpack.c.l.b16 %v623
    %v1182 = vunpack.c.h.b16 %v623
    %v1183 = vunpack.c.l.b16 %v624
    %v1184 = vunpack.c.h.b16 %v624
    %v1185 = vunpack.c.l.b16 %v625
    %v1186 = vunpack.c.h.b16 %v625
    %v1187 = vunpack.c.l.b16 %v626
    %v1188 = vunpack.c.h.b16 %v626
    %v1189 = vunpack.c.l.b16 %v627
    %v1190 = vunpack.c.h.b16 %v627
    %v1191 = vunpack.c.l.b16 %v628
    %v1192 = vunpack.c.h.b16 %v628
    %v1193 = vunpack.c.l.b16 %v629
    %v1194 = vunpack.c.h.b16 %v629
    %v1195 = vunpack.c.l.b16 %v630
    %v1196 = vunpack.c.h.b16 %v630
    %v1197 = vunpack.c.l.b16 %v631
    %v1198 = vunpack.c.h.b16 %v631
    %v1199 = vunpack.c.l.b16 %v632
    %v1200 = vunpack.c.h.b16 %v632
    %v1201 = vunpack.c.l.b16 %v633
    %v1202 = vunpack.c.h.b16 %v633
    %v1203 = vunpack.c.l.b16 %v634
    %v1204 = vunpack.c.h.b16 %v634
    %v1205 = vunpack.c.l.b16 %v635
    %v1206 = vunpack.c.h.b16 %v635
    %v1207 = vunpack.c.l.b16 %v636
    %v1208 = vunpack.c.h.b16 %v636
    %v1209 = vunpack.c.l.b16 %v637
    %v1210 = vunpack.c.h.b16 %v637
    %v1211 = vunpack.c.l.b16 %v638
    %v1212 = vunpack.c.h.b16 %v638
    %v1213 = vunpack.c.l.b16 %v639
    %v1214 = vunpack.c.h.b16 %v639
    %v1215 = vunpack.c.l.b16 %v640
    %v1216 = vunpack.c.h.b16 %v640
    %v1217 = vunpack.c.l.b16 %v641
    %v1218 = vunpack.c.h.b16 %v641
    %v1219 = vunpack.c.l.b16 %v642
    %v1220 = vunpack.c.h.b16 %v642
    %v1221 = vunpack.c.l.b16 %v643
    %v1222 = vunpack.c.h.b16 %v643
    %v1223 = vunpack.c.l.b16 %v644
    %v1224 = vunpack.c.h.b16 %v644
    %v1225 = vunpack.c.l.b16 %v645
    %v1226 = vunpack.c.h.b16 %v645
    %v1227 = vunpack.c.l.b16 %v646
    %v1228 = vunpack.c.h.b16 %v646
    %v1229 = vunpack.c.l.b16 %v647
    %v1230 = vunpack.c.h.b16 %v647
    %v1231 = vunpack.c.l.b16 %v648
    %v1232 = vunpack.c.h.b16 %v648
    %v1233 = vunpack.c.l.b16 %v649
    %v1234 = vunpack.c.h.b16 %v649
    %v1235 = vunpack.c.l.b16 %v650
    %v1236 = vunpack.c.h.b16 %v650
    %v1237 = vunpack.c.l.b16 %v651
    %v1238 = vunpack.c.h.b16 %v651
    %v1239 = vunpack.c.l.b16 %v652
    %v1240 = vunpack.c.h.b16 %v652
    %v1241 = vunpack.c.l.b16 %v653
    %v1242 = vunpack.c.h.b16 %v653
    %v1243 = vunpack.c.l.b16 %v654
    %v1244 = vunpack.c.h.b16 %v654
    %v1245 = vunpack.c.l.b16 %v655
    %v1246 = vunpack.c.h.b16 %v655
    %v1247 = vunpack.c.l.b16 %v656
    %v1248 = vunpack.c.h.b16 %v656
    %v1249 = vunpack.c.l.b16 %v657
    %v1250 = vunpack.c.h.b16 %v657
    %v1251 = vunpack.c.l.b16 %v658
    %v1252 = vunpack.c.h.b16 %v658
    %v1253 = vunpack.c.l.b16 %v659
    %v1254 = vunpack.c.h.b16 %v659
    %v1255 = vunpack.c.l.b16 %v660
    %v1256 = vunpack.c.h.b16 %v660
    %v1257 = vunpack.c.l.b16 %v661
    %v1258 = vunpack.c.h.b16 %v661
    %v1259 = vunpack.c.l.b16 %v662
    %v1260 = vunpack.c.h.b16 %v662
    %v1261 = vunpack.c.l.b16 %v663
    %v1262 = vunpack.c.h.b16 %v663
    %v1263 = vunpack.c.l.b16 %v664
    %v1264 = vunpack.c.h.b16 %v664
    %v1265 = vunpack.c.l.b16 %v665
    %v1266 = vunpack.c.h.b16 %v665
    %v1267 = vunpack.c.l.b16 %v666
    %v1268 = vunpack.c.h.b16 %v666
    %v1269 = vunpack.c.l.b16 %v667
    %v1270 = vunpack.c.h.b16 %v667
    %v1271 = vunpack.c.l.b16 %v668
    %v1272 = vunpack.c.h.b16 %v668
    %v1273 = vunpack.c.l.b16 %v669
    %v1274 = vunpack.c.h.b16 %v669
    %v1275 = vunpack.c.l.b16 %v670
    %v1276 = vunpack.c.h.b16 %v670
    %v1277 = vunpack.c.l.b16 %v671
    %v1278 = vunpack.c.h.b16 %v671
    %v1279 = vunpack.c.l.b16 %v672
    %v1280 = vunpack.c.h.b16 %v672
    %v1281 = vunpack.c.l.b16 %v673
    %v1282 = vunpack.c.h.b16 %v673
    %v1283 = vunpack.c.l.b16 %v674
    %v1284 = vunpack.c.h.b16 %v674
    %v1285 = vunpack.c.l.b16 %v675
    %v1286 = vunpack.c.h.b16 %v675
    %v1287 = vunpack.c.l.b16 %v676
    %v1288 = vunpack.c.h.b16 %v676
    %v1289 = vunpack.c.l.b16 %v677
    %v1290 = vunpack.c.h.b16 %v677
    %v1291 = vunpack.c.l.b16 %v678
    %v1292 = vunpack.c.h.b16 %v678
    %v1293 = vunpack.c.l.b16 %v679
    %v1294 = vunpack.c.h.b16 %v679
    %v1295 = vunpack.c.l.b16 %v680
    %v1296 = vunpack.c.h.b16 %v680
    %v1297 = vunpack.c.l.b16 %v681
    %v1298 = vunpack.c.h.b16 %v681
    %v1299 = vunpack.c.l.b16 %v682
    %v1300 = vunpack.c.h.b16 %v682
    %v1301 = vunpack.c.l.b16 %v683
    %v1302 = vunpack.c.h.b16 %v683
    %v1303 = vunpack.c.l.b16 %v684
    %v1304 = vunpack.c.h.b16 %v684
    %v1305 = vunpack.c.l.b16 %v685
    %v1306 = vunpack.c.h.b16 %v685
    %v1307 = vunpack.c.l.b16 %v686
    %v1308 = vunpack.c.h.b16 %v686
    %v1309 = vunpack.c.l.b16 %v687
    %v1310 = vunpack.c.h.b16 %v687
    %v1311 = vunpack.c.l.b16 %v688
    %v1312 = vunpack.c.h.b16 %v688
    %v1313 = vunpack.c.l.b16 %v689
    %v1314 = vunpack.c.h.b16 %v689
    %v1315 = vunpack.c.l.b16 %v690
    %v1316 = vunpack.c.h.b16 %v690
    %v1317 = vunpack.c.l.b16 %v691
    %v1318 = vunpack.c.h.b16 %v691
    %v1319 = vunpack.c.l.b16 %v692
    %v1320 = vunpack.c.h.b16 %v692
    %v1321 = vunpack.c.l.b16 %v693
    %v1322 = vunpack.c.h.b16 %v693
    %v1323 = vunpack.c.l.b16 %v694
    %v1324 = vunpack.c.h.b16 %v694
    %v1325 = vunpack.c.l.b16 %v695
    %v1326 = vunpack.c.h.b16 %v695
    %v1327 = vunpack.c.l.b16 %v696
    %v1328 = vunpack.c.h.b16 %v696
    %v1329 = vunpack.c.l.b16 %v697
    %v1330 = vunpack.c.h.b16 %v697
    %v1331 = vunpack.c.l.b16 %v698
    %v1332 = vunpack.c.h.b16 %v698
    %v1333 = vunpack.c.l.b16 %v699
    %v1334 = vunpack.c.h.b16 %v699
    %v1335 = vunpack.c.l.b16 %v700
    %v1336 = vunpack.c.h.b16 %v700
    %v1337 = vunpack.c.l.b16 %v701
    %v1338 = vunpack.c.h.b16 %v701
    %v1339 = vunpack.c.l.b16 %v702
    %v1340 = vunpack.c.h.b16 %v702
    %v1341 = vunpack.c.l.b16 %v703
    %v1342 = vunpack.c.h.b16 %v703
    %v1343 = vunpack.c.l.b16 %v704
    %v1344 = vunpack.c.h.b16 %v704
    %v1345 = vunpack.c.l.b16 %v705
    %v1346 = vunpack.c.h.b16 %v705
    %v1347 = vunpack.c.l.b16 %v706
    %v1348 = vunpack.c.h.b16 %v706
    %v1349 = vunpack.c.l.b16 %v707
    %v1350 = vunpack.c.h.b16 %v707
    %v1351 = vunpack.c.l.b16 %v708
    %v1352 = vunpack.c.h.b16 %v708
    %v1353 = vunpack.c.l.b16 %v709
    %v1354 = vunpack.c.h.b16 %v709
    %v1355 = vunpack.c.l.b16 %v710
    %v1356 = vunpack.c.h.b16 %v710
    %v1357 = vunpack.c.l.b16 %v711
    %v1358 = vunpack.c.h.b16 %v711
    %v1359 = vunpack.c.l.b16 %v712
    %v1360 = vunpack.c.h.b16 %v712
    %v1361 = vunpack.c.l.b16 %v713
    %v1362 = vunpack.c.h.b16 %v713
    %v1363 = vunpack.c.l.b16 %v714
    %v1364 = vunpack.c.h.b16 %v714
    %v1365 = vunpack.c.l.b16 %v715
    %v1366 = vunpack.c.h.b16 %v715
    %v1367 = vunpack.c.l.b16 %v716
    %v1368 = vunpack.c.h.b16 %v716
    %v1369 = vunpack.c.l.b16 %v717
    %v1370 = vunpack.c.h.b16 %v717
    %v1371 = vunpack.c.l.b16 %v718
    %v1372 = vunpack.c.h.b16 %v718
    %v1373 = vunpack.c.l.b16 %v719
    %v1374 = vunpack.c.h.b16 %v719
    %v1375 = vunpack.c.l.b16 %v720
    %v1376 = vunpack.c.h.b16 %v720
    %v1377 = vunpack.c.l.b16 %v721
    %v1378 = vunpack.c.h.b16 %v721
    %v1379 = vunpack.c.l.b16 %v722
    %v1380 = vunpack.c.h.b16 %v722
    %v1381 = vunpack.c.l.b16 %v723
    %v1382 = vunpack.c.h.b16 %v723
    %v1383 = vunpack.c.l.b16 %v724
    %v1384 = vunpack.c.h.b16 %v724
    %v1385 = vunpack.c.l.b16 %v725
    %v1386 = vunpack.c.h.b16 %v725
    %v1387 = vunpack.c.l.b16 %v726
    %v1388 = vunpack.c.h.b16 %v726
    %v1389 = vunpack.c.l.b16 %v727
    %v1390 = vunpack.c.h.b16 %v727
    %v1391 = vunpack.c.l.b16 %v728
    %v1392 = vunpack.c.h.b16 %v728
    %v1393 = vunpack.c.l.b16 %v729
    %v1394 = vunpack.c.h.b16 %v729
    %v1395 = vunpack.c.l.b16 %v730
    %v1396 = vunpack.c.h.b16 %v730
    %v1397 = vunpack.c.l.b16 %v731
    %v1398 = vunpack.c.h.b16 %v731
    %v1399 = vunpack.c.l.b16 %v732
    %v1400 = vunpack.c.h.b16 %v732
    %v1401 = vunpack.c.l.b16 %v733
    %v1402 = vunpack.c.h.b16 %v733
    %v1403 = vunpack.c.l.b16 %v734
    %v1404 = vunpack.c.h.b16 %v734
    %v1405 = vunpack.c.l.b16 %v735
    %v1406 = vunpack.c.h.b16 %v735
    %v1407 = vunpack.c.l.b16 %v736
    %v1408 = vunpack.c.h.b16 %v736
    %v1409 = vunpack.c.l.b16 %v737
    %v1410 = vunpack.c.h.b16 %v737
    %v1411 = vunpack.c.l.b16 %v738
    %v1412 = vunpack.c.h.b16 %v738
    %v1413 = vunpack.c.l.b16 %v739
    %v1414 = vunpack.c.h.b16 %v739
    %v1415 = vunpack.c.l.b16 %v740
    %v1416 = vunpack.c.h.b16 %v740
    %v1417 = vunpack.c.l.b16 %v741
    %v1418 = vunpack.c.h.b16 %v741
    %v1419 = vunpack.c.l.b16 %v742
    %v1420 = vunpack.c.h.b16 %v742
    %v1421 = vunpack.c.l.b16 %v743
    %v1422 = vunpack.c.h.b16 %v743
    %v1423 = vunpack.c.l.b16 %v744
    %v1424 = vunpack.c.h.b16 %v744
    %v1425 = vunpack.c.l.b16 %v745
    %v1426 = vunpack.c.h.b16 %v745
    %v1427 = vunpack.c.l.b16 %v746
    %v1428 = vunpack.c.h.b16 %v746
    %v1429 = vunpack.c.l.b16 %v747
    %v1430 = vunpack.c.h.b16 %v747
    %v1431 = vunpack.c.l.b16 %v748
    %v1432 = vunpack.c.h.b16 %v748
    %v1433 = vunpack.c.l.b16 %v749
    %v1434 = vunpack.c.h.b16 %v749
    %v1435 = vunpack.c.l.b16 %v750
    %v1436 = vunpack.c.h.b16 %v750
    %v1437 = vunpack.c.l.b16 %v751
    %v1438 = vunpack.c.h.b16 %v751
    %v1439 = vunpack.c.l.b16 %v752
    %v1440 = vunpack.c.h.b16 %v752
    %v1441 = vunpack.c.l.b16 %v753
    %v1442 = vunpack.c.h.b16 %v753
    %v1443 = vunpack.c.l.b16 %v754
    %v1444 = vunpack.c.h.b16 %v754
    %v1445 = vunpack.c.l.b16 %v755
    %v1446 = vunpack.c.h.b16 %v755
    %v1447 = vunpack.c.l.b16 %v756
    %v1448 = vunpack.c.h.b16 %v756
    %v1449 = vunpack.c.l.b16 %v757
    %v1450 = vunpack.c.h.b16 %v757
    %v1451 = vunpack.c.l.b16 %v758
    %v1452 = vunpack.c.h.b16 %v758
    %v1453 = vunpack.c.l.b16 %v759
    %v1454 = vunpack.c.h.b16 %v759
    %v1455 = vunpack.c.l.b16 %v760
    %v1456 = vunpack.c.h.b16 %v760
    %v1457 = vunpack.c.l.b16 %v761
    %v1458 = vunpack.c.h.b16 %v761
    %v1459 = vunpack.c.l.b16 %v762
    %v1460 = vunpack.c.h.b16 %v762
    %v1461 = vunpack.c.l.b16 %v763
    %v1462 = vunpack.c.h.b16 %v763
    %v1463 = vunpack.c.l.b16 %v764
    %v1464 = vunpack.c.h.b16 %v764
    %v1465 = vunpack.c.l.b16 %v765
    %v1466 = vunpack.c.h.b16 %v765
    %v1467 = vunpack.c.l.b16 %v766
    %v1468 = vunpack.c.h.b16 %v766
    %v1469 = vunpack.c.l.b16 %v767
    %v1470 = vunpack.c.h.b16 %v767
    %v1471 = vunpack.c.l.b16 %v768
    %v1472 = vunpack.c.h.b16 %v768
    %v1473 = vunpack.c.l.b16 %v769
    %v1474 = vunpack.c.h.b16 %v769
    %v1475 = vunpack.c.l.b16 %v770
    %v1476 = vunpack.c.h.b16 %v770
    %v1477 = vunpack.c.l.b16 %v771
    %v1478 = vunpack.c.h.b16 %v771
    %v1479 = vunpack.c.l.b16 %v772
    %v1480 = vunpack.c.h.b16 %v772
    %v1481 = vunpack.c.l.b16 %v773
    %v1482 = vunpack.c.h.b16 %v773
    %v1483 = vunpack.c.l.b16 %v774
    %v1484 = vunpack.c.h.b16 %v774
    %v1485 = vunpack.c.l.b16 %v775
    %v1486 = vunpack.c.h.b16 %v775
    %v1487 = vunpack.c.l.b16 %v776
    %v1488 = vunpack.c.h.b16 %v776
    %v1489 = vunpack.c.l.b16 %v777
    %v1490 = vunpack.c.h.b16 %v777
    %v1491 = vunpack.c.l.b16 %v778
    %v1492 = vunpack.c.h.b16 %v778
    %v1493 = vunpack.c.l.b16 %v779
    %v1494 = vunpack.c.h.b16 %v779
    %v1495 = vunpack.c.l.b16 %v780
    %v1496 = vunpack.c.h.b16 %v780
    %v1497 = vunpack.c.l.b16 %v781
    %v1498 = vunpack.c.h.b16 %v781
    %v1499 = vunpack.c.l.b16 %v782
    %v1500 = vunpack.c.h.b16 %v782
    %v1501 = vunpack.c.l.b16 %v783
    %v1502 = vunpack.c.h.b16 %v783
    %v1503 = vunpack.c.l.b16 %v784
    %v1504 = vunpack.c.h.b16 %v784
    %v1505 = vunpack.c.l.b16 %v785
    %v1506 = vunpack.c.h.b16 %v785
    %v1507 = vunpack.c.l.b16 %v786
    %v1508 = vunpack.c.h.b16 %v786
    %v1509 = vunpack.c.l.b16 %v787
    %v1510 = vunpack.c.h.b16 %v787
    %v1511 = vunpack.c.l.b16 %v788
    %v1512 = vunpack.c.h.b16 %v788
    %v1513 = vunpack.c.l.b16 %v789
    %v1514 = vunpack.c.h.b16 %v789
    %v1515 = vunpack.c.l.b16 %v790
    %v1516 = vunpack.c.h.b16 %v790
    %v1517 = vunpack.c.l.b16 %v791
    %v1518 = vunpack.c.h.b16 %v791
    %v1519 = vunpack.c.l.b16 %v792
    %v1520 = vunpack.c.h.b16 %v792
    %v1521 = vunpack.c.l.b16 %v793
    %v1522 = vunpack.c.h.b16 %v793
    %v1523 = vunpack.c.l.b16 %v794
    %v1524 = vunpack.c.h.b16 %v794
    %v1525 = vunpack.c.l.b16 %v795
    %v1526 = vunpack.c.h.b16 %v795
    %v1527 = vunpack.c.l.b16 %v796
    %v1528 = vunpack.c.h.b16 %v796
    %v1529 = vunpack.c.l.b16 %v797
    %v1530 = vunpack.c.h.b16 %v797
    %v1531 = vunpack.c.l.b16 %v798
    %v1532 = vunpack.c.h.b16 %v798
    %v1533 = vunpack.c.l.b16 %v799
    %v1534 = vunpack.c.h.b16 %v799
    %v1535 = vunpack.c.l.b16 %v800
    %v1536 = vunpack.c.h.b16 %v800
    %v1537 = vunpack.c.l.b16 %v801
    %v1538 = vunpack.c.h.b16 %v801
    %v1539 = vunpack.c.l.b16 %v802
    %v1540 = vunpack.c.h.b16 %v802
    %v1541 = vunpack.c.l.b16 %v803
    %v1542 = vunpack.c.h.b16 %v803
    %v1543 = vunpack.c.l.b16 %v804
    %v1544 = vunpack.c.h.b16 %v804
    %v1545 = vunpack.c.l.b16 %v805
    %v1546 = vunpack.c.h.b16 %v805
    %v1547 = vunpack.c.l.b16 %v806
    %v1548 = vunpack.c.h.b16 %v806
    %v1549 = vunpack.c.l.b16 %v807
    %v1550 = vunpack.c.h.b16 %v807
    %v1551 = vunpack.c.l.b16 %v808
    %v1552 = vunpack.c.h.b16 %v808
    %v1553 = vunpack.c.l.b16 %v809
    %v1554 = vunpack.c.h.b16 %v809
    %v1555 = vunpack.c.l.b16 %v810
    %v1556 = vunpack.c.h.b16 %v810
    %v1557 = vunpack.c.l.b16 %v811
    %v1558 = vunpack.c.h.b16 %v811
    %v1559 = vunpack.c.l.b16 %v812
    %v1560 = vunpack.c.h.b16 %v812
    %v1561 = vunpack.c.l.b16 %v813
    %v1562 = vunpack.c.h.b16 %v813
    %v1563 = vunpack.c.l.b16 %v814
    %v1564 = vunpack.c.h.b16 %v814
    %v1565 = vunpack.c.l.b16 %v815
    %v1566 = vunpack.c.h.b16 %v815
    %v1567 = vunpack.c.l.b16 %v816
    %v1568 = vunpack.c.h.b16 %v816
    %v1569 = vunpack.c.l.b16 %v817
    %v1570 = vunpack.c.h.b16 %v817
    %v1571 = vunpack.c.l.b16 %v818
    %v1572 = vunpack.c.h.b16 %v818
    %v1573 = vunpack.c.l.b16 %v819
    %v1574 = vunpack.c.h.b16 %v819
    %v1575 = vunpack.c.l.b16 %v820
    %v1576 = vunpack.c.h.b16 %v820
    %v1577 = vunpack.c.l.b16 %v821
    %v1578 = vunpack.c.h.b16 %v821
    %v1579 = vunpack.c.l.b16 %v822
    %v1580 = vunpack.c.h.b16 %v822
    %v1581 = vunpack.c.l.b16 %v823
    %v1582 = vunpack.c.h.b16 %v823
    %v1583 = vunpack.c.l.b16 %v824
    %v1584 = vunpack.c.h.b16 %v824
    %v1585 = vunpack.c.l.b16 %v825
    %v1586 = vunpack.c.h.b16 %v825
    %v1587 = vunpack.c.l.b16 %v826
    %v1588 = vunpack.c.h.b16 %v826
    %v1589 = vunpack.c.l.b16 %v827
    %v1590 = vunpack.c.h.b16 %v827
    %v1591 = vunpack.c.l.b16 %v828
    %v1592 = vunpack.c.h.b16 %v828
    %v1593 = vunpack.c.l.b16 %v829
    %v1594 = vunpack.c.h.b16 %v829
    %v1595 = vunpack.c.l.b16 %v830
    %v1596 = vunpack.c.h.b16 %v830
    %v1597 = vunpack.c.l.b16 %v831
    %v1598 = vunpack.c.h.b16 %v831
    %v1599 = vunpack.c.l.b16 %v832
    %v1600 = vunpack.c.h.b16 %v832
    %v1601 = vunpack.c.l.b16 %v833
    %v1602 = vunpack.c.h.b16 %v833
    %v1603 = vunpack.c.l.b16 %v834
    %v1604 = vunpack.c.h.b16 %v834
    %v1605 = vunpack.c.l.b16 %v835
    %v1606 = vunpack.c.h.b16 %v835
    %v1607 = vunpack.c.l.b16 %v836
    %v1608 = vunpack.c.h.b16 %v836
    %v1609 = vunpack.c.l.b16 %v837
    %v1610 = vunpack.c.h.b16 %v837
    %v1611 = vunpack.c.l.b16 %v838
    %v1612 = vunpack.c.h.b16 %v838
    %v1613 = vunpack.c.l.b16 %v839
    %v1614 = vunpack.c.h.b16 %v839
    %v1615 = vunpack.c.l.b16 %v840
    %v1616 = vunpack.c.h.b16 %v840
    %v1617 = vunpack.c.l.b16 %v841
    %v1618 = vunpack.c.h.b16 %v841
    %v1619 = vunpack.c.l.b16 %v842
    %v1620 = vunpack.c.h.b16 %v842
    %v1621 = vunpack.c.l.b16 %v843
    %v1622 = vunpack.c.h.b16 %v843
    %v1623 = vunpack.c.l.b16 %v844
    %v1624 = vunpack.c.h.b16 %v844
    %v1625 = vunpack.c.l.b16 %v845
    %v1626 = vunpack.c.h.b16 %v845
    %v1627 = vunpack.c.l.b16 %v846
    %v1628 = vunpack.c.h.b16 %v846
    %v1629 = vunpack.c.l.b16 %v847
    %v1630 = vunpack.c.h.b16 %v847
    %v1631 = vunpack.c.l.b16 %v848
    %v1632 = vunpack.c.h.b16 %v848
    %v1633 = vunpack.c.l.b16 %v849
    %v1634 = vunpack.c.h.b16 %v849
    %v1635 = vunpack.c.l.b16 %v850
    %v1636 = vunpack.c.h.b16 %v850
    %v1637 = vunpack.c.l.b16 %v851
    %v1638 = vunpack.c.h.b16 %v851
    %v1639 = vunpack.c.l.b16 %v852
    %v1640 = vunpack.c.h.b16 %v852
    %v1641 = vunpack.c.l.b16 %v853
    %v1642 = vunpack.c.h.b16 %v853
    %v1643 = vunpack.c.l.b16 %v854
    %v1644 = vunpack.c.h.b16 %v854
    %v1645 = vunpack.c.l.b16 %v855
    %v1646 = vunpack.c.h.b16 %v855
    %v1647 = vunpack.c.l.b16 %v856
    %v1648 = vunpack.c.h.b16 %v856
    %v1649 = vunpack.c.l.b16 %v857
    %v1650 = vunpack.c.h.b16 %v857
    %v1651 = vunpack.c.l.b16 %v858
    %v1652 = vunpack.c.h.b16 %v858
    %v1653 = vunpack.c.l.b16 %v859
    %v1654 = vunpack.c.h.b16 %v859
    %v1655 = vunpack.c.l.b16 %v860
    %v1656 = vunpack.c.h.b16 %v860
    %v1657 = vunpack.c.l.b16 %v861
    %v1658 = vunpack.c.h.b16 %v861
    %v1659 = vunpack.c.l.b16 %v862
    %v1660 = vunpack.c.h.b16 %v862
    %v1661 = vunpack.c.l.b16 %v863
    %v1662 = vunpack.c.h.b16 %v863
    %v1663 = vunpack.c.l.b16 %v864
    %v1664 = vunpack.c.h.b16 %v864
    %v1665 = vunpack.c.l.b16 %v865
    %v1666 = vunpack.c.h.b16 %v865
    %v1667 = vunpack.c.l.b16 %v866
    %v1668 = vunpack.c.h.b16 %v866
    %v1669 = vunpack.c.l.b16 %v867
    %v1670 = vunpack.c.h.b16 %v867
    %v1671 = vunpack.c.l.b16 %v868
    %v1672 = vunpack.c.h.b16 %v868
    %v1673 = vunpack.c.l.b16 %v869
    %v1674 = vunpack.c.h.b16 %v869
    %v1675 = vunpack.c.l.b16 %v870
    %v1676 = vunpack.c.h.b16 %v870
    %v1677 = vunpack.c.l.b16 %v871
    %v1678 = vunpack.c.h.b16 %v871
    %v1679 = vunpack.c.l.b16 %v872
    %v1680 = vunpack.c.h.b16 %v872
    %v1681 = vunpack.c.l.b16 %v873
    %v1682 = vunpack.c.h.b16 %v873
    %v1683 = vunpack.c.l.b16 %v874
    %v1684 = vunpack.c.h.b16 %v874
    %v1685 = vpack.c.b16 %v1181, %v1173
    %v1686 = vpack.c.b16 %v1182, %v1174
    %v1687 = vpack.c.b16 %v1183, %v1175
    %v1688 = vpack.c.b16 %v1184, %v1176
    %v1689 = vpack.c.b16 %v1185, %v1177
    %v1690 = vpack.c.b16 %v1186, %v1178
    %v1691 = vpack.c.b16 %v1187, %v1179
    %v1692 = vpack.c.b16 %v1188, %v1180
    %v1693 = vpack.c.b16 %v1197, %v1189
    %v1694 = vpack.c.b16 %v1198, %v1190
    %v1695 = vpack.c.b16 %v1199, %v1191
    %v1696 = vpack.c.b16 %v1200, %v1192
    %v1697 = vpack.c.b16 %v1201, %v1193
    %v1698 = vpack.c.b16 %v1202, %v1194
    %v1699 = vpack.c.b16 %v1203, %v1195
    %v1700 = vpack.c.b16 %v1204, %v1196
    %v1701 = vpack.c.b16 %v1213, %v1205
    %v1702 = vpack.c.b16 %v1214, %v1206
    %v1703 = vpack.c.b16 %v1215, %v1207
    %v1704 = vpack.c.b16 %v1216, %v1208
    %v1705 = vpack.c.b16 %v1217, %v1209
    %v1706 = vpack.c.b16 %v1218, %v1210
    %v1707 = vpack.c.b16 %v1219, %v1211
    %v1708 = vpack.c.b16 %v1220, %v1212
    %v1709 = vpack.c.b16 %v1229, %v1221
    %v1710 = vpack.c.b16 %v1230, %v1222
    %v1711 = vpack.c.b16 %v1231, %v1223
    %v1712 = vpack.c.b16 %v1232, %v1224
    %v1713 = vpack.c.b16 %v1233, %v1225
    %v1714 = vpack.c.b16 %v1234, %v1226
    %v1715 = vpack.c.b16 %v1235, %v1227
    %v1716 = vpack.c.b16 %v1236, %v1228
    %v1717 = vpack.c.b16 %v1245, %v1237
    %v1718 = vpack.c.b16 %v1246, %v1238
    %v1719 = vpack.c.b16 %v1247, %v1239
    %v1720 = vpack.c.b16 %v1248, %v1240
    %v1721 = vpack.c.b16 %v1249, %v1241
    %v1722 = vpack.c.b16 %v1250, %v1242
    %v1723 = vpack.c.b16 %v1251, %v1243
    %v1724 = vpack.c.b16 %v1252, %v1244
    %v1725 = vpack.c.b16 %v1261, %v1253
    %v1726 = vpack.c.b16 %v1262, %v1254
    %v1727 = vpack.c.b16 %v1263, %v1255
    %v1728 = vpack.c.b16 %v1264, %v1256
    %v1729 = vpack.c.b16 %v1265, %v1257
    %v1730 = vpack.c.b16 %v1266, %v1258
    %v1731 = vpack.c.b16 %v1267, %v1259
    %v1732 = vpack.c.b16 %v1268, %v1260
    %v1733 = vpack.c.b16 %v1277, %v1269
    %v1734 = vpack.c.b16 %v1278, %v1270
    %v1735 = vpack.c.b16 %v1279, %v1271
    %v1736 = vpack.c.b16 %v1280, %v1272
    %v1737 = vpack.c.b16 %v1281, %v1273
    %v1738 = vpack.c.b16 %v1282, %v1274
    %v1739 = vpack.c.b16 %v1283, %v1275
    %v1740 = vpack.c.b16 %v1284, %v1276
    %v1741 = vpack.c.b16 %v1293, %v1285
    %v1742 = vpack.c.b16 %v1294, %v1286
    %v1743 = vpack.c.b16 %v1295, %v1287
    %v1744 = vpack.c.b16 %v1296, %v1288
    %v1745 = vpack.c.b16 %v1297, %v1289
    %v1746 = vpack.c.b16 %v1298, %v1290
    %v1747 = vpack.c.b16 %v1299, %v1291
    %v1748 = vpack.c.b16 %v1300, %v1292
    %v1749 = vpack.c.b16 %v1309, %v1301
    %v1750 = vpack.c.b16 %v1310, %v1302
    %v1751 = vpack.c.b16 %v1311, %v1303
    %v1752 = vpack.c.b16 %v1312, %v1304
    %v1753 = vpack.c.b16 %v1313, %v1305
    %v1754 = vpack.c.b16 %v1314, %v1306
    %v1755 = vpack.c.b16 %v1315, %v1307
    %v1756 = vpack.c.b16 %v1316, %v1308
    %v1757 = vpack.c.b16 %v1325, %v1317
    %v1758 = vpack.c.b16 %v1326, %v1318
    %v1759 = vpack.c.b16 %v1327, %v1319
    %v1760 = vpack.c.b16 %v1328, %v1320
    %v1761 = vpack.c.b16 %v1329, %v1321
    %v1762 = vpack.c.b16 %v1330, %v1322
    %v1763 = vpack.c.b16 %v1331, %v1323
    %v1764 = vpack.c.b16 %v1332, %v1324
    %v1765 = vpack.c.b16 %v1341, %v1333
    %v1766 = vpack.c.b16 %v1342, %v1334
    %v1767 = vpack.c.b16 %v1343, %v1335
    %v1768 = vpack.c.b16 %v1344, %v1336
    %v1769 = vpack.c.b16 %v1345, %v1337
    %v1770 = vpack.c.b16 %v1346, %v1338
    %v1771 = vpack.c.b16 %v1347, %v1339
    %v1772 = vpack.c.b16 %v1348, %v1340
    %v1773 = vpack.c.b16 %v1357, %v1349
    %v1774 = vpack.c.b16 %v1358, %v1350
    %v1775 = vpack.c.b16 %v1359, %v1351
    %v1776 = vpack.c.b16 %v1360, %v1352
    %v1777 = vpack.c.b16 %v1361, %v1353
    %v1778 = vpack.c.b16 %v1362, %v1354
    %v1779 = vpack.c.b16 %v1363, %v1355
    %v1780 = vpack.c.b16 %v1364, %v1356
    %v1781 = vpack.c.b16 %v1373, %v1365
    %v1782 = vpack.c.b16 %v1374, %v1366
    %v1783 = vpack.c.b16 %v1375, %v1367
    %v1784 = vpack.c.b16 %v1376, %v1368
    %v1785 = vpack.c.b16 %v1377, %v1369
    %v1786 = vpack.c.b16 %v1378, %v1370
    %v1787 = vpack.c.b16 %v1379, %v1371
    %v1788 = vpack.c.b16 %v1380, %v1372
    %v1789 = vpack.c.b16 %v1389, %v1381
    %v1790 = vpack.c.b16 %v1390, %v1382
    %v1791 = vpack.c.b16 %v1391, %v1383
    %v1792 = vpack.c.b16 %v1392, %v1384
    %v1793 = vpack.c.b16 %v1393, %v1385
    %v1794 = vpack.c.b16 %v1394, %v1386
    %v1795 = vpack.c.b16 %v1395, %v1387
    %v1796 = vpack.c.b16 %v1396, %v1388
    %v1797 = vpack.c.b16 %v1405, %v1397
    %v1798 = vpack.c.b16 %v1406, %v1398
    %v1799 = vpack.c.b16 %v1407, %v1399
    %v1800 = vpack.c.b16 %v1408, %v1400
    %v1801 = vpack.c.b16 %v1409, %v1401
    %v1802 = vpack.c.b16 %v1410, %v1402
    %v1803 = vpack.c.b16 %v1411, %v1403
    %v1804 = vpack.c.b16 %v1412, %v1404
    %v1805 = vpack.c.b16 %v1421, %v1413
    %v1806 = vpack.c.b16 %v1422, %v1414
    %v1807 = vpack.c.b16 %v1423, %v1415
    %v1808 = vpack.c.b16 %v1424, %v1416
    %v1809 = vpack.c.b16 %v1425, %v1417
    %v1810 = vpack.c.b16 %v1426, %v1418
    %v1811 = vpack.c.b16 %v1427, %v1419
    %v1812 = vpack.c.b16 %v1428, %v1420
    %v1813 = vpack.c.b16 %v1437, %v1429
    %v1814 = vpack.c.b16 %v1438, %v1430
    %v1815 = vpack.c.b16 %v1439, %v1431
    %v1816 = vpack.c.b16 %v1440, %v1432
    %v1817 = vpack.c.b16 %v1441, %v1433
    %v1818 = vpack.c.b16 %v1442, %v1434
    %v1819 = vpack.c.b16 %v1443, %v1435
    %v1820 = vpack.c.b16 %v1444, %v1436
    %v1821 = vpack.c.b16 %v1453, %v1445
    %v1822 = vpack.c.b16 %v1454, %v1446
    %v1823 = vpack.c.b16 %v1455, %v1447
    %v1824 = vpack.c.b16 %v1456, %v1448
    %v1825 = vpack.c.b16 %v1457, %v1449
    %v1826 = vpack.c.b16 %v1458, %v1450
    %v1827 = vpack.c.b16 %v1459, %v1451
    %v1828 = vpack.c.b16 %v1460, %v1452
    %v1829 = vpack.c.b16 %v1469, %v1461
    %v1830 = vpack.c.b16 %v1470, %v1462
    %v1831 = vpack.c.b16 %v1471, %v1463
    %v1832 = vpack.c.b16 %v1472, %v1464
    %v1833 = vpack.c.b16 %v1473, %v1465
    %v1834 = vpack.c.b16 %v1474, %v1466
    %v1835 = vpack.c.b16 %v1475, %v1467
    %v1836 = vpack.c.b16 %v1476, %v1468
    %v1837 = vpack.c.b16 %v1485, %v1477
    %v1838 = vpack.c.b16 %v1486, %v1478
    %v1839 = vpack.c.b16 %v1487, %v1479
    %v1840 = vpack.c.b16 %v1488, %v1480
    %v1841 = vpack.c.b16 %v1489, %v1481
    %v1842 = vpack.c.b16 %v1490, %v1482
    %v1843 = vpack.c.b16 %v1491, %v1483
    %v1844 = vpack.c.b16 %v1492, %v1484
    %v1845 = vpack.c.b16 %v1501, %v1493
    %v1846 = vpack.c.b16 %v1502, %v1494
    %v1847 = vpack.c.b16 %v1503, %v1495
    %v1848 = vpack.c.b16 %v1504, %v1496
    %v1849 = vpack.c.b16 %v1505, %v1497
    %v1850 = vpack.c.b16 %v1506, %v1498
    %v1851 = vpack.c.b16 %v1507, %v1499
    %v1852 = vpack.c.b16 %v1508, %v1500
    %v1853 = vpack.c.b16 %v1517, %v1509
    %v1854 = vpack.c.b16 %v1518, %v1510
    %v1855 = vpack.c.b16 %v1519, %v1511
    %v1856 = vpack.c.b16 %v1520, %v1512
    %v1857 = vpack.c.b16 %v1521, %v1513
    %v1858 = vpack.c.b16 %v1522, %v1514
    %v1859 = vpack.c.b16 %v1523, %v1515
    %v1860 = vpack.c.b16 %v1524, %v1516
    %v1861 = vpack.c.b16 %v1533, %v1525
    %v1862 = vpack.c.b16 %v1534, %v1526
    %v1863 = vpack.c.b16 %v1535, %v1527
    %v1864 = vpack.c.b16 %v1536, %v1528
    %v1865 = vpack.c.b16 %v1537, %v1529
    %v1866 = vpack.c.b16 %v1538, %v1530
    %v1867 = vpack.c.b16 %v1539, %v1531
    %v1868 = vpack.c.b16 %v1540, %v1532
    %v1869 = vpack.c.b16 %v1549, %v1541
    %v1870 = vpack.c.b16 %v1550, %v1542
    %v1871 = vpack.c.b16 %v1551, %v1543
    %v1872 = vpack.c.b16 %v1552, %v1544
    %v1873 = vpack.c.b16 %v1553, %v1545
    %v1874 = vpack.c.b16 %v1554, %v1546
    %v1875 = vpack.c.b16 %v1555, %v1547
    %v1876 = vpack.c.b16 %v1556, %v1548
    %v1877 = vpack.c.b16 %v1565, %v1557
    %v1878 = vpack.c.b16 %v1566, %v1558
    %v1879 = vpack.c.b16 %v1567, %v1559
    %v1880 = vpack.c.b16 %v1568, %v1560
    %v1881 = vpack.c.b16 %v1569, %v1561
    %v1882 = vpack.c.b16 %v1570, %v1562
    %v1883 = vpack.c.b16 %v1571, %v1563
    %v1884 = vpack.c.b16 %v1572, %v1564
    %v1885 = vpack.c.b16 %v1581, %v1573
    %v1886 = vpack.c.b16 %v1582, %v1574
    %v1887 = vpack.c.b16 %v1583, %v1575
    %v1888 = vpack.c.b16 %v1584, %v1576
    %v1889 = vpack.c.b16 %v1585, %v1577
    %v1890 = vpack.c.b16 %v1586, %v1578
    %v1891 = vpack.c.b16 %v1587, %v1579
    %v1892 = vpack.c.b16 %v1588, %v1580
    %v1893 = vpack.c.b16 %v1597, %v1589
    %v1894 = vpack.c.b16 %v1598, %v1590
    %v1895 = vpack.c.b16 %v1599, %v1591
    %v1896 = vpack.c.b16 %v1600, %v1592
    %v1897 = vpack.c.b16 %v1601, %v1593
    %v1898 = vpack.c.b16 %v1602, %v1594
    %v1899 = vpack.c.b16 %v1603, %v1595
    %v1900 = vpack.c.b16 %v1604, %v1596
    %v1901 = vpack.c.b16 %v1613, %v1605
    %v1902 = vpack.c.b16 %v1614, %v1606
    %v1903 = vpack.c.b16 %v1615, %v1607
    %v1904 = vpack.c.b16 %v1616, %v1608
    %v1905 = vpack.c.b16 %v1617, %v1609
    %v1906 = vpack.c.b16 %v1618, %v1610
    %v1907 = vpack.c.b16 %v1619, %v1611
    %v1908 = vpack.c.b16 %v1620, %v1612
    %v1909 = vpack.c.b16 %v1629, %v1621
    %v1910 = vpack.c.b16 %v1630, %v1622
    %v1911 = vpack.c.b16 %v1631, %v1623
    %v1912 = vpack.c.b16 %v1632, %v1624
    %v1913 = vpack.c.b16 %v1633, %v1625
    %v1914 = vpack.c.b16 %v1634, %v1626
    %v1915 = vpack.c.b16 %v1635, %v1627
    %v1916 = vpack.c.b16 %v1636, %v1628
    %v1917 = vpack.c.b16 %v1645, %v1637
    %v1918 = vpack.c.b16 %v1646, %v1638
    %v1919 = vpack.c.b16 %v1647, %v1639
    %v1920 = vpack.c.b16 %v1648, %v1640
    %v1921 = vpack.c.b16 %v1649, %v1641
    %v1922 = vpack.c.b16 %v1650, %v1642
    %v1923 = vpack.c.b16 %v1651, %v1643
    %v1924 = vpack.c.b16 %v1652, %v1644
    %v1925 = vpack.c.b16 %v1661, %v1653
    %v1926 = vpack.c.b16 %v1662, %v1654
    %v1927 = vpack.c.b16 %v1663, %v1655
    %v1928 = vpack.c.b16 %v1664, %v1656
    %v1929 = vpack.c.b16 %v1665, %v1657
    %v1930 = vpack.c.b16 %v1666, %v1658
    %v1931 = vpack.c.b16 %v1667, %v1659
    %v1932 = vpack.c.b16 %v1668, %v1660
    %v1933 = vpack.c.b16 %v1677, %v1669
    %v1934 = vpack.c.b16 %v1678, %v1670
    %v1935 = vpack.c.b16 %v1679, %v1671
    %v1936 = vpack.c.b16 %v1680, %v1672
    %v1937 = vpack.c.b16 %v1681, %v1673
    %v1938 = vpack.c.b16 %v1682, %v1674
    %v1939 = vpack.c.b16 %v1683, %v1675
    %v1940 = vpack.c.b16 %v1684, %v1676
    %2197 = vmatprep.subr.bf16.mxu0 %v1686
    %2198 = vmatpush1.bf16.msra.mxu0 %v1685
    %2199 = vmatprep.subr.bf16.mxu0 %v1694
    %2200 = vmatpush1.bf16.msra.mxu0 %v1693
    %2201 = vmatprep.subr.bf16.mxu0 %v1702
    %2202 = vmatpush1.bf16.msra.mxu0 %v1701
    %2203 = vmatprep.subr.bf16.mxu0 %v1710
    %2204 = vmatpush1.bf16.msra.mxu0 %v1709
    %2205 = vmatprep.subr.bf16.mxu0 %v1718
    %2206 = vmatpush1.bf16.msra.mxu0 %v1717
    %2207 = vmatprep.subr.bf16.mxu0 %v1726
    %2208 = vmatpush1.bf16.msra.mxu0 %v1725
    %2209 = vmatprep.subr.bf16.mxu0 %v1734
    %2210 = vmatpush1.bf16.msra.mxu0 %v1733
    %2211 = vmatprep.subr.bf16.mxu0 %v1742
    %2212 = vmatpush1.bf16.msra.mxu0 %v1741
    %2213 = vmatprep.subr.bf16.mxu0 %v1750
    %2214 = vmatpush1.bf16.msra.mxu0 %v1749
    %2215 = vmatprep.subr.bf16.mxu0 %v1758
    %2216 = vmatpush1.bf16.msra.mxu0 %v1757
    %2217 = vmatprep.subr.bf16.mxu0 %v1766
    %2218 = vmatpush1.bf16.msra.mxu0 %v1765
    %2219 = vmatprep.subr.bf16.mxu0 %v1774
    %2220 = vmatpush1.bf16.msra.mxu0 %v1773
    %2221 = vmatprep.subr.bf16.mxu0 %v1782
    %2222 = vmatpush1.bf16.msra.mxu0 %v1781
    %2223 = vmatprep.subr.bf16.mxu0 %v1790
    %2224 = vmatpush1.bf16.msra.mxu0 %v1789
    %2225 = vmatprep.subr.bf16.mxu0 %v1798
    %2226 = vmatpush1.bf16.msra.mxu0 %v1797
    %2227 = vmatprep.subr.bf16.mxu0 %v1806
    %2228 = vmatpush1.bf16.msra.mxu0 %v1805
    %2229 = vmatprep.mubr.bf16.mxu0 %v616
    %2230 = vmatmul.mubr.bf16.gmra.mrb[0].mxu0 %v615
    %v2231 = vpop.f32.mrb[0].mxu0
    %v2232 = vadd.f32 %v880, %v2231
    %v2233 = vpop.f32.mrb[0].mxu0
    %v2234 = vadd.f32 %v884, %v2233
    %v2235 = vpop.f32.mrb[0].mxu0
    %v2236 = vpop.f32.mrb[0].mxu0
    %2237 = vdwg.mxu0
    %2238 = vmatprep.subr.bf16.mxu0 %v1814
    %2239 = vmatpush1.bf16.msra.mxu0 %v1813
    %2240 = vmatprep.subr.bf16.mxu0 %v1822
    %2241 = vmatpush1.bf16.msra.mxu0 %v1821
    %2242 = vmatprep.subr.bf16.mxu0 %v1830
    %2243 = vmatpush1.bf16.msra.mxu0 %v1829
    %2244 = vmatprep.subr.bf16.mxu0 %v1838
    %2245 = vmatpush1.bf16.msra.mxu0 %v1837
    %2246 = vmatprep.subr.bf16.mxu0 %v1846
    %2247 = vmatpush1.bf16.msra.mxu0 %v1845
    %2248 = vmatprep.subr.bf16.mxu0 %v1854
    %2249 = vmatpush1.bf16.msra.mxu0 %v1853
    %2250 = vmatprep.subr.bf16.mxu0 %v1862
    %2251 = vmatpush1.bf16.msra.mxu0 %v1861
    %2252 = vmatprep.subr.bf16.mxu0 %v1870
    %2253 = vmatpush1.bf16.msra.mxu0 %v1869
    %2254 = vmatprep.subr.bf16.mxu0 %v1878
    %2255 = vmatpush1.bf16.msra.mxu0 %v1877
    %2256 = vmatprep.subr.bf16.mxu0 %v1886
    %2257 = vmatpush1.bf16.msra.mxu0 %v1885
    %2258 = vmatprep.subr.bf16.mxu0 %v1894
    %2259 = vmatpush1.bf16.msra.mxu0 %v1893
    %2260 = vmatprep.subr.bf16.mxu0 %v1902
    %2261 = vmatpush1.bf16.msra.mxu0 %v1901
    %2262 = vmatprep.subr.bf16.mxu0 %v1910
    %2263 = vmatpush1.bf16.msra.mxu0 %v1909
    %2264 = vmatprep.subr.bf16.mxu0 %v1918
    %2265 = vmatpush1.bf16.msra.mxu0 %v1917
    %2266 = vmatprep.subr.bf16.mxu0 %v1926
    %2267 = vmatpush1.bf16.msra.mxu0 %v1925
    %2268 = vmatprep.subr.bf16.mxu0 %v1934
    %2269 = vmatpush1.bf16.msra.mxu0 %v1933
    %2270 = vmatprep.mubr.bf16.mxu0 %v618
    %2271 = vmatmul.mubr.bf16.gmra.mrb[0].mxu0 %v617
    %v2272 = vpop.f32.mrb[0].mxu0
    %v2273 = vadd.f32 %v2232, %v2272
    %v2274 = vpop.f32.mrb[0].mxu0
    %v2275 = vadd.f32 %v2234, %v2274
    %v2276 = vpop.f32.mrb[0].mxu0
    %v2277 = vpop.f32.mrb[0].mxu0
    %2278 = vdwg.mxu0
    %2279 = vmatprep.subr.bf16.mxu0 %v1688
    %2280 = vmatpush1.bf16.msra.mxu0 %v1687
    %2281 = vmatprep.subr.bf16.mxu0 %v1696
    %2282 = vmatpush1.bf16.msra.mxu0 %v1695
    %2283 = vmatprep.subr.bf16.mxu0 %v1704
    %2284 = vmatpush1.bf16.msra.mxu0 %v1703
    %2285 = vmatprep.subr.bf16.mxu0 %v1712
    %2286 = vmatpush1.bf16.msra.mxu0 %v1711
    %2287 = vmatprep.subr.bf16.mxu0 %v1720
    %2288 = vmatpush1.bf16.msra.mxu0 %v1719
    %2289 = vmatprep.subr.bf16.mxu0 %v1728
    %2290 = vmatpush1.bf16.msra.mxu0 %v1727
    %2291 = vmatprep.subr.bf16.mxu0 %v1736
    %2292 = vmatpush1.bf16.msra.mxu0 %v1735
    %2293 = vmatprep.subr.bf16.mxu0 %v1744
    %2294 = vmatpush1.bf16.msra.mxu0 %v1743
    %2295 = vmatprep.subr.bf16.mxu0 %v1752
    %2296 = vmatpush1.bf16.msra.mxu0 %v1751
    %2297 = vmatprep.subr.bf16.mxu0 %v1760
    %2298 = vmatpush1.bf16.msra.mxu0 %v1759
    %2299 = vmatprep.subr.bf16.mxu0 %v1768
    %2300 = vmatpush1.bf16.msra.mxu0 %v1767
    %2301 = vmatprep.subr.bf16.mxu0 %v1776
    %2302 = vmatpush1.bf16.msra.mxu0 %v1775
    %2303 = vmatprep.subr.bf16.mxu0 %v1784
    %2304 = vmatpush1.bf16.msra.mxu0 %v1783
    %2305 = vmatprep.subr.bf16.mxu0 %v1792
    %2306 = vmatpush1.bf16.msra.mxu0 %v1791
    %2307 = vmatprep.subr.bf16.mxu0 %v1800
    %2308 = vmatpush1.bf16.msra.mxu0 %v1799
    %2309 = vmatprep.subr.bf16.mxu0 %v1808
    %2310 = vmatpush1.bf16.msra.mxu0 %v1807
    %2311 = vmatprep.mubr.bf16.mxu0 %v616
    %2312 = vmatmul.mubr.bf16.gmra.mrb[0].mxu0 %v615
    %v2313 = vpop.f32.mrb[0].mxu0
    %v2314 = vadd.f32 %v888, %v2313
    %v2315 = vpop.f32.mrb[0].mxu0
    %v2316 = vadd.f32 %v892, %v2315
    %v2317 = vpop.f32.mrb[0].mxu0
    %v2318 = vpop.f32.mrb[0].mxu0
    %2319 = vdwg.mxu0
    %2320 = vmatprep.subr.bf16.mxu0 %v1816
    %2321 = vmatpush1.bf16.msra.mxu0 %v1815
    %2322 = vmatprep.subr.bf16.mxu0 %v1824
    %2323 = vmatpush1.bf16.msra.mxu0 %v1823
    %2324 = vmatprep.subr.bf16.mxu0 %v1832
    %2325 = vmatpush1.bf16.msra.mxu0 %v1831
    %2326 = vmatprep.subr.bf16.mxu0 %v1840
    %2327 = vmatpush1.bf16.msra.mxu0 %v1839
    %2328 = vmatprep.subr.bf16.mxu0 %v1848
    %2329 = vmatpush1.bf16.msra.mxu0 %v1847
    %2330 = vmatprep.subr.bf16.mxu0 %v1856
    %2331 = vmatpush1.bf16.msra.mxu0 %v1855
    %2332 = vmatprep.subr.bf16.mxu0 %v1864
    %2333 = vmatpush1.bf16.msra.mxu0 %v1863
    %2334 = vmatprep.subr.bf16.mxu0 %v1872
    %2335 = vmatpush1.bf16.msra.mxu0 %v1871
    %2336 = vmatprep.subr.bf16.mxu0 %v1880
    %2337 = vmatpush1.bf16.msra.mxu0 %v1879
    %2338 = vmatprep.subr.bf16.mxu0 %v1888
    %2339 = vmatpush1.bf16.msra.mxu0 %v1887
    %2340 = vmatprep.subr.bf16.mxu0 %v1896
    %2341 = vmatpush1.bf16.msra.mxu0 %v1895
    %2342 = vmatprep.subr.bf16.mxu0 %v1904
    %2343 = vmatpush1.bf16.msra.mxu0 %v1903
    %2344 = vmatprep.subr.bf16.mxu0 %v1912
    %2345 = vmatpush1.bf16.msra.mxu0 %v1911
    %2346 = vmatprep.subr.bf16.mxu0 %v1920
    %2347 = vmatpush1.bf16.msra.mxu0 %v1919
    %2348 = vmatprep.subr.bf16.mxu0 %v1928
    %2349 = vmatpush1.bf16.msra.mxu0 %v1927
    %2350 = vmatprep.subr.bf16.mxu0 %v1936
    %2351 = vmatpush1.bf16.msra.mxu0 %v1935
    %2352 = vmatprep.mubr.bf16.mxu0 %v618
    %2353 = vmatmul.mubr.bf16.gmra.mrb[0].mxu0 %v617
    %v2354 = vpop.f32.mrb[0].mxu0
    %v2355 = vadd.f32 %v2314, %v2354
    %v2356 = vpop.f32.mrb[0].mxu0
    %v2357 = vadd.f32 %v2316, %v2356
    %v2358 = vpop.f32.mrb[0].mxu0
    %v2359 = vpop.f32.mrb[0].mxu0
    %2360 = vdwg.mxu0
    %2361 = vmatprep.subr.bf16.mxu0 %v1690
    %2362 = vmatpush1.bf16.msra.mxu0 %v1689
    %2363 = vmatprep.subr.bf16.mxu0 %v1698
    %2364 = vmatpush1.bf16.msra.mxu0 %v1697
    %2365 = vmatprep.subr.bf16.mxu0 %v1706
    %2366 = vmatpush1.bf16.msra.mxu0 %v1705
    %2367 = vmatprep.subr.bf16.mxu0 %v1714
    %2368 = vmatpush1.bf16.msra.mxu0 %v1713
    %2369 = vmatprep.subr.bf16.mxu0 %v1722
    %2370 = vmatpush1.bf16.msra.mxu0 %v1721
    %2371 = vmatprep.subr.bf16.mxu0 %v1730
    %2372 = vmatpush1.bf16.msra.mxu0 %v1729
    %2373 = vmatprep.subr.bf16.mxu0 %v1738
    %2374 = vmatpush1.bf16.msra.mxu0 %v1737
    %2375 = vmatprep.subr.bf16.mxu0 %v1746
    %2376 = vmatpush1.bf16.msra.mxu0 %v1745
    %2377 = vmatprep.subr.bf16.mxu0 %v1754
    %2378 = vmatpush1.bf16.msra.mxu0 %v1753
    %2379 = vmatprep.subr.bf16.mxu0 %v1762
    %2380 = vmatpush1.bf16.msra.mxu0 %v1761
    %2381 = vmatprep.subr.bf16.mxu0 %v1770
    %2382 = vmatpush1.bf16.msra.mxu0 %v1769
    %2383 = vmatprep.subr.bf16.mxu0 %v1778
    %2384 = vmatpush1.bf16.msra.mxu0 %v1777
    %2385 = vmatprep.subr.bf16.mxu0 %v1786
    %2386 = vmatpush1.bf16.msra.mxu0 %v1785
    %2387 = vmatprep.subr.bf16.mxu0 %v1794
    %2388 = vmatpush1.bf16.msra.mxu0 %v1793
    %2389 = vmatprep.subr.bf16.mxu0 %v1802
    %2390 = vmatpush1.bf16.msra.mxu0 %v1801
    %2391 = vmatprep.subr.bf16.mxu0 %v1810
    %2392 = vmatpush1.bf16.msra.mxu0 %v1809
    %2393 = vmatprep.mubr.bf16.mxu0 %v616
    %2394 = vmatmul.mubr.bf16.gmra.mrb[0].mxu0 %v615
    %v2395 = vpop.f32.mrb[0].mxu0
    %v2396 = vadd.f32 %v896, %v2395
    %v2397 = vpop.f32.mrb[0].mxu0
    %v2398 = vadd.f32 %v900, %v2397
    %v2399 = vpop.f32.mrb[0].mxu0
    %v2400 = vpop.f32.mrb[0].mxu0
    %2401 = vdwg.mxu0
    %2402 = vmatprep.subr.bf16.mxu0 %v1818
    %2403 = vmatpush1.bf16.msra.mxu0 %v1817
    %2404 = vmatprep.subr.bf16.mxu0 %v1826
    %2405 = vmatpush1.bf16.msra.mxu0 %v1825
    %2406 = vmatprep.subr.bf16.mxu0 %v1834
    %2407 = vmatpush1.bf16.msra.mxu0 %v1833
    %2408 = vmatprep.subr.bf16.mxu0 %v1842
    %2409 = vmatpush1.bf16.msra.mxu0 %v1841
    %2410 = vmatprep.subr.bf16.mxu0 %v1850
    %2411 = vmatpush1.bf16.msra.mxu0 %v1849
    %2412 = vmatprep.subr.bf16.mxu0 %v1858
    %2413 = vmatpush1.bf16.msra.mxu0 %v1857
    %2414 = vmatprep.subr.bf16.mxu0 %v1866
    %2415 = vmatpush1.bf16.msra.mxu0 %v1865
    %2416 = vmatprep.subr.bf16.mxu0 %v1874
    %2417 = vmatpush1.bf16.msra.mxu0 %v1873
    %2418 = vmatprep.subr.bf16.mxu0 %v1882
    %2419 = vmatpush1.bf16.msra.mxu0 %v1881
    %2420 = vmatprep.subr.bf16.mxu0 %v1890
    %2421 = vmatpush1.bf16.msra.mxu0 %v1889
    %2422 = vmatprep.subr.bf16.mxu0 %v1898
    %2423 = vmatpush1.bf16.msra.mxu0 %v1897
    %2424 = vmatprep.subr.bf16.mxu0 %v1906
    %2425 = vmatpush1.bf16.msra.mxu0 %v1905
    %2426 = vmatprep.subr.bf16.mxu0 %v1914
    %2427 = vmatpush1.bf16.msra.mxu0 %v1913
    %2428 = vmatprep.subr.bf16.mxu0 %v1922
    %2429 = vmatpush1.bf16.msra.mxu0 %v1921
    %2430 = vmatprep.subr.bf16.mxu0 %v1930
    %2431 = vmatpush1.bf16.msra.mxu0 %v1929
    %2432 = vmatprep.subr.bf16.mxu0 %v1938
    %2433 = vmatpush1.bf16.msra.mxu0 %v1937
    %2434 = vmatprep.mubr.bf16.mxu0 %v618
    %2435 = vmatmul.mubr.bf16.gmra.mrb[0].mxu0 %v617
    %v2436 = vpop.f32.mrb[0].mxu0
    %v2437 = vadd.f32 %v2396, %v2436
    %v2438 = vpop.f32.mrb[0].mxu0
    %v2439 = vadd.f32 %v2398, %v2438
    %v2440 = vpop.f32.mrb[0].mxu0
    %v2441 = vpop.f32.mrb[0].mxu0
    %2442 = vdwg.mxu0
    %2443 = vmatprep.subr.bf16.mxu0 %v1692
    %2444 = vmatpush1.bf16.msra.mxu0 %v1691
    %2445 = vmatprep.subr.bf16.mxu0 %v1700
    %2446 = vmatpush1.bf16.msra.mxu0 %v1699
    %2447 = vmatprep.subr.bf16.mxu0 %v1708
    %2448 = vmatpush1.bf16.msra.mxu0 %v1707
    %2449 = vmatprep.subr.bf16.mxu0 %v1716
    %2450 = vmatpush1.bf16.msra.mxu0 %v1715
    %2451 = vmatprep.subr.bf16.mxu0 %v1724
    %2452 = vmatpush1.bf16.msra.mxu0 %v1723
    %2453 = vmatprep.subr.bf16.mxu0 %v1732
    %2454 = vmatpush1.bf16.msra.mxu0 %v1731
    %2455 = vmatprep.subr.bf16.mxu0 %v1740
    %2456 = vmatpush1.bf16.msra.mxu0 %v1739
    %2457 = vmatprep.subr.bf16.mxu0 %v1748
    %2458 = vmatpush1.bf16.msra.mxu0 %v1747
    %2459 = vmatprep.subr.bf16.mxu0 %v1756
    %2460 = vmatpush1.bf16.msra.mxu0 %v1755
    %2461 = vmatprep.subr.bf16.mxu0 %v1764
    %2462 = vmatpush1.bf16.msra.mxu0 %v1763
    %2463 = vmatprep.subr.bf16.mxu0 %v1772
    %2464 = vmatpush1.bf16.msra.mxu0 %v1771
    %2465 = vmatprep.subr.bf16.mxu0 %v1780
    %2466 = vmatpush1.bf16.msra.mxu0 %v1779
    %2467 = vmatprep.subr.bf16.mxu0 %v1788
    %2468 = vmatpush1.bf16.msra.mxu0 %v1787
    %2469 = vmatprep.subr.bf16.mxu0 %v1796
    %2470 = vmatpush1.bf16.msra.mxu0 %v1795
    %2471 = vmatprep.subr.bf16.mxu0 %v1804
    %2472 = vmatpush1.bf16.msra.mxu0 %v1803
    %2473 = vmatprep.subr.bf16.mxu0 %v1812
    %2474 = vmatpush1.bf16.msra.mxu0 %v1811
    %2475 = vmatprep.mubr.bf16.mxu0 %v616
    %2476 = vmatmul.mubr.bf16.gmra.mrb[0].mxu0 %v615
    %v2477 = vpop.f32.mrb[0].mxu0
    %v2478 = vadd.f32 %v904, %v2477
    %v2479 = vpop.f32.mrb[0].mxu0
    %v2480 = vadd.f32 %v908, %v2479
    %v2481 = vpop.f32.mrb[0].mxu0
    %v2482 = vpop.f32.mrb[0].mxu0
    %2483 = vdwg.mxu0
    %2484 = vmatprep.subr.bf16.mxu0 %v1820
    %2485 = vmatpush1.bf16.msra.mxu0 %v1819
    %2486 = vmatprep.subr.bf16.mxu0 %v1828
    %2487 = vmatpush1.bf16.msra.mxu0 %v1827
    %2488 = vmatprep.subr.bf16.mxu0 %v1836
    %2489 = vmatpush1.bf16.msra.mxu0 %v1835
    %2490 = vmatprep.subr.bf16.mxu0 %v1844
    %2491 = vmatpush1.bf16.msra.mxu0 %v1843
    %2492 = vmatprep.subr.bf16.mxu0 %v1852
    %2493 = vmatpush1.bf16.msra.mxu0 %v1851
    %2494 = vmatprep.subr.bf16.mxu0 %v1860
    %2495 = vmatpush1.bf16.msra.mxu0 %v1859
    %2496 = vmatprep.subr.bf16.mxu0 %v1868
    %2497 = vmatpush1.bf16.msra.mxu0 %v1867
    %2498 = vmatprep.subr.bf16.mxu0 %v1876
    %2499 = vmatpush1.bf16.msra.mxu0 %v1875
    %2500 = vmatprep.subr.bf16.mxu0 %v1884
    %2501 = vmatpush1.bf16.msra.mxu0 %v1883
    %2502 = vmatprep.subr.bf16.mxu0 %v1892
    %2503 = vmatpush1.bf16.msra.mxu0 %v1891
    %2504 = vmatprep.subr.bf16.mxu0 %v1900
    %2505 = vmatpush1.bf16.msra.mxu0 %v1899
    %2506 = vmatprep.subr.bf16.mxu0 %v1908
    %2507 = vmatpush1.bf16.msra.mxu0 %v1907
    %2508 = vmatprep.subr.bf16.mxu0 %v1916
    %2509 = vmatpush1.bf16.msra.mxu0 %v1915
    %2510 = vmatprep.subr.bf16.mxu0 %v1924
    %2511 = vmatpush1.bf16.msra.mxu0 %v1923
    %2512 = vmatprep.subr.bf16.mxu0 %v1932
    %2513 = vmatpush1.bf16.msra.mxu0 %v1931
    %2514 = vmatprep.subr.bf16.mxu0 %v1940
    %2515 = vmatpush1.bf16.msra.mxu0 %v1939
    %2516 = vmatprep.mubr.bf16.mxu0 %v618
    %2517 = vmatmul.mubr.bf16.gmra.mrb[0].mxu0 %v617
    %v2518 = vpop.f32.mrb[0].mxu0
    %v2519 = vadd.f32 %v2478, %v2518
    %v2520 = vpop.f32.mrb[0].mxu0
    %v2521 = vadd.f32 %v2480, %v2520
    %v2522 = vpop.f32.mrb[0].mxu0
    %v2523 = vpop.f32.mrb[0].mxu0
    %2524 = vdwg.mxu0
    %v2525 = vmax.f32 %v2273, 0.0
    %v2526 = vmax.f32 %v2275, 0.0
    %v2527 = vmax.f32 %v2355, 0.0
    %v2528 = vmax.f32 %v2357, 0.0
    %v2529 = vmax.f32 %v2437, 0.0
    %v2530 = vmax.f32 %v2439, 0.0
    %v2531 = vmax.f32 %v2519, 0.0
    %v2532 = vmax.f32 %v2521, 0.0
    %v2533 = vpack.c.bf16 %v2525, %v2525
    %v2534 = vpack.c.bf16 %v2526, %v2526
    %v2535 = vpack.c.bf16 %v2527, %v2527
    %v2536 = vpack.c.bf16 %v2528, %v2528
    %v2537 = vpack.c.bf16 %v2529, %v2529
    %v2538 = vpack.c.bf16 %v2530, %v2530
    %v2539 = vpack.c.bf16 %v2531, %v2531
    %v2540 = vpack.c.bf16 %v2532, %v2532
    %v2541 = vld [vmem:[#allocation11] sm:$0xff]
    %v2542 = vld [vmem:[#allocation11 + $0x8] sm:$0xff]
    %v2543 = vld [vmem:[#allocation11 + $0x10] sm:$0xff]
    %v2544 = vld [vmem:[#allocation11 + $0x18] sm:$0xff]
    %v2545 = vld [vmem:[#allocation11 + $0x20] sm:$0xff]
    %v2546 = vld [vmem:[#allocation11 + $0x28] sm:$0xf]
    %v2547 = vld [vmem:[#allocation11 + $0x2c] sm:$0xff]
    %v2548 = vld [vmem:[#allocation11 + $0x34] sm:$0xff]
    %v2549 = vld [vmem:[#allocation11 + $0x3c] sm:$0xff]
    %v2550 = vld [vmem:[#allocation11 + $0x44] sm:$0xff]
    %v2551 = vld [vmem:[#allocation11 + $0x4c] sm:$0xff]
    %v2552 = vld [vmem:[#allocation11 + $0x54] sm:$0xf]
    %v2553 = vld [vmem:[#allocation11 + $0x58] sm:$0xff]
    %v2554 = vld [vmem:[#allocation11 + $0x60] sm:$0xff]
    %v2555 = vld [vmem:[#allocation11 + $0x68] sm:$0xff]
    %v2556 = vld [vmem:[#allocation11 + $0x70] sm:$0xff]
    %v2557 = vld [vmem:[#allocation11 + $0x78] sm:$0xff]
    %v2558 = vld [vmem:[#allocation11 + $0x80] sm:$0xf]
    %v2559 = vld [vmem:[#allocation11 + $0x84] sm:$0xff]
    %v2560 = vld [vmem:[#allocation11 + $0x8c] sm:$0xff]
    %v2561 = vld [vmem:[#allocation11 + $0x94] sm:$0xff]
    %v2562 = vld [vmem:[#allocation11 + $0x9c] sm:$0xff]
    %v2563 = vld [vmem:[#allocation11 + $0xa4] sm:$0xff]
    %v2564 = vld [vmem:[#allocation11 + $0xac] sm:$0xf]
    %v2565 = vld [vmem:[#allocation11 + $0xb0] sm:$0xff]
    %v2566 = vld [vmem:[#allocation11 + $0xb8] sm:$0xff]
    %v2567 = vld [vmem:[#allocation11 + $0xc0] sm:$0xff]
    %v2568 = vld [vmem:[#allocation11 + $0xc8] sm:$0xff]
    %v2569 = vld [vmem:[#allocation11 + $0xd0] sm:$0xff]
    %v2570 = vld [vmem:[#allocation11 + $0xd8] sm:$0xf]
    %v2571 = vld [vmem:[#allocation11 + $0xdc] sm:$0xff]
    %v2572 = vld [vmem:[#allocation11 + $0xe4] sm:$0xff]
    %v2573 = vld [vmem:[#allocation11 + $0xec] sm:$0xff]
    %v2574 = vld [vmem:[#allocation11 + $0xf4] sm:$0xff]
    %v2575 = vld [vmem:[#allocation11 + $0xfc] sm:$0xff]
    %v2576 = vld [vmem:[#allocation11 + $0x104] sm:$0xf]
    %v2577 = vld [vmem:[#allocation11 + $0x108] sm:$0xff]
    %v2578 = vld [vmem:[#allocation11 + $0x110] sm:$0xff]
    %v2579 = vld [vmem:[#allocation11 + $0x118] sm:$0xff]
    %v2580 = vld [vmem:[#allocation11 + $0x120] sm:$0xff]
    %v2581 = vld [vmem:[#allocation11 + $0x128] sm:$0xff]
    %v2582 = vld [vmem:[#allocation11 + $0x130] sm:$0xf]
    %v2583 = vld [vmem:[#allocation11 + $0x134] sm:$0xff]
    %v2584 = vld [vmem:[#allocation11 + $0x13c] sm:$0xff]
    %v2585 = vld [vmem:[#allocation11 + $0x144] sm:$0xff]
    %v2586 = vld [vmem:[#allocation11 + $0x14c] sm:$0xff]
    %v2587 = vld [vmem:[#allocation11 + $0x154] sm:$0xff]
    %v2588 = vld [vmem:[#allocation11 + $0x15c] sm:$0xf]
    %v2589 = vld [vmem:[#allocation11 + $0x160] sm:$0xff]
    %v2590 = vld [vmem:[#allocation11 + $0x168] sm:$0xff]
    %v2591 = vld [vmem:[#allocation11 + $0x170] sm:$0xff]
    %v2592 = vld [vmem:[#allocation11 + $0x178] sm:$0xff]
    %v2593 = vld [vmem:[#allocation11 + $0x180] sm:$0xff]
    %v2594 = vld [vmem:[#allocation11 + $0x188] sm:$0xf]
    %v2595 = vld [vmem:[#allocation11 + $0x18c] sm:$0xff]
    %v2596 = vld [vmem:[#allocation11 + $0x194] sm:$0xff]
    %v2597 = vld [vmem:[#allocation11 + $0x19c] sm:$0xff]
    %v2598 = vld [vmem:[#allocation11 + $0x1a4] sm:$0xff]
    %v2599 = vld [vmem:[#allocation11 + $0x1ac] sm:$0xff]
    %v2600 = vld [vmem:[#allocation11 + $0x1b4] sm:$0xf]
    %v2601 = vld [vmem:[#allocation11 + $0x1b8] sm:$0xff]
    %v2602 = vld [vmem:[#allocation11 + $0x1c0] sm:$0xff]
    %v2603 = vld [vmem:[#allocation11 + $0x1c8] sm:$0xff]
    %v2604 = vld [vmem:[#allocation11 + $0x1d0] sm:$0xff]
    %v2605 = vld [vmem:[#allocation11 + $0x1d8] sm:$0xff]
    %v2606 = vld [vmem:[#allocation11 + $0x1e0] sm:$0xf]
    %v2607 = vld [vmem:[#allocation11 + $0x1e4] sm:$0xff]
    %v2608 = vld [vmem:[#allocation11 + $0x1ec] sm:$0xff]
    %v2609 = vld [vmem:[#allocation11 + $0x1f4] sm:$0xff]
    %v2610 = vld [vmem:[#allocation11 + $0x1fc] sm:$0xff]
    %v2611 = vld [vmem:[#allocation11 + $0x204] sm:$0xff]
    %v2612 = vld [vmem:[#allocation11 + $0x20c] sm:$0xf]
    %v2613 = vld [vmem:[#allocation11 + $0x210] sm:$0xff]
    %v2614 = vld [vmem:[#allocation11 + $0x218] sm:$0xff]
    %v2615 = vld [vmem:[#allocation11 + $0x220] sm:$0xff]
    %v2616 = vld [vmem:[#allocation11 + $0x228] sm:$0xff]
    %v2617 = vld [vmem:[#allocation11 + $0x230] sm:$0xff]
    %v2618 = vld [vmem:[#allocation11 + $0x238] sm:$0xf]
    %v2619 = vld [vmem:[#allocation11 + $0x23c] sm:$0xff]
    %v2620 = vld [vmem:[#allocation11 + $0x244] sm:$0xff]
    %v2621 = vld [vmem:[#allocation11 + $0x24c] sm:$0xff]
    %v2622 = vld [vmem:[#allocation11 + $0x254] sm:$0xff]
    %v2623 = vld [vmem:[#allocation11 + $0x25c] sm:$0xff]
    %v2624 = vld [vmem:[#allocation11 + $0x264] sm:$0xf]
    %v2625 = vld [vmem:[#allocation11 + $0x268] sm:$0xff]
    %v2626 = vld [vmem:[#allocation11 + $0x270] sm:$0xff]
    %v2627 = vld [vmem:[#allocation11 + $0x278] sm:$0xff]
    %v2628 = vld [vmem:[#allocation11 + $0x280] sm:$0xff]
    %v2629 = vld [vmem:[#allocation11 + $0x288] sm:$0xff]
    %v2630 = vld [vmem:[#allocation11 + $0x290] sm:$0xf]
    %v2631 = vld [vmem:[#allocation11 + $0x294] sm:$0xff]
    %v2632 = vld [vmem:[#allocation11 + $0x29c] sm:$0xff]
    %v2633 = vld [vmem:[#allocation11 + $0x2a4] sm:$0xff]
    %v2634 = vld [vmem:[#allocation11 + $0x2ac] sm:$0xff]
    %v2635 = vld [vmem:[#allocation11 + $0x2b4] sm:$0xff]
    %v2636 = vld [vmem:[#allocation11 + $0x2bc] sm:$0xf]
    %v2637 = vld [vmem:[#allocation11 + $0x2c0] sm:$0xff]
    %v2638 = vld [vmem:[#allocation11 + $0x2c8] sm:$0xff]
    %v2639 = vld [vmem:[#allocation11 + $0x2d0] sm:$0xff]
    %v2640 = vld [vmem:[#allocation11 + $0x2d8] sm:$0xff]
    %v2641 = vld [vmem:[#allocation11 + $0x2e0] sm:$0xff]
    %v2642 = vld [vmem:[#allocation11 + $0x2e8] sm:$0xf]
    %v2643 = vld [vmem:[#allocation11 + $0x2ec] sm:$0xff]
    %v2644 = vld [vmem:[#allocation11 + $0x2f4] sm:$0xff]
    %v2645 = vld [vmem:[#allocation11 + $0x2fc] sm:$0xff]
    %v2646 = vld [vmem:[#allocation11 + $0x304] sm:$0xff]
    %v2647 = vld [vmem:[#allocation11 + $0x30c] sm:$0xff]
    %v2648 = vld [vmem:[#allocation11 + $0x314] sm:$0xf]
    %v2649 = vld [vmem:[#allocation11 + $0x318] sm:$0xff]
    %v2650 = vld [vmem:[#allocation11 + $0x320] sm:$0xff]
    %v2651 = vld [vmem:[#allocation11 + $0x328] sm:$0xff]
    %v2652 = vld [vmem:[#allocation11 + $0x330] sm:$0xff]
    %v2653 = vld [vmem:[#allocation11 + $0x338] sm:$0xff]
    %v2654 = vld [vmem:[#allocation11 + $0x340] sm:$0xf]
    %v2655 = vld [vmem:[#allocation11 + $0x344] sm:$0xff]
    %v2656 = vld [vmem:[#allocation11 + $0x34c] sm:$0xff]
    %v2657 = vld [vmem:[#allocation11 + $0x354] sm:$0xff]
    %v2658 = vld [vmem:[#allocation11 + $0x35c] sm:$0xff]
    %v2659 = vld [vmem:[#allocation11 + $0x364] sm:$0xff]
    %v2660 = vld [vmem:[#allocation11 + $0x36c] sm:$0xf]
    %v2661 = vld [vmem:[#allocation11 + $0x370] sm:$0xff]
    %v2662 = vld [vmem:[#allocation11 + $0x378] sm:$0xff]
    %v2663 = vld [vmem:[#allocation11 + $0x380] sm:$0xff]
    %v2664 = vld [vmem:[#allocation11 + $0x388] sm:$0xff]
    %v2665 = vld [vmem:[#allocation11 + $0x390] sm:$0xff]
    %v2666 = vld [vmem:[#allocation11 + $0x398] sm:$0xf]
    %v2667 = vld [vmem:[#allocation11 + $0x39c] sm:$0xff]
    %v2668 = vld [vmem:[#allocation11 + $0x3a4] sm:$0xff]
    %v2669 = vld [vmem:[#allocation11 + $0x3ac] sm:$0xff]
    %v2670 = vld [vmem:[#allocation11 + $0x3b4] sm:$0xff]
    %v2671 = vld [vmem:[#allocation11 + $0x3bc] sm:$0xff]
    %v2672 = vld [vmem:[#allocation11 + $0x3c4] sm:$0xf]
    %v2673 = vld [vmem:[#allocation11 + $0x3c8] sm:$0xff]
    %v2674 = vld [vmem:[#allocation11 + $0x3d0] sm:$0xff]
    %v2675 = vld [vmem:[#allocation11 + $0x3d8] sm:$0xff]
    %v2676 = vld [vmem:[#allocation11 + $0x3e0] sm:$0xff]
    %v2677 = vld [vmem:[#allocation11 + $0x3e8] sm:$0xff]
    %v2678 = vld [vmem:[#allocation11 + $0x3f0] sm:$0xf]
    %v2679 = vld [vmem:[#allocation11 + $0x3f4] sm:$0xff]
    %v2680 = vld [vmem:[#allocation11 + $0x3fc] sm:$0xff]
    %v2681 = vld [vmem:[#allocation11 + $0x404] sm:$0xff]
    %v2682 = vld [vmem:[#allocation11 + $0x40c] sm:$0xff]
    %v2683 = vld [vmem:[#allocation11 + $0x414] sm:$0xff]
    %v2684 = vld [vmem:[#allocation11 + $0x41c] sm:$0xf]
    %v2685 = vld [vmem:[#allocation11 + $0x420] sm:$0xff]
    %v2686 = vld [vmem:[#allocation11 + $0x428] sm:$0xff]
    %v2687 = vld [vmem:[#allocation11 + $0x430] sm:$0xff]
    %v2688 = vld [vmem:[#allocation11 + $0x438] sm:$0xff]
    %v2689 = vld [vmem:[#allocation11 + $0x440] sm:$0xff]
    %v2690 = vld [vmem:[#allocation11 + $0x448] sm:$0xf]
    %v2691 = vld [vmem:[#allocation11 + $0x44c] sm:$0xff]
    %v2692 = vld [vmem:[#allocation11 + $0x454] sm:$0xff]
    %v2693 = vld [vmem:[#allocation11 + $0x45c] sm:$0xff]
    %v2694 = vld [vmem:[#allocation11 + $0x464] sm:$0xff]
    %v2695 = vld [vmem:[#allocation11 + $0x46c] sm:$0xff]
    %v2696 = vld [vmem:[#allocation11 + $0x474] sm:$0xf]
    %v2697 = vld [vmem:[#allocation11 + $0x478] sm:$0xff]
    %v2698 = vld [vmem:[#allocation11 + $0x480] sm:$0xff]
    %v2699 = vld [vmem:[#allocation11 + $0x488] sm:$0xff]
    %v2700 = vld [vmem:[#allocation11 + $0x490] sm:$0xff]
    %v2701 = vld [vmem:[#allocation11 + $0x498] sm:$0xff]
    %v2702 = vld [vmem:[#allocation11 + $0x4a0] sm:$0xf]
    %v2703 = vld [vmem:[#allocation11 + $0x4a4] sm:$0xff]
    %v2704 = vld [vmem:[#allocation11 + $0x4ac] sm:$0xff]
    %v2705 = vld [vmem:[#allocation11 + $0x4b4] sm:$0xff]
    %v2706 = vld [vmem:[#allocation11 + $0x4bc] sm:$0xff]
    %v2707 = vld [vmem:[#allocation11 + $0x4c4] sm:$0xff]
    %v2708 = vld [vmem:[#allocation11 + $0x4cc] sm:$0xf]
    %v2709 = vld [vmem:[#allocation11 + $0x4d0] sm:$0xff]
    %v2710 = vld [vmem:[#allocation11 + $0x4d8] sm:$0xff]
    %v2711 = vld [vmem:[#allocation11 + $0x4e0] sm:$0xff]
    %v2712 = vld [vmem:[#allocation11 + $0x4e8] sm:$0xff]
    %v2713 = vld [vmem:[#allocation11 + $0x4f0] sm:$0xff]
    %v2714 = vld [vmem:[#allocation11 + $0x4f8] sm:$0xf]
    %v2715 = vld [vmem:[#allocation11 + $0x4fc] sm:$0xff]
    %v2716 = vld [vmem:[#allocation11 + $0x504] sm:$0xff]
    %v2717 = vld [vmem:[#allocation11 + $0x50c] sm:$0xff]
    %v2718 = vld [vmem:[#allocation11 + $0x514] sm:$0xff]
    %v2719 = vld [vmem:[#allocation11 + $0x51c] sm:$0xff]
    %v2720 = vld [vmem:[#allocation11 + $0x524] sm:$0xf]
    %v2721 = vld [vmem:[#allocation11 + $0x528] sm:$0xff]
    %v2722 = vld [vmem:[#allocation11 + $0x530] sm:$0xff]
    %v2723 = vld [vmem:[#allocation11 + $0x538] sm:$0xff]
    %v2724 = vld [vmem:[#allocation11 + $0x540] sm:$0xff]
    %v2725 = vld [vmem:[#allocation11 + $0x548] sm:$0xff]
    %v2726 = vld [vmem:[#allocation11 + $0x550] sm:$0xf]
    %v2727 = vld [vmem:[#allocation11 + $0x554] sm:$0xff]
    %v2728 = vld [vmem:[#allocation11 + $0x55c] sm:$0xff]
    %v2729 = vld [vmem:[#allocation11 + $0x564] sm:$0xff]
    %v2730 = vld [vmem:[#allocation11 + $0x56c] sm:$0xff]
    %v2731 = vld [vmem:[#allocation11 + $0x574] sm:$0xff]
    %v2732 = vld [vmem:[#allocation11 + $0x57c] sm:$0xf]
    %v2733 = vld [vmem:[#allocation11 + $0x580] sm:$0xff]
    %v2734 = vld [vmem:[#allocation11 + $0x588] sm:$0xff]
    %v2735 = vld [vmem:[#allocation11 + $0x590] sm:$0xff]
    %v2736 = vld [vmem:[#allocation11 + $0x598] sm:$0xff]
    %v2737 = vld [vmem:[#allocation11 + $0x5a0] sm:$0xff]
    %v2738 = vld [vmem:[#allocation11 + $0x5a8] sm:$0xf]
    %v2739 = vld [vmem:[#allocation11 + $0x5ac] sm:$0xff]
    %v2740 = vld [vmem:[#allocation11 + $0x5b4] sm:$0xff]
    %v2741 = vld [vmem:[#allocation11 + $0x5bc] sm:$0xff]
    %v2742 = vld [vmem:[#allocation11 + $0x5c4] sm:$0xff]
    %v2743 = vld [vmem:[#allocation11 + $0x5cc] sm:$0xff]
    %v2744 = vld [vmem:[#allocation11 + $0x5d4] sm:$0xf]
    %v2745 = vld [vmem:[#allocation11 + $0x5d8] sm:$0xff]
    %v2746 = vld [vmem:[#allocation11 + $0x5e0] sm:$0xff]
    %v2747 = vld [vmem:[#allocation11 + $0x5e8] sm:$0xff]
    %v2748 = vld [vmem:[#allocation11 + $0x5f0] sm:$0xff]
    %v2749 = vld [vmem:[#allocation11 + $0x5f8] sm:$0xff]
    %v2750 = vld [vmem:[#allocation11 + $0x600] sm:$0xf]
    %v2751 = vld [vmem:[#allocation11 + $0x604] sm:$0xff]
    %v2752 = vld [vmem:[#allocation11 + $0x60c] sm:$0xff]
    %v2753 = vld [vmem:[#allocation11 + $0x614] sm:$0xff]
    %v2754 = vld [vmem:[#allocation11 + $0x61c] sm:$0xff]
    %v2755 = vld [vmem:[#allocation11 + $0x624] sm:$0xff]
    %v2756 = vld [vmem:[#allocation11 + $0x62c] sm:$0xf]
    %v2757 = vld [vmem:[#allocation11 + $0x630] sm:$0xff]
    %v2758 = vld [vmem:[#allocation11 + $0x638] sm:$0xff]
    %v2759 = vld [vmem:[#allocation11 + $0x640] sm:$0xff]
    %v2760 = vld [vmem:[#allocation11 + $0x648] sm:$0xff]
    %v2761 = vld [vmem:[#allocation11 + $0x650] sm:$0xff]
    %v2762 = vld [vmem:[#allocation11 + $0x658] sm:$0xf]
    %v2763 = vld [vmem:[#allocation11 + $0x65c] sm:$0xff]
    %v2764 = vld [vmem:[#allocation11 + $0x664] sm:$0xff]
    %v2765 = vld [vmem:[#allocation11 + $0x66c] sm:$0xff]
    %v2766 = vld [vmem:[#allocation11 + $0x674] sm:$0xff]
    %v2767 = vld [vmem:[#allocation11 + $0x67c] sm:$0xff]
    %v2768 = vld [vmem:[#allocation11 + $0x684] sm:$0xf]
    %v2769 = vld [vmem:[#allocation11 + $0x688] sm:$0xff]
    %v2770 = vld [vmem:[#allocation11 + $0x690] sm:$0xff]
    %v2771 = vld [vmem:[#allocation11 + $0x698] sm:$0xff]
    %v2772 = vld [vmem:[#allocation11 + $0x6a0] sm:$0xff]
    %v2773 = vld [vmem:[#allocation11 + $0x6a8] sm:$0xff]
    %v2774 = vld [vmem:[#allocation11 + $0x6b0] sm:$0xf]
    %v2775 = vld [vmem:[#allocation11 + $0x6b4] sm:$0xff]
    %v2776 = vld [vmem:[#allocation11 + $0x6bc] sm:$0xff]
    %v2777 = vld [vmem:[#allocation11 + $0x6c4] sm:$0xff]
    %v2778 = vld [vmem:[#allocation11 + $0x6cc] sm:$0xff]
    %v2779 = vld [vmem:[#allocation11 + $0x6d4] sm:$0xff]
    %v2780 = vld [vmem:[#allocation11 + $0x6dc] sm:$0xf]
    %v2781 = vld [vmem:[#allocation11 + $0x6e0] sm:$0xff]
    %v2782 = vld [vmem:[#allocation11 + $0x6e8] sm:$0xff]
    %v2783 = vld [vmem:[#allocation11 + $0x6f0] sm:$0xff]
    %v2784 = vld [vmem:[#allocation11 + $0x6f8] sm:$0xff]
    %v2785 = vld [vmem:[#allocation11 + $0x700] sm:$0xff]
    %v2786 = vld [vmem:[#allocation11 + $0x708] sm:$0xf]
    %v2787 = vld [vmem:[#allocation11 + $0x70c] sm:$0xff]
    %v2788 = vld [vmem:[#allocation11 + $0x714] sm:$0xff]
    %v2789 = vld [vmem:[#allocation11 + $0x71c] sm:$0xff]
    %v2790 = vld [vmem:[#allocation11 + $0x724] sm:$0xff]
    %v2791 = vld [vmem:[#allocation11 + $0x72c] sm:$0xff]
    %v2792 = vld [vmem:[#allocation11 + $0x734] sm:$0xf]
    %v2793 = vld [vmem:[#allocation11 + $0x738] sm:$0xff]
    %v2794 = vld [vmem:[#allocation11 + $0x740] sm:$0xff]
    %v2795 = vld [vmem:[#allocation11 + $0x748] sm:$0xff]
    %v2796 = vld [vmem:[#allocation11 + $0x750] sm:$0xff]
    %v2797 = vld [vmem:[#allocation11 + $0x758] sm:$0xff]
    %v2798 = vld [vmem:[#allocation11 + $0x760] sm:$0xf]
    %v2799 = vld [vmem:[#allocation11 + $0x764] sm:$0xff]
    %v2800 = vld [vmem:[#allocation11 + $0x76c] sm:$0xff]
    %v2801 = vld [vmem:[#allocation11 + $0x774] sm:$0xff]
    %v2802 = vld [vmem:[#allocation11 + $0x77c] sm:$0xff]
    %v2803 = vld [vmem:[#allocation11 + $0x784] sm:$0xff]
    %v2804 = vld [vmem:[#allocation11 + $0x78c] sm:$0xf]
    %v2805 = vld [vmem:[#allocation11 + $0x790] sm:$0xff]
    %v2806 = vld [vmem:[#allocation11 + $0x798] sm:$0xff]
    %v2807 = vld [vmem:[#allocation11 + $0x7a0] sm:$0xff]
    %v2808 = vld [vmem:[#allocation11 + $0x7a8] sm:$0xff]
    %v2809 = vld [vmem:[#allocation11 + $0x7b0] sm:$0xff]
    %v2810 = vld [vmem:[#allocation11 + $0x7b8] sm:$0xf]
    %v2811 = vld [vmem:[#allocation11 + $0x7bc] sm:$0xff]
    %v2812 = vld [vmem:[#allocation11 + $0x7c4] sm:$0xff]
    %v2813 = vld [vmem:[#allocation11 + $0x7cc] sm:$0xff]
    %v2814 = vld [vmem:[#allocation11 + $0x7d4] sm:$0xff]
    %v2815 = vld [vmem:[#allocation11 + $0x7dc] sm:$0xff]
    %v2816 = vld [vmem:[#allocation11 + $0x7e4] sm:$0xf]
    %v2817 = vld [vmem:[#allocation11 + $0x7e8] sm:$0xff]
    %v2818 = vld [vmem:[#allocation11 + $0x7f0] sm:$0xff]
    %v2819 = vld [vmem:[#allocation11 + $0x7f8] sm:$0xff]
    %v2820 = vld [vmem:[#allocation11 + $0x800] sm:$0xff]
    %v2821 = vld [vmem:[#allocation11 + $0x808] sm:$0xff]
    %v2822 = vld [vmem:[#allocation11 + $0x810] sm:$0xf]
    %v2823 = vld [vmem:[#allocation11 + $0x814] sm:$0xff]
    %v2824 = vld [vmem:[#allocation11 + $0x81c] sm:$0xff]
    %v2825 = vld [vmem:[#allocation11 + $0x824] sm:$0xff]
    %v2826 = vld [vmem:[#allocation11 + $0x82c] sm:$0xff]
    %v2827 = vld [vmem:[#allocation11 + $0x834] sm:$0xff]
    %v2828 = vld [vmem:[#allocation11 + $0x83c] sm:$0xf]
    %v2829 = vld [vmem:[#allocation11 + $0x840] sm:$0xff]
    %v2830 = vld [vmem:[#allocation11 + $0x848] sm:$0xff]
    %v2831 = vld [vmem:[#allocation11 + $0x850] sm:$0xff]
    %v2832 = vld [vmem:[#allocation11 + $0x858] sm:$0xff]
    %v2833 = vld [vmem:[#allocation11 + $0x860] sm:$0xff]
    %v2834 = vld [vmem:[#allocation11 + $0x868] sm:$0xf]
    %v2835 = vld [vmem:[#allocation11 + $0x86c] sm:$0xff]
    %v2836 = vld [vmem:[#allocation11 + $0x874] sm:$0xff]
    %v2837 = vld [vmem:[#allocation11 + $0x87c] sm:$0xff]
    %v2838 = vld [vmem:[#allocation11 + $0x884] sm:$0xff]
    %v2839 = vld [vmem:[#allocation11 + $0x88c] sm:$0xff]
    %v2840 = vld [vmem:[#allocation11 + $0x894] sm:$0xf]
    %v2841 = vld [vmem:[#allocation11 + $0x898] sm:$0xff]
    %v2842 = vld [vmem:[#allocation11 + $0x8a0] sm:$0xff]
    %v2843 = vld [vmem:[#allocation11 + $0x8a8] sm:$0xff]
    %v2844 = vld [vmem:[#allocation11 + $0x8b0] sm:$0xff]
    %v2845 = vld [vmem:[#allocation11 + $0x8b8] sm:$0xff]
    %v2846 = vld [vmem:[#allocation11 + $0x8c0] sm:$0xf]
    %v2847 = vld [vmem:[#allocation11 + $0x8c4] sm:$0xff]
    %v2848 = vld [vmem:[#allocation11 + $0x8cc] sm:$0xff]
    %v2849 = vld [vmem:[#allocation11 + $0x8d4] sm:$0xff]
    %v2850 = vld [vmem:[#allocation11 + $0x8dc] sm:$0xff]
    %v2851 = vld [vmem:[#allocation11 + $0x8e4] sm:$0xff]
    %v2852 = vld [vmem:[#allocation11 + $0x8ec] sm:$0xf]
    %v2853 = vld [vmem:[#allocation11 + $0x8f0] sm:$0xff]
    %v2854 = vld [vmem:[#allocation11 + $0x8f8] sm:$0xff]
    %v2855 = vld [vmem:[#allocation11 + $0x900] sm:$0xff]
    %v2856 = vld [vmem:[#allocation11 + $0x908] sm:$0xff]
    %v2857 = vld [vmem:[#allocation11 + $0x910] sm:$0xff]
    %v2858 = vld [vmem:[#allocation11 + $0x918] sm:$0xf]
    %v2859 = vld [vmem:[#allocation11 + $0x91c] sm:$0xff]
    %v2860 = vld [vmem:[#allocation11 + $0x924] sm:$0xff]
    %v2861 = vld [vmem:[#allocation11 + $0x92c] sm:$0xff]
    %v2862 = vld [vmem:[#allocation11 + $0x934] sm:$0xff]
    %v2863 = vld [vmem:[#allocation11 + $0x93c] sm:$0xff]
    %v2864 = vld [vmem:[#allocation11 + $0x944] sm:$0xf]
    %v2865 = vld [vmem:[#allocation11 + $0x948] sm:$0xff]
    %v2866 = vld [vmem:[#allocation11 + $0x950] sm:$0xff]
    %v2867 = vld [vmem:[#allocation11 + $0x958] sm:$0xff]
    %v2868 = vld [vmem:[#allocation11 + $0x960] sm:$0xff]
    %v2869 = vld [vmem:[#allocation11 + $0x968] sm:$0xff]
    %v2870 = vld [vmem:[#allocation11 + $0x970] sm:$0xf]
    %v2871 = vld [vmem:[#allocation11 + $0x974] sm:$0xff]
    %v2872 = vld [vmem:[#allocation11 + $0x97c] sm:$0xff]
    %v2873 = vld [vmem:[#allocation11 + $0x984] sm:$0xff]
    %v2874 = vld [vmem:[#allocation11 + $0x98c] sm:$0xff]
    %v2875 = vld [vmem:[#allocation11 + $0x994] sm:$0xff]
    %v2876 = vld [vmem:[#allocation11 + $0x99c] sm:$0xf]
    %v2877 = vld [vmem:[#allocation11 + $0x9a0] sm:$0xff]
    %v2878 = vld [vmem:[#allocation11 + $0x9a8] sm:$0xff]
    %v2879 = vld [vmem:[#allocation11 + $0x9b0] sm:$0xff]
    %v2880 = vld [vmem:[#allocation11 + $0x9b8] sm:$0xff]
    %v2881 = vld [vmem:[#allocation11 + $0x9c0] sm:$0xff]
    %v2882 = vld [vmem:[#allocation11 + $0x9c8] sm:$0xf]
    %v2883 = vld [vmem:[#allocation11 + $0x9cc] sm:$0xff]
    %v2884 = vld [vmem:[#allocation11 + $0x9d4] sm:$0xff]
    %v2885 = vld [vmem:[#allocation11 + $0x9dc] sm:$0xff]
    %v2886 = vld [vmem:[#allocation11 + $0x9e4] sm:$0xff]
    %v2887 = vld [vmem:[#allocation11 + $0x9ec] sm:$0xff]
    %v2888 = vld [vmem:[#allocation11 + $0x9f4] sm:$0xf]
    %v2889 = vld [vmem:[#allocation11 + $0x9f8] sm:$0xff]
    %v2890 = vld [vmem:[#allocation11 + $0xa00] sm:$0xff]
    %v2891 = vld [vmem:[#allocation11 + $0xa08] sm:$0xff]
    %v2892 = vld [vmem:[#allocation11 + $0xa10] sm:$0xff]
    %v2893 = vld [vmem:[#allocation11 + $0xa18] sm:$0xff]
    %v2894 = vld [vmem:[#allocation11 + $0xa20] sm:$0xf]
    %v2895 = vld [vmem:[#allocation11 + $0xa24] sm:$0xff]
    %v2896 = vld [vmem:[#allocation11 + $0xa2c] sm:$0xff]
    %v2897 = vld [vmem:[#allocation11 + $0xa34] sm:$0xff]
    %v2898 = vld [vmem:[#allocation11 + $0xa3c] sm:$0xff]
    %v2899 = vld [vmem:[#allocation11 + $0xa44] sm:$0xff]
    %v2900 = vld [vmem:[#allocation11 + $0xa4c] sm:$0xf]
    %v2901 = vld [vmem:[#allocation11 + $0xa50] sm:$0xff]
    %v2902 = vld [vmem:[#allocation11 + $0xa58] sm:$0xff]
    %v2903 = vld [vmem:[#allocation11 + $0xa60] sm:$0xff]
    %v2904 = vld [vmem:[#allocation11 + $0xa68] sm:$0xff]
    %v2905 = vld [vmem:[#allocation11 + $0xa70] sm:$0xff]
    %v2906 = vld [vmem:[#allocation11 + $0xa78] sm:$0xf]
    %v2907 = vld [vmem:[#allocation11 + $0xa7c] sm:$0xff]
    %v2908 = vld [vmem:[#allocation11 + $0xa84] sm:$0xff]
    %v2909 = vld [vmem:[#allocation11 + $0xa8c] sm:$0xff]
    %v2910 = vld [vmem:[#allocation11 + $0xa94] sm:$0xff]
    %v2911 = vld [vmem:[#allocation11 + $0xa9c] sm:$0xff]
    %v2912 = vld [vmem:[#allocation11 + $0xaa4] sm:$0xf]
    %v2913 = vld [vmem:[#allocation11 + $0xaa8] sm:$0xff]
    %v2914 = vld [vmem:[#allocation11 + $0xab0] sm:$0xff]
    %v2915 = vld [vmem:[#allocation11 + $0xab8] sm:$0xff]
    %v2916 = vld [vmem:[#allocation11 + $0xac0] sm:$0xff]
    %v2917 = vld [vmem:[#allocation11 + $0xac8] sm:$0xff]
    %v2918 = vld [vmem:[#allocation11 + $0xad0] sm:$0xf]
    %v2919 = vld [vmem:[#allocation11 + $0xad4] sm:$0xff]
    %v2920 = vld [vmem:[#allocation11 + $0xadc] sm:$0xff]
    %v2921 = vld [vmem:[#allocation11 + $0xae4] sm:$0xff]
    %v2922 = vld [vmem:[#allocation11 + $0xaec] sm:$0xff]
    %v2923 = vld [vmem:[#allocation11 + $0xaf4] sm:$0xff]
    %v2924 = vld [vmem:[#allocation11 + $0xafc] sm:$0xf]
    %v2925 = vld [vmem:[#allocation11 + $0xb00] sm:$0xff]
    %v2926 = vld [vmem:[#allocation11 + $0xb08] sm:$0xff]
    %v2927 = vld [vmem:[#allocation11 + $0xb10] sm:$0xff]
    %v2928 = vld [vmem:[#allocation11 + $0xb18] sm:$0xff]
    %v2929 = vld [vmem:[#allocation11 + $0xb20] sm:$0xff]
    %v2930 = vld [vmem:[#allocation11 + $0xb28] sm:$0xf]
    %v2931 = vld [vmem:[#allocation11 + $0xb2c] sm:$0xff]
    %v2932 = vld [vmem:[#allocation11 + $0xb34] sm:$0xff]
    %v2933 = vld [vmem:[#allocation11 + $0xb3c] sm:$0xff]
    %v2934 = vld [vmem:[#allocation11 + $0xb44] sm:$0xff]
    %v2935 = vld [vmem:[#allocation11 + $0xb4c] sm:$0xff]
    %v2936 = vld [vmem:[#allocation11 + $0xb54] sm:$0xf]
    %v2937 = vld [vmem:[#allocation11 + $0xb58] sm:$0xff]
    %v2938 = vld [vmem:[#allocation11 + $0xb60] sm:$0xff]
    %v2939 = vld [vmem:[#allocation11 + $0xb68] sm:$0xff]
    %v2940 = vld [vmem:[#allocation11 + $0xb70] sm:$0xff]
    %v2941 = vld [vmem:[#allocation11 + $0xb78] sm:$0xff]
    %v2942 = vld [vmem:[#allocation11 + $0xb80] sm:$0xf]
    %v2943 = vld [vmem:[#allocation11 + $0xb84] sm:$0xff]
    %v2944 = vld [vmem:[#allocation11 + $0xb8c] sm:$0xff]
    %v2945 = vld [vmem:[#allocation11 + $0xb94] sm:$0xff]
    %v2946 = vld [vmem:[#allocation11 + $0xb9c] sm:$0xff]
    %v2947 = vld [vmem:[#allocation11 + $0xba4] sm:$0xff]
    %v2948 = vld [vmem:[#allocation11 + $0xbac] sm:$0xf]
    %v2949 = vld [vmem:[#allocation11 + $0xbb0] sm:$0xff]
    %v2950 = vld [vmem:[#allocation11 + $0xbb8] sm:$0xff]
    %v2951 = vld [vmem:[#allocation11 + $0xbc0] sm:$0xff]
    %v2952 = vld [vmem:[#allocation11 + $0xbc8] sm:$0xff]
    %v2953 = vld [vmem:[#allocation11 + $0xbd0] sm:$0xff]
    %v2954 = vld [vmem:[#allocation11 + $0xbd8] sm:$0xf]
    %v2955 = vld [vmem:[#allocation11 + $0xbdc] sm:$0xff]
    %v2956 = vld [vmem:[#allocation11 + $0xbe4] sm:$0xff]
    %v2957 = vld [vmem:[#allocation11 + $0xbec] sm:$0xff]
    %v2958 = vld [vmem:[#allocation11 + $0xbf4] sm:$0xff]
    %v2959 = vld [vmem:[#allocation11 + $0xbfc] sm:$0xff]
    %v2960 = vld [vmem:[#allocation11 + $0xc04] sm:$0xf]
    %v2961 = vld [vmem:[#allocation11 + $0xc08] sm:$0xff]
    %v2962 = vld [vmem:[#allocation11 + $0xc10] sm:$0xff]
    %v2963 = vld [vmem:[#allocation11 + $0xc18] sm:$0xff]
    %v2964 = vld [vmem:[#allocation11 + $0xc20] sm:$0xff]
    %v2965 = vld [vmem:[#allocation11 + $0xc28] sm:$0xff]
    %v2966 = vld [vmem:[#allocation11 + $0xc30] sm:$0xf]
    %v2967 = vld [vmem:[#allocation11 + $0xc34] sm:$0xff]
    %v2968 = vld [vmem:[#allocation11 + $0xc3c] sm:$0xff]
    %v2969 = vld [vmem:[#allocation11 + $0xc44] sm:$0xff]
    %v2970 = vld [vmem:[#allocation11 + $0xc4c] sm:$0xff]
    %v2971 = vld [vmem:[#allocation11 + $0xc54] sm:$0xff]
    %v2972 = vld [vmem:[#allocation11 + $0xc5c] sm:$0xf]
    %v2973 = vld [vmem:[#allocation11 + $0xc60] sm:$0xff]
    %v2974 = vld [vmem:[#allocation11 + $0xc68] sm:$0xff]
    %v2975 = vld [vmem:[#allocation11 + $0xc70] sm:$0xff]
    %v2976 = vld [vmem:[#allocation11 + $0xc78] sm:$0xff]
    %v2977 = vld [vmem:[#allocation11 + $0xc80] sm:$0xff]
    %v2978 = vld [vmem:[#allocation11 + $0xc88] sm:$0xf]
    %v2979 = vld [vmem:[#allocation11 + $0xc8c] sm:$0xff]
    %v2980 = vld [vmem:[#allocation11 + $0xc94] sm:$0xff]
    %v2981 = vld [vmem:[#allocation11 + $0xc9c] sm:$0xff]
    %v2982 = vld [vmem:[#allocation11 + $0xca4] sm:$0xff]
    %v2983 = vld [vmem:[#allocation11 + $0xcac] sm:$0xff]
    %v2984 = vld [vmem:[#allocation11 + $0xcb4] sm:$0xf]
    %v2985 = vld [vmem:[#allocation11 + $0xcb8] sm:$0xff]
    %v2986 = vld [vmem:[#allocation11 + $0xcc0] sm:$0xff]
    %v2987 = vld [vmem:[#allocation11 + $0xcc8] sm:$0xff]
    %v2988 = vld [vmem:[#allocation11 + $0xcd0] sm:$0xff]
    %v2989 = vld [vmem:[#allocation11 + $0xcd8] sm:$0xff]
    %v2990 = vld [vmem:[#allocation11 + $0xce0] sm:$0xf]
    %v2991 = vld [vmem:[#allocation11 + $0xce4] sm:$0xff]
    %v2992 = vld [vmem:[#allocation11 + $0xcec] sm:$0xff]
    %v2993 = vld [vmem:[#allocation11 + $0xcf4] sm:$0xff]
    %v2994 = vld [vmem:[#allocation11 + $0xcfc] sm:$0xff]
    %v2995 = vld [vmem:[#allocation11 + $0xd04] sm:$0xff]
    %v2996 = vld [vmem:[#allocation11 + $0xd0c] sm:$0xf]
    %v2997 = vld [vmem:[#allocation11 + $0xd10] sm:$0xff]
    %v2998 = vld [vmem:[#allocation11 + $0xd18] sm:$0xff]
    %v2999 = vld [vmem:[#allocation11 + $0xd20] sm:$0xff]
    %v3000 = vld [vmem:[#allocation11 + $0xd28] sm:$0xff]
    %v3001 = vld [vmem:[#allocation11 + $0xd30] sm:$0xff]
    %v3002 = vld [vmem:[#allocation11 + $0xd38] sm:$0xf]
    %v3003 = vld [vmem:[#allocation11 + $0xd3c] sm:$0xff]
    %v3004 = vld [vmem:[#allocation11 + $0xd44] sm:$0xff]
    %v3005 = vld [vmem:[#allocation11 + $0xd4c] sm:$0xff]
    %v3006 = vld [vmem:[#allocation11 + $0xd54] sm:$0xff]
    %v3007 = vld [vmem:[#allocation11 + $0xd5c] sm:$0xff]
    %v3008 = vld [vmem:[#allocation11 + $0xd64] sm:$0xf]
    %v3009 = vld [vmem:[#allocation11 + $0xd68] sm:$0xff]
    %v3010 = vld [vmem:[#allocation11 + $0xd70] sm:$0xff]
    %v3011 = vld [vmem:[#allocation11 + $0xd78] sm:$0xff]
    %v3012 = vld [vmem:[#allocation11 + $0xd80] sm:$0xff]
    %v3013 = vld [vmem:[#allocation11 + $0xd88] sm:$0xff]
    %v3014 = vld [vmem:[#allocation11 + $0xd90] sm:$0xf]
    %v3015 = vld [vmem:[#allocation11 + $0xd94] sm:$0xff]
    %v3016 = vld [vmem:[#allocation11 + $0xd9c] sm:$0xff]
    %v3017 = vld [vmem:[#allocation11 + $0xda4] sm:$0xff]
    %v3018 = vld [vmem:[#allocation11 + $0xdac] sm:$0xff]
    %v3019 = vld [vmem:[#allocation11 + $0xdb4] sm:$0xff]
    %v3020 = vld [vmem:[#allocation11 + $0xdbc] sm:$0xf]
    %v3021 = vld [vmem:[#allocation11 + $0xdc0] sm:$0xff]
    %v3022 = vld [vmem:[#allocation11 + $0xdc8] sm:$0xff]
    %v3023 = vld [vmem:[#allocation11 + $0xdd0] sm:$0xff]
    %v3024 = vld [vmem:[#allocation11 + $0xdd8] sm:$0xff]
    %v3025 = vld [vmem:[#allocation11 + $0xde0] sm:$0xff]
    %v3026 = vld [vmem:[#allocation11 + $0xde8] sm:$0xf]
    %v3027 = vld [vmem:[#allocation11 + $0xdec] sm:$0xff]
    %v3028 = vld [vmem:[#allocation11 + $0xdf4] sm:$0xff]
    %v3029 = vld [vmem:[#allocation11 + $0xdfc] sm:$0xff]
    %v3030 = vld [vmem:[#allocation11 + $0xe04] sm:$0xff]
    %v3031 = vld [vmem:[#allocation11 + $0xe0c] sm:$0xff]
    %v3032 = vld [vmem:[#allocation11 + $0xe14] sm:$0xf]
    %v3033 = vld [vmem:[#allocation11 + $0xe18] sm:$0xff]
    %v3034 = vld [vmem:[#allocation11 + $0xe20] sm:$0xff]
    %v3035 = vld [vmem:[#allocation11 + $0xe28] sm:$0xff]
    %v3036 = vld [vmem:[#allocation11 + $0xe30] sm:$0xff]
    %v3037 = vld [vmem:[#allocation11 + $0xe38] sm:$0xff]
    %v3038 = vld [vmem:[#allocation11 + $0xe40] sm:$0xf]
    %v3039 = vld [vmem:[#allocation11 + $0xe44] sm:$0xff]
    %v3040 = vld [vmem:[#allocation11 + $0xe4c] sm:$0xff]
    %v3041 = vld [vmem:[#allocation11 + $0xe54] sm:$0xff]
    %v3042 = vld [vmem:[#allocation11 + $0xe5c] sm:$0xff]
    %v3043 = vld [vmem:[#allocation11 + $0xe64] sm:$0xff]
    %v3044 = vld [vmem:[#allocation11 + $0xe6c] sm:$0xf]
    %v3045 = vld [vmem:[#allocation11 + $0xe70] sm:$0xff]
    %v3046 = vld [vmem:[#allocation11 + $0xe78] sm:$0xff]
    %v3047 = vld [vmem:[#allocation11 + $0xe80] sm:$0xff]
    %v3048 = vld [vmem:[#allocation11 + $0xe88] sm:$0xff]
    %v3049 = vld [vmem:[#allocation11 + $0xe90] sm:$0xff]
    %v3050 = vld [vmem:[#allocation11 + $0xe98] sm:$0xf]
    %v3051 = vld [vmem:[#allocation11 + $0xe9c] sm:$0xff]
    %v3052 = vld [vmem:[#allocation11 + $0xea4] sm:$0xff]
    %v3053 = vld [vmem:[#allocation11 + $0xeac] sm:$0xff]
    %v3054 = vld [vmem:[#allocation11 + $0xeb4] sm:$0xff]
    %v3055 = vld [vmem:[#allocation11 + $0xebc] sm:$0xff]
    %v3056 = vld [vmem:[#allocation11 + $0xec4] sm:$0xf]
    %v3057 = vld [vmem:[#allocation11 + $0xec8] sm:$0xff]
    %v3058 = vld [vmem:[#allocation11 + $0xed0] sm:$0xff]
    %v3059 = vld [vmem:[#allocation11 + $0xed8] sm:$0xff]
    %v3060 = vld [vmem:[#allocation11 + $0xee0] sm:$0xff]
    %v3061 = vld [vmem:[#allocation11 + $0xee8] sm:$0xff]
    %v3062 = vld [vmem:[#allocation11 + $0xef0] sm:$0xf]
    %v3063 = vld [vmem:[#allocation11 + $0xef4] sm:$0xff]
    %v3064 = vld [vmem:[#allocation11 + $0xefc] sm:$0xff]
    %v3065 = vld [vmem:[#allocation11 + $0xf04] sm:$0xff]
    %v3066 = vld [vmem:[#allocation11 + $0xf0c] sm:$0xff]
    %v3067 = vld [vmem:[#allocation11 + $0xf14] sm:$0xff]
    %v3068 = vld [vmem:[#allocation11 + $0xf1c] sm:$0xf]
    %v3069 = vld [vmem:[#allocation11 + $0xf20] sm:$0xff]
    %v3070 = vld [vmem:[#allocation11 + $0xf28] sm:$0xff]
    %v3071 = vld [vmem:[#allocation11 + $0xf30] sm:$0xff]
    %v3072 = vld [vmem:[#allocation11 + $0xf38] sm:$0xff]
    %v3073 = vld [vmem:[#allocation11 + $0xf40] sm:$0xff]
    %v3074 = vld [vmem:[#allocation11 + $0xf48] sm:$0xf]
    %v3075 = vld [vmem:[#allocation11 + $0xf4c] sm:$0xff]
    %v3076 = vld [vmem:[#allocation11 + $0xf54] sm:$0xff]
    %v3077 = vld [vmem:[#allocation11 + $0xf5c] sm:$0xff]
    %v3078 = vld [vmem:[#allocation11 + $0xf64] sm:$0xff]
    %v3079 = vld [vmem:[#allocation11 + $0xf6c] sm:$0xff]
    %v3080 = vld [vmem:[#allocation11 + $0xf74] sm:$0xf]
    %v3081 = vld [vmem:[#allocation11 + $0xf78] sm:$0xff]
    %v3082 = vld [vmem:[#allocation11 + $0xf80] sm:$0xff]
    %v3083 = vld [vmem:[#allocation11 + $0xf88] sm:$0xff]
    %v3084 = vld [vmem:[#allocation11 + $0xf90] sm:$0xff]
    %v3085 = vld [vmem:[#allocation11 + $0xf98] sm:$0xff]
    %v3086 = vld [vmem:[#allocation11 + $0xfa0] sm:$0xf]
    %v3087 = vld [vmem:[#allocation11 + $0xfa4] sm:$0xff]
    %v3088 = vld [vmem:[#allocation11 + $0xfac] sm:$0xff]
    %v3089 = vld [vmem:[#allocation11 + $0xfb4] sm:$0xff]
    %v3090 = vld [vmem:[#allocation11 + $0xfbc] sm:$0xff]
    %v3091 = vld [vmem:[#allocation11 + $0xfc4] sm:$0xff]
    %v3092 = vld [vmem:[#allocation11 + $0xfcc] sm:$0xf]
    %v3093 = vld [vmem:[#allocation11 + $0xfd0] sm:$0xff]
    %v3094 = vld [vmem:[#allocation11 + $0xfd8] sm:$0xff]
    %v3095 = vld [vmem:[#allocation11 + $0xfe0] sm:$0xff]
    %v3096 = vld [vmem:[#allocation11 + $0xfe8] sm:$0xff]
    %v3097 = vld [vmem:[#allocation11 + $0xff0] sm:$0xff]
    %v3098 = vld [vmem:[#allocation11 + $0xff8] sm:$0xf]
    %v3099 = vld [vmem:[#allocation11 + $0xffc] sm:$0xff]
    %v3100 = vld [vmem:[#allocation11 + $0x1004] sm:$0xff]
    %v3101 = vld [vmem:[#allocation11 + $0x100c] sm:$0xff]
    %v3102 = vld [vmem:[#allocation11 + $0x1014] sm:$0xff]
    %v3103 = vld [vmem:[#allocation11 + $0x101c] sm:$0xff]
    %v3104 = vld [vmem:[#allocation11 + $0x1024] sm:$0xf]
    %v3105 = vld [vmem:[#allocation11 + $0x1028] sm:$0xff]
    %v3106 = vld [vmem:[#allocation11 + $0x1030] sm:$0xff]
    %v3107 = vld [vmem:[#allocation11 + $0x1038] sm:$0xff]
    %v3108 = vld [vmem:[#allocation11 + $0x1040] sm:$0xff]
    %v3109 = vld [vmem:[#allocation11 + $0x1048] sm:$0xff]
    %v3110 = vld [vmem:[#allocation11 + $0x1050] sm:$0xf]
    %v3111 = vld [vmem:[#allocation11 + $0x1054] sm:$0xff]
    %v3112 = vld [vmem:[#allocation11 + $0x105c] sm:$0xff]
    %v3113 = vld [vmem:[#allocation11 + $0x1064] sm:$0xff]
    %v3114 = vld [vmem:[#allocation11 + $0x106c] sm:$0xff]
    %v3115 = vld [vmem:[#allocation11 + $0x1074] sm:$0xff]
    %v3116 = vld [vmem:[#allocation11 + $0x107c] sm:$0xf]
    %v3117 = vld [vmem:[#allocation11 + $0x1080] sm:$0xff]
    %v3118 = vld [vmem:[#allocation11 + $0x1088] sm:$0xff]
    %v3119 = vld [vmem:[#allocation11 + $0x1090] sm:$0xff]
    %v3120 = vld [vmem:[#allocation11 + $0x1098] sm:$0xff]
    %v3121 = vld [vmem:[#allocation11 + $0x10a0] sm:$0xff]
    %v3122 = vld [vmem:[#allocation11 + $0x10a8] sm:$0xf]
    %v3123 = vld [vmem:[#allocation11 + $0x10ac] sm:$0xff]
    %v3124 = vld [vmem:[#allocation11 + $0x10b4] sm:$0xff]
    %v3125 = vld [vmem:[#allocation11 + $0x10bc] sm:$0xff]
    %v3126 = vld [vmem:[#allocation11 + $0x10c4] sm:$0xff]
    %v3127 = vld [vmem:[#allocation11 + $0x10cc] sm:$0xff]
    %v3128 = vld [vmem:[#allocation11 + $0x10d4] sm:$0xf]
    %v3129 = vld [vmem:[#allocation11 + $0x10d8] sm:$0xff]
    %v3130 = vld [vmem:[#allocation11 + $0x10e0] sm:$0xff]
    %v3131 = vld [vmem:[#allocation11 + $0x10e8] sm:$0xff]
    %v3132 = vld [vmem:[#allocation11 + $0x10f0] sm:$0xff]
    %v3133 = vld [vmem:[#allocation11 + $0x10f8] sm:$0xff]
    %v3134 = vld [vmem:[#allocation11 + $0x1100] sm:$0xf]
    %v3135 = vld [vmem:[#allocation11 + $0x1104] sm:$0xff]
    %v3136 = vld [vmem:[#allocation11 + $0x110c] sm:$0xff]
    %v3137 = vld [vmem:[#allocation11 + $0x1114] sm:$0xff]
    %v3138 = vld [vmem:[#allocation11 + $0x111c] sm:$0xff]
    %v3139 = vld [vmem:[#allocation11 + $0x1124] sm:$0xff]
    %v3140 = vld [vmem:[#allocation11 + $0x112c] sm:$0xf]
    %v3141 = vld [vmem:[#allocation11 + $0x1130] sm:$0xff]
    %v3142 = vld [vmem:[#allocation11 + $0x1138] sm:$0xff]
    %v3143 = vld [vmem:[#allocation11 + $0x1140] sm:$0xff]
    %v3144 = vld [vmem:[#allocation11 + $0x1148] sm:$0xff]
    %v3145 = vld [vmem:[#allocation11 + $0x1150] sm:$0xff]
    %v3146 = vld [vmem:[#allocation11 + $0x1158] sm:$0xf]
    %v3147 = vld [vmem:[#allocation11 + $0x115c] sm:$0xff]
    %v3148 = vld [vmem:[#allocation11 + $0x1164] sm:$0xff]
    %v3149 = vld [vmem:[#allocation11 + $0x116c] sm:$0xff]
    %v3150 = vld [vmem:[#allocation11 + $0x1174] sm:$0xff]
    %v3151 = vld [vmem:[#allocation11 + $0x117c] sm:$0xff]
    %v3152 = vld [vmem:[#allocation11 + $0x1184] sm:$0xf]
    %v3153 = vld [vmem:[#allocation11 + $0x1188] sm:$0xff]
    %v3154 = vld [vmem:[#allocation11 + $0x1190] sm:$0xff]
    %v3155 = vld [vmem:[#allocation11 + $0x1198] sm:$0xff]
    %v3156 = vld [vmem:[#allocation11 + $0x11a0] sm:$0xff]
    %v3157 = vld [vmem:[#allocation11 + $0x11a8] sm:$0xff]
    %v3158 = vld [vmem:[#allocation11 + $0x11b0] sm:$0xf]
    %v3159 = vld [vmem:[#allocation11 + $0x11b4] sm:$0xff]
    %v3160 = vld [vmem:[#allocation11 + $0x11bc] sm:$0xff]
    %v3161 = vld [vmem:[#allocation11 + $0x11c4] sm:$0xff]
    %v3162 = vld [vmem:[#allocation11 + $0x11cc] sm:$0xff]
    %v3163 = vld [vmem:[#allocation11 + $0x11d4] sm:$0xff]
    %v3164 = vld [vmem:[#allocation11 + $0x11dc] sm:$0xf]
    %v3165 = vld [vmem:[#allocation11 + $0x11e0] sm:$0xff]
    %v3166 = vld [vmem:[#allocation11 + $0x11e8] sm:$0xff]
    %v3167 = vld [vmem:[#allocation11 + $0x11f0] sm:$0xff]
    %v3168 = vld [vmem:[#allocation11 + $0x11f8] sm:$0xff]
    %v3169 = vld [vmem:[#allocation11 + $0x1200] sm:$0xff]
    %v3170 = vld [vmem:[#allocation11 + $0x1208] sm:$0xf]
    %v3171 = vld [vmem:[#allocation11 + $0x120c] sm:$0xff]
    %v3172 = vld [vmem:[#allocation11 + $0x1214] sm:$0xff]
    %v3173 = vld [vmem:[#allocation11 + $0x121c] sm:$0xff]
    %v3174 = vld [vmem:[#allocation11 + $0x1224] sm:$0xff]
    %v3175 = vld [vmem:[#allocation11 + $0x122c] sm:$0xff]
    %v3176 = vld [vmem:[#allocation11 + $0x1234] sm:$0xf]
    %v3177 = vld [vmem:[#allocation11 + $0x1238] sm:$0xff]
    %v3178 = vld [vmem:[#allocation11 + $0x1240] sm:$0xff]
    %v3179 = vld [vmem:[#allocation11 + $0x1248] sm:$0xff]
    %v3180 = vld [vmem:[#allocation11 + $0x1250] sm:$0xff]
    %v3181 = vld [vmem:[#allocation11 + $0x1258] sm:$0xff]
    %v3182 = vld [vmem:[#allocation11 + $0x1260] sm:$0xf]
    %v3183 = vld [vmem:[#allocation11 + $0x1264] sm:$0xff]
    %v3184 = vld [vmem:[#allocation11 + $0x126c] sm:$0xff]
    %v3185 = vld [vmem:[#allocation11 + $0x1274] sm:$0xff]
    %v3186 = vld [vmem:[#allocation11 + $0x127c] sm:$0xff]
    %v3187 = vld [vmem:[#allocation11 + $0x1284] sm:$0xff]
    %v3188 = vld [vmem:[#allocation11 + $0x128c] sm:$0xf]
    %v3189 = vld [vmem:[#allocation11 + $0x1290] sm:$0xff]
    %v3190 = vld [vmem:[#allocation11 + $0x1298] sm:$0xff]
    %v3191 = vld [vmem:[#allocation11 + $0x12a0] sm:$0xff]
    %v3192 = vld [vmem:[#allocation11 + $0x12a8] sm:$0xff]
    %v3193 = vld [vmem:[#allocation11 + $0x12b0] sm:$0xff]
    %v3194 = vld [vmem:[#allocation11 + $0x12b8] sm:$0xf]
    %v3195 = vld [vmem:[#allocation11 + $0x12bc] sm:$0xff]
    %v3196 = vld [vmem:[#allocation11 + $0x12c4] sm:$0xff]
    %v3197 = vld [vmem:[#allocation11 + $0x12cc] sm:$0xff]
    %v3198 = vld [vmem:[#allocation11 + $0x12d4] sm:$0xff]
    %v3199 = vld [vmem:[#allocation11 + $0x12dc] sm:$0xff]
    %v3200 = vld [vmem:[#allocation11 + $0x12e4] sm:$0xf]
    %v3201 = vld [vmem:[#allocation11 + $0x12e8] sm:$0xff]
    %v3202 = vld [vmem:[#allocation11 + $0x12f0] sm:$0xff]
    %v3203 = vld [vmem:[#allocation11 + $0x12f8] sm:$0xff]
    %v3204 = vld [vmem:[#allocation11 + $0x1300] sm:$0xff]
    %v3205 = vld [vmem:[#allocation11 + $0x1308] sm:$0xff]
    %v3206 = vld [vmem:[#allocation11 + $0x1310] sm:$0xf]
    %v3207 = vld [vmem:[#allocation11 + $0x1314] sm:$0xff]
    %v3208 = vld [vmem:[#allocation11 + $0x131c] sm:$0xff]
    %v3209 = vld [vmem:[#allocation11 + $0x1324] sm:$0xff]
    %v3210 = vld [vmem:[#allocation11 + $0x132c] sm:$0xff]
    %v3211 = vld [vmem:[#allocation11 + $0x1334] sm:$0xff]
    %v3212 = vld [vmem:[#allocation11 + $0x133c] sm:$0xf]
    %v3213 = vld [vmem:[#allocation11 + $0x1340] sm:$0xff]
    %v3214 = vld [vmem:[#allocation11 + $0x1348] sm:$0xff]
    %v3215 = vld [vmem:[#allocation11 + $0x1350] sm:$0xff]
    %v3216 = vld [vmem:[#allocation11 + $0x1358] sm:$0xff]
    %v3217 = vld [vmem:[#allocation11 + $0x1360] sm:$0xff]
    %v3218 = vld [vmem:[#allocation11 + $0x1368] sm:$0xf]
    %v3219 = vld [vmem:[#allocation11 + $0x136c] sm:$0xff]
    %v3220 = vld [vmem:[#allocation11 + $0x1374] sm:$0xff]
    %v3221 = vld [vmem:[#allocation11 + $0x137c] sm:$0xff]
    %v3222 = vld [vmem:[#allocation11 + $0x1384] sm:$0xff]
    %v3223 = vld [vmem:[#allocation11 + $0x138c] sm:$0xff]
    %v3224 = vld [vmem:[#allocation11 + $0x1394] sm:$0xf]
    %v3225 = vld [vmem:[#allocation11 + $0x1398] sm:$0xff]
    %v3226 = vld [vmem:[#allocation11 + $0x13a0] sm:$0xff]
    %v3227 = vld [vmem:[#allocation11 + $0x13a8] sm:$0xff]
    %v3228 = vld [vmem:[#allocation11 + $0x13b0] sm:$0xff]
    %v3229 = vld [vmem:[#allocation11 + $0x13b8] sm:$0xff]
    %v3230 = vld [vmem:[#allocation11 + $0x13c0] sm:$0xf]
    %v3231 = vld [vmem:[#allocation11 + $0x13c4] sm:$0xff]
    %v3232 = vld [vmem:[#allocation11 + $0x13cc] sm:$0xff]
    %v3233 = vld [vmem:[#allocation11 + $0x13d4] sm:$0xff]
    %v3234 = vld [vmem:[#allocation11 + $0x13dc] sm:$0xff]
    %v3235 = vld [vmem:[#allocation11 + $0x13e4] sm:$0xff]
    %v3236 = vld [vmem:[#allocation11 + $0x13ec] sm:$0xf]
    %v3237 = vld [vmem:[#allocation11 + $0x13f0] sm:$0xff]
    %v3238 = vld [vmem:[#allocation11 + $0x13f8] sm:$0xff]
    %v3239 = vld [vmem:[#allocation11 + $0x1400] sm:$0xff]
    %v3240 = vld [vmem:[#allocation11 + $0x1408] sm:$0xff]
    %v3241 = vld [vmem:[#allocation11 + $0x1410] sm:$0xff]
    %v3242 = vld [vmem:[#allocation11 + $0x1418] sm:$0xf]
    %v3243 = vld [vmem:[#allocation11 + $0x141c] sm:$0xff]
    %v3244 = vld [vmem:[#allocation11 + $0x1424] sm:$0xff]
    %v3245 = vld [vmem:[#allocation11 + $0x142c] sm:$0xff]
    %v3246 = vld [vmem:[#allocation11 + $0x1434] sm:$0xff]
    %v3247 = vld [vmem:[#allocation11 + $0x143c] sm:$0xff]
    %v3248 = vld [vmem:[#allocation11 + $0x1444] sm:$0xf]
    %v3249 = vld [vmem:[#allocation11 + $0x1448] sm:$0xff]
    %v3250 = vld [vmem:[#allocation11 + $0x1450] sm:$0xff]
    %v3251 = vld [vmem:[#allocation11 + $0x1458] sm:$0xff]
    %v3252 = vld [vmem:[#allocation11 + $0x1460] sm:$0xff]
    %v3253 = vld [vmem:[#allocation11 + $0x1468] sm:$0xff]
    %v3254 = vld [vmem:[#allocation11 + $0x1470] sm:$0xf]
    %v3255 = vld [vmem:[#allocation11 + $0x1474] sm:$0xff]
    %v3256 = vld [vmem:[#allocation11 + $0x147c] sm:$0xff]
    %v3257 = vld [vmem:[#allocation11 + $0x1484] sm:$0xff]
    %v3258 = vld [vmem:[#allocation11 + $0x148c] sm:$0xff]
    %v3259 = vld [vmem:[#allocation11 + $0x1494] sm:$0xff]
    %v3260 = vld [vmem:[#allocation11 + $0x149c] sm:$0xf]
    %v3261 = vld [vmem:[#allocation11 + $0x14a0] sm:$0xff]
    %v3262 = vld [vmem:[#allocation11 + $0x14a8] sm:$0xff]
    %v3263 = vld [vmem:[#allocation11 + $0x14b0] sm:$0xff]
    %v3264 = vld [vmem:[#allocation11 + $0x14b8] sm:$0xff]
    %v3265 = vld [vmem:[#allocation11 + $0x14c0] sm:$0xff]
    %v3266 = vld [vmem:[#allocation11 + $0x14c8] sm:$0xf]
    %v3267 = vld [vmem:[#allocation11 + $0x14cc] sm:$0xff]
    %v3268 = vld [vmem:[#allocation11 + $0x14d4] sm:$0xff]
    %v3269 = vld [vmem:[#allocation11 + $0x14dc] sm:$0xff]
    %v3270 = vld [vmem:[#allocation11 + $0x14e4] sm:$0xff]
    %v3271 = vld [vmem:[#allocation11 + $0x14ec] sm:$0xff]
    %v3272 = vld [vmem:[#allocation11 + $0x14f4] sm:$0xf]
    %v3273 = vld [vmem:[#allocation11 + $0x14f8] sm:$0xff]
    %v3274 = vld [vmem:[#allocation11 + $0x1500] sm:$0xff]
    %v3275 = vld [vmem:[#allocation11 + $0x1508] sm:$0xff]
    %v3276 = vld [vmem:[#allocation11 + $0x1510] sm:$0xff]
    %v3277 = vld [vmem:[#allocation11 + $0x1518] sm:$0xff]
    %v3278 = vld [vmem:[#allocation11 + $0x1520] sm:$0xf]
    %v3279 = vld [vmem:[#allocation11 + $0x1524] sm:$0xff]
    %v3280 = vld [vmem:[#allocation11 + $0x152c] sm:$0xff]
    %v3281 = vld [vmem:[#allocation11 + $0x1534] sm:$0xff]
    %v3282 = vld [vmem:[#allocation11 + $0x153c] sm:$0xff]
    %v3283 = vld [vmem:[#allocation11 + $0x1544] sm:$0xff]
    %v3284 = vld [vmem:[#allocation11 + $0x154c] sm:$0xf]
    %v3285 = vld [vmem:[#allocation11 + $0x1550] sm:$0xff]
    %v3286 = vld [vmem:[#allocation11 + $0x1558] sm:$0xff]
    %v3287 = vld [vmem:[#allocation11 + $0x1560] sm:$0xff]
    %v3288 = vld [vmem:[#allocation11 + $0x1568] sm:$0xff]
    %v3289 = vld [vmem:[#allocation11 + $0x1570] sm:$0xff]
    %v3290 = vld [vmem:[#allocation11 + $0x1578] sm:$0xf]
    %v3291 = vld [vmem:[#allocation11 + $0x157c] sm:$0xff]
    %v3292 = vld [vmem:[#allocation11 + $0x1584] sm:$0xff]
    %v3293 = vld [vmem:[#allocation11 + $0x158c] sm:$0xff]
    %v3294 = vld [vmem:[#allocation11 + $0x1594] sm:$0xff]
    %v3295 = vld [vmem:[#allocation11 + $0x159c] sm:$0xff]
    %v3296 = vld [vmem:[#allocation11 + $0x15a4] sm:$0xf]
    %v3297 = vld [vmem:[#allocation11 + $0x15a8] sm:$0xff]
    %v3298 = vld [vmem:[#allocation11 + $0x15b0] sm:$0xff]
    %v3299 = vld [vmem:[#allocation11 + $0x15b8] sm:$0xff]
    %v3300 = vld [vmem:[#allocation11 + $0x15c0] sm:$0xff]
    %v3301 = vld [vmem:[#allocation11 + $0x15c8] sm:$0xff]
    %v3302 = vld [vmem:[#allocation11 + $0x15d0] sm:$0xf]
    %v3303 = vld [vmem:[#allocation11 + $0x15d4] sm:$0xff]
    %v3304 = vld [vmem:[#allocation11 + $0x15dc] sm:$0xff]
    %v3305 = vld [vmem:[#allocation11 + $0x15e4] sm:$0xff]
    %v3306 = vld [vmem:[#allocation11 + $0x15ec] sm:$0xff]
    %v3307 = vld [vmem:[#allocation11 + $0x15f4] sm:$0xff]
    %v3308 = vld [vmem:[#allocation11 + $0x15fc] sm:$0xf]
    %v3309 = vld [vmem:[#allocation13] sm:$0xff]
    %v3310 = vld [vmem:[#allocation13 + $0x8] sm:$0x7]
    %v3313 = vlaneseq
    %v3314 = vshrl.u32 %v3313, 7
    %v3315 = vsub.s32 0, %v3314
    %v3316 = vrot.slane %v3309, %v3315
    %v3317 = vlaneseq
    %v3318 = vshrl.u32 %v3317, 7
    %v3319 = vsub.s32 1, %v3318
    %v3320 = vrot.slane %v3309, %v3319
    %v3321 = vlaneseq
    %v3322 = vshrl.u32 %v3321, 7
    %v3323 = vsub.s32 2, %v3322
    %v3324 = vrot.slane %v3309, %v3323
    %v3325 = vlaneseq
    %v3326 = vshrl.u32 %v3325, 7
    %v3327 = vsub.s32 3, %v3326
    %v3328 = vrot.slane %v3309, %v3327
    %v3329 = vlaneseq
    %v3330 = vshrl.u32 %v3329, 7
    %v3331 = vsub.s32 4, %v3330
    %v3332 = vrot.slane %v3309, %v3331
    %v3333 = vlaneseq
    %v3334 = vshrl.u32 %v3333, 7
    %v3335 = vsub.s32 5, %v3334
    %v3336 = vrot.slane %v3309, %v3335
    %v3337 = vlaneseq
    %v3338 = vshrl.u32 %v3337, 7
    %v3339 = vsub.s32 6, %v3338
    %v3340 = vrot.slane %v3309, %v3339
    %v3341 = vlaneseq
    %v3342 = vshrl.u32 %v3341, 7
    %v3343 = vsub.s32 7, %v3342
    %v3344 = vrot.slane %v3309, %v3343
    %v3345 = vlaneseq
    %v3346 = vshrl.u32 %v3345, 7
    %v3347 = vsub.s32 0, %v3346
    %v3348 = vrot.slane %v3310, %v3347
    %v3349 = vlaneseq
    %v3350 = vshrl.u32 %v3349, 7
    %v3351 = vsub.s32 1, %v3350
    %v3352 = vrot.slane %v3310, %v3351
    %v3353 = vlaneseq
    %v3354 = vshrl.u32 %v3353, 7
    %v3355 = vsub.s32 2, %v3354
    %v3356 = vrot.slane %v3310, %v3355
    %v4136 = vunpack.c.l.b16 %v2541
    %v4137 = vunpack.c.h.b16 %v2541
    %v4138 = vunpack.c.l.b16 %v2542
    %v4139 = vunpack.c.h.b16 %v2542
    %v4140 = vunpack.c.l.b16 %v2543
    %v4141 = vunpack.c.h.b16 %v2543
    %v4142 = vunpack.c.l.b16 %v2544
    %v4143 = vunpack.c.h.b16 %v2544
    %v4144 = vunpack.c.l.b16 %v2545
    %v4145 = vunpack.c.h.b16 %v2545
    %v4146 = vunpack.c.l.b16 %v2546
    %v4147 = vunpack.c.l.b16 %v2547
    %v4148 = vunpack.c.h.b16 %v2547
    %v4149 = vunpack.c.l.b16 %v2548
    %v4150 = vunpack.c.h.b16 %v2548
    %v4151 = vunpack.c.l.b16 %v2549
    %v4152 = vunpack.c.h.b16 %v2549
    %v4153 = vunpack.c.l.b16 %v2550
    %v4154 = vunpack.c.h.b16 %v2550
    %v4155 = vunpack.c.l.b16 %v2551
    %v4156 = vunpack.c.h.b16 %v2551
    %v4157 = vunpack.c.l.b16 %v2552
    %v4158 = vunpack.c.l.b16 %v2553
    %v4159 = vunpack.c.h.b16 %v2553
    %v4160 = vunpack.c.l.b16 %v2554
    %v4161 = vunpack.c.h.b16 %v2554
    %v4162 = vunpack.c.l.b16 %v2555
    %v4163 = vunpack.c.h.b16 %v2555
    %v4164 = vunpack.c.l.b16 %v2556
    %v4165 = vunpack.c.h.b16 %v2556
    %v4166 = vunpack.c.l.b16 %v2557
    %v4167 = vunpack.c.h.b16 %v2557
    %v4168 = vunpack.c.l.b16 %v2558
    %v4169 = vunpack.c.l.b16 %v2559
    %v4170 = vunpack.c.h.b16 %v2559
    %v4171 = vunpack.c.l.b16 %v2560
    %v4172 = vunpack.c.h.b16 %v2560
    %v4173 = vunpack.c.l.b16 %v2561
    %v4174 = vunpack.c.h.b16 %v2561
    %v4175 = vunpack.c.l.b16 %v2562
    %v4176 = vunpack.c.h.b16 %v2562
    %v4177 = vunpack.c.l.b16 %v2563
    %v4178 = vunpack.c.h.b16 %v2563
    %v4179 = vunpack.c.l.b16 %v2564
    %v4180 = vunpack.c.l.b16 %v2565
    %v4181 = vunpack.c.h.b16 %v2565
    %v4182 = vunpack.c.l.b16 %v2566
    %v4183 = vunpack.c.h.b16 %v2566
    %v4184 = vunpack.c.l.b16 %v2567
    %v4185 = vunpack.c.h.b16 %v2567
    %v4186 = vunpack.c.l.b16 %v2568
    %v4187 = vunpack.c.h.b16 %v2568
    %v4188 = vunpack.c.l.b16 %v2569
    %v4189 = vunpack.c.h.b16 %v2569
    %v4190 = vunpack.c.l.b16 %v2570
    %v4191 = vunpack.c.l.b16 %v2571
    %v4192 = vunpack.c.h.b16 %v2571
    %v4193 = vunpack.c.l.b16 %v2572
    %v4194 = vunpack.c.h.b16 %v2572
    %v4195 = vunpack.c.l.b16 %v2573
    %v4196 = vunpack.c.h.b16 %v2573
    %v4197 = vunpack.c.l.b16 %v2574
    %v4198 = vunpack.c.h.b16 %v2574
    %v4199 = vunpack.c.l.b16 %v2575
    %v4200 = vunpack.c.h.b16 %v2575
    %v4201 = vunpack.c.l.b16 %v2576
    %v4202 = vunpack.c.l.b16 %v2577
    %v4203 = vunpack.c.h.b16 %v2577
    %v4204 = vunpack.c.l.b16 %v2578
    %v4205 = vunpack.c.h.b16 %v2578
    %v4206 = vunpack.c.l.b16 %v2579
    %v4207 = vunpack.c.h.b16 %v2579
    %v4208 = vunpack.c.l.b16 %v2580
    %v4209 = vunpack.c.h.b16 %v2580
    %v4210 = vunpack.c.l.b16 %v2581
    %v4211 = vunpack.c.h.b16 %v2581
    %v4212 = vunpack.c.l.b16 %v2582
    %v4213 = vunpack.c.l.b16 %v2583
    %v4214 = vunpack.c.h.b16 %v2583
    %v4215 = vunpack.c.l.b16 %v2584
    %v4216 = vunpack.c.h.b16 %v2584
    %v4217 = vunpack.c.l.b16 %v2585
    %v4218 = vunpack.c.h.b16 %v2585
    %v4219 = vunpack.c.l.b16 %v2586
    %v4220 = vunpack.c.h.b16 %v2586
    %v4221 = vunpack.c.l.b16 %v2587
    %v4222 = vunpack.c.h.b16 %v2587
    %v4223 = vunpack.c.l.b16 %v2588
    %v4224 = vunpack.c.l.b16 %v2589
    %v4225 = vunpack.c.h.b16 %v2589
    %v4226 = vunpack.c.l.b16 %v2590
    %v4227 = vunpack.c.h.b16 %v2590
    %v4228 = vunpack.c.l.b16 %v2591
    %v4229 = vunpack.c.h.b16 %v2591
    %v4230 = vunpack.c.l.b16 %v2592
    %v4231 = vunpack.c.h.b16 %v2592
    %v4232 = vunpack.c.l.b16 %v2593
    %v4233 = vunpack.c.h.b16 %v2593
    %v4234 = vunpack.c.l.b16 %v2594
    %v4235 = vunpack.c.l.b16 %v2595
    %v4236 = vunpack.c.h.b16 %v2595
    %v4237 = vunpack.c.l.b16 %v2596
    %v4238 = vunpack.c.h.b16 %v2596
    %v4239 = vunpack.c.l.b16 %v2597
    %v4240 = vunpack.c.h.b16 %v2597
    %v4241 = vunpack.c.l.b16 %v2598
    %v4242 = vunpack.c.h.b16 %v2598
    %v4243 = vunpack.c.l.b16 %v2599
    %v4244 = vunpack.c.h.b16 %v2599
    %v4245 = vunpack.c.l.b16 %v2600
    %v4246 = vunpack.c.l.b16 %v2601
    %v4247 = vunpack.c.h.b16 %v2601
    %v4248 = vunpack.c.l.b16 %v2602
    %v4249 = vunpack.c.h.b16 %v2602
    %v4250 = vunpack.c.l.b16 %v2603
    %v4251 = vunpack.c.h.b16 %v2603
    %v4252 = vunpack.c.l.b16 %v2604
    %v4253 = vunpack.c.h.b16 %v2604
    %v4254 = vunpack.c.l.b16 %v2605
    %v4255 = vunpack.c.h.b16 %v2605
    %v4256 = vunpack.c.l.b16 %v2606
    %v4257 = vunpack.c.l.b16 %v2607
    %v4258 = vunpack.c.h.b16 %v2607
    %v4259 = vunpack.c.l.b16 %v2608
    %v4260 = vunpack.c.h.b16 %v2608
    %v4261 = vunpack.c.l.b16 %v2609
    %v4262 = vunpack.c.h.b16 %v2609
    %v4263 = vunpack.c.l.b16 %v2610
    %v4264 = vunpack.c.h.b16 %v2610
    %v4265 = vunpack.c.l.b16 %v2611
    %v4266 = vunpack.c.h.b16 %v2611
    %v4267 = vunpack.c.l.b16 %v2612
    %v4268 = vunpack.c.l.b16 %v2613
    %v4269 = vunpack.c.h.b16 %v2613
    %v4270 = vunpack.c.l.b16 %v2614
    %v4271 = vunpack.c.h.b16 %v2614
    %v4272 = vunpack.c.l.b16 %v2615
    %v4273 = vunpack.c.h.b16 %v2615
    %v4274 = vunpack.c.l.b16 %v2616
    %v4275 = vunpack.c.h.b16 %v2616
    %v4276 = vunpack.c.l.b16 %v2617
    %v4277 = vunpack.c.h.b16 %v2617
    %v4278 = vunpack.c.l.b16 %v2618
    %v4279 = vunpack.c.l.b16 %v2619
    %v4280 = vunpack.c.h.b16 %v2619
    %v4281 = vunpack.c.l.b16 %v2620
    %v4282 = vunpack.c.h.b16 %v2620
    %v4283 = vunpack.c.l.b16 %v2621
    %v4284 = vunpack.c.h.b16 %v2621
    %v4285 = vunpack.c.l.b16 %v2622
    %v4286 = vunpack.c.h.b16 %v2622
    %v4287 = vunpack.c.l.b16 %v2623
    %v4288 = vunpack.c.h.b16 %v2623
    %v4289 = vunpack.c.l.b16 %v2624
    %v4290 = vunpack.c.l.b16 %v2625
    %v4291 = vunpack.c.h.b16 %v2625
    %v4292 = vunpack.c.l.b16 %v2626
    %v4293 = vunpack.c.h.b16 %v2626
    %v4294 = vunpack.c.l.b16 %v2627
    %v4295 = vunpack.c.h.b16 %v2627
    %v4296 = vunpack.c.l.b16 %v2628
    %v4297 = vunpack.c.h.b16 %v2628
    %v4298 = vunpack.c.l.b16 %v2629
    %v4299 = vunpack.c.h.b16 %v2629
    %v4300 = vunpack.c.l.b16 %v2630
    %v4301 = vunpack.c.l.b16 %v2631
    %v4302 = vunpack.c.h.b16 %v2631
    %v4303 = vunpack.c.l.b16 %v2632
    %v4304 = vunpack.c.h.b16 %v2632
    %v4305 = vunpack.c.l.b16 %v2633
    %v4306 = vunpack.c.h.b16 %v2633
    %v4307 = vunpack.c.l.b16 %v2634
    %v4308 = vunpack.c.h.b16 %v2634
    %v4309 = vunpack.c.l.b16 %v2635
    %v4310 = vunpack.c.h.b16 %v2635
    %v4311 = vunpack.c.l.b16 %v2636
    %v4312 = vunpack.c.l.b16 %v2637
    %v4313 = vunpack.c.h.b16 %v2637
    %v4314 = vunpack.c.l.b16 %v2638
    %v4315 = vunpack.c.h.b16 %v2638
    %v4316 = vunpack.c.l.b16 %v2639
    %v4317 = vunpack.c.h.b16 %v2639
    %v4318 = vunpack.c.l.b16 %v2640
    %v4319 = vunpack.c.h.b16 %v2640
    %v4320 = vunpack.c.l.b16 %v2641
    %v4321 = vunpack.c.h.b16 %v2641
    %v4322 = vunpack.c.l.b16 %v2642
    %v4323 = vunpack.c.l.b16 %v2643
    %v4324 = vunpack.c.h.b16 %v2643
    %v4325 = vunpack.c.l.b16 %v2644
    %v4326 = vunpack.c.h.b16 %v2644
    %v4327 = vunpack.c.l.b16 %v2645
    %v4328 = vunpack.c.h.b16 %v2645
    %v4329 = vunpack.c.l.b16 %v2646
    %v4330 = vunpack.c.h.b16 %v2646
    %v4331 = vunpack.c.l.b16 %v2647
    %v4332 = vunpack.c.h.b16 %v2647
    %v4333 = vunpack.c.l.b16 %v2648
    %v4334 = vunpack.c.l.b16 %v2649
    %v4335 = vunpack.c.h.b16 %v2649
    %v4336 = vunpack.c.l.b16 %v2650
    %v4337 = vunpack.c.h.b16 %v2650
    %v4338 = vunpack.c.l.b16 %v2651
    %v4339 = vunpack.c.h.b16 %v2651
    %v4340 = vunpack.c.l.b16 %v2652
    %v4341 = vunpack.c.h.b16 %v2652
    %v4342 = vunpack.c.l.b16 %v2653
    %v4343 = vunpack.c.h.b16 %v2653
    %v4344 = vunpack.c.l.b16 %v2654
    %v4345 = vunpack.c.l.b16 %v2655
    %v4346 = vunpack.c.h.b16 %v2655
    %v4347 = vunpack.c.l.b16 %v2656
    %v4348 = vunpack.c.h.b16 %v2656
    %v4349 = vunpack.c.l.b16 %v2657
    %v4350 = vunpack.c.h.b16 %v2657
    %v4351 = vunpack.c.l.b16 %v2658
    %v4352 = vunpack.c.h.b16 %v2658
    %v4353 = vunpack.c.l.b16 %v2659
    %v4354 = vunpack.c.h.b16 %v2659
    %v4355 = vunpack.c.l.b16 %v2660
    %v4356 = vunpack.c.l.b16 %v2661
    %v4357 = vunpack.c.h.b16 %v2661
    %v4358 = vunpack.c.l.b16 %v2662
    %v4359 = vunpack.c.h.b16 %v2662
    %v4360 = vunpack.c.l.b16 %v2663
    %v4361 = vunpack.c.h.b16 %v2663
    %v4362 = vunpack.c.l.b16 %v2664
    %v4363 = vunpack.c.h.b16 %v2664
    %v4364 = vunpack.c.l.b16 %v2665
    %v4365 = vunpack.c.h.b16 %v2665
    %v4366 = vunpack.c.l.b16 %v2666
    %v4367 = vunpack.c.l.b16 %v2667
    %v4368 = vunpack.c.h.b16 %v2667
    %v4369 = vunpack.c.l.b16 %v2668
    %v4370 = vunpack.c.h.b16 %v2668
    %v4371 = vunpack.c.l.b16 %v2669
    %v4372 = vunpack.c.h.b16 %v2669
    %v4373 = vunpack.c.l.b16 %v2670
    %v4374 = vunpack.c.h.b16 %v2670
    %v4375 = vunpack.c.l.b16 %v2671
    %v4376 = vunpack.c.h.b16 %v2671
    %v4377 = vunpack.c.l.b16 %v2672
    %v4378 = vunpack.c.l.b16 %v2673
    %v4379 = vunpack.c.h.b16 %v2673
    %v4380 = vunpack.c.l.b16 %v2674
    %v4381 = vunpack.c.h.b16 %v2674
    %v4382 = vunpack.c.l.b16 %v2675
    %v4383 = vunpack.c.h.b16 %v2675
    %v4384 = vunpack.c.l.b16 %v2676
    %v4385 = vunpack.c.h.b16 %v2676
    %v4386 = vunpack.c.l.b16 %v2677
    %v4387 = vunpack.c.h.b16 %v2677
    %v4388 = vunpack.c.l.b16 %v2678
    %v4389 = vunpack.c.l.b16 %v2679
    %v4390 = vunpack.c.h.b16 %v2679
    %v4391 = vunpack.c.l.b16 %v2680
    %v4392 = vunpack.c.h.b16 %v2680
    %v4393 = vunpack.c.l.b16 %v2681
    %v4394 = vunpack.c.h.b16 %v2681
    %v4395 = vunpack.c.l.b16 %v2682
    %v4396 = vunpack.c.h.b16 %v2682
    %v4397 = vunpack.c.l.b16 %v2683
    %v4398 = vunpack.c.h.b16 %v2683
    %v4399 = vunpack.c.l.b16 %v2684
    %v4400 = vunpack.c.l.b16 %v2685
    %v4401 = vunpack.c.h.b16 %v2685
    %v4402 = vunpack.c.l.b16 %v2686
    %v4403 = vunpack.c.h.b16 %v2686
    %v4404 = vunpack.c.l.b16 %v2687
    %v4405 = vunpack.c.h.b16 %v2687
    %v4406 = vunpack.c.l.b16 %v2688
    %v4407 = vunpack.c.h.b16 %v2688
    %v4408 = vunpack.c.l.b16 %v2689
    %v4409 = vunpack.c.h.b16 %v2689
    %v4410 = vunpack.c.l.b16 %v2690
    %v4411 = vunpack.c.l.b16 %v2691
    %v4412 = vunpack.c.h.b16 %v2691
    %v4413 = vunpack.c.l.b16 %v2692
    %v4414 = vunpack.c.h.b16 %v2692
    %v4415 = vunpack.c.l.b16 %v2693
    %v4416 = vunpack.c.h.b16 %v2693
    %v4417 = vunpack.c.l.b16 %v2694
    %v4418 = vunpack.c.h.b16 %v2694
    %v4419 = vunpack.c.l.b16 %v2695
    %v4420 = vunpack.c.h.b16 %v2695
    %v4421 = vunpack.c.l.b16 %v2696
    %v4422 = vunpack.c.l.b16 %v2697
    %v4423 = vunpack.c.h.b16 %v2697
    %v4424 = vunpack.c.l.b16 %v2698
    %v4425 = vunpack.c.h.b16 %v2698
    %v4426 = vunpack.c.l.b16 %v2699
    %v4427 = vunpack.c.h.b16 %v2699
    %v4428 = vunpack.c.l.b16 %v2700
    %v4429 = vunpack.c.h.b16 %v2700
    %v4430 = vunpack.c.l.b16 %v2701
    %v4431 = vunpack.c.h.b16 %v2701
    %v4432 = vunpack.c.l.b16 %v2702
    %v4433 = vunpack.c.l.b16 %v2703
    %v4434 = vunpack.c.h.b16 %v2703
    %v4435 = vunpack.c.l.b16 %v2704
    %v4436 = vunpack.c.h.b16 %v2704
    %v4437 = vunpack.c.l.b16 %v2705
    %v4438 = vunpack.c.h.b16 %v2705
    %v4439 = vunpack.c.l.b16 %v2706
    %v4440 = vunpack.c.h.b16 %v2706
    %v4441 = vunpack.c.l.b16 %v2707
    %v4442 = vunpack.c.h.b16 %v2707
    %v4443 = vunpack.c.l.b16 %v2708
    %v4444 = vunpack.c.l.b16 %v2709
    %v4445 = vunpack.c.h.b16 %v2709
    %v4446 = vunpack.c.l.b16 %v2710
    %v4447 = vunpack.c.h.b16 %v2710
    %v4448 = vunpack.c.l.b16 %v2711
    %v4449 = vunpack.c.h.b16 %v2711
    %v4450 = vunpack.c.l.b16 %v2712
    %v4451 = vunpack.c.h.b16 %v2712
    %v4452 = vunpack.c.l.b16 %v2713
    %v4453 = vunpack.c.h.b16 %v2713
    %v4454 = vunpack.c.l.b16 %v2714
    %v4455 = vunpack.c.l.b16 %v2715
    %v4456 = vunpack.c.h.b16 %v2715
    %v4457 = vunpack.c.l.b16 %v2716
    %v4458 = vunpack.c.h.b16 %v2716
    %v4459 = vunpack.c.l.b16 %v2717
    %v4460 = vunpack.c.h.b16 %v2717
    %v4461 = vunpack.c.l.b16 %v2718
    %v4462 = vunpack.c.h.b16 %v2718
    %v4463 = vunpack.c.l.b16 %v2719
    %v4464 = vunpack.c.h.b16 %v2719
    %v4465 = vunpack.c.l.b16 %v2720
    %v4466 = vunpack.c.l.b16 %v2721
    %v4467 = vunpack.c.h.b16 %v2721
    %v4468 = vunpack.c.l.b16 %v2722
    %v4469 = vunpack.c.h.b16 %v2722
    %v4470 = vunpack.c.l.b16 %v2723
    %v4471 = vunpack.c.h.b16 %v2723
    %v4472 = vunpack.c.l.b16 %v2724
    %v4473 = vunpack.c.h.b16 %v2724
    %v4474 = vunpack.c.l.b16 %v2725
    %v4475 = vunpack.c.h.b16 %v2725
    %v4476 = vunpack.c.l.b16 %v2726
    %v4477 = vunpack.c.l.b16 %v2727
    %v4478 = vunpack.c.h.b16 %v2727
    %v4479 = vunpack.c.l.b16 %v2728
    %v4480 = vunpack.c.h.b16 %v2728
    %v4481 = vunpack.c.l.b16 %v2729
    %v4482 = vunpack.c.h.b16 %v2729
    %v4483 = vunpack.c.l.b16 %v2730
    %v4484 = vunpack.c.h.b16 %v2730
    %v4485 = vunpack.c.l.b16 %v2731
    %v4486 = vunpack.c.h.b16 %v2731
    %v4487 = vunpack.c.l.b16 %v2732
    %v4488 = vunpack.c.l.b16 %v2733
    %v4489 = vunpack.c.h.b16 %v2733
    %v4490 = vunpack.c.l.b16 %v2734
    %v4491 = vunpack.c.h.b16 %v2734
    %v4492 = vunpack.c.l.b16 %v2735
    %v4493 = vunpack.c.h.b16 %v2735
    %v4494 = vunpack.c.l.b16 %v2736
    %v4495 = vunpack.c.h.b16 %v2736
    %v4496 = vunpack.c.l.b16 %v2737
    %v4497 = vunpack.c.h.b16 %v2737
    %v4498 = vunpack.c.l.b16 %v2738
    %v4499 = vunpack.c.l.b16 %v2739
    %v4500 = vunpack.c.h.b16 %v2739
    %v4501 = vunpack.c.l.b16 %v2740
    %v4502 = vunpack.c.h.b16 %v2740
    %v4503 = vunpack.c.l.b16 %v2741
    %v4504 = vunpack.c.h.b16 %v2741
    %v4505 = vunpack.c.l.b16 %v2742
    %v4506 = vunpack.c.h.b16 %v2742
    %v4507 = vunpack.c.l.b16 %v2743
    %v4508 = vunpack.c.h.b16 %v2743
    %v4509 = vunpack.c.l.b16 %v2744
    %v4510 = vunpack.c.l.b16 %v2745
    %v4511 = vunpack.c.h.b16 %v2745
    %v4512 = vunpack.c.l.b16 %v2746
    %v4513 = vunpack.c.h.b16 %v2746
    %v4514 = vunpack.c.l.b16 %v2747
    %v4515 = vunpack.c.h.b16 %v2747
    %v4516 = vunpack.c.l.b16 %v2748
    %v4517 = vunpack.c.h.b16 %v2748
    %v4518 = vunpack.c.l.b16 %v2749
    %v4519 = vunpack.c.h.b16 %v2749
    %v4520 = vunpack.c.l.b16 %v2750
    %v4521 = vunpack.c.l.b16 %v2751
    %v4522 = vunpack.c.h.b16 %v2751
    %v4523 = vunpack.c.l.b16 %v2752
    %v4524 = vunpack.c.h.b16 %v2752
    %v4525 = vunpack.c.l.b16 %v2753
    %v4526 = vunpack.c.h.b16 %v2753
    %v4527 = vunpack.c.l.b16 %v2754
    %v4528 = vunpack.c.h.b16 %v2754
    %v4529 = vunpack.c.l.b16 %v2755
    %v4530 = vunpack.c.h.b16 %v2755
    %v4531 = vunpack.c.l.b16 %v2756
    %v4532 = vunpack.c.l.b16 %v2757
    %v4533 = vunpack.c.h.b16 %v2757
    %v4534 = vunpack.c.l.b16 %v2758
    %v4535 = vunpack.c.h.b16 %v2758
    %v4536 = vunpack.c.l.b16 %v2759
    %v4537 = vunpack.c.h.b16 %v2759
    %v4538 = vunpack.c.l.b16 %v2760
    %v4539 = vunpack.c.h.b16 %v2760
    %v4540 = vunpack.c.l.b16 %v2761
    %v4541 = vunpack.c.h.b16 %v2761
    %v4542 = vunpack.c.l.b16 %v2762
    %v4543 = vunpack.c.l.b16 %v2763
    %v4544 = vunpack.c.h.b16 %v2763
    %v4545 = vunpack.c.l.b16 %v2764
    %v4546 = vunpack.c.h.b16 %v2764
    %v4547 = vunpack.c.l.b16 %v2765
    %v4548 = vunpack.c.h.b16 %v2765
    %v4549 = vunpack.c.l.b16 %v2766
    %v4550 = vunpack.c.h.b16 %v2766
    %v4551 = vunpack.c.l.b16 %v2767
    %v4552 = vunpack.c.h.b16 %v2767
    %v4553 = vunpack.c.l.b16 %v2768
    %v4554 = vunpack.c.l.b16 %v2769
    %v4555 = vunpack.c.h.b16 %v2769
    %v4556 = vunpack.c.l.b16 %v2770
    %v4557 = vunpack.c.h.b16 %v2770
    %v4558 = vunpack.c.l.b16 %v2771
    %v4559 = vunpack.c.h.b16 %v2771
    %v4560 = vunpack.c.l.b16 %v2772
    %v4561 = vunpack.c.h.b16 %v2772
    %v4562 = vunpack.c.l.b16 %v2773
    %v4563 = vunpack.c.h.b16 %v2773
    %v4564 = vunpack.c.l.b16 %v2774
    %v4565 = vunpack.c.l.b16 %v2775
    %v4566 = vunpack.c.h.b16 %v2775
    %v4567 = vunpack.c.l.b16 %v2776
    %v4568 = vunpack.c.h.b16 %v2776
    %v4569 = vunpack.c.l.b16 %v2777
    %v4570 = vunpack.c.h.b16 %v2777
    %v4571 = vunpack.c.l.b16 %v2778
    %v4572 = vunpack.c.h.b16 %v2778
    %v4573 = vunpack.c.l.b16 %v2779
    %v4574 = vunpack.c.h.b16 %v2779
    %v4575 = vunpack.c.l.b16 %v2780
    %v4576 = vunpack.c.l.b16 %v2781
    %v4577 = vunpack.c.h.b16 %v2781
    %v4578 = vunpack.c.l.b16 %v2782
    %v4579 = vunpack.c.h.b16 %v2782
    %v4580 = vunpack.c.l.b16 %v2783
    %v4581 = vunpack.c.h.b16 %v2783
    %v4582 = vunpack.c.l.b16 %v2784
    %v4583 = vunpack.c.h.b16 %v2784
    %v4584 = vunpack.c.l.b16 %v2785
    %v4585 = vunpack.c.h.b16 %v2785
    %v4586 = vunpack.c.l.b16 %v2786
    %v4587 = vunpack.c.l.b16 %v2787
    %v4588 = vunpack.c.h.b16 %v2787
    %v4589 = vunpack.c.l.b16 %v2788
    %v4590 = vunpack.c.h.b16 %v2788
    %v4591 = vunpack.c.l.b16 %v2789
    %v4592 = vunpack.c.h.b16 %v2789
    %v4593 = vunpack.c.l.b16 %v2790
    %v4594 = vunpack.c.h.b16 %v2790
    %v4595 = vunpack.c.l.b16 %v2791
    %v4596 = vunpack.c.h.b16 %v2791
    %v4597 = vunpack.c.l.b16 %v2792
    %v4598 = vunpack.c.l.b16 %v2793
    %v4599 = vunpack.c.h.b16 %v2793
    %v4600 = vunpack.c.l.b16 %v2794
    %v4601 = vunpack.c.h.b16 %v2794
    %v4602 = vunpack.c.l.b16 %v2795
    %v4603 = vunpack.c.h.b16 %v2795
    %v4604 = vunpack.c.l.b16 %v2796
    %v4605 = vunpack.c.h.b16 %v2796
    %v4606 = vunpack.c.l.b16 %v2797
    %v4607 = vunpack.c.h.b16 %v2797
    %v4608 = vunpack.c.l.b16 %v2798
    %v4609 = vunpack.c.l.b16 %v2799
    %v4610 = vunpack.c.h.b16 %v2799
    %v4611 = vunpack.c.l.b16 %v2800
    %v4612 = vunpack.c.h.b16 %v2800
    %v4613 = vunpack.c.l.b16 %v2801
    %v4614 = vunpack.c.h.b16 %v2801
    %v4615 = vunpack.c.l.b16 %v2802
    %v4616 = vunpack.c.h.b16 %v2802
    %v4617 = vunpack.c.l.b16 %v2803
    %v4618 = vunpack.c.h.b16 %v2803
    %v4619 = vunpack.c.l.b16 %v2804
    %v4620 = vunpack.c.l.b16 %v2805
    %v4621 = vunpack.c.h.b16 %v2805
    %v4622 = vunpack.c.l.b16 %v2806
    %v4623 = vunpack.c.h.b16 %v2806
    %v4624 = vunpack.c.l.b16 %v2807
    %v4625 = vunpack.c.h.b16 %v2807
    %v4626 = vunpack.c.l.b16 %v2808
    %v4627 = vunpack.c.h.b16 %v2808
    %v4628 = vunpack.c.l.b16 %v2809
    %v4629 = vunpack.c.h.b16 %v2809
    %v4630 = vunpack.c.l.b16 %v2810
    %v4631 = vunpack.c.l.b16 %v2811
    %v4632 = vunpack.c.h.b16 %v2811
    %v4633 = vunpack.c.l.b16 %v2812
    %v4634 = vunpack.c.h.b16 %v2812
    %v4635 = vunpack.c.l.b16 %v2813
    %v4636 = vunpack.c.h.b16 %v2813
    %v4637 = vunpack.c.l.b16 %v2814
    %v4638 = vunpack.c.h.b16 %v2814
    %v4639 = vunpack.c.l.b16 %v2815
    %v4640 = vunpack.c.h.b16 %v2815
    %v4641 = vunpack.c.l.b16 %v2816
    %v4642 = vunpack.c.l.b16 %v2817
    %v4643 = vunpack.c.h.b16 %v2817
    %v4644 = vunpack.c.l.b16 %v2818
    %v4645 = vunpack.c.h.b16 %v2818
    %v4646 = vunpack.c.l.b16 %v2819
    %v4647 = vunpack.c.h.b16 %v2819
    %v4648 = vunpack.c.l.b16 %v2820
    %v4649 = vunpack.c.h.b16 %v2820
    %v4650 = vunpack.c.l.b16 %v2821
    %v4651 = vunpack.c.h.b16 %v2821
    %v4652 = vunpack.c.l.b16 %v2822
    %v4653 = vunpack.c.l.b16 %v2823
    %v4654 = vunpack.c.h.b16 %v2823
    %v4655 = vunpack.c.l.b16 %v2824
    %v4656 = vunpack.c.h.b16 %v2824
    %v4657 = vunpack.c.l.b16 %v2825
    %v4658 = vunpack.c.h.b16 %v2825
    %v4659 = vunpack.c.l.b16 %v2826
    %v4660 = vunpack.c.h.b16 %v2826
    %v4661 = vunpack.c.l.b16 %v2827
    %v4662 = vunpack.c.h.b16 %v2827
    %v4663 = vunpack.c.l.b16 %v2828
    %v4664 = vunpack.c.l.b16 %v2829
    %v4665 = vunpack.c.h.b16 %v2829
    %v4666 = vunpack.c.l.b16 %v2830
    %v4667 = vunpack.c.h.b16 %v2830
    %v4668 = vunpack.c.l.b16 %v2831
    %v4669 = vunpack.c.h.b16 %v2831
    %v4670 = vunpack.c.l.b16 %v2832
    %v4671 = vunpack.c.h.b16 %v2832
    %v4672 = vunpack.c.l.b16 %v2833
    %v4673 = vunpack.c.h.b16 %v2833
    %v4674 = vunpack.c.l.b16 %v2834
    %v4675 = vunpack.c.l.b16 %v2835
    %v4676 = vunpack.c.h.b16 %v2835
    %v4677 = vunpack.c.l.b16 %v2836
    %v4678 = vunpack.c.h.b16 %v2836
    %v4679 = vunpack.c.l.b16 %v2837
    %v4680 = vunpack.c.h.b16 %v2837
    %v4681 = vunpack.c.l.b16 %v2838
    %v4682 = vunpack.c.h.b16 %v2838
    %v4683 = vunpack.c.l.b16 %v2839
    %v4684 = vunpack.c.h.b16 %v2839
    %v4685 = vunpack.c.l.b16 %v2840
    %v4686 = vunpack.c.l.b16 %v2841
    %v4687 = vunpack.c.h.b16 %v2841
    %v4688 = vunpack.c.l.b16 %v2842
    %v4689 = vunpack.c.h.b16 %v2842
    %v4690 = vunpack.c.l.b16 %v2843
    %v4691 = vunpack.c.h.b16 %v2843
    %v4692 = vunpack.c.l.b16 %v2844
    %v4693 = vunpack.c.h.b16 %v2844
    %v4694 = vunpack.c.l.b16 %v2845
    %v4695 = vunpack.c.h.b16 %v2845
    %v4696 = vunpack.c.l.b16 %v2846
    %v4697 = vunpack.c.l.b16 %v2847
    %v4698 = vunpack.c.h.b16 %v2847
    %v4699 = vunpack.c.l.b16 %v2848
    %v4700 = vunpack.c.h.b16 %v2848
    %v4701 = vunpack.c.l.b16 %v2849
    %v4702 = vunpack.c.h.b16 %v2849
    %v4703 = vunpack.c.l.b16 %v2850
    %v4704 = vunpack.c.h.b16 %v2850
    %v4705 = vunpack.c.l.b16 %v2851
    %v4706 = vunpack.c.h.b16 %v2851
    %v4707 = vunpack.c.l.b16 %v2852
    %v4708 = vunpack.c.l.b16 %v2853
    %v4709 = vunpack.c.h.b16 %v2853
    %v4710 = vunpack.c.l.b16 %v2854
    %v4711 = vunpack.c.h.b16 %v2854
    %v4712 = vunpack.c.l.b16 %v2855
    %v4713 = vunpack.c.h.b16 %v2855
    %v4714 = vunpack.c.l.b16 %v2856
    %v4715 = vunpack.c.h.b16 %v2856
    %v4716 = vunpack.c.l.b16 %v2857
    %v4717 = vunpack.c.h.b16 %v2857
    %v4718 = vunpack.c.l.b16 %v2858
    %v4719 = vunpack.c.l.b16 %v2859
    %v4720 = vunpack.c.h.b16 %v2859
    %v4721 = vunpack.c.l.b16 %v2860
    %v4722 = vunpack.c.h.b16 %v2860
    %v4723 = vunpack.c.l.b16 %v2861
    %v4724 = vunpack.c.h.b16 %v2861
    %v4725 = vunpack.c.l.b16 %v2862
    %v4726 = vunpack.c.h.b16 %v2862
    %v4727 = vunpack.c.l.b16 %v2863
    %v4728 = vunpack.c.h.b16 %v2863
    %v4729 = vunpack.c.l.b16 %v2864
    %v4730 = vunpack.c.l.b16 %v2865
    %v4731 = vunpack.c.h.b16 %v2865
    %v4732 = vunpack.c.l.b16 %v2866
    %v4733 = vunpack.c.h.b16 %v2866
    %v4734 = vunpack.c.l.b16 %v2867
    %v4735 = vunpack.c.h.b16 %v2867
    %v4736 = vunpack.c.l.b16 %v2868
    %v4737 = vunpack.c.h.b16 %v2868
    %v4738 = vunpack.c.l.b16 %v2869
    %v4739 = vunpack.c.h.b16 %v2869
    %v4740 = vunpack.c.l.b16 %v2870
    %v4741 = vunpack.c.l.b16 %v2871
    %v4742 = vunpack.c.h.b16 %v2871
    %v4743 = vunpack.c.l.b16 %v2872
    %v4744 = vunpack.c.h.b16 %v2872
    %v4745 = vunpack.c.l.b16 %v2873
    %v4746 = vunpack.c.h.b16 %v2873
    %v4747 = vunpack.c.l.b16 %v2874
    %v4748 = vunpack.c.h.b16 %v2874
    %v4749 = vunpack.c.l.b16 %v2875
    %v4750 = vunpack.c.h.b16 %v2875
    %v4751 = vunpack.c.l.b16 %v2876
    %v4752 = vunpack.c.l.b16 %v2877
    %v4753 = vunpack.c.h.b16 %v2877
    %v4754 = vunpack.c.l.b16 %v2878
    %v4755 = vunpack.c.h.b16 %v2878
    %v4756 = vunpack.c.l.b16 %v2879
    %v4757 = vunpack.c.h.b16 %v2879
    %v4758 = vunpack.c.l.b16 %v2880
    %v4759 = vunpack.c.h.b16 %v2880
    %v4760 = vunpack.c.l.b16 %v2881
    %v4761 = vunpack.c.h.b16 %v2881
    %v4762 = vunpack.c.l.b16 %v2882
    %v4763 = vunpack.c.l.b16 %v2883
    %v4764 = vunpack.c.h.b16 %v2883
    %v4765 = vunpack.c.l.b16 %v2884
    %v4766 = vunpack.c.h.b16 %v2884
    %v4767 = vunpack.c.l.b16 %v2885
    %v4768 = vunpack.c.h.b16 %v2885
    %v4769 = vunpack.c.l.b16 %v2886
    %v4770 = vunpack.c.h.b16 %v2886
    %v4771 = vunpack.c.l.b16 %v2887
    %v4772 = vunpack.c.h.b16 %v2887
    %v4773 = vunpack.c.l.b16 %v2888
    %v4774 = vunpack.c.l.b16 %v2889
    %v4775 = vunpack.c.h.b16 %v2889
    %v4776 = vunpack.c.l.b16 %v2890
    %v4777 = vunpack.c.h.b16 %v2890
    %v4778 = vunpack.c.l.b16 %v2891
    %v4779 = vunpack.c.h.b16 %v2891
    %v4780 = vunpack.c.l.b16 %v2892
    %v4781 = vunpack.c.h.b16 %v2892
    %v4782 = vunpack.c.l.b16 %v2893
    %v4783 = vunpack.c.h.b16 %v2893
    %v4784 = vunpack.c.l.b16 %v2894
    %v4785 = vunpack.c.l.b16 %v2895
    %v4786 = vunpack.c.h.b16 %v2895
    %v4787 = vunpack.c.l.b16 %v2896
    %v4788 = vunpack.c.h.b16 %v2896
    %v4789 = vunpack.c.l.b16 %v2897
    %v4790 = vunpack.c.h.b16 %v2897
    %v4791 = vunpack.c.l.b16 %v2898
    %v4792 = vunpack.c.h.b16 %v2898
    %v4793 = vunpack.c.l.b16 %v2899
    %v4794 = vunpack.c.h.b16 %v2899
    %v4795 = vunpack.c.l.b16 %v2900
    %v4796 = vunpack.c.l.b16 %v2901
    %v4797 = vunpack.c.h.b16 %v2901
    %v4798 = vunpack.c.l.b16 %v2902
    %v4799 = vunpack.c.h.b16 %v2902
    %v4800 = vunpack.c.l.b16 %v2903
    %v4801 = vunpack.c.h.b16 %v2903
    %v4802 = vunpack.c.l.b16 %v2904
    %v4803 = vunpack.c.h.b16 %v2904
    %v4804 = vunpack.c.l.b16 %v2905
    %v4805 = vunpack.c.h.b16 %v2905
    %v4806 = vunpack.c.l.b16 %v2906
    %v4807 = vunpack.c.l.b16 %v2907
    %v4808 = vunpack.c.h.b16 %v2907
    %v4809 = vunpack.c.l.b16 %v2908
    %v4810 = vunpack.c.h.b16 %v2908
    %v4811 = vunpack.c.l.b16 %v2909
    %v4812 = vunpack.c.h.b16 %v2909
    %v4813 = vunpack.c.l.b16 %v2910
    %v4814 = vunpack.c.h.b16 %v2910
    %v4815 = vunpack.c.l.b16 %v2911
    %v4816 = vunpack.c.h.b16 %v2911
    %v4817 = vunpack.c.l.b16 %v2912
    %v4818 = vunpack.c.l.b16 %v2913
    %v4819 = vunpack.c.h.b16 %v2913
    %v4820 = vunpack.c.l.b16 %v2914
    %v4821 = vunpack.c.h.b16 %v2914
    %v4822 = vunpack.c.l.b16 %v2915
    %v4823 = vunpack.c.h.b16 %v2915
    %v4824 = vunpack.c.l.b16 %v2916
    %v4825 = vunpack.c.h.b16 %v2916
    %v4826 = vunpack.c.l.b16 %v2917
    %v4827 = vunpack.c.h.b16 %v2917
    %v4828 = vunpack.c.l.b16 %v2918
    %v4829 = vunpack.c.l.b16 %v2919
    %v4830 = vunpack.c.h.b16 %v2919
    %v4831 = vunpack.c.l.b16 %v2920
    %v4832 = vunpack.c.h.b16 %v2920
    %v4833 = vunpack.c.l.b16 %v2921
    %v4834 = vunpack.c.h.b16 %v2921
    %v4835 = vunpack.c.l.b16 %v2922
    %v4836 = vunpack.c.h.b16 %v2922
    %v4837 = vunpack.c.l.b16 %v2923
    %v4838 = vunpack.c.h.b16 %v2923
    %v4839 = vunpack.c.l.b16 %v2924
    %v4840 = vunpack.c.l.b16 %v2925
    %v4841 = vunpack.c.h.b16 %v2925
    %v4842 = vunpack.c.l.b16 %v2926
    %v4843 = vunpack.c.h.b16 %v2926
    %v4844 = vunpack.c.l.b16 %v2927
    %v4845 = vunpack.c.h.b16 %v2927
    %v4846 = vunpack.c.l.b16 %v2928
    %v4847 = vunpack.c.h.b16 %v2928
    %v4848 = vunpack.c.l.b16 %v2929
    %v4849 = vunpack.c.h.b16 %v2929
    %v4850 = vunpack.c.l.b16 %v2930
    %v4851 = vunpack.c.l.b16 %v2931
    %v4852 = vunpack.c.h.b16 %v2931
    %v4853 = vunpack.c.l.b16 %v2932
    %v4854 = vunpack.c.h.b16 %v2932
    %v4855 = vunpack.c.l.b16 %v2933
    %v4856 = vunpack.c.h.b16 %v2933
    %v4857 = vunpack.c.l.b16 %v2934
    %v4858 = vunpack.c.h.b16 %v2934
    %v4859 = vunpack.c.l.b16 %v2935
    %v4860 = vunpack.c.h.b16 %v2935
    %v4861 = vunpack.c.l.b16 %v2936
    %v4862 = vunpack.c.l.b16 %v2937
    %v4863 = vunpack.c.h.b16 %v2937
    %v4864 = vunpack.c.l.b16 %v2938
    %v4865 = vunpack.c.h.b16 %v2938
    %v4866 = vunpack.c.l.b16 %v2939
    %v4867 = vunpack.c.h.b16 %v2939
    %v4868 = vunpack.c.l.b16 %v2940
    %v4869 = vunpack.c.h.b16 %v2940
    %v4870 = vunpack.c.l.b16 %v2941
    %v4871 = vunpack.c.h.b16 %v2941
    %v4872 = vunpack.c.l.b16 %v2942
    %v4873 = vunpack.c.l.b16 %v2943
    %v4874 = vunpack.c.h.b16 %v2943
    %v4875 = vunpack.c.l.b16 %v2944
    %v4876 = vunpack.c.h.b16 %v2944
    %v4877 = vunpack.c.l.b16 %v2945
    %v4878 = vunpack.c.h.b16 %v2945
    %v4879 = vunpack.c.l.b16 %v2946
    %v4880 = vunpack.c.h.b16 %v2946
    %v4881 = vunpack.c.l.b16 %v2947
    %v4882 = vunpack.c.h.b16 %v2947
    %v4883 = vunpack.c.l.b16 %v2948
    %v4884 = vunpack.c.l.b16 %v2949
    %v4885 = vunpack.c.h.b16 %v2949
    %v4886 = vunpack.c.l.b16 %v2950
    %v4887 = vunpack.c.h.b16 %v2950
    %v4888 = vunpack.c.l.b16 %v2951
    %v4889 = vunpack.c.h.b16 %v2951
    %v4890 = vunpack.c.l.b16 %v2952
    %v4891 = vunpack.c.h.b16 %v2952
    %v4892 = vunpack.c.l.b16 %v2953
    %v4893 = vunpack.c.h.b16 %v2953
    %v4894 = vunpack.c.l.b16 %v2954
    %v4895 = vunpack.c.l.b16 %v2955
    %v4896 = vunpack.c.h.b16 %v2955
    %v4897 = vunpack.c.l.b16 %v2956
    %v4898 = vunpack.c.h.b16 %v2956
    %v4899 = vunpack.c.l.b16 %v2957
    %v4900 = vunpack.c.h.b16 %v2957
    %v4901 = vunpack.c.l.b16 %v2958
    %v4902 = vunpack.c.h.b16 %v2958
    %v4903 = vunpack.c.l.b16 %v2959
    %v4904 = vunpack.c.h.b16 %v2959
    %v4905 = vunpack.c.l.b16 %v2960
    %v4906 = vunpack.c.l.b16 %v2961
    %v4907 = vunpack.c.h.b16 %v2961
    %v4908 = vunpack.c.l.b16 %v2962
    %v4909 = vunpack.c.h.b16 %v2962
    %v4910 = vunpack.c.l.b16 %v2963
    %v4911 = vunpack.c.h.b16 %v2963
    %v4912 = vunpack.c.l.b16 %v2964
    %v4913 = vunpack.c.h.b16 %v2964
    %v4914 = vunpack.c.l.b16 %v2965
    %v4915 = vunpack.c.h.b16 %v2965
    %v4916 = vunpack.c.l.b16 %v2966
    %v4917 = vunpack.c.l.b16 %v2967
    %v4918 = vunpack.c.h.b16 %v2967
    %v4919 = vunpack.c.l.b16 %v2968
    %v4920 = vunpack.c.h.b16 %v2968
    %v4921 = vunpack.c.l.b16 %v2969
    %v4922 = vunpack.c.h.b16 %v2969
    %v4923 = vunpack.c.l.b16 %v2970
    %v4924 = vunpack.c.h.b16 %v2970
    %v4925 = vunpack.c.l.b16 %v2971
    %v4926 = vunpack.c.h.b16 %v2971
    %v4927 = vunpack.c.l.b16 %v2972
    %v4928 = vunpack.c.l.b16 %v2973
    %v4929 = vunpack.c.h.b16 %v2973
    %v4930 = vunpack.c.l.b16 %v2974
    %v4931 = vunpack.c.h.b16 %v2974
    %v4932 = vunpack.c.l.b16 %v2975
    %v4933 = vunpack.c.h.b16 %v2975
    %v4934 = vunpack.c.l.b16 %v2976
    %v4935 = vunpack.c.h.b16 %v2976
    %v4936 = vunpack.c.l.b16 %v2977
    %v4937 = vunpack.c.h.b16 %v2977
    %v4938 = vunpack.c.l.b16 %v2978
    %v4939 = vunpack.c.l.b16 %v2979
    %v4940 = vunpack.c.h.b16 %v2979
    %v4941 = vunpack.c.l.b16 %v2980
    %v4942 = vunpack.c.h.b16 %v2980
    %v4943 = vunpack.c.l.b16 %v2981
    %v4944 = vunpack.c.h.b16 %v2981
    %v4945 = vunpack.c.l.b16 %v2982
    %v4946 = vunpack.c.h.b16 %v2982
    %v4947 = vunpack.c.l.b16 %v2983
    %v4948 = vunpack.c.h.b16 %v2983
    %v4949 = vunpack.c.l.b16 %v2984
    %v4950 = vunpack.c.l.b16 %v2985
    %v4951 = vunpack.c.h.b16 %v2985
    %v4952 = vunpack.c.l.b16 %v2986
    %v4953 = vunpack.c.h.b16 %v2986
    %v4954 = vunpack.c.l.b16 %v2987
    %v4955 = vunpack.c.h.b16 %v2987
    %v4956 = vunpack.c.l.b16 %v2988
    %v4957 = vunpack.c.h.b16 %v2988
    %v4958 = vunpack.c.l.b16 %v2989
    %v4959 = vunpack.c.h.b16 %v2989
    %v4960 = vunpack.c.l.b16 %v2990
    %v4961 = vunpack.c.l.b16 %v2991
    %v4962 = vunpack.c.h.b16 %v2991
    %v4963 = vunpack.c.l.b16 %v2992
    %v4964 = vunpack.c.h.b16 %v2992
    %v4965 = vunpack.c.l.b16 %v2993
    %v4966 = vunpack.c.h.b16 %v2993
    %v4967 = vunpack.c.l.b16 %v2994
    %v4968 = vunpack.c.h.b16 %v2994
    %v4969 = vunpack.c.l.b16 %v2995
    %v4970 = vunpack.c.h.b16 %v2995
    %v4971 = vunpack.c.l.b16 %v2996
    %v4972 = vunpack.c.l.b16 %v2997
    %v4973 = vunpack.c.h.b16 %v2997
    %v4974 = vunpack.c.l.b16 %v2998
    %v4975 = vunpack.c.h.b16 %v2998
    %v4976 = vunpack.c.l.b16 %v2999
    %v4977 = vunpack.c.h.b16 %v2999
    %v4978 = vunpack.c.l.b16 %v3000
    %v4979 = vunpack.c.h.b16 %v3000
    %v4980 = vunpack.c.l.b16 %v3001
    %v4981 = vunpack.c.h.b16 %v3001
    %v4982 = vunpack.c.l.b16 %v3002
    %v4983 = vunpack.c.l.b16 %v3003
    %v4984 = vunpack.c.h.b16 %v3003
    %v4985 = vunpack.c.l.b16 %v3004
    %v4986 = vunpack.c.h.b16 %v3004
    %v4987 = vunpack.c.l.b16 %v3005
    %v4988 = vunpack.c.h.b16 %v3005
    %v4989 = vunpack.c.l.b16 %v3006
    %v4990 = vunpack.c.h.b16 %v3006
    %v4991 = vunpack.c.l.b16 %v3007
    %v4992 = vunpack.c.h.b16 %v3007
    %v4993 = vunpack.c.l.b16 %v3008
    %v4994 = vunpack.c.l.b16 %v3009
    %v4995 = vunpack.c.h.b16 %v3009
    %v4996 = vunpack.c.l.b16 %v3010
    %v4997 = vunpack.c.h.b16 %v3010
    %v4998 = vunpack.c.l.b16 %v3011
    %v4999 = vunpack.c.h.b16 %v3011
    %v5000 = vunpack.c.l.b16 %v3012
    %v5001 = vunpack.c.h.b16 %v3012
    %v5002 = vunpack.c.l.b16 %v3013
    %v5003 = vunpack.c.h.b16 %v3013
    %v5004 = vunpack.c.l.b16 %v3014
    %v5005 = vunpack.c.l.b16 %v3015
    %v5006 = vunpack.c.h.b16 %v3015
    %v5007 = vunpack.c.l.b16 %v3016
    %v5008 = vunpack.c.h.b16 %v3016
    %v5009 = vunpack.c.l.b16 %v3017
    %v5010 = vunpack.c.h.b16 %v3017
    %v5011 = vunpack.c.l.b16 %v3018
    %v5012 = vunpack.c.h.b16 %v3018
    %v5013 = vunpack.c.l.b16 %v3019
    %v5014 = vunpack.c.h.b16 %v3019
    %v5015 = vunpack.c.l.b16 %v3020
    %v5016 = vunpack.c.l.b16 %v3021
    %v5017 = vunpack.c.h.b16 %v3021
    %v5018 = vunpack.c.l.b16 %v3022
    %v5019 = vunpack.c.h.b16 %v3022
    %v5020 = vunpack.c.l.b16 %v3023
    %v5021 = vunpack.c.h.b16 %v3023
    %v5022 = vunpack.c.l.b16 %v3024
    %v5023 = vunpack.c.h.b16 %v3024
    %v5024 = vunpack.c.l.b16 %v3025
    %v5025 = vunpack.c.h.b16 %v3025
    %v5026 = vunpack.c.l.b16 %v3026
    %v5027 = vunpack.c.l.b16 %v3027
    %v5028 = vunpack.c.h.b16 %v3027
    %v5029 = vunpack.c.l.b16 %v3028
    %v5030 = vunpack.c.h.b16 %v3028
    %v5031 = vunpack.c.l.b16 %v3029
    %v5032 = vunpack.c.h.b16 %v3029
    %v5033 = vunpack.c.l.b16 %v3030
    %v5034 = vunpack.c.h.b16 %v3030
    %v5035 = vunpack.c.l.b16 %v3031
    %v5036 = vunpack.c.h.b16 %v3031
    %v5037 = vunpack.c.l.b16 %v3032
    %v5038 = vunpack.c.l.b16 %v3033
    %v5039 = vunpack.c.h.b16 %v3033
    %v5040 = vunpack.c.l.b16 %v3034
    %v5041 = vunpack.c.h.b16 %v3034
    %v5042 = vunpack.c.l.b16 %v3035
    %v5043 = vunpack.c.h.b16 %v3035
    %v5044 = vunpack.c.l.b16 %v3036
    %v5045 = vunpack.c.h.b16 %v3036
    %v5046 = vunpack.c.l.b16 %v3037
    %v5047 = vunpack.c.h.b16 %v3037
    %v5048 = vunpack.c.l.b16 %v3038
    %v5049 = vunpack.c.l.b16 %v3039
    %v5050 = vunpack.c.h.b16 %v3039
    %v5051 = vunpack.c.l.b16 %v3040
    %v5052 = vunpack.c.h.b16 %v3040
    %v5053 = vunpack.c.l.b16 %v3041
    %v5054 = vunpack.c.h.b16 %v3041
    %v5055 = vunpack.c.l.b16 %v3042
    %v5056 = vunpack.c.h.b16 %v3042
    %v5057 = vunpack.c.l.b16 %v3043
    %v5058 = vunpack.c.h.b16 %v3043
    %v5059 = vunpack.c.l.b16 %v3044
    %v5060 = vunpack.c.l.b16 %v3045
    %v5061 = vunpack.c.h.b16 %v3045
    %v5062 = vunpack.c.l.b16 %v3046
    %v5063 = vunpack.c.h.b16 %v3046
    %v5064 = vunpack.c.l.b16 %v3047
    %v5065 = vunpack.c.h.b16 %v3047
    %v5066 = vunpack.c.l.b16 %v3048
    %v5067 = vunpack.c.h.b16 %v3048
    %v5068 = vunpack.c.l.b16 %v3049
    %v5069 = vunpack.c.h.b16 %v3049
    %v5070 = vunpack.c.l.b16 %v3050
    %v5071 = vunpack.c.l.b16 %v3051
    %v5072 = vunpack.c.h.b16 %v3051
    %v5073 = vunpack.c.l.b16 %v3052
    %v5074 = vunpack.c.h.b16 %v3052
    %v5075 = vunpack.c.l.b16 %v3053
    %v5076 = vunpack.c.h.b16 %v3053
    %v5077 = vunpack.c.l.b16 %v3054
    %v5078 = vunpack.c.h.b16 %v3054
    %v5079 = vunpack.c.l.b16 %v3055
    %v5080 = vunpack.c.h.b16 %v3055
    %v5081 = vunpack.c.l.b16 %v3056
    %v5082 = vunpack.c.l.b16 %v3057
    %v5083 = vunpack.c.h.b16 %v3057
    %v5084 = vunpack.c.l.b16 %v3058
    %v5085 = vunpack.c.h.b16 %v3058
    %v5086 = vunpack.c.l.b16 %v3059
    %v5087 = vunpack.c.h.b16 %v3059
    %v5088 = vunpack.c.l.b16 %v3060
    %v5089 = vunpack.c.h.b16 %v3060
    %v5090 = vunpack.c.l.b16 %v3061
    %v5091 = vunpack.c.h.b16 %v3061
    %v5092 = vunpack.c.l.b16 %v3062
    %v5093 = vunpack.c.l.b16 %v3063
    %v5094 = vunpack.c.h.b16 %v3063
    %v5095 = vunpack.c.l.b16 %v3064
    %v5096 = vunpack.c.h.b16 %v3064
    %v5097 = vunpack.c.l.b16 %v3065
    %v5098 = vunpack.c.h.b16 %v3065
    %v5099 = vunpack.c.l.b16 %v3066
    %v5100 = vunpack.c.h.b16 %v3066
    %v5101 = vunpack.c.l.b16 %v3067
    %v5102 = vunpack.c.h.b16 %v3067
    %v5103 = vunpack.c.l.b16 %v3068
    %v5104 = vunpack.c.l.b16 %v3069
    %v5105 = vunpack.c.h.b16 %v3069
    %v5106 = vunpack.c.l.b16 %v3070
    %v5107 = vunpack.c.h.b16 %v3070
    %v5108 = vunpack.c.l.b16 %v3071
    %v5109 = vunpack.c.h.b16 %v3071
    %v5110 = vunpack.c.l.b16 %v3072
    %v5111 = vunpack.c.h.b16 %v3072
    %v5112 = vunpack.c.l.b16 %v3073
    %v5113 = vunpack.c.h.b16 %v3073
    %v5114 = vunpack.c.l.b16 %v3074
    %v5115 = vunpack.c.l.b16 %v3075
    %v5116 = vunpack.c.h.b16 %v3075
    %v5117 = vunpack.c.l.b16 %v3076
    %v5118 = vunpack.c.h.b16 %v3076
    %v5119 = vunpack.c.l.b16 %v3077
    %v5120 = vunpack.c.h.b16 %v3077
    %v5121 = vunpack.c.l.b16 %v3078
    %v5122 = vunpack.c.h.b16 %v3078
    %v5123 = vunpack.c.l.b16 %v3079
    %v5124 = vunpack.c.h.b16 %v3079
    %v5125 = vunpack.c.l.b16 %v3080
    %v5126 = vunpack.c.l.b16 %v3081
    %v5127 = vunpack.c.h.b16 %v3081
    %v5128 = vunpack.c.l.b16 %v3082
    %v5129 = vunpack.c.h.b16 %v3082
    %v5130 = vunpack.c.l.b16 %v3083
    %v5131 = vunpack.c.h.b16 %v3083
    %v5132 = vunpack.c.l.b16 %v3084
    %v5133 = vunpack.c.h.b16 %v3084
    %v5134 = vunpack.c.l.b16 %v3085
    %v5135 = vunpack.c.h.b16 %v3085
    %v5136 = vunpack.c.l.b16 %v3086
    %v5137 = vunpack.c.l.b16 %v3087
    %v5138 = vunpack.c.h.b16 %v3087
    %v5139 = vunpack.c.l.b16 %v3088
    %v5140 = vunpack.c.h.b16 %v3088
    %v5141 = vunpack.c.l.b16 %v3089
    %v5142 = vunpack.c.h.b16 %v3089
    %v5143 = vunpack.c.l.b16 %v3090
    %v5144 = vunpack.c.h.b16 %v3090
    %v5145 = vunpack.c.l.b16 %v3091
    %v5146 = vunpack.c.h.b16 %v3091
    %v5147 = vunpack.c.l.b16 %v3092
    %v5148 = vunpack.c.l.b16 %v3093
    %v5149 = vunpack.c.h.b16 %v3093
    %v5150 = vunpack.c.l.b16 %v3094
    %v5151 = vunpack.c.h.b16 %v3094
    %v5152 = vunpack.c.l.b16 %v3095
    %v5153 = vunpack.c.h.b16 %v3095
    %v5154 = vunpack.c.l.b16 %v3096
    %v5155 = vunpack.c.h.b16 %v3096
    %v5156 = vunpack.c.l.b16 %v3097
    %v5157 = vunpack.c.h.b16 %v3097
    %v5158 = vunpack.c.l.b16 %v3098
    %v5159 = vunpack.c.l.b16 %v3099
    %v5160 = vunpack.c.h.b16 %v3099
    %v5161 = vunpack.c.l.b16 %v3100
    %v5162 = vunpack.c.h.b16 %v3100
    %v5163 = vunpack.c.l.b16 %v3101
    %v5164 = vunpack.c.h.b16 %v3101
    %v5165 = vunpack.c.l.b16 %v3102
    %v5166 = vunpack.c.h.b16 %v3102
    %v5167 = vunpack.c.l.b16 %v3103
    %v5168 = vunpack.c.h.b16 %v3103
    %v5169 = vunpack.c.l.b16 %v3104
    %v5170 = vunpack.c.l.b16 %v3105
    %v5171 = vunpack.c.h.b16 %v3105
    %v5172 = vunpack.c.l.b16 %v3106
    %v5173 = vunpack.c.h.b16 %v3106
    %v5174 = vunpack.c.l.b16 %v3107
    %v5175 = vunpack.c.h.b16 %v3107
    %v5176 = vunpack.c.l.b16 %v3108
    %v5177 = vunpack.c.h.b16 %v3108
    %v5178 = vunpack.c.l.b16 %v3109
    %v5179 = vunpack.c.h.b16 %v3109
    %v5180 = vunpack.c.l.b16 %v3110
    %v5181 = vunpack.c.l.b16 %v3111
    %v5182 = vunpack.c.h.b16 %v3111
    %v5183 = vunpack.c.l.b16 %v3112
    %v5184 = vunpack.c.h.b16 %v3112
    %v5185 = vunpack.c.l.b16 %v3113
    %v5186 = vunpack.c.h.b16 %v3113
    %v5187 = vunpack.c.l.b16 %v3114
    %v5188 = vunpack.c.h.b16 %v3114
    %v5189 = vunpack.c.l.b16 %v3115
    %v5190 = vunpack.c.h.b16 %v3115
    %v5191 = vunpack.c.l.b16 %v3116
    %v5192 = vunpack.c.l.b16 %v3117
    %v5193 = vunpack.c.h.b16 %v3117
    %v5194 = vunpack.c.l.b16 %v3118
    %v5195 = vunpack.c.h.b16 %v3118
    %v5196 = vunpack.c.l.b16 %v3119
    %v5197 = vunpack.c.h.b16 %v3119
    %v5198 = vunpack.c.l.b16 %v3120
    %v5199 = vunpack.c.h.b16 %v3120
    %v5200 = vunpack.c.l.b16 %v3121
    %v5201 = vunpack.c.h.b16 %v3121
    %v5202 = vunpack.c.l.b16 %v3122
    %v5203 = vunpack.c.l.b16 %v3123
    %v5204 = vunpack.c.h.b16 %v3123
    %v5205 = vunpack.c.l.b16 %v3124
    %v5206 = vunpack.c.h.b16 %v3124
    %v5207 = vunpack.c.l.b16 %v3125
    %v5208 = vunpack.c.h.b16 %v3125
    %v5209 = vunpack.c.l.b16 %v3126
    %v5210 = vunpack.c.h.b16 %v3126
    %v5211 = vunpack.c.l.b16 %v3127
    %v5212 = vunpack.c.h.b16 %v3127
    %v5213 = vunpack.c.l.b16 %v3128
    %v5214 = vunpack.c.l.b16 %v3129
    %v5215 = vunpack.c.h.b16 %v3129
    %v5216 = vunpack.c.l.b16 %v3130
    %v5217 = vunpack.c.h.b16 %v3130
    %v5218 = vunpack.c.l.b16 %v3131
    %v5219 = vunpack.c.h.b16 %v3131
    %v5220 = vunpack.c.l.b16 %v3132
    %v5221 = vunpack.c.h.b16 %v3132
    %v5222 = vunpack.c.l.b16 %v3133
    %v5223 = vunpack.c.h.b16 %v3133
    %v5224 = vunpack.c.l.b16 %v3134
    %v5225 = vunpack.c.l.b16 %v3135
    %v5226 = vunpack.c.h.b16 %v3135
    %v5227 = vunpack.c.l.b16 %v3136
    %v5228 = vunpack.c.h.b16 %v3136
    %v5229 = vunpack.c.l.b16 %v3137
    %v5230 = vunpack.c.h.b16 %v3137
    %v5231 = vunpack.c.l.b16 %v3138
    %v5232 = vunpack.c.h.b16 %v3138
    %v5233 = vunpack.c.l.b16 %v3139
    %v5234 = vunpack.c.h.b16 %v3139
    %v5235 = vunpack.c.l.b16 %v3140
    %v5236 = vunpack.c.l.b16 %v3141
    %v5237 = vunpack.c.h.b16 %v3141
    %v5238 = vunpack.c.l.b16 %v3142
    %v5239 = vunpack.c.h.b16 %v3142
    %v5240 = vunpack.c.l.b16 %v3143
    %v5241 = vunpack.c.h.b16 %v3143
    %v5242 = vunpack.c.l.b16 %v3144
    %v5243 = vunpack.c.h.b16 %v3144
    %v5244 = vunpack.c.l.b16 %v3145
    %v5245 = vunpack.c.h.b16 %v3145
    %v5246 = vunpack.c.l.b16 %v3146
    %v5247 = vunpack.c.l.b16 %v3147
    %v5248 = vunpack.c.h.b16 %v3147
    %v5249 = vunpack.c.l.b16 %v3148
    %v5250 = vunpack.c.h.b16 %v3148
    %v5251 = vunpack.c.l.b16 %v3149
    %v5252 = vunpack.c.h.b16 %v3149
    %v5253 = vunpack.c.l.b16 %v3150
    %v5254 = vunpack.c.h.b16 %v3150
    %v5255 = vunpack.c.l.b16 %v3151
    %v5256 = vunpack.c.h.b16 %v3151
    %v5257 = vunpack.c.l.b16 %v3152
    %v5258 = vunpack.c.l.b16 %v3153
    %v5259 = vunpack.c.h.b16 %v3153
    %v5260 = vunpack.c.l.b16 %v3154
    %v5261 = vunpack.c.h.b16 %v3154
    %v5262 = vunpack.c.l.b16 %v3155
    %v5263 = vunpack.c.h.b16 %v3155
    %v5264 = vunpack.c.l.b16 %v3156
    %v5265 = vunpack.c.h.b16 %v3156
    %v5266 = vunpack.c.l.b16 %v3157
    %v5267 = vunpack.c.h.b16 %v3157
    %v5268 = vunpack.c.l.b16 %v3158
    %v5269 = vunpack.c.l.b16 %v3159
    %v5270 = vunpack.c.h.b16 %v3159
    %v5271 = vunpack.c.l.b16 %v3160
    %v5272 = vunpack.c.h.b16 %v3160
    %v5273 = vunpack.c.l.b16 %v3161
    %v5274 = vunpack.c.h.b16 %v3161
    %v5275 = vunpack.c.l.b16 %v3162
    %v5276 = vunpack.c.h.b16 %v3162
    %v5277 = vunpack.c.l.b16 %v3163
    %v5278 = vunpack.c.h.b16 %v3163
    %v5279 = vunpack.c.l.b16 %v3164
    %v5280 = vunpack.c.l.b16 %v3165
    %v5281 = vunpack.c.h.b16 %v3165
    %v5282 = vunpack.c.l.b16 %v3166
    %v5283 = vunpack.c.h.b16 %v3166
    %v5284 = vunpack.c.l.b16 %v3167
    %v5285 = vunpack.c.h.b16 %v3167
    %v5286 = vunpack.c.l.b16 %v3168
    %v5287 = vunpack.c.h.b16 %v3168
    %v5288 = vunpack.c.l.b16 %v3169
    %v5289 = vunpack.c.h.b16 %v3169
    %v5290 = vunpack.c.l.b16 %v3170
    %v5291 = vunpack.c.l.b16 %v3171
    %v5292 = vunpack.c.h.b16 %v3171
    %v5293 = vunpack.c.l.b16 %v3172
    %v5294 = vunpack.c.h.b16 %v3172
    %v5295 = vunpack.c.l.b16 %v3173
    %v5296 = vunpack.c.h.b16 %v3173
    %v5297 = vunpack.c.l.b16 %v3174
    %v5298 = vunpack.c.h.b16 %v3174
    %v5299 = vunpack.c.l.b16 %v3175
    %v5300 = vunpack.c.h.b16 %v3175
    %v5301 = vunpack.c.l.b16 %v3176
    %v5302 = vunpack.c.l.b16 %v3177
    %v5303 = vunpack.c.h.b16 %v3177
    %v5304 = vunpack.c.l.b16 %v3178
    %v5305 = vunpack.c.h.b16 %v3178
    %v5306 = vunpack.c.l.b16 %v3179
    %v5307 = vunpack.c.h.b16 %v3179
    %v5308 = vunpack.c.l.b16 %v3180
    %v5309 = vunpack.c.h.b16 %v3180
    %v5310 = vunpack.c.l.b16 %v3181
    %v5311 = vunpack.c.h.b16 %v3181
    %v5312 = vunpack.c.l.b16 %v3182
    %v5313 = vunpack.c.l.b16 %v3183
    %v5314 = vunpack.c.h.b16 %v3183
    %v5315 = vunpack.c.l.b16 %v3184
    %v5316 = vunpack.c.h.b16 %v3184
    %v5317 = vunpack.c.l.b16 %v3185
    %v5318 = vunpack.c.h.b16 %v3185
    %v5319 = vunpack.c.l.b16 %v3186
    %v5320 = vunpack.c.h.b16 %v3186
    %v5321 = vunpack.c.l.b16 %v3187
    %v5322 = vunpack.c.h.b16 %v3187
    %v5323 = vunpack.c.l.b16 %v3188
    %v5324 = vunpack.c.l.b16 %v3189
    %v5325 = vunpack.c.h.b16 %v3189
    %v5326 = vunpack.c.l.b16 %v3190
    %v5327 = vunpack.c.h.b16 %v3190
    %v5328 = vunpack.c.l.b16 %v3191
    %v5329 = vunpack.c.h.b16 %v3191
    %v5330 = vunpack.c.l.b16 %v3192
    %v5331 = vunpack.c.h.b16 %v3192
    %v5332 = vunpack.c.l.b16 %v3193
    %v5333 = vunpack.c.h.b16 %v3193
    %v5334 = vunpack.c.l.b16 %v3194
    %v5335 = vunpack.c.l.b16 %v3195
    %v5336 = vunpack.c.h.b16 %v3195
    %v5337 = vunpack.c.l.b16 %v3196
    %v5338 = vunpack.c.h.b16 %v3196
    %v5339 = vunpack.c.l.b16 %v3197
    %v5340 = vunpack.c.h.b16 %v3197
    %v5341 = vunpack.c.l.b16 %v3198
    %v5342 = vunpack.c.h.b16 %v3198
    %v5343 = vunpack.c.l.b16 %v3199
    %v5344 = vunpack.c.h.b16 %v3199
    %v5345 = vunpack.c.l.b16 %v3200
    %v5346 = vunpack.c.l.b16 %v3201
    %v5347 = vunpack.c.h.b16 %v3201
    %v5348 = vunpack.c.l.b16 %v3202
    %v5349 = vunpack.c.h.b16 %v3202
    %v5350 = vunpack.c.l.b16 %v3203
    %v5351 = vunpack.c.h.b16 %v3203
    %v5352 = vunpack.c.l.b16 %v3204
    %v5353 = vunpack.c.h.b16 %v3204
    %v5354 = vunpack.c.l.b16 %v3205
    %v5355 = vunpack.c.h.b16 %v3205
    %v5356 = vunpack.c.l.b16 %v3206
    %v5357 = vunpack.c.l.b16 %v3207
    %v5358 = vunpack.c.h.b16 %v3207
    %v5359 = vunpack.c.l.b16 %v3208
    %v5360 = vunpack.c.h.b16 %v3208
    %v5361 = vunpack.c.l.b16 %v3209
    %v5362 = vunpack.c.h.b16 %v3209
    %v5363 = vunpack.c.l.b16 %v3210
    %v5364 = vunpack.c.h.b16 %v3210
    %v5365 = vunpack.c.l.b16 %v3211
    %v5366 = vunpack.c.h.b16 %v3211
    %v5367 = vunpack.c.l.b16 %v3212
    %v5368 = vunpack.c.l.b16 %v3213
    %v5369 = vunpack.c.h.b16 %v3213
    %v5370 = vunpack.c.l.b16 %v3214
    %v5371 = vunpack.c.h.b16 %v3214
    %v5372 = vunpack.c.l.b16 %v3215
    %v5373 = vunpack.c.h.b16 %v3215
    %v5374 = vunpack.c.l.b16 %v3216
    %v5375 = vunpack.c.h.b16 %v3216
    %v5376 = vunpack.c.l.b16 %v3217
    %v5377 = vunpack.c.h.b16 %v3217
    %v5378 = vunpack.c.l.b16 %v3218
    %v5379 = vunpack.c.l.b16 %v3219
    %v5380 = vunpack.c.h.b16 %v3219
    %v5381 = vunpack.c.l.b16 %v3220
    %v5382 = vunpack.c.h.b16 %v3220
    %v5383 = vunpack.c.l.b16 %v3221
    %v5384 = vunpack.c.h.b16 %v3221
    %v5385 = vunpack.c.l.b16 %v3222
    %v5386 = vunpack.c.h.b16 %v3222
    %v5387 = vunpack.c.l.b16 %v3223
    %v5388 = vunpack.c.h.b16 %v3223
    %v5389 = vunpack.c.l.b16 %v3224
    %v5390 = vunpack.c.l.b16 %v3225
    %v5391 = vunpack.c.h.b16 %v3225
    %v5392 = vunpack.c.l.b16 %v3226
    %v5393 = vunpack.c.h.b16 %v3226
    %v5394 = vunpack.c.l.b16 %v3227
    %v5395 = vunpack.c.h.b16 %v3227
    %v5396 = vunpack.c.l.b16 %v3228
    %v5397 = vunpack.c.h.b16 %v3228
    %v5398 = vunpack.c.l.b16 %v3229
    %v5399 = vunpack.c.h.b16 %v3229
    %v5400 = vunpack.c.l.b16 %v3230
    %v5401 = vunpack.c.l.b16 %v3231
    %v5402 = vunpack.c.h.b16 %v3231
    %v5403 = vunpack.c.l.b16 %v3232
    %v5404 = vunpack.c.h.b16 %v3232
    %v5405 = vunpack.c.l.b16 %v3233
    %v5406 = vunpack.c.h.b16 %v3233
    %v5407 = vunpack.c.l.b16 %v3234
    %v5408 = vunpack.c.h.b16 %v3234
    %v5409 = vunpack.c.l.b16 %v3235
    %v5410 = vunpack.c.h.b16 %v3235
    %v5411 = vunpack.c.l.b16 %v3236
    %v5412 = vunpack.c.l.b16 %v3237
    %v5413 = vunpack.c.h.b16 %v3237
    %v5414 = vunpack.c.l.b16 %v3238
    %v5415 = vunpack.c.h.b16 %v3238
    %v5416 = vunpack.c.l.b16 %v3239
    %v5417 = vunpack.c.h.b16 %v3239
    %v5418 = vunpack.c.l.b16 %v3240
    %v5419 = vunpack.c.h.b16 %v3240
    %v5420 = vunpack.c.l.b16 %v3241
    %v5421 = vunpack.c.h.b16 %v3241
    %v5422 = vunpack.c.l.b16 %v3242
    %v5423 = vunpack.c.l.b16 %v3243
    %v5424 = vunpack.c.h.b16 %v3243
    %v5425 = vunpack.c.l.b16 %v3244
    %v5426 = vunpack.c.h.b16 %v3244
    %v5427 = vunpack.c.l.b16 %v3245
    %v5428 = vunpack.c.h.b16 %v3245
    %v5429 = vunpack.c.l.b16 %v3246
    %v5430 = vunpack.c.h.b16 %v3246
    %v5431 = vunpack.c.l.b16 %v3247
    %v5432 = vunpack.c.h.b16 %v3247
    %v5433 = vunpack.c.l.b16 %v3248
    %v5434 = vunpack.c.l.b16 %v3249
    %v5435 = vunpack.c.h.b16 %v3249
    %v5436 = vunpack.c.l.b16 %v3250
    %v5437 = vunpack.c.h.b16 %v3250
    %v5438 = vunpack.c.l.b16 %v3251
    %v5439 = vunpack.c.h.b16 %v3251
    %v5440 = vunpack.c.l.b16 %v3252
    %v5441 = vunpack.c.h.b16 %v3252
    %v5442 = vunpack.c.l.b16 %v3253
    %v5443 = vunpack.c.h.b16 %v3253
    %v5444 = vunpack.c.l.b16 %v3254
    %v5445 = vunpack.c.l.b16 %v3255
    %v5446 = vunpack.c.h.b16 %v3255
    %v5447 = vunpack.c.l.b16 %v3256
    %v5448 = vunpack.c.h.b16 %v3256
    %v5449 = vunpack.c.l.b16 %v3257
    %v5450 = vunpack.c.h.b16 %v3257
    %v5451 = vunpack.c.l.b16 %v3258
    %v5452 = vunpack.c.h.b16 %v3258
    %v5453 = vunpack.c.l.b16 %v3259
    %v5454 = vunpack.c.h.b16 %v3259
    %v5455 = vunpack.c.l.b16 %v3260
    %v5456 = vunpack.c.l.b16 %v3261
    %v5457 = vunpack.c.h.b16 %v3261
    %v5458 = vunpack.c.l.b16 %v3262
    %v5459 = vunpack.c.h.b16 %v3262
    %v5460 = vunpack.c.l.b16 %v3263
    %v5461 = vunpack.c.h.b16 %v3263
    %v5462 = vunpack.c.l.b16 %v3264
    %v5463 = vunpack.c.h.b16 %v3264
    %v5464 = vunpack.c.l.b16 %v3265
    %v5465 = vunpack.c.h.b16 %v3265
    %v5466 = vunpack.c.l.b16 %v3266
    %v5467 = vunpack.c.l.b16 %v3267
    %v5468 = vunpack.c.h.b16 %v3267
    %v5469 = vunpack.c.l.b16 %v3268
    %v5470 = vunpack.c.h.b16 %v3268
    %v5471 = vunpack.c.l.b16 %v3269
    %v5472 = vunpack.c.h.b16 %v3269
    %v5473 = vunpack.c.l.b16 %v3270
    %v5474 = vunpack.c.h.b16 %v3270
    %v5475 = vunpack.c.l.b16 %v3271
    %v5476 = vunpack.c.h.b16 %v3271
    %v5477 = vunpack.c.l.b16 %v3272
    %v5478 = vunpack.c.l.b16 %v3273
    %v5479 = vunpack.c.h.b16 %v3273
    %v5480 = vunpack.c.l.b16 %v3274
    %v5481 = vunpack.c.h.b16 %v3274
    %v5482 = vunpack.c.l.b16 %v3275
    %v5483 = vunpack.c.h.b16 %v3275
    %v5484 = vunpack.c.l.b16 %v3276
    %v5485 = vunpack.c.h.b16 %v3276
    %v5486 = vunpack.c.l.b16 %v3277
    %v5487 = vunpack.c.h.b16 %v3277
    %v5488 = vunpack.c.l.b16 %v3278
    %v5489 = vunpack.c.l.b16 %v3279
    %v5490 = vunpack.c.h.b16 %v3279
    %v5491 = vunpack.c.l.b16 %v3280
    %v5492 = vunpack.c.h.b16 %v3280
    %v5493 = vunpack.c.l.b16 %v3281
    %v5494 = vunpack.c.h.b16 %v3281
    %v5495 = vunpack.c.l.b16 %v3282
    %v5496 = vunpack.c.h.b16 %v3282
    %v5497 = vunpack.c.l.b16 %v3283
    %v5498 = vunpack.c.h.b16 %v3283
    %v5499 = vunpack.c.l.b16 %v3284
    %v5500 = vunpack.c.l.b16 %v3285
    %v5501 = vunpack.c.h.b16 %v3285
    %v5502 = vunpack.c.l.b16 %v3286
    %v5503 = vunpack.c.h.b16 %v3286
    %v5504 = vunpack.c.l.b16 %v3287
    %v5505 = vunpack.c.h.b16 %v3287
    %v5506 = vunpack.c.l.b16 %v3288
    %v5507 = vunpack.c.h.b16 %v3288
    %v5508 = vunpack.c.l.b16 %v3289
    %v5509 = vunpack.c.h.b16 %v3289
    %v5510 = vunpack.c.l.b16 %v3290
    %v5511 = vunpack.c.l.b16 %v3291
    %v5512 = vunpack.c.h.b16 %v3291
    %v5513 = vunpack.c.l.b16 %v3292
    %v5514 = vunpack.c.h.b16 %v3292
    %v5515 = vunpack.c.l.b16 %v3293
    %v5516 = vunpack.c.h.b16 %v3293
    %v5517 = vunpack.c.l.b16 %v3294
    %v5518 = vunpack.c.h.b16 %v3294
    %v5519 = vunpack.c.l.b16 %v3295
    %v5520 = vunpack.c.h.b16 %v3295
    %v5521 = vunpack.c.l.b16 %v3296
    %v5522 = vunpack.c.l.b16 %v3297
    %v5523 = vunpack.c.h.b16 %v3297
    %v5524 = vunpack.c.l.b16 %v3298
    %v5525 = vunpack.c.h.b16 %v3298
    %v5526 = vunpack.c.l.b16 %v3299
    %v5527 = vunpack.c.h.b16 %v3299
    %v5528 = vunpack.c.l.b16 %v3300
    %v5529 = vunpack.c.h.b16 %v3300
    %v5530 = vunpack.c.l.b16 %v3301
    %v5531 = vunpack.c.h.b16 %v3301
    %v5532 = vunpack.c.l.b16 %v3302
    %v5533 = vunpack.c.l.b16 %v3303
    %v5534 = vunpack.c.h.b16 %v3303
    %v5535 = vunpack.c.l.b16 %v3304
    %v5536 = vunpack.c.h.b16 %v3304
    %v5537 = vunpack.c.l.b16 %v3305
    %v5538 = vunpack.c.h.b16 %v3305
    %v5539 = vunpack.c.l.b16 %v3306
    %v5540 = vunpack.c.h.b16 %v3306
    %v5541 = vunpack.c.l.b16 %v3307
    %v5542 = vunpack.c.h.b16 %v3307
    %v5543 = vunpack.c.l.b16 %v3308
    %v5544 = vpack.c.b16 %v4147, %v4136
    %v5545 = vpack.c.b16 %v4148, %v4137
    %v5546 = vpack.c.b16 %v4149, %v4138
    %v5547 = vpack.c.b16 %v4150, %v4139
    %v5548 = vpack.c.b16 %v4151, %v4140
    %v5549 = vpack.c.b16 %v4152, %v4141
    %v5550 = vpack.c.b16 %v4153, %v4142
    %v5551 = vpack.c.b16 %v4154, %v4143
    %v5552 = vpack.c.b16 %v4155, %v4144
    %v5553 = vpack.c.b16 %v4156, %v4145
    %v5554 = vpack.c.b16 %v4157, %v4146
    %v5555 = vpack.c.b16 %v4169, %v4158
    %v5556 = vpack.c.b16 %v4170, %v4159
    %v5557 = vpack.c.b16 %v4171, %v4160
    %v5558 = vpack.c.b16 %v4172, %v4161
    %v5559 = vpack.c.b16 %v4173, %v4162
    %v5560 = vpack.c.b16 %v4174, %v4163
    %v5561 = vpack.c.b16 %v4175, %v4164
    %v5562 = vpack.c.b16 %v4176, %v4165
    %v5563 = vpack.c.b16 %v4177, %v4166
    %v5564 = vpack.c.b16 %v4178, %v4167
    %v5565 = vpack.c.b16 %v4179, %v4168
    %v5566 = vpack.c.b16 %v4191, %v4180
    %v5567 = vpack.c.b16 %v4192, %v4181
    %v5568 = vpack.c.b16 %v4193, %v4182
    %v5569 = vpack.c.b16 %v4194, %v4183
    %v5570 = vpack.c.b16 %v4195, %v4184
    %v5571 = vpack.c.b16 %v4196, %v4185
    %v5572 = vpack.c.b16 %v4197, %v4186
    %v5573 = vpack.c.b16 %v4198, %v4187
    %v5574 = vpack.c.b16 %v4199, %v4188
    %v5575 = vpack.c.b16 %v4200, %v4189
    %v5576 = vpack.c.b16 %v4201, %v4190
    %v5577 = vpack.c.b16 %v4213, %v4202
    %v5578 = vpack.c.b16 %v4214, %v4203
    %v5579 = vpack.c.b16 %v4215, %v4204
    %v5580 = vpack.c.b16 %v4216, %v4205
    %v5581 = vpack.c.b16 %v4217, %v4206
    %v5582 = vpack.c.b16 %v4218, %v4207
    %v5583 = vpack.c.b16 %v4219, %v4208
    %v5584 = vpack.c.b16 %v4220, %v4209
    %v5585 = vpack.c.b16 %v4221, %v4210
    %v5586 = vpack.c.b16 %v4222, %v4211
    %v5587 = vpack.c.b16 %v4223, %v4212
    %v5588 = vpack.c.b16 %v4235, %v4224
    %v5589 = vpack.c.b16 %v4236, %v4225
    %v5590 = vpack.c.b16 %v4237, %v4226
    %v5591 = vpack.c.b16 %v4238, %v4227
    %v5592 = vpack.c.b16 %v4239, %v4228
    %v5593 = vpack.c.b16 %v4240, %v4229
    %v5594 = vpack.c.b16 %v4241, %v4230
    %v5595 = vpack.c.b16 %v4242, %v4231
    %v5596 = vpack.c.b16 %v4243, %v4232
    %v5597 = vpack.c.b16 %v4244, %v4233
    %v5598 = vpack.c.b16 %v4245, %v4234
    %v5599 = vpack.c.b16 %v4257, %v4246
    %v5600 = vpack.c.b16 %v4258, %v4247
    %v5601 = vpack.c.b16 %v4259, %v4248
    %v5602 = vpack.c.b16 %v4260, %v4249
    %v5603 = vpack.c.b16 %v4261, %v4250
    %v5604 = vpack.c.b16 %v4262, %v4251
    %v5605 = vpack.c.b16 %v4263, %v4252
    %v5606 = vpack.c.b16 %v4264, %v4253
    %v5607 = vpack.c.b16 %v4265, %v4254
    %v5608 = vpack.c.b16 %v4266, %v4255
    %v5609 = vpack.c.b16 %v4267, %v4256
    %v5610 = vpack.c.b16 %v4279, %v4268
    %v5611 = vpack.c.b16 %v4280, %v4269
    %v5612 = vpack.c.b16 %v4281, %v4270
    %v5613 = vpack.c.b16 %v4282, %v4271
    %v5614 = vpack.c.b16 %v4283, %v4272
    %v5615 = vpack.c.b16 %v4284, %v4273
    %v5616 = vpack.c.b16 %v4285, %v4274
    %v5617 = vpack.c.b16 %v4286, %v4275
    %v5618 = vpack.c.b16 %v4287, %v4276
    %v5619 = vpack.c.b16 %v4288, %v4277
    %v5620 = vpack.c.b16 %v4289, %v4278
    %v5621 = vpack.c.b16 %v4301, %v4290
    %v5622 = vpack.c.b16 %v4302, %v4291
    %v5623 = vpack.c.b16 %v4303, %v4292
    %v5624 = vpack.c.b16 %v4304, %v4293
    %v5625 = vpack.c.b16 %v4305, %v4294
    %v5626 = vpack.c.b16 %v4306, %v4295
    %v5627 = vpack.c.b16 %v4307, %v4296
    %v5628 = vpack.c.b16 %v4308, %v4297
    %v5629 = vpack.c.b16 %v4309, %v4298
    %v5630 = vpack.c.b16 %v4310, %v4299
    %v5631 = vpack.c.b16 %v4311, %v4300
    %v5632 = vpack.c.b16 %v4323, %v4312
    %v5633 = vpack.c.b16 %v4324, %v4313
    %v5634 = vpack.c.b16 %v4325, %v4314
    %v5635 = vpack.c.b16 %v4326, %v4315
    %v5636 = vpack.c.b16 %v4327, %v4316
    %v5637 = vpack.c.b16 %v4328, %v4317
    %v5638 = vpack.c.b16 %v4329, %v4318
    %v5639 = vpack.c.b16 %v4330, %v4319
    %v5640 = vpack.c.b16 %v4331, %v4320
    %v5641 = vpack.c.b16 %v4332, %v4321
    %v5642 = vpack.c.b16 %v4333, %v4322
    %v5643 = vpack.c.b16 %v4345, %v4334
    %v5644 = vpack.c.b16 %v4346, %v4335
    %v5645 = vpack.c.b16 %v4347, %v4336
    %v5646 = vpack.c.b16 %v4348, %v4337
    %v5647 = vpack.c.b16 %v4349, %v4338
    %v5648 = vpack.c.b16 %v4350, %v4339
    %v5649 = vpack.c.b16 %v4351, %v4340
    %v5650 = vpack.c.b16 %v4352, %v4341
    %v5651 = vpack.c.b16 %v4353, %v4342
    %v5652 = vpack.c.b16 %v4354, %v4343
    %v5653 = vpack.c.b16 %v4355, %v4344
    %v5654 = vpack.c.b16 %v4367, %v4356
    %v5655 = vpack.c.b16 %v4368, %v4357
    %v5656 = vpack.c.b16 %v4369, %v4358
    %v5657 = vpack.c.b16 %v4370, %v4359
    %v5658 = vpack.c.b16 %v4371, %v4360
    %v5659 = vpack.c.b16 %v4372, %v4361
    %v5660 = vpack.c.b16 %v4373, %v4362
    %v5661 = vpack.c.b16 %v4374, %v4363
    %v5662 = vpack.c.b16 %v4375, %v4364
    %v5663 = vpack.c.b16 %v4376, %v4365
    %v5664 = vpack.c.b16 %v4377, %v4366
    %v5665 = vpack.c.b16 %v4389, %v4378
    %v5666 = vpack.c.b16 %v4390, %v4379
    %v5667 = vpack.c.b16 %v4391, %v4380
    %v5668 = vpack.c.b16 %v4392, %v4381
    %v5669 = vpack.c.b16 %v4393, %v4382
    %v5670 = vpack.c.b16 %v4394, %v4383
    %v5671 = vpack.c.b16 %v4395, %v4384
    %v5672 = vpack.c.b16 %v4396, %v4385
    %v5673 = vpack.c.b16 %v4397, %v4386
    %v5674 = vpack.c.b16 %v4398, %v4387
    %v5675 = vpack.c.b16 %v4399, %v4388
    %v5676 = vpack.c.b16 %v4411, %v4400
    %v5677 = vpack.c.b16 %v4412, %v4401
    %v5678 = vpack.c.b16 %v4413, %v4402
    %v5679 = vpack.c.b16 %v4414, %v4403
    %v5680 = vpack.c.b16 %v4415, %v4404
    %v5681 = vpack.c.b16 %v4416, %v4405
    %v5682 = vpack.c.b16 %v4417, %v4406
    %v5683 = vpack.c.b16 %v4418, %v4407
    %v5684 = vpack.c.b16 %v4419, %v4408
    %v5685 = vpack.c.b16 %v4420, %v4409
    %v5686 = vpack.c.b16 %v4421, %v4410
    %v5687 = vpack.c.b16 %v4433, %v4422
    %v5688 = vpack.c.b16 %v4434, %v4423
    %v5689 = vpack.c.b16 %v4435, %v4424
    %v5690 = vpack.c.b16 %v4436, %v4425
    %v5691 = vpack.c.b16 %v4437, %v4426
    %v5692 = vpack.c.b16 %v4438, %v4427
    %v5693 = vpack.c.b16 %v4439, %v4428
    %v5694 = vpack.c.b16 %v4440, %v4429
    %v5695 = vpack.c.b16 %v4441, %v4430
    %v5696 = vpack.c.b16 %v4442, %v4431
    %v5697 = vpack.c.b16 %v4443, %v4432
    %v5698 = vpack.c.b16 %v4455, %v4444
    %v5699 = vpack.c.b16 %v4456, %v4445
    %v5700 = vpack.c.b16 %v4457, %v4446
    %v5701 = vpack.c.b16 %v4458, %v4447
    %v5702 = vpack.c.b16 %v4459, %v4448
    %v5703 = vpack.c.b16 %v4460, %v4449
    %v5704 = vpack.c.b16 %v4461, %v4450
    %v5705 = vpack.c.b16 %v4462, %v4451
    %v5706 = vpack.c.b16 %v4463, %v4452
    %v5707 = vpack.c.b16 %v4464, %v4453
    %v5708 = vpack.c.b16 %v4465, %v4454
    %v5709 = vpack.c.b16 %v4477, %v4466
    %v5710 = vpack.c.b16 %v4478, %v4467
    %v5711 = vpack.c.b16 %v4479, %v4468
    %v5712 = vpack.c.b16 %v4480, %v4469
    %v5713 = vpack.c.b16 %v4481, %v4470
    %v5714 = vpack.c.b16 %v4482, %v4471
    %v5715 = vpack.c.b16 %v4483, %v4472
    %v5716 = vpack.c.b16 %v4484, %v4473
    %v5717 = vpack.c.b16 %v4485, %v4474
    %v5718 = vpack.c.b16 %v4486, %v4475
    %v5719 = vpack.c.b16 %v4487, %v4476
    %v5720 = vpack.c.b16 %v4499, %v4488
    %v5721 = vpack.c.b16 %v4500, %v4489
    %v5722 = vpack.c.b16 %v4501, %v4490
    %v5723 = vpack.c.b16 %v4502, %v4491
    %v5724 = vpack.c.b16 %v4503, %v4492
    %v5725 = vpack.c.b16 %v4504, %v4493
    %v5726 = vpack.c.b16 %v4505, %v4494
    %v5727 = vpack.c.b16 %v4506, %v4495
    %v5728 = vpack.c.b16 %v4507, %v4496
    %v5729 = vpack.c.b16 %v4508, %v4497
    %v5730 = vpack.c.b16 %v4509, %v4498
    %v5731 = vpack.c.b16 %v4521, %v4510
    %v5732 = vpack.c.b16 %v4522, %v4511
    %v5733 = vpack.c.b16 %v4523, %v4512
    %v5734 = vpack.c.b16 %v4524, %v4513
    %v5735 = vpack.c.b16 %v4525, %v4514
    %v5736 = vpack.c.b16 %v4526, %v4515
    %v5737 = vpack.c.b16 %v4527, %v4516
    %v5738 = vpack.c.b16 %v4528, %v4517
    %v5739 = vpack.c.b16 %v4529, %v4518
    %v5740 = vpack.c.b16 %v4530, %v4519
    %v5741 = vpack.c.b16 %v4531, %v4520
    %v5742 = vpack.c.b16 %v4543, %v4532
    %v5743 = vpack.c.b16 %v4544, %v4533
    %v5744 = vpack.c.b16 %v4545, %v4534
    %v5745 = vpack.c.b16 %v4546, %v4535
    %v5746 = vpack.c.b16 %v4547, %v4536
    %v5747 = vpack.c.b16 %v4548, %v4537
    %v5748 = vpack.c.b16 %v4549, %v4538
    %v5749 = vpack.c.b16 %v4550, %v4539
    %v5750 = vpack.c.b16 %v4551, %v4540
    %v5751 = vpack.c.b16 %v4552, %v4541
    %v5752 = vpack.c.b16 %v4553, %v4542
    %v5753 = vpack.c.b16 %v4565, %v4554
    %v5754 = vpack.c.b16 %v4566, %v4555
    %v5755 = vpack.c.b16 %v4567, %v4556
    %v5756 = vpack.c.b16 %v4568, %v4557
    %v5757 = vpack.c.b16 %v4569, %v4558
    %v5758 = vpack.c.b16 %v4570, %v4559
    %v5759 = vpack.c.b16 %v4571, %v4560
    %v5760 = vpack.c.b16 %v4572, %v4561
    %v5761 = vpack.c.b16 %v4573, %v4562
    %v5762 = vpack.c.b16 %v4574, %v4563
    %v5763 = vpack.c.b16 %v4575, %v4564
    %v5764 = vpack.c.b16 %v4587, %v4576
    %v5765 = vpack.c.b16 %v4588, %v4577
    %v5766 = vpack.c.b16 %v4589, %v4578
    %v5767 = vpack.c.b16 %v4590, %v4579
    %v5768 = vpack.c.b16 %v4591, %v4580
    %v5769 = vpack.c.b16 %v4592, %v4581
    %v5770 = vpack.c.b16 %v4593, %v4582
    %v5771 = vpack.c.b16 %v4594, %v4583
    %v5772 = vpack.c.b16 %v4595, %v4584
    %v5773 = vpack.c.b16 %v4596, %v4585
    %v5774 = vpack.c.b16 %v4597, %v4586
    %v5775 = vpack.c.b16 %v4609, %v4598
    %v5776 = vpack.c.b16 %v4610, %v4599
    %v5777 = vpack.c.b16 %v4611, %v4600
    %v5778 = vpack.c.b16 %v4612, %v4601
    %v5779 = vpack.c.b16 %v4613, %v4602
    %v5780 = vpack.c.b16 %v4614, %v4603
    %v5781 = vpack.c.b16 %v4615, %v4604
    %v5782 = vpack.c.b16 %v4616, %v4605
    %v5783 = vpack.c.b16 %v4617, %v4606
    %v5784 = vpack.c.b16 %v4618, %v4607
    %v5785 = vpack.c.b16 %v4619, %v4608
    %v5786 = vpack.c.b16 %v4631, %v4620
    %v5787 = vpack.c.b16 %v4632, %v4621
    %v5788 = vpack.c.b16 %v4633, %v4622
    %v5789 = vpack.c.b16 %v4634, %v4623
    %v5790 = vpack.c.b16 %v4635, %v4624
    %v5791 = vpack.c.b16 %v4636, %v4625
    %v5792 = vpack.c.b16 %v4637, %v4626
    %v5793 = vpack.c.b16 %v4638, %v4627
    %v5794 = vpack.c.b16 %v4639, %v4628
    %v5795 = vpack.c.b16 %v4640, %v4629
    %v5796 = vpack.c.b16 %v4641, %v4630
    %v5797 = vpack.c.b16 %v4653, %v4642
    %v5798 = vpack.c.b16 %v4654, %v4643
    %v5799 = vpack.c.b16 %v4655, %v4644
    %v5800 = vpack.c.b16 %v4656, %v4645
    %v5801 = vpack.c.b16 %v4657, %v4646
    %v5802 = vpack.c.b16 %v4658, %v4647
    %v5803 = vpack.c.b16 %v4659, %v4648
    %v5804 = vpack.c.b16 %v4660, %v4649
    %v5805 = vpack.c.b16 %v4661, %v4650
    %v5806 = vpack.c.b16 %v4662, %v4651
    %v5807 = vpack.c.b16 %v4663, %v4652
    %v5808 = vpack.c.b16 %v4675, %v4664
    %v5809 = vpack.c.b16 %v4676, %v4665
    %v5810 = vpack.c.b16 %v4677, %v4666
    %v5811 = vpack.c.b16 %v4678, %v4667
    %v5812 = vpack.c.b16 %v4679, %v4668
    %v5813 = vpack.c.b16 %v4680, %v4669
    %v5814 = vpack.c.b16 %v4681, %v4670
    %v5815 = vpack.c.b16 %v4682, %v4671
    %v5816 = vpack.c.b16 %v4683, %v4672
    %v5817 = vpack.c.b16 %v4684, %v4673
    %v5818 = vpack.c.b16 %v4685, %v4674
    %v5819 = vpack.c.b16 %v4697, %v4686
    %v5820 = vpack.c.b16 %v4698, %v4687
    %v5821 = vpack.c.b16 %v4699, %v4688
    %v5822 = vpack.c.b16 %v4700, %v4689
    %v5823 = vpack.c.b16 %v4701, %v4690
    %v5824 = vpack.c.b16 %v4702, %v4691
    %v5825 = vpack.c.b16 %v4703, %v4692
    %v5826 = vpack.c.b16 %v4704, %v4693
    %v5827 = vpack.c.b16 %v4705, %v4694
    %v5828 = vpack.c.b16 %v4706, %v4695
    %v5829 = vpack.c.b16 %v4707, %v4696
    %v5830 = vpack.c.b16 %v4719, %v4708
    %v5831 = vpack.c.b16 %v4720, %v4709
    %v5832 = vpack.c.b16 %v4721, %v4710
    %v5833 = vpack.c.b16 %v4722, %v4711
    %v5834 = vpack.c.b16 %v4723, %v4712
    %v5835 = vpack.c.b16 %v4724, %v4713
    %v5836 = vpack.c.b16 %v4725, %v4714
    %v5837 = vpack.c.b16 %v4726, %v4715
    %v5838 = vpack.c.b16 %v4727, %v4716
    %v5839 = vpack.c.b16 %v4728, %v4717
    %v5840 = vpack.c.b16 %v4729, %v4718
    %v5841 = vpack.c.b16 %v4741, %v4730
    %v5842 = vpack.c.b16 %v4742, %v4731
    %v5843 = vpack.c.b16 %v4743, %v4732
    %v5844 = vpack.c.b16 %v4744, %v4733
    %v5845 = vpack.c.b16 %v4745, %v4734
    %v5846 = vpack.c.b16 %v4746, %v4735
    %v5847 = vpack.c.b16 %v4747, %v4736
    %v5848 = vpack.c.b16 %v4748, %v4737
    %v5849 = vpack.c.b16 %v4749, %v4738
    %v5850 = vpack.c.b16 %v4750, %v4739
    %v5851 = vpack.c.b16 %v4751, %v4740
    %v5852 = vpack.c.b16 %v4763, %v4752
    %v5853 = vpack.c.b16 %v4764, %v4753
    %v5854 = vpack.c.b16 %v4765, %v4754
    %v5855 = vpack.c.b16 %v4766, %v4755
    %v5856 = vpack.c.b16 %v4767, %v4756
    %v5857 = vpack.c.b16 %v4768, %v4757
    %v5858 = vpack.c.b16 %v4769, %v4758
    %v5859 = vpack.c.b16 %v4770, %v4759
    %v5860 = vpack.c.b16 %v4771, %v4760
    %v5861 = vpack.c.b16 %v4772, %v4761
    %v5862 = vpack.c.b16 %v4773, %v4762
    %v5863 = vpack.c.b16 %v4785, %v4774
    %v5864 = vpack.c.b16 %v4786, %v4775
    %v5865 = vpack.c.b16 %v4787, %v4776
    %v5866 = vpack.c.b16 %v4788, %v4777
    %v5867 = vpack.c.b16 %v4789, %v4778
    %v5868 = vpack.c.b16 %v4790, %v4779
    %v5869 = vpack.c.b16 %v4791, %v4780
    %v5870 = vpack.c.b16 %v4792, %v4781
    %v5871 = vpack.c.b16 %v4793, %v4782
    %v5872 = vpack.c.b16 %v4794, %v4783
    %v5873 = vpack.c.b16 %v4795, %v4784
    %v5874 = vpack.c.b16 %v4807, %v4796
    %v5875 = vpack.c.b16 %v4808, %v4797
    %v5876 = vpack.c.b16 %v4809, %v4798
    %v5877 = vpack.c.b16 %v4810, %v4799
    %v5878 = vpack.c.b16 %v4811, %v4800
    %v5879 = vpack.c.b16 %v4812, %v4801
    %v5880 = vpack.c.b16 %v4813, %v4802
    %v5881 = vpack.c.b16 %v4814, %v4803
    %v5882 = vpack.c.b16 %v4815, %v4804
    %v5883 = vpack.c.b16 %v4816, %v4805
    %v5884 = vpack.c.b16 %v4817, %v4806
    %v5885 = vpack.c.b16 %v4829, %v4818
    %v5886 = vpack.c.b16 %v4830, %v4819
    %v5887 = vpack.c.b16 %v4831, %v4820
    %v5888 = vpack.c.b16 %v4832, %v4821
    %v5889 = vpack.c.b16 %v4833, %v4822
    %v5890 = vpack.c.b16 %v4834, %v4823
    %v5891 = vpack.c.b16 %v4835, %v4824
    %v5892 = vpack.c.b16 %v4836, %v4825
    %v5893 = vpack.c.b16 %v4837, %v4826
    %v5894 = vpack.c.b16 %v4838, %v4827
    %v5895 = vpack.c.b16 %v4839, %v4828
    %v5896 = vpack.c.b16 %v4851, %v4840
    %v5897 = vpack.c.b16 %v4852, %v4841
    %v5898 = vpack.c.b16 %v4853, %v4842
    %v5899 = vpack.c.b16 %v4854, %v4843
    %v5900 = vpack.c.b16 %v4855, %v4844
    %v5901 = vpack.c.b16 %v4856, %v4845
    %v5902 = vpack.c.b16 %v4857, %v4846
    %v5903 = vpack.c.b16 %v4858, %v4847
    %v5904 = vpack.c.b16 %v4859, %v4848
    %v5905 = vpack.c.b16 %v4860, %v4849
    %v5906 = vpack.c.b16 %v4861, %v4850
    %v5907 = vpack.c.b16 %v4873, %v4862
    %v5908 = vpack.c.b16 %v4874, %v4863
    %v5909 = vpack.c.b16 %v4875, %v4864
    %v5910 = vpack.c.b16 %v4876, %v4865
    %v5911 = vpack.c.b16 %v4877, %v4866
    %v5912 = vpack.c.b16 %v4878, %v4867
    %v5913 = vpack.c.b16 %v4879, %v4868
    %v5914 = vpack.c.b16 %v4880, %v4869
    %v5915 = vpack.c.b16 %v4881, %v4870
    %v5916 = vpack.c.b16 %v4882, %v4871
    %v5917 = vpack.c.b16 %v4883, %v4872
    %v5918 = vpack.c.b16 %v4895, %v4884
    %v5919 = vpack.c.b16 %v4896, %v4885
    %v5920 = vpack.c.b16 %v4897, %v4886
    %v5921 = vpack.c.b16 %v4898, %v4887
    %v5922 = vpack.c.b16 %v4899, %v4888
    %v5923 = vpack.c.b16 %v4900, %v4889
    %v5924 = vpack.c.b16 %v4901, %v4890
    %v5925 = vpack.c.b16 %v4902, %v4891
    %v5926 = vpack.c.b16 %v4903, %v4892
    %v5927 = vpack.c.b16 %v4904, %v4893
    %v5928 = vpack.c.b16 %v4905, %v4894
    %v5929 = vpack.c.b16 %v4917, %v4906
    %v5930 = vpack.c.b16 %v4918, %v4907
    %v5931 = vpack.c.b16 %v4919, %v4908
    %v5932 = vpack.c.b16 %v4920, %v4909
    %v5933 = vpack.c.b16 %v4921, %v4910
    %v5934 = vpack.c.b16 %v4922, %v4911
    %v5935 = vpack.c.b16 %v4923, %v4912
    %v5936 = vpack.c.b16 %v4924, %v4913
    %v5937 = vpack.c.b16 %v4925, %v4914
    %v5938 = vpack.c.b16 %v4926, %v4915
    %v5939 = vpack.c.b16 %v4927, %v4916
    %v5940 = vpack.c.b16 %v4939, %v4928
    %v5941 = vpack.c.b16 %v4940, %v4929
    %v5942 = vpack.c.b16 %v4941, %v4930
    %v5943 = vpack.c.b16 %v4942, %v4931
    %v5944 = vpack.c.b16 %v4943, %v4932
    %v5945 = vpack.c.b16 %v4944, %v4933
    %v5946 = vpack.c.b16 %v4945, %v4934
    %v5947 = vpack.c.b16 %v4946, %v4935
    %v5948 = vpack.c.b16 %v4947, %v4936
    %v5949 = vpack.c.b16 %v4948, %v4937
    %v5950 = vpack.c.b16 %v4949, %v4938
    %v5951 = vpack.c.b16 %v4961, %v4950
    %v5952 = vpack.c.b16 %v4962, %v4951
    %v5953 = vpack.c.b16 %v4963, %v4952
    %v5954 = vpack.c.b16 %v4964, %v4953
    %v5955 = vpack.c.b16 %v4965, %v4954
    %v5956 = vpack.c.b16 %v4966, %v4955
    %v5957 = vpack.c.b16 %v4967, %v4956
    %v5958 = vpack.c.b16 %v4968, %v4957
    %v5959 = vpack.c.b16 %v4969, %v4958
    %v5960 = vpack.c.b16 %v4970, %v4959
    %v5961 = vpack.c.b16 %v4971, %v4960
    %v5962 = vpack.c.b16 %v4983, %v4972
    %v5963 = vpack.c.b16 %v4984, %v4973
    %v5964 = vpack.c.b16 %v4985, %v4974
    %v5965 = vpack.c.b16 %v4986, %v4975
    %v5966 = vpack.c.b16 %v4987, %v4976
    %v5967 = vpack.c.b16 %v4988, %v4977
    %v5968 = vpack.c.b16 %v4989, %v4978
    %v5969 = vpack.c.b16 %v4990, %v4979
    %v5970 = vpack.c.b16 %v4991, %v4980
    %v5971 = vpack.c.b16 %v4992, %v4981
    %v5972 = vpack.c.b16 %v4993, %v4982
    %v5973 = vpack.c.b16 %v5005, %v4994
    %v5974 = vpack.c.b16 %v5006, %v4995
    %v5975 = vpack.c.b16 %v5007, %v4996
    %v5976 = vpack.c.b16 %v5008, %v4997
    %v5977 = vpack.c.b16 %v5009, %v4998
    %v5978 = vpack.c.b16 %v5010, %v4999
    %v5979 = vpack.c.b16 %v5011, %v5000
    %v5980 = vpack.c.b16 %v5012, %v5001
    %v5981 = vpack.c.b16 %v5013, %v5002
    %v5982 = vpack.c.b16 %v5014, %v5003
    %v5983 = vpack.c.b16 %v5015, %v5004
    %v5984 = vpack.c.b16 %v5027, %v5016
    %v5985 = vpack.c.b16 %v5028, %v5017
    %v5986 = vpack.c.b16 %v5029, %v5018
    %v5987 = vpack.c.b16 %v5030, %v5019
    %v5988 = vpack.c.b16 %v5031, %v5020
    %v5989 = vpack.c.b16 %v5032, %v5021
    %v5990 = vpack.c.b16 %v5033, %v5022
    %v5991 = vpack.c.b16 %v5034, %v5023
    %v5992 = vpack.c.b16 %v5035, %v5024
    %v5993 = vpack.c.b16 %v5036, %v5025
    %v5994 = vpack.c.b16 %v5037, %v5026
    %v5995 = vpack.c.b16 %v5049, %v5038
    %v5996 = vpack.c.b16 %v5050, %v5039
    %v5997 = vpack.c.b16 %v5051, %v5040
    %v5998 = vpack.c.b16 %v5052, %v5041
    %v5999 = vpack.c.b16 %v5053, %v5042
    %v6000 = vpack.c.b16 %v5054, %v5043
    %v6001 = vpack.c.b16 %v5055, %v5044
    %v6002 = vpack.c.b16 %v5056, %v5045
    %v6003 = vpack.c.b16 %v5057, %v5046
    %v6004 = vpack.c.b16 %v5058, %v5047
    %v6005 = vpack.c.b16 %v5059, %v5048
    %v6006 = vpack.c.b16 %v5071, %v5060
    %v6007 = vpack.c.b16 %v5072, %v5061
    %v6008 = vpack.c.b16 %v5073, %v5062
    %v6009 = vpack.c.b16 %v5074, %v5063
    %v6010 = vpack.c.b16 %v5075, %v5064
    %v6011 = vpack.c.b16 %v5076, %v5065
    %v6012 = vpack.c.b16 %v5077, %v5066
    %v6013 = vpack.c.b16 %v5078, %v5067
    %v6014 = vpack.c.b16 %v5079, %v5068
    %v6015 = vpack.c.b16 %v5080, %v5069
    %v6016 = vpack.c.b16 %v5081, %v5070
    %v6017 = vpack.c.b16 %v5093, %v5082
    %v6018 = vpack.c.b16 %v5094, %v5083
    %v6019 = vpack.c.b16 %v5095, %v5084
    %v6020 = vpack.c.b16 %v5096, %v5085
    %v6021 = vpack.c.b16 %v5097, %v5086
    %v6022 = vpack.c.b16 %v5098, %v5087
    %v6023 = vpack.c.b16 %v5099, %v5088
    %v6024 = vpack.c.b16 %v5100, %v5089
    %v6025 = vpack.c.b16 %v5101, %v5090
    %v6026 = vpack.c.b16 %v5102, %v5091
    %v6027 = vpack.c.b16 %v5103, %v5092
    %v6028 = vpack.c.b16 %v5115, %v5104
    %v6029 = vpack.c.b16 %v5116, %v5105
    %v6030 = vpack.c.b16 %v5117, %v5106
    %v6031 = vpack.c.b16 %v5118, %v5107
    %v6032 = vpack.c.b16 %v5119, %v5108
    %v6033 = vpack.c.b16 %v5120, %v5109
    %v6034 = vpack.c.b16 %v5121, %v5110
    %v6035 = vpack.c.b16 %v5122, %v5111
    %v6036 = vpack.c.b16 %v5123, %v5112
    %v6037 = vpack.c.b16 %v5124, %v5113
    %v6038 = vpack.c.b16 %v5125, %v5114
    %v6039 = vpack.c.b16 %v5137, %v5126
    %v6040 = vpack.c.b16 %v5138, %v5127
    %v6041 = vpack.c.b16 %v5139, %v5128
    %v6042 = vpack.c.b16 %v5140, %v5129
    %v6043 = vpack.c.b16 %v5141, %v5130
    %v6044 = vpack.c.b16 %v5142, %v5131
    %v6045 = vpack.c.b16 %v5143, %v5132
    %v6046 = vpack.c.b16 %v5144, %v5133
    %v6047 = vpack.c.b16 %v5145, %v5134
    %v6048 = vpack.c.b16 %v5146, %v5135
    %v6049 = vpack.c.b16 %v5147, %v5136
    %v6050 = vpack.c.b16 %v5159, %v5148
    %v6051 = vpack.c.b16 %v5160, %v5149
    %v6052 = vpack.c.b16 %v5161, %v5150
    %v6053 = vpack.c.b16 %v5162, %v5151
    %v6054 = vpack.c.b16 %v5163, %v5152
    %v6055 = vpack.c.b16 %v5164, %v5153
    %v6056 = vpack.c.b16 %v5165, %v5154
    %v6057 = vpack.c.b16 %v5166, %v5155
    %v6058 = vpack.c.b16 %v5167, %v5156
    %v6059 = vpack.c.b16 %v5168, %v5157
    %v6060 = vpack.c.b16 %v5169, %v5158
    %v6061 = vpack.c.b16 %v5181, %v5170
    %v6062 = vpack.c.b16 %v5182, %v5171
    %v6063 = vpack.c.b16 %v5183, %v5172
    %v6064 = vpack.c.b16 %v5184, %v5173
    %v6065 = vpack.c.b16 %v5185, %v5174
    %v6066 = vpack.c.b16 %v5186, %v5175
    %v6067 = vpack.c.b16 %v5187, %v5176
    %v6068 = vpack.c.b16 %v5188, %v5177
    %v6069 = vpack.c.b16 %v5189, %v5178
    %v6070 = vpack.c.b16 %v5190, %v5179
    %v6071 = vpack.c.b16 %v5191, %v5180
    %v6072 = vpack.c.b16 %v5203, %v5192
    %v6073 = vpack.c.b16 %v5204, %v5193
    %v6074 = vpack.c.b16 %v5205, %v5194
    %v6075 = vpack.c.b16 %v5206, %v5195
    %v6076 = vpack.c.b16 %v5207, %v5196
    %v6077 = vpack.c.b16 %v5208, %v5197
    %v6078 = vpack.c.b16 %v5209, %v5198
    %v6079 = vpack.c.b16 %v5210, %v5199
    %v6080 = vpack.c.b16 %v5211, %v5200
    %v6081 = vpack.c.b16 %v5212, %v5201
    %v6082 = vpack.c.b16 %v5213, %v5202
    %v6083 = vpack.c.b16 %v5225, %v5214
    %v6084 = vpack.c.b16 %v5226, %v5215
    %v6085 = vpack.c.b16 %v5227, %v5216
    %v6086 = vpack.c.b16 %v5228, %v5217
    %v6087 = vpack.c.b16 %v5229, %v5218
    %v6088 = vpack.c.b16 %v5230, %v5219
    %v6089 = vpack.c.b16 %v5231, %v5220
    %v6090 = vpack.c.b16 %v5232, %v5221
    %v6091 = vpack.c.b16 %v5233, %v5222
    %v6092 = vpack.c.b16 %v5234, %v5223
    %v6093 = vpack.c.b16 %v5235, %v5224
    %v6094 = vpack.c.b16 %v5247, %v5236
    %v6095 = vpack.c.b16 %v5248, %v5237
    %v6096 = vpack.c.b16 %v5249, %v5238
    %v6097 = vpack.c.b16 %v5250, %v5239
    %v6098 = vpack.c.b16 %v5251, %v5240
    %v6099 = vpack.c.b16 %v5252, %v5241
    %v6100 = vpack.c.b16 %v5253, %v5242
    %v6101 = vpack.c.b16 %v5254, %v5243
    %v6102 = vpack.c.b16 %v5255, %v5244
    %v6103 = vpack.c.b16 %v5256, %v5245
    %v6104 = vpack.c.b16 %v5257, %v5246
    %v6105 = vpack.c.b16 %v5269, %v5258
    %v6106 = vpack.c.b16 %v5270, %v5259
    %v6107 = vpack.c.b16 %v5271, %v5260
    %v6108 = vpack.c.b16 %v5272, %v5261
    %v6109 = vpack.c.b16 %v5273, %v5262
    %v6110 = vpack.c.b16 %v5274, %v5263
    %v6111 = vpack.c.b16 %v5275, %v5264
    %v6112 = vpack.c.b16 %v5276, %v5265
    %v6113 = vpack.c.b16 %v5277, %v5266
    %v6114 = vpack.c.b16 %v5278, %v5267
    %v6115 = vpack.c.b16 %v5279, %v5268
    %v6116 = vpack.c.b16 %v5291, %v5280
    %v6117 = vpack.c.b16 %v5292, %v5281
    %v6118 = vpack.c.b16 %v5293, %v5282
    %v6119 = vpack.c.b16 %v5294, %v5283
    %v6120 = vpack.c.b16 %v5295, %v5284
    %v6121 = vpack.c.b16 %v5296, %v5285
    %v6122 = vpack.c.b16 %v5297, %v5286
    %v6123 = vpack.c.b16 %v5298, %v5287
    %v6124 = vpack.c.b16 %v5299, %v5288
    %v6125 = vpack.c.b16 %v5300, %v5289
    %v6126 = vpack.c.b16 %v5301, %v5290
    %v6127 = vpack.c.b16 %v5313, %v5302
    %v6128 = vpack.c.b16 %v5314, %v5303
    %v6129 = vpack.c.b16 %v5315, %v5304
    %v6130 = vpack.c.b16 %v5316, %v5305
    %v6131 = vpack.c.b16 %v5317, %v5306
    %v6132 = vpack.c.b16 %v5318, %v5307
    %v6133 = vpack.c.b16 %v5319, %v5308
    %v6134 = vpack.c.b16 %v5320, %v5309
    %v6135 = vpack.c.b16 %v5321, %v5310
    %v6136 = vpack.c.b16 %v5322, %v5311
    %v6137 = vpack.c.b16 %v5323, %v5312
    %v6138 = vpack.c.b16 %v5335, %v5324
    %v6139 = vpack.c.b16 %v5336, %v5325
    %v6140 = vpack.c.b16 %v5337, %v5326
    %v6141 = vpack.c.b16 %v5338, %v5327
    %v6142 = vpack.c.b16 %v5339, %v5328
    %v6143 = vpack.c.b16 %v5340, %v5329
    %v6144 = vpack.c.b16 %v5341, %v5330
    %v6145 = vpack.c.b16 %v5342, %v5331
    %v6146 = vpack.c.b16 %v5343, %v5332
    %v6147 = vpack.c.b16 %v5344, %v5333
    %v6148 = vpack.c.b16 %v5345, %v5334
    %v6149 = vpack.c.b16 %v5357, %v5346
    %v6150 = vpack.c.b16 %v5358, %v5347
    %v6151 = vpack.c.b16 %v5359, %v5348
    %v6152 = vpack.c.b16 %v5360, %v5349
    %v6153 = vpack.c.b16 %v5361, %v5350
    %v6154 = vpack.c.b16 %v5362, %v5351
    %v6155 = vpack.c.b16 %v5363, %v5352
    %v6156 = vpack.c.b16 %v5364, %v5353
    %v6157 = vpack.c.b16 %v5365, %v5354
    %v6158 = vpack.c.b16 %v5366, %v5355
    %v6159 = vpack.c.b16 %v5367, %v5356
    %v6160 = vpack.c.b16 %v5379, %v5368
    %v6161 = vpack.c.b16 %v5380, %v5369
    %v6162 = vpack.c.b16 %v5381, %v5370
    %v6163 = vpack.c.b16 %v5382, %v5371
    %v6164 = vpack.c.b16 %v5383, %v5372
    %v6165 = vpack.c.b16 %v5384, %v5373
    %v6166 = vpack.c.b16 %v5385, %v5374
    %v6167 = vpack.c.b16 %v5386, %v5375
    %v6168 = vpack.c.b16 %v5387, %v5376
    %v6169 = vpack.c.b16 %v5388, %v5377
    %v6170 = vpack.c.b16 %v5389, %v5378
    %v6171 = vpack.c.b16 %v5401, %v5390
    %v6172 = vpack.c.b16 %v5402, %v5391
    %v6173 = vpack.c.b16 %v5403, %v5392
    %v6174 = vpack.c.b16 %v5404, %v5393
    %v6175 = vpack.c.b16 %v5405, %v5394
    %v6176 = vpack.c.b16 %v5406, %v5395
    %v6177 = vpack.c.b16 %v5407, %v5396
    %v6178 = vpack.c.b16 %v5408, %v5397
    %v6179 = vpack.c.b16 %v5409, %v5398
    %v6180 = vpack.c.b16 %v5410, %v5399
    %v6181 = vpack.c.b16 %v5411, %v5400
    %v6182 = vpack.c.b16 %v5423, %v5412
    %v6183 = vpack.c.b16 %v5424, %v5413
    %v6184 = vpack.c.b16 %v5425, %v5414
    %v6185 = vpack.c.b16 %v5426, %v5415
    %v6186 = vpack.c.b16 %v5427, %v5416
    %v6187 = vpack.c.b16 %v5428, %v5417
    %v6188 = vpack.c.b16 %v5429, %v5418
    %v6189 = vpack.c.b16 %v5430, %v5419
    %v6190 = vpack.c.b16 %v5431, %v5420
    %v6191 = vpack.c.b16 %v5432, %v5421
    %v6192 = vpack.c.b16 %v5433, %v5422
    %v6193 = vpack.c.b16 %v5445, %v5434
    %v6194 = vpack.c.b16 %v5446, %v5435
    %v6195 = vpack.c.b16 %v5447, %v5436
    %v6196 = vpack.c.b16 %v5448, %v5437
    %v6197 = vpack.c.b16 %v5449, %v5438
    %v6198 = vpack.c.b16 %v5450, %v5439
    %v6199 = vpack.c.b16 %v5451, %v5440
    %v6200 = vpack.c.b16 %v5452, %v5441
    %v6201 = vpack.c.b16 %v5453, %v5442
    %v6202 = vpack.c.b16 %v5454, %v5443
    %v6203 = vpack.c.b16 %v5455, %v5444
    %v6204 = vpack.c.b16 %v5467, %v5456
    %v6205 = vpack.c.b16 %v5468, %v5457
    %v6206 = vpack.c.b16 %v5469, %v5458
    %v6207 = vpack.c.b16 %v5470, %v5459
    %v6208 = vpack.c.b16 %v5471, %v5460
    %v6209 = vpack.c.b16 %v5472, %v5461
    %v6210 = vpack.c.b16 %v5473, %v5462
    %v6211 = vpack.c.b16 %v5474, %v5463
    %v6212 = vpack.c.b16 %v5475, %v5464
    %v6213 = vpack.c.b16 %v5476, %v5465
    %v6214 = vpack.c.b16 %v5477, %v5466
    %v6215 = vpack.c.b16 %v5489, %v5478
    %v6216 = vpack.c.b16 %v5490, %v5479
    %v6217 = vpack.c.b16 %v5491, %v5480
    %v6218 = vpack.c.b16 %v5492, %v5481
    %v6219 = vpack.c.b16 %v5493, %v5482
    %v6220 = vpack.c.b16 %v5494, %v5483
    %v6221 = vpack.c.b16 %v5495, %v5484
    %v6222 = vpack.c.b16 %v5496, %v5485
    %v6223 = vpack.c.b16 %v5497, %v5486
    %v6224 = vpack.c.b16 %v5498, %v5487
    %v6225 = vpack.c.b16 %v5499, %v5488
    %v6226 = vpack.c.b16 %v5511, %v5500
    %v6227 = vpack.c.b16 %v5512, %v5501
    %v6228 = vpack.c.b16 %v5513, %v5502
    %v6229 = vpack.c.b16 %v5514, %v5503
    %v6230 = vpack.c.b16 %v5515, %v5504
    %v6231 = vpack.c.b16 %v5516, %v5505
    %v6232 = vpack.c.b16 %v5517, %v5506
    %v6233 = vpack.c.b16 %v5518, %v5507
    %v6234 = vpack.c.b16 %v5519, %v5508
    %v6235 = vpack.c.b16 %v5520, %v5509
    %v6236 = vpack.c.b16 %v5521, %v5510
    %v6237 = vpack.c.b16 %v5533, %v5522
    %v6238 = vpack.c.b16 %v5534, %v5523
    %v6239 = vpack.c.b16 %v5535, %v5524
    %v6240 = vpack.c.b16 %v5536, %v5525
    %v6241 = vpack.c.b16 %v5537, %v5526
    %v6242 = vpack.c.b16 %v5538, %v5527
    %v6243 = vpack.c.b16 %v5539, %v5528
    %v6244 = vpack.c.b16 %v5540, %v5529
    %v6245 = vpack.c.b16 %v5541, %v5530
    %v6246 = vpack.c.b16 %v5542, %v5531
    %v6247 = vpack.c.b16 %v5543, %v5532
    %6952 = vmatprep.subr.bf16.mxu0 %v5545
    %6953 = vmatpush1.bf16.msra.mxu0 %v5544
    %6954 = vmatprep.subr.bf16.mxu0 %v5556
    %6955 = vmatpush1.bf16.msra.mxu0 %v5555
    %6956 = vmatprep.subr.bf16.mxu0 %v5567
    %6957 = vmatpush1.bf16.msra.mxu0 %v5566
    %6958 = vmatprep.subr.bf16.mxu0 %v5578
    %6959 = vmatpush1.bf16.msra.mxu0 %v5577
    %6960 = vmatprep.subr.bf16.mxu0 %v5589
    %6961 = vmatpush1.bf16.msra.mxu0 %v5588
    %6962 = vmatprep.subr.bf16.mxu0 %v5600
    %6963 = vmatpush1.bf16.msra.mxu0 %v5599
    %6964 = vmatprep.subr.bf16.mxu0 %v5611
    %6965 = vmatpush1.bf16.msra.mxu0 %v5610
    %6966 = vmatprep.subr.bf16.mxu0 %v5622
    %6967 = vmatpush1.bf16.msra.mxu0 %v5621
    %6968 = vmatprep.subr.bf16.mxu0 %v5633
    %6969 = vmatpush1.bf16.msra.mxu0 %v5632
    %6970 = vmatprep.subr.bf16.mxu0 %v5644
    %6971 = vmatpush1.bf16.msra.mxu0 %v5643
    %6972 = vmatprep.subr.bf16.mxu0 %v5655
    %6973 = vmatpush1.bf16.msra.mxu0 %v5654
    %6974 = vmatprep.subr.bf16.mxu0 %v5666
    %6975 = vmatpush1.bf16.msra.mxu0 %v5665
    %6976 = vmatprep.subr.bf16.mxu0 %v5677
    %6977 = vmatpush1.bf16.msra.mxu0 %v5676
    %6978 = vmatprep.subr.bf16.mxu0 %v5688
    %6979 = vmatpush1.bf16.msra.mxu0 %v5687
    %6980 = vmatprep.subr.bf16.mxu0 %v5699
    %6981 = vmatpush1.bf16.msra.mxu0 %v5698
    %6982 = vmatprep.subr.bf16.mxu0 %v5710
    %6983 = vmatpush1.bf16.msra.mxu0 %v5709
    %6984 = vmatprep.mubr.bf16.mxu0 %v2534
    %6985 = vmatmul.mubr.bf16.gmra.mrb[0].mxu0 %v2533
    %v6986 = vpop.f32.mrb[0].mxu0
    %v6987 = vadd.f32 %v3316, %v6986
    %v6988 = vpop.f32.mrb[0].mxu0
    %v6989 = vadd.f32 %v3320, %v6988
    %v6990 = vpop.f32.mrb[0].mxu0
    %v6991 = vpop.f32.mrb[0].mxu0
    %6992 = vdwg.mxu0
    %6993 = vmatprep.subr.bf16.mxu0 %v5721
    %6994 = vmatpush1.bf16.msra.mxu0 %v5720
    %6995 = vmatprep.subr.bf16.mxu0 %v5732
    %6996 = vmatpush1.bf16.msra.mxu0 %v5731
    %6997 = vmatprep.subr.bf16.mxu0 %v5743
    %6998 = vmatpush1.bf16.msra.mxu0 %v5742
    %6999 = vmatprep.subr.bf16.mxu0 %v5754
    %7000 = vmatpush1.bf16.msra.mxu0 %v5753
    %7001 = vmatprep.subr.bf16.mxu0 %v5765
    %7002 = vmatpush1.bf16.msra.mxu0 %v5764
    %7003 = vmatprep.subr.bf16.mxu0 %v5776
    %7004 = vmatpush1.bf16.msra.mxu0 %v5775
    %7005 = vmatprep.subr.bf16.mxu0 %v5787
    %7006 = vmatpush1.bf16.msra.mxu0 %v5786
    %7007 = vmatprep.subr.bf16.mxu0 %v5798
    %7008 = vmatpush1.bf16.msra.mxu0 %v5797
    %7009 = vmatprep.subr.bf16.mxu0 %v5809
    %7010 = vmatpush1.bf16.msra.mxu0 %v5808
    %7011 = vmatprep.subr.bf16.mxu0 %v5820
    %7012 = vmatpush1.bf16.msra.mxu0 %v5819
    %7013 = vmatprep.subr.bf16.mxu0 %v5831
    %7014 = vmatpush1.bf16.msra.mxu0 %v5830
    %7015 = vmatprep.subr.bf16.mxu0 %v5842
    %7016 = vmatpush1.bf16.msra.mxu0 %v5841
    %7017 = vmatprep.subr.bf16.mxu0 %v5853
    %7018 = vmatpush1.bf16.msra.mxu0 %v5852
    %7019 = vmatprep.subr.bf16.mxu0 %v5864
    %7020 = vmatpush1.bf16.msra.mxu0 %v5863
    %7021 = vmatprep.subr.bf16.mxu0 %v5875
    %7022 = vmatpush1.bf16.msra.mxu0 %v5874
    %7023 = vmatprep.subr.bf16.mxu0 %v5886
    %7024 = vmatpush1.bf16.msra.mxu0 %v5885
    %7025 = vmatprep.mubr.bf16.mxu0 %v2536
    %7026 = vmatmul.mubr.bf16.gmra.mrb[0].mxu0 %v2535
    %v7027 = vpop.f32.mrb[0].mxu0
    %v7028 = vadd.f32 %v6987, %v7027
    %v7029 = vpop.f32.mrb[0].mxu0
    %v7030 = vadd.f32 %v6989, %v7029
    %v7031 = vpop.f32.mrb[0].mxu0
    %v7032 = vpop.f32.mrb[0].mxu0
    %7033 = vdwg.mxu0
    %7034 = vmatprep.subr.bf16.mxu0 %v5897
    %7035 = vmatpush1.bf16.msra.mxu0 %v5896
    %7036 = vmatprep.subr.bf16.mxu0 %v5908
    %7037 = vmatpush1.bf16.msra.mxu0 %v5907
    %7038 = vmatprep.subr.bf16.mxu0 %v5919
    %7039 = vmatpush1.bf16.msra.mxu0 %v5918
    %7040 = vmatprep.subr.bf16.mxu0 %v5930
    %7041 = vmatpush1.bf16.msra.mxu0 %v5929
    %7042 = vmatprep.subr.bf16.mxu0 %v5941
    %7043 = vmatpush1.bf16.msra.mxu0 %v5940
    %7044 = vmatprep.subr.bf16.mxu0 %v5952
    %7045 = vmatpush1.bf16.msra.mxu0 %v5951
    %7046 = vmatprep.subr.bf16.mxu0 %v5963
    %7047 = vmatpush1.bf16.msra.mxu0 %v5962
    %7048 = vmatprep.subr.bf16.mxu0 %v5974
    %7049 = vmatpush1.bf16.msra.mxu0 %v5973
    %7050 = vmatprep.subr.bf16.mxu0 %v5985
    %7051 = vmatpush1.bf16.msra.mxu0 %v5984
    %7052 = vmatprep.subr.bf16.mxu0 %v5996
    %7053 = vmatpush1.bf16.msra.mxu0 %v5995
    %7054 = vmatprep.subr.bf16.mxu0 %v6007
    %7055 = vmatpush1.bf16.msra.mxu0 %v6006
    %7056 = vmatprep.subr.bf16.mxu0 %v6018
    %7057 = vmatpush1.bf16.msra.mxu0 %v6017
    %7058 = vmatprep.subr.bf16.mxu0 %v6029
    %7059 = vmatpush1.bf16.msra.mxu0 %v6028
    %7060 = vmatprep.subr.bf16.mxu0 %v6040
    %7061 = vmatpush1.bf16.msra.mxu0 %v6039
    %7062 = vmatprep.subr.bf16.mxu0 %v6051
    %7063 = vmatpush1.bf16.msra.mxu0 %v6050
    %7064 = vmatprep.subr.bf16.mxu0 %v6062
    %7065 = vmatpush1.bf16.msra.mxu0 %v6061
    %7066 = vmatprep.mubr.bf16.mxu0 %v2538
    %7067 = vmatmul.mubr.bf16.gmra.mrb[0].mxu0 %v2537
    %v7068 = vpop.f32.mrb[0].mxu0
    %v7069 = vadd.f32 %v7028, %v7068
    %v7070 = vpop.f32.mrb[0].mxu0
    %v7071 = vadd.f32 %v7030, %v7070
    %v7072 = vpop.f32.mrb[0].mxu0
    %v7073 = vpop.f32.mrb[0].mxu0
    %7074 = vdwg.mxu0
    %7075 = vmatprep.subr.bf16.mxu0 %v6073
    %7076 = vmatpush1.bf16.msra.mxu0 %v6072
    %7077 = vmatprep.subr.bf16.mxu0 %v6084
    %7078 = vmatpush1.bf16.msra.mxu0 %v6083
    %7079 = vmatprep.subr.bf16.mxu0 %v6095
    %7080 = vmatpush1.bf16.msra.mxu0 %v6094
    %7081 = vmatprep.subr.bf16.mxu0 %v6106
    %7082 = vmatpush1.bf16.msra.mxu0 %v6105
    %7083 = vmatprep.subr.bf16.mxu0 %v6117
    %7084 = vmatpush1.bf16.msra.mxu0 %v6116
    %7085 = vmatprep.subr.bf16.mxu0 %v6128
    %7086 = vmatpush1.bf16.msra.mxu0 %v6127
    %7087 = vmatprep.subr.bf16.mxu0 %v6139
    %7088 = vmatpush1.bf16.msra.mxu0 %v6138
    %7089 = vmatprep.subr.bf16.mxu0 %v6150
    %7090 = vmatpush1.bf16.msra.mxu0 %v6149
    %7091 = vmatprep.subr.bf16.mxu0 %v6161
    %7092 = vmatpush1.bf16.msra.mxu0 %v6160
    %7093 = vmatprep.subr.bf16.mxu0 %v6172
    %7094 = vmatpush1.bf16.msra.mxu0 %v6171
    %7095 = vmatprep.subr.bf16.mxu0 %v6183
    %7096 = vmatpush1.bf16.msra.mxu0 %v6182
    %7097 = vmatprep.subr.bf16.mxu0 %v6194
    %7098 = vmatpush1.bf16.msra.mxu0 %v6193
    %7099 = vmatprep.subr.bf16.mxu0 %v6205
    %7100 = vmatpush1.bf16.msra.mxu0 %v6204
    %7101 = vmatprep.subr.bf16.mxu0 %v6216
    %7102 = vmatpush1.bf16.msra.mxu0 %v6215
    %7103 = vmatprep.subr.bf16.mxu0 %v6227
    %7104 = vmatpush1.bf16.msra.mxu0 %v6226
    %7105 = vmatprep.subr.bf16.mxu0 %v6238
    %7106 = vmatpush1.bf16.msra.mxu0 %v6237
    %7107 = vmatprep.mubr.bf16.mxu0 %v2540
    %7108 = vmatmul.mubr.bf16.gmra.mrb[0].mxu0 %v2539
    %v7109 = vpop.f32.mrb[0].mxu0
    %v7110 = vadd.f32 %v7069, %v7109
    %v7111 = vpop.f32.mrb[0].mxu0
    %v7112 = vadd.f32 %v7071, %v7111
    %v7113 = vpop.f32.mrb[0].mxu0
    %v7114 = vpop.f32.mrb[0].mxu0
    %7115 = vdwg.mxu0
    %7116 = vmatprep.subr.bf16.mxu0 %v5547
    %7117 = vmatpush1.bf16.msra.mxu0 %v5546
    %7118 = vmatprep.subr.bf16.mxu0 %v5558
    %7119 = vmatpush1.bf16.msra.mxu0 %v5557
    %7120 = vmatprep.subr.bf16.mxu0 %v5569
    %7121 = vmatpush1.bf16.msra.mxu0 %v5568
    %7122 = vmatprep.subr.bf16.mxu0 %v5580
    %7123 = vmatpush1.bf16.msra.mxu0 %v5579
    %7124 = vmatprep.subr.bf16.mxu0 %v5591
    %7125 = vmatpush1.bf16.msra.mxu0 %v5590
    %7126 = vmatprep.subr.bf16.mxu0 %v5602
    %7127 = vmatpush1.bf16.msra.mxu0 %v5601
    %7128 = vmatprep.subr.bf16.mxu0 %v5613
    %7129 = vmatpush1.bf16.msra.mxu0 %v5612
    %7130 = vmatprep.subr.bf16.mxu0 %v5624
    %7131 = vmatpush1.bf16.msra.mxu0 %v5623
    %7132 = vmatprep.subr.bf16.mxu0 %v5635
    %7133 = vmatpush1.bf16.msra.mxu0 %v5634
    %7134 = vmatprep.subr.bf16.mxu0 %v5646
    %7135 = vmatpush1.bf16.msra.mxu0 %v5645
    %7136 = vmatprep.subr.bf16.mxu0 %v5657
    %7137 = vmatpush1.bf16.msra.mxu0 %v5656
    %7138 = vmatprep.subr.bf16.mxu0 %v5668
    %7139 = vmatpush1.bf16.msra.mxu0 %v5667
    %7140 = vmatprep.subr.bf16.mxu0 %v5679
    %7141 = vmatpush1.bf16.msra.mxu0 %v5678
    %7142 = vmatprep.subr.bf16.mxu0 %v5690
    %7143 = vmatpush1.bf16.msra.mxu0 %v5689
    %7144 = vmatprep.subr.bf16.mxu0 %v5701
    %7145 = vmatpush1.bf16.msra.mxu0 %v5700
    %7146 = vmatprep.subr.bf16.mxu0 %v5712
    %7147 = vmatpush1.bf16.msra.mxu0 %v5711
    %7148 = vmatprep.mubr.bf16.mxu0 %v2534
    %7149 = vmatmul.mubr.bf16.gmra.mrb[0].mxu0 %v2533
    %v7150 = vpop.f32.mrb[0].mxu0
    %v7151 = vadd.f32 %v3324, %v7150
    %v7152 = vpop.f32.mrb[0].mxu0
    %v7153 = vadd.f32 %v3328, %v7152
    %v7154 = vpop.f32.mrb[0].mxu0
    %v7155 = vpop.f32.mrb[0].mxu0
    %7156 = vdwg.mxu0
    %7157 = vmatprep.subr.bf16.mxu0 %v5723
    %7158 = vmatpush1.bf16.msra.mxu0 %v5722
    %7159 = vmatprep.subr.bf16.mxu0 %v5734
    %7160 = vmatpush1.bf16.msra.mxu0 %v5733
    %7161 = vmatprep.subr.bf16.mxu0 %v5745
    %7162 = vmatpush1.bf16.msra.mxu0 %v5744
    %7163 = vmatprep.subr.bf16.mxu0 %v5756
    %7164 = vmatpush1.bf16.msra.mxu0 %v5755
    %7165 = vmatprep.subr.bf16.mxu0 %v5767
    %7166 = vmatpush1.bf16.msra.mxu0 %v5766
    %7167 = vmatprep.subr.bf16.mxu0 %v5778
    %7168 = vmatpush1.bf16.msra.mxu0 %v5777
    %7169 = vmatprep.subr.bf16.mxu0 %v5789
    %7170 = vmatpush1.bf16.msra.mxu0 %v5788
    %7171 = vmatprep.subr.bf16.mxu0 %v5800
    %7172 = vmatpush1.bf16.msra.mxu0 %v5799
    %7173 = vmatprep.subr.bf16.mxu0 %v5811
    %7174 = vmatpush1.bf16.msra.mxu0 %v5810
    %7175 = vmatprep.subr.bf16.mxu0 %v5822
    %7176 = vmatpush1.bf16.msra.mxu0 %v5821
    %7177 = vmatprep.subr.bf16.mxu0 %v5833
    %7178 = vmatpush1.bf16.msra.mxu0 %v5832
    %7179 = vmatprep.subr.bf16.mxu0 %v5844
    %7180 = vmatpush1.bf16.msra.mxu0 %v5843
    %7181 = vmatprep.subr.bf16.mxu0 %v5855
    %7182 = vmatpush1.bf16.msra.mxu0 %v5854
    %7183 = vmatprep.subr.bf16.mxu0 %v5866
    %7184 = vmatpush1.bf16.msra.mxu0 %v5865
    %7185 = vmatprep.subr.bf16.mxu0 %v5877
    %7186 = vmatpush1.bf16.msra.mxu0 %v5876
    %7187 = vmatprep.subr.bf16.mxu0 %v5888
    %7188 = vmatpush1.bf16.msra.mxu0 %v5887
    %7189 = vmatprep.mubr.bf16.mxu0 %v2536
    %7190 = vmatmul.mubr.bf16.gmra.mrb[0].mxu0 %v2535
    %v7191 = vpop.f32.mrb[0].mxu0
    %v7192 = vadd.f32 %v7151, %v7191
    %v7193 = vpop.f32.mrb[0].mxu0
    %v7194 = vadd.f32 %v7153, %v7193
    %v7195 = vpop.f32.mrb[0].mxu0
    %v7196 = vpop.f32.mrb[0].mxu0
    %7197 = vdwg.mxu0
    %7198 = vmatprep.subr.bf16.mxu0 %v5899
    %7199 = vmatpush1.bf16.msra.mxu0 %v5898
    %7200 = vmatprep.subr.bf16.mxu0 %v5910
    %7201 = vmatpush1.bf16.msra.mxu0 %v5909
    %7202 = vmatprep.subr.bf16.mxu0 %v5921
    %7203 = vmatpush1.bf16.msra.mxu0 %v5920
    %7204 = vmatprep.subr.bf16.mxu0 %v5932
    %7205 = vmatpush1.bf16.msra.mxu0 %v5931
    %7206 = vmatprep.subr.bf16.mxu0 %v5943
    %7207 = vmatpush1.bf16.msra.mxu0 %v5942
    %7208 = vmatprep.subr.bf16.mxu0 %v5954
    %7209 = vmatpush1.bf16.msra.mxu0 %v5953
    %7210 = vmatprep.subr.bf16.mxu0 %v5965
    %7211 = vmatpush1.bf16.msra.mxu0 %v5964
    %7212 = vmatprep.subr.bf16.mxu0 %v5976
    %7213 = vmatpush1.bf16.msra.mxu0 %v5975
    %7214 = vmatprep.subr.bf16.mxu0 %v5987
    %7215 = vmatpush1.bf16.msra.mxu0 %v5986
    %7216 = vmatprep.subr.bf16.mxu0 %v5998
    %7217 = vmatpush1.bf16.msra.mxu0 %v5997
    %7218 = vmatprep.subr.bf16.mxu0 %v6009
    %7219 = vmatpush1.bf16.msra.mxu0 %v6008
    %7220 = vmatprep.subr.bf16.mxu0 %v6020
    %7221 = vmatpush1.bf16.msra.mxu0 %v6019
    %7222 = vmatprep.subr.bf16.mxu0 %v6031
    %7223 = vmatpush1.bf16.msra.mxu0 %v6030
    %7224 = vmatprep.subr.bf16.mxu0 %v6042
    %7225 = vmatpush1.bf16.msra.mxu0 %v6041
    %7226 = vmatprep.subr.bf16.mxu0 %v6053
    %7227 = vmatpush1.bf16.msra.mxu0 %v6052
    %7228 = vmatprep.subr.bf16.mxu0 %v6064
    %7229 = vmatpush1.bf16.msra.mxu0 %v6063
    %7230 = vmatprep.mubr.bf16.mxu0 %v2538
    %7231 = vmatmul.mubr.bf16.gmra.mrb[0].mxu0 %v2537
    %v7232 = vpop.f32.mrb[0].mxu0
    %v7233 = vadd.f32 %v7192, %v7232
    %v7234 = vpop.f32.mrb[0].mxu0
    %v7235 = vadd.f32 %v7194, %v7234
    %v7236 = vpop.f32.mrb[0].mxu0
    %v7237 = vpop.f32.mrb[0].mxu0
    %7238 = vdwg.mxu0
    %7239 = vmatprep.subr.bf16.mxu0 %v6075
    %7240 = vmatpush1.bf16.msra.mxu0 %v6074
    %7241 = vmatprep.subr.bf16.mxu0 %v6086
    %7242 = vmatpush1.bf16.msra.mxu0 %v6085
    %7243 = vmatprep.subr.bf16.mxu0 %v6097
    %7244 = vmatpush1.bf16.msra.mxu0 %v6096
    %7245 = vmatprep.subr.bf16.mxu0 %v6108
    %7246 = vmatpush1.bf16.msra.mxu0 %v6107
    %7247 = vmatprep.subr.bf16.mxu0 %v6119
    %7248 = vmatpush1.bf16.msra.mxu0 %v6118
    %7249 = vmatprep.subr.bf16.mxu0 %v6130
    %7250 = vmatpush1.bf16.msra.mxu0 %v6129
    %7251 = vmatprep.subr.bf16.mxu0 %v6141
    %7252 = vmatpush1.bf16.msra.mxu0 %v6140
    %7253 = vmatprep.subr.bf16.mxu0 %v6152
    %7254 = vmatpush1.bf16.msra.mxu0 %v6151
    %7255 = vmatprep.subr.bf16.mxu0 %v6163
    %7256 = vmatpush1.bf16.msra.mxu0 %v6162
    %7257 = vmatprep.subr.bf16.mxu0 %v6174
    %7258 = vmatpush1.bf16.msra.mxu0 %v6173
    %7259 = vmatprep.subr.bf16.mxu0 %v6185
    %7260 = vmatpush1.bf16.msra.mxu0 %v6184
    %7261 = vmatprep.subr.bf16.mxu0 %v6196
    %7262 = vmatpush1.bf16.msra.mxu0 %v6195
    %7263 = vmatprep.subr.bf16.mxu0 %v6207
    %7264 = vmatpush1.bf16.msra.mxu0 %v6206
    %7265 = vmatprep.subr.bf16.mxu0 %v6218
    %7266 = vmatpush1.bf16.msra.mxu0 %v6217
    %7267 = vmatprep.subr.bf16.mxu0 %v6229
    %7268 = vmatpush1.bf16.msra.mxu0 %v6228
    %7269 = vmatprep.subr.bf16.mxu0 %v6240
    %7270 = vmatpush1.bf16.msra.mxu0 %v6239
    %7271 = vmatprep.mubr.bf16.mxu0 %v2540
    %7272 = vmatmul.mubr.bf16.gmra.mrb[0].mxu0 %v2539
    %v7273 = vpop.f32.mrb[0].mxu0
    %v7274 = vadd.f32 %v7233, %v7273
    %v7275 = vpop.f32.mrb[0].mxu0
    %v7276 = vadd.f32 %v7235, %v7275
    %v7277 = vpop.f32.mrb[0].mxu0
    %v7278 = vpop.f32.mrb[0].mxu0
    %7279 = vdwg.mxu0
    %7280 = vmatprep.subr.bf16.mxu0 %v5549
    %7281 = vmatpush1.bf16.msra.mxu0 %v5548
    %7282 = vmatprep.subr.bf16.mxu0 %v5560
    %7283 = vmatpush1.bf16.msra.mxu0 %v5559
    %7284 = vmatprep.subr.bf16.mxu0 %v5571
    %7285 = vmatpush1.bf16.msra.mxu0 %v5570
    %7286 = vmatprep.subr.bf16.mxu0 %v5582
    %7287 = vmatpush1.bf16.msra.mxu0 %v5581
    %7288 = vmatprep.subr.bf16.mxu0 %v5593
    %7289 = vmatpush1.bf16.msra.mxu0 %v5592
    %7290 = vmatprep.subr.bf16.mxu0 %v5604
    %7291 = vmatpush1.bf16.msra.mxu0 %v5603
    %7292 = vmatprep.subr.bf16.mxu0 %v5615
    %7293 = vmatpush1.bf16.msra.mxu0 %v5614
    %7294 = vmatprep.subr.bf16.mxu0 %v5626
    %7295 = vmatpush1.bf16.msra.mxu0 %v5625
    %7296 = vmatprep.subr.bf16.mxu0 %v5637
    %7297 = vmatpush1.bf16.msra.mxu0 %v5636
    %7298 = vmatprep.subr.bf16.mxu0 %v5648
    %7299 = vmatpush1.bf16.msra.mxu0 %v5647
    %7300 = vmatprep.subr.bf16.mxu0 %v5659
    %7301 = vmatpush1.bf16.msra.mxu0 %v5658
    %7302 = vmatprep.subr.bf16.mxu0 %v5670
    %7303 = vmatpush1.bf16.msra.mxu0 %v5669
    %7304 = vmatprep.subr.bf16.mxu0 %v5681
    %7305 = vmatpush1.bf16.msra.mxu0 %v5680
    %7306 = vmatprep.subr.bf16.mxu0 %v5692
    %7307 = vmatpush1.bf16.msra.mxu0 %v5691
    %7308 = vmatprep.subr.bf16.mxu0 %v5703
    %7309 = vmatpush1.bf16.msra.mxu0 %v5702
    %7310 = vmatprep.subr.bf16.mxu0 %v5714
    %7311 = vmatpush1.bf16.msra.mxu0 %v5713
    %7312 = vmatprep.mubr.bf16.mxu0 %v2534
    %7313 = vmatmul.mubr.bf16.gmra.mrb[0].mxu0 %v2533
    %v7314 = vpop.f32.mrb[0].mxu0
    %v7315 = vadd.f32 %v3332, %v7314
    %v7316 = vpop.f32.mrb[0].mxu0
    %v7317 = vadd.f32 %v3336, %v7316
    %v7318 = vpop.f32.mrb[0].mxu0
    %v7319 = vpop.f32.mrb[0].mxu0
    %7320 = vdwg.mxu0
    %7321 = vmatprep.subr.bf16.mxu0 %v5725
    %7322 = vmatpush1.bf16.msra.mxu0 %v5724
    %7323 = vmatprep.subr.bf16.mxu0 %v5736
    %7324 = vmatpush1.bf16.msra.mxu0 %v5735
    %7325 = vmatprep.subr.bf16.mxu0 %v5747
    %7326 = vmatpush1.bf16.msra.mxu0 %v5746
    %7327 = vmatprep.subr.bf16.mxu0 %v5758
    %7328 = vmatpush1.bf16.msra.mxu0 %v5757
    %7329 = vmatprep.subr.bf16.mxu0 %v5769
    %7330 = vmatpush1.bf16.msra.mxu0 %v5768
    %7331 = vmatprep.subr.bf16.mxu0 %v5780
    %7332 = vmatpush1.bf16.msra.mxu0 %v5779
    %7333 = vmatprep.subr.bf16.mxu0 %v5791
    %7334 = vmatpush1.bf16.msra.mxu0 %v5790
    %7335 = vmatprep.subr.bf16.mxu0 %v5802
    %7336 = vmatpush1.bf16.msra.mxu0 %v5801
    %7337 = vmatprep.subr.bf16.mxu0 %v5813
    %7338 = vmatpush1.bf16.msra.mxu0 %v5812
    %7339 = vmatprep.subr.bf16.mxu0 %v5824
    %7340 = vmatpush1.bf16.msra.mxu0 %v5823
    %7341 = vmatprep.subr.bf16.mxu0 %v5835
    %7342 = vmatpush1.bf16.msra.mxu0 %v5834
    %7343 = vmatprep.subr.bf16.mxu0 %v5846
    %7344 = vmatpush1.bf16.msra.mxu0 %v5845
    %7345 = vmatprep.subr.bf16.mxu0 %v5857
    %7346 = vmatpush1.bf16.msra.mxu0 %v5856
    %7347 = vmatprep.subr.bf16.mxu0 %v5868
    %7348 = vmatpush1.bf16.msra.mxu0 %v5867
    %7349 = vmatprep.subr.bf16.mxu0 %v5879
    %7350 = vmatpush1.bf16.msra.mxu0 %v5878
    %7351 = vmatprep.subr.bf16.mxu0 %v5890
    %7352 = vmatpush1.bf16.msra.mxu0 %v5889
    %7353 = vmatprep.mubr.bf16.mxu0 %v2536
    %7354 = vmatmul.mubr.bf16.gmra.mrb[0].mxu0 %v2535
    %v7355 = vpop.f32.mrb[0].mxu0
    %v7356 = vadd.f32 %v7315, %v7355
    %v7357 = vpop.f32.mrb[0].mxu0
    %v7358 = vadd.f32 %v7317, %v7357
    %v7359 = vpop.f32.mrb[0].mxu0
    %v7360 = vpop.f32.mrb[0].mxu0
    %7361 = vdwg.mxu0
    %7362 = vmatprep.subr.bf16.mxu0 %v5901
    %7363 = vmatpush1.bf16.msra.mxu0 %v5900
    %7364 = vmatprep.subr.bf16.mxu0 %v5912
    %7365 = vmatpush1.bf16.msra.mxu0 %v5911
    %7366 = vmatprep.subr.bf16.mxu0 %v5923
    %7367 = vmatpush1.bf16.msra.mxu0 %v5922
    %7368 = vmatprep.subr.bf16.mxu0 %v5934
    %7369 = vmatpush1.bf16.msra.mxu0 %v5933
    %7370 = vmatprep.subr.bf16.mxu0 %v5945
    %7371 = vmatpush1.bf16.msra.mxu0 %v5944
    %7372 = vmatprep.subr.bf16.mxu0 %v5956
    %7373 = vmatpush1.bf16.msra.mxu0 %v5955
    %7374 = vmatprep.subr.bf16.mxu0 %v5967
    %7375 = vmatpush1.bf16.msra.mxu0 %v5966
    %7376 = vmatprep.subr.bf16.mxu0 %v5978
    %7377 = vmatpush1.bf16.msra.mxu0 %v5977
    %7378 = vmatprep.subr.bf16.mxu0 %v5989
    %7379 = vmatpush1.bf16.msra.mxu0 %v5988
    %7380 = vmatprep.subr.bf16.mxu0 %v6000
    %7381 = vmatpush1.bf16.msra.mxu0 %v5999
    %7382 = vmatprep.subr.bf16.mxu0 %v6011
    %7383 = vmatpush1.bf16.msra.mxu0 %v6010
    %7384 = vmatprep.subr.bf16.mxu0 %v6022
    %7385 = vmatpush1.bf16.msra.mxu0 %v6021
    %7386 = vmatprep.subr.bf16.mxu0 %v6033
    %7387 = vmatpush1.bf16.msra.mxu0 %v6032
    %7388 = vmatprep.subr.bf16.mxu0 %v6044
    %7389 = vmatpush1.bf16.msra.mxu0 %v6043
    %7390 = vmatprep.subr.bf16.mxu0 %v6055
    %7391 = vmatpush1.bf16.msra.mxu0 %v6054
    %7392 = vmatprep.subr.bf16.mxu0 %v6066
    %7393 = vmatpush1.bf16.msra.mxu0 %v6065
    %7394 = vmatprep.mubr.bf16.mxu0 %v2538
    %7395 = vmatmul.mubr.bf16.gmra.mrb[0].mxu0 %v2537
    %v7396 = vpop.f32.mrb[0].mxu0
    %v7397 = vadd.f32 %v7356, %v7396
    %v7398 = vpop.f32.mrb[0].mxu0
    %v7399 = vadd.f32 %v7358, %v7398
    %v7400 = vpop.f32.mrb[0].mxu0
    %v7401 = vpop.f32.mrb[0].mxu0
    %7402 = vdwg.mxu0
    %7403 = vmatprep.subr.bf16.mxu0 %v6077
    %7404 = vmatpush1.bf16.msra.mxu0 %v6076
    %7405 = vmatprep.subr.bf16.mxu0 %v6088
    %7406 = vmatpush1.bf16.msra.mxu0 %v6087
    %7407 = vmatprep.subr.bf16.mxu0 %v6099
    %7408 = vmatpush1.bf16.msra.mxu0 %v6098
    %7409 = vmatprep.subr.bf16.mxu0 %v6110
    %7410 = vmatpush1.bf16.msra.mxu0 %v6109
    %7411 = vmatprep.subr.bf16.mxu0 %v6121
    %7412 = vmatpush1.bf16.msra.mxu0 %v6120
    %7413 = vmatprep.subr.bf16.mxu0 %v6132
    %7414 = vmatpush1.bf16.msra.mxu0 %v6131
    %7415 = vmatprep.subr.bf16.mxu0 %v6143
    %7416 = vmatpush1.bf16.msra.mxu0 %v6142
    %7417 = vmatprep.subr.bf16.mxu0 %v6154
    %7418 = vmatpush1.bf16.msra.mxu0 %v6153
    %7419 = vmatprep.subr.bf16.mxu0 %v6165
    %7420 = vmatpush1.bf16.msra.mxu0 %v6164
    %7421 = vmatprep.subr.bf16.mxu0 %v6176
    %7422 = vmatpush1.bf16.msra.mxu0 %v6175
    %7423 = vmatprep.subr.bf16.mxu0 %v6187
    %7424 = vmatpush1.bf16.msra.mxu0 %v6186
    %7425 = vmatprep.subr.bf16.mxu0 %v6198
    %7426 = vmatpush1.bf16.msra.mxu0 %v6197
    %7427 = vmatprep.subr.bf16.mxu0 %v6209
    %7428 = vmatpush1.bf16.msra.mxu0 %v6208
    %7429 = vmatprep.subr.bf16.mxu0 %v6220
    %7430 = vmatpush1.bf16.msra.mxu0 %v6219
    %7431 = vmatprep.subr.bf16.mxu0 %v6231
    %7432 = vmatpush1.bf16.msra.mxu0 %v6230
    %7433 = vmatprep.subr.bf16.mxu0 %v6242
    %7434 = vmatpush1.bf16.msra.mxu0 %v6241
    %7435 = vmatprep.mubr.bf16.mxu0 %v2540
    %7436 = vmatmul.mubr.bf16.gmra.mrb[0].mxu0 %v2539
    %v7437 = vpop.f32.mrb[0].mxu0
    %v7438 = vadd.f32 %v7397, %v7437
    %v7439 = vpop.f32.mrb[0].mxu0
    %v7440 = vadd.f32 %v7399, %v7439
    %v7441 = vpop.f32.mrb[0].mxu0
    %v7442 = vpop.f32.mrb[0].mxu0
    %7443 = vdwg.mxu0
    %7444 = vmatprep.subr.bf16.mxu0 %v5551
    %7445 = vmatpush1.bf16.msra.mxu0 %v5550
    %7446 = vmatprep.subr.bf16.mxu0 %v5562
    %7447 = vmatpush1.bf16.msra.mxu0 %v5561
    %7448 = vmatprep.subr.bf16.mxu0 %v5573
    %7449 = vmatpush1.bf16.msra.mxu0 %v5572
    %7450 = vmatprep.subr.bf16.mxu0 %v5584
    %7451 = vmatpush1.bf16.msra.mxu0 %v5583
    %7452 = vmatprep.subr.bf16.mxu0 %v5595
    %7453 = vmatpush1.bf16.msra.mxu0 %v5594
    %7454 = vmatprep.subr.bf16.mxu0 %v5606
    %7455 = vmatpush1.bf16.msra.mxu0 %v5605
    %7456 = vmatprep.subr.bf16.mxu0 %v5617
    %7457 = vmatpush1.bf16.msra.mxu0 %v5616
    %7458 = vmatprep.subr.bf16.mxu0 %v5628
    %7459 = vmatpush1.bf16.msra.mxu0 %v5627
    %7460 = vmatprep.subr.bf16.mxu0 %v5639
    %7461 = vmatpush1.bf16.msra.mxu0 %v5638
    %7462 = vmatprep.subr.bf16.mxu0 %v5650
    %7463 = vmatpush1.bf16.msra.mxu0 %v5649
    %7464 = vmatprep.subr.bf16.mxu0 %v5661
    %7465 = vmatpush1.bf16.msra.mxu0 %v5660
    %7466 = vmatprep.subr.bf16.mxu0 %v5672
    %7467 = vmatpush1.bf16.msra.mxu0 %v5671
    %7468 = vmatprep.subr.bf16.mxu0 %v5683
    %7469 = vmatpush1.bf16.msra.mxu0 %v5682
    %7470 = vmatprep.subr.bf16.mxu0 %v5694
    %7471 = vmatpush1.bf16.msra.mxu0 %v5693
    %7472 = vmatprep.subr.bf16.mxu0 %v5705
    %7473 = vmatpush1.bf16.msra.mxu0 %v5704
    %7474 = vmatprep.subr.bf16.mxu0 %v5716
    %7475 = vmatpush1.bf16.msra.mxu0 %v5715
    %7476 = vmatprep.mubr.bf16.mxu0 %v2534
    %7477 = vmatmul.mubr.bf16.gmra.mrb[0].mxu0 %v2533
    %v7478 = vpop.f32.mrb[0].mxu0
    %v7479 = vadd.f32 %v3340, %v7478
    %v7480 = vpop.f32.mrb[0].mxu0
    %v7481 = vadd.f32 %v3344, %v7480
    %v7482 = vpop.f32.mrb[0].mxu0
    %v7483 = vpop.f32.mrb[0].mxu0
    %7484 = vdwg.mxu0
    %7485 = vmatprep.subr.bf16.mxu0 %v5727
    %7486 = vmatpush1.bf16.msra.mxu0 %v5726
    %7487 = vmatprep.subr.bf16.mxu0 %v5738
    %7488 = vmatpush1.bf16.msra.mxu0 %v5737
    %7489 = vmatprep.subr.bf16.mxu0 %v5749
    %7490 = vmatpush1.bf16.msra.mxu0 %v5748
    %7491 = vmatprep.subr.bf16.mxu0 %v5760
    %7492 = vmatpush1.bf16.msra.mxu0 %v5759
    %7493 = vmatprep.subr.bf16.mxu0 %v5771
    %7494 = vmatpush1.bf16.msra.mxu0 %v5770
    %7495 = vmatprep.subr.bf16.mxu0 %v5782
    %7496 = vmatpush1.bf16.msra.mxu0 %v5781
    %7497 = vmatprep.subr.bf16.mxu0 %v5793
    %7498 = vmatpush1.bf16.msra.mxu0 %v5792
    %7499 = vmatprep.subr.bf16.mxu0 %v5804
    %7500 = vmatpush1.bf16.msra.mxu0 %v5803
    %7501 = vmatprep.subr.bf16.mxu0 %v5815
    %7502 = vmatpush1.bf16.msra.mxu0 %v5814
    %7503 = vmatprep.subr.bf16.mxu0 %v5826
    %7504 = vmatpush1.bf16.msra.mxu0 %v5825
    %7505 = vmatprep.subr.bf16.mxu0 %v5837
    %7506 = vmatpush1.bf16.msra.mxu0 %v5836
    %7507 = vmatprep.subr.bf16.mxu0 %v5848
    %7508 = vmatpush1.bf16.msra.mxu0 %v5847
    %7509 = vmatprep.subr.bf16.mxu0 %v5859
    %7510 = vmatpush1.bf16.msra.mxu0 %v5858
    %7511 = vmatprep.subr.bf16.mxu0 %v5870
    %7512 = vmatpush1.bf16.msra.mxu0 %v5869
    %7513 = vmatprep.subr.bf16.mxu0 %v5881
    %7514 = vmatpush1.bf16.msra.mxu0 %v5880
    %7515 = vmatprep.subr.bf16.mxu0 %v5892
    %7516 = vmatpush1.bf16.msra.mxu0 %v5891
    %7517 = vmatprep.mubr.bf16.mxu0 %v2536
    %7518 = vmatmul.mubr.bf16.gmra.mrb[0].mxu0 %v2535
    %v7519 = vpop.f32.mrb[0].mxu0
    %v7520 = vadd.f32 %v7479, %v7519
    %v7521 = vpop.f32.mrb[0].mxu0
    %v7522 = vadd.f32 %v7481, %v7521
    %v7523 = vpop.f32.mrb[0].mxu0
    %v7524 = vpop.f32.mrb[0].mxu0
    %7525 = vdwg.mxu0
    %7526 = vmatprep.subr.bf16.mxu0 %v5903
    %7527 = vmatpush1.bf16.msra.mxu0 %v5902
    %7528 = vmatprep.subr.bf16.mxu0 %v5914
    %7529 = vmatpush1.bf16.msra.mxu0 %v5913
    %7530 = vmatprep.subr.bf16.mxu0 %v5925
    %7531 = vmatpush1.bf16.msra.mxu0 %v5924
    %7532 = vmatprep.subr.bf16.mxu0 %v5936
    %7533 = vmatpush1.bf16.msra.mxu0 %v5935
    %7534 = vmatprep.subr.bf16.mxu0 %v5947
    %7535 = vmatpush1.bf16.msra.mxu0 %v5946
    %7536 = vmatprep.subr.bf16.mxu0 %v5958
    %7537 = vmatpush1.bf16.msra.mxu0 %v5957
    %7538 = vmatprep.subr.bf16.mxu0 %v5969
    %7539 = vmatpush1.bf16.msra.mxu0 %v5968
    %7540 = vmatprep.subr.bf16.mxu0 %v5980
    %7541 = vmatpush1.bf16.msra.mxu0 %v5979
    %7542 = vmatprep.subr.bf16.mxu0 %v5991
    %7543 = vmatpush1.bf16.msra.mxu0 %v5990
    %7544 = vmatprep.subr.bf16.mxu0 %v6002
    %7545 = vmatpush1.bf16.msra.mxu0 %v6001
    %7546 = vmatprep.subr.bf16.mxu0 %v6013
    %7547 = vmatpush1.bf16.msra.mxu0 %v6012
    %7548 = vmatprep.subr.bf16.mxu0 %v6024
    %7549 = vmatpush1.bf16.msra.mxu0 %v6023
    %7550 = vmatprep.subr.bf16.mxu0 %v6035
    %7551 = vmatpush1.bf16.msra.mxu0 %v6034
    %7552 = vmatprep.subr.bf16.mxu0 %v6046
    %7553 = vmatpush1.bf16.msra.mxu0 %v6045
    %7554 = vmatprep.subr.bf16.mxu0 %v6057
    %7555 = vmatpush1.bf16.msra.mxu0 %v6056
    %7556 = vmatprep.subr.bf16.mxu0 %v6068
    %7557 = vmatpush1.bf16.msra.mxu0 %v6067
    %7558 = vmatprep.mubr.bf16.mxu0 %v2538
    %7559 = vmatmul.mubr.bf16.gmra.mrb[0].mxu0 %v2537
    %v7560 = vpop.f32.mrb[0].mxu0
    %v7561 = vadd.f32 %v7520, %v7560
    %v7562 = vpop.f32.mrb[0].mxu0
    %v7563 = vadd.f32 %v7522, %v7562
    %v7564 = vpop.f32.mrb[0].mxu0
    %v7565 = vpop.f32.mrb[0].mxu0
    %7566 = vdwg.mxu0
    %7567 = vmatprep.subr.bf16.mxu0 %v6079
    %7568 = vmatpush1.bf16.msra.mxu0 %v6078
    %7569 = vmatprep.subr.bf16.mxu0 %v6090
    %7570 = vmatpush1.bf16.msra.mxu0 %v6089
    %7571 = vmatprep.subr.bf16.mxu0 %v6101
    %7572 = vmatpush1.bf16.msra.mxu0 %v6100
    %7573 = vmatprep.subr.bf16.mxu0 %v6112
    %7574 = vmatpush1.bf16.msra.mxu0 %v6111
    %7575 = vmatprep.subr.bf16.mxu0 %v6123
    %7576 = vmatpush1.bf16.msra.mxu0 %v6122
    %7577 = vmatprep.subr.bf16.mxu0 %v6134
    %7578 = vmatpush1.bf16.msra.mxu0 %v6133
    %7579 = vmatprep.subr.bf16.mxu0 %v6145
    %7580 = vmatpush1.bf16.msra.mxu0 %v6144
    %7581 = vmatprep.subr.bf16.mxu0 %v6156
    %7582 = vmatpush1.bf16.msra.mxu0 %v6155
    %7583 = vmatprep.subr.bf16.mxu0 %v6167
    %7584 = vmatpush1.bf16.msra.mxu0 %v6166
    %7585 = vmatprep.subr.bf16.mxu0 %v6178
    %7586 = vmatpush1.bf16.msra.mxu0 %v6177
    %7587 = vmatprep.subr.bf16.mxu0 %v6189
    %7588 = vmatpush1.bf16.msra.mxu0 %v6188
    %7589 = vmatprep.subr.bf16.mxu0 %v6200
    %7590 = vmatpush1.bf16.msra.mxu0 %v6199
    %7591 = vmatprep.subr.bf16.mxu0 %v6211
    %7592 = vmatpush1.bf16.msra.mxu0 %v6210
    %7593 = vmatprep.subr.bf16.mxu0 %v6222
    %7594 = vmatpush1.bf16.msra.mxu0 %v6221
    %7595 = vmatprep.subr.bf16.mxu0 %v6233
    %7596 = vmatpush1.bf16.msra.mxu0 %v6232
    %7597 = vmatprep.subr.bf16.mxu0 %v6244
    %7598 = vmatpush1.bf16.msra.mxu0 %v6243
    %7599 = vmatprep.mubr.bf16.mxu0 %v2540
    %7600 = vmatmul.mubr.bf16.gmra.mrb[0].mxu0 %v2539
    %v7601 = vpop.f32.mrb[0].mxu0
    %v7602 = vadd.f32 %v7561, %v7601
    %v7603 = vpop.f32.mrb[0].mxu0
    %v7604 = vadd.f32 %v7563, %v7603
    %v7605 = vpop.f32.mrb[0].mxu0
    %v7606 = vpop.f32.mrb[0].mxu0
    %7607 = vdwg.mxu0
    %7608 = vmatprep.subr.bf16.mxu0 %v5553
    %7609 = vmatpush1.bf16.msra.mxu0 %v5552
    %7610 = vmatprep.subr.bf16.mxu0 %v5564
    %7611 = vmatpush1.bf16.msra.mxu0 %v5563
    %7612 = vmatprep.subr.bf16.mxu0 %v5575
    %7613 = vmatpush1.bf16.msra.mxu0 %v5574
    %7614 = vmatprep.subr.bf16.mxu0 %v5586
    %7615 = vmatpush1.bf16.msra.mxu0 %v5585
    %7616 = vmatprep.subr.bf16.mxu0 %v5597
    %7617 = vmatpush1.bf16.msra.mxu0 %v5596
    %7618 = vmatprep.subr.bf16.mxu0 %v5608
    %7619 = vmatpush1.bf16.msra.mxu0 %v5607
    %7620 = vmatprep.subr.bf16.mxu0 %v5619
    %7621 = vmatpush1.bf16.msra.mxu0 %v5618
    %7622 = vmatprep.subr.bf16.mxu0 %v5630
    %7623 = vmatpush1.bf16.msra.mxu0 %v5629
    %7624 = vmatprep.subr.bf16.mxu0 %v5641
    %7625 = vmatpush1.bf16.msra.mxu0 %v5640
    %7626 = vmatprep.subr.bf16.mxu0 %v5652
    %7627 = vmatpush1.bf16.msra.mxu0 %v5651
    %7628 = vmatprep.subr.bf16.mxu0 %v5663
    %7629 = vmatpush1.bf16.msra.mxu0 %v5662
    %7630 = vmatprep.subr.bf16.mxu0 %v5674
    %7631 = vmatpush1.bf16.msra.mxu0 %v5673
    %7632 = vmatprep.subr.bf16.mxu0 %v5685
    %7633 = vmatpush1.bf16.msra.mxu0 %v5684
    %7634 = vmatprep.subr.bf16.mxu0 %v5696
    %7635 = vmatpush1.bf16.msra.mxu0 %v5695
    %7636 = vmatprep.subr.bf16.mxu0 %v5707
    %7637 = vmatpush1.bf16.msra.mxu0 %v5706
    %7638 = vmatprep.subr.bf16.mxu0 %v5718
    %7639 = vmatpush1.bf16.msra.mxu0 %v5717
    %7640 = vmatprep.mubr.bf16.mxu0 %v2534
    %7641 = vmatmul.mubr.bf16.gmra.mrb[0].mxu0 %v2533
    %v7642 = vpop.f32.mrb[0].mxu0
    %v7643 = vadd.f32 %v3348, %v7642
    %v7644 = vpop.f32.mrb[0].mxu0
    %v7645 = vadd.f32 %v3352, %v7644
    %v7646 = vpop.f32.mrb[0].mxu0
    %v7647 = vpop.f32.mrb[0].mxu0
    %7648 = vdwg.mxu0
    %7649 = vmatprep.subr.bf16.mxu0 %v5729
    %7650 = vmatpush1.bf16.msra.mxu0 %v5728
    %7651 = vmatprep.subr.bf16.mxu0 %v5740
    %7652 = vmatpush1.bf16.msra.mxu0 %v5739
    %7653 = vmatprep.subr.bf16.mxu0 %v5751
    %7654 = vmatpush1.bf16.msra.mxu0 %v5750
    %7655 = vmatprep.subr.bf16.mxu0 %v5762
    %7656 = vmatpush1.bf16.msra.mxu0 %v5761
    %7657 = vmatprep.subr.bf16.mxu0 %v5773
    %7658 = vmatpush1.bf16.msra.mxu0 %v5772
    %7659 = vmatprep.subr.bf16.mxu0 %v5784
    %7660 = vmatpush1.bf16.msra.mxu0 %v5783
    %7661 = vmatprep.subr.bf16.mxu0 %v5795
    %7662 = vmatpush1.bf16.msra.mxu0 %v5794
    %7663 = vmatprep.subr.bf16.mxu0 %v5806
    %7664 = vmatpush1.bf16.msra.mxu0 %v5805
    %7665 = vmatprep.subr.bf16.mxu0 %v5817
    %7666 = vmatpush1.bf16.msra.mxu0 %v5816
    %7667 = vmatprep.subr.bf16.mxu0 %v5828
    %7668 = vmatpush1.bf16.msra.mxu0 %v5827
    %7669 = vmatprep.subr.bf16.mxu0 %v5839
    %7670 = vmatpush1.bf16.msra.mxu0 %v5838
    %7671 = vmatprep.subr.bf16.mxu0 %v5850
    %7672 = vmatpush1.bf16.msra.mxu0 %v5849
    %7673 = vmatprep.subr.bf16.mxu0 %v5861
    %7674 = vmatpush1.bf16.msra.mxu0 %v5860
    %7675 = vmatprep.subr.bf16.mxu0 %v5872
    %7676 = vmatpush1.bf16.msra.mxu0 %v5871
    %7677 = vmatprep.subr.bf16.mxu0 %v5883
    %7678 = vmatpush1.bf16.msra.mxu0 %v5882
    %7679 = vmatprep.subr.bf16.mxu0 %v5894
    %7680 = vmatpush1.bf16.msra.mxu0 %v5893
    %7681 = vmatprep.mubr.bf16.mxu0 %v2536
    %7682 = vmatmul.mubr.bf16.gmra.mrb[0].mxu0 %v2535
    %v7683 = vpop.f32.mrb[0].mxu0
    %v7684 = vadd.f32 %v7643, %v7683
    %v7685 = vpop.f32.mrb[0].mxu0
    %v7686 = vadd.f32 %v7645, %v7685
    %v7687 = vpop.f32.mrb[0].mxu0
    %v7688 = vpop.f32.mrb[0].mxu0
    %7689 = vdwg.mxu0
    %7690 = vmatprep.subr.bf16.mxu0 %v5905
    %7691 = vmatpush1.bf16.msra.mxu0 %v5904
    %7692 = vmatprep.subr.bf16.mxu0 %v5916
    %7693 = vmatpush1.bf16.msra.mxu0 %v5915
    %7694 = vmatprep.subr.bf16.mxu0 %v5927
    %7695 = vmatpush1.bf16.msra.mxu0 %v5926
    %7696 = vmatprep.subr.bf16.mxu0 %v5938
    %7697 = vmatpush1.bf16.msra.mxu0 %v5937
    %7698 = vmatprep.subr.bf16.mxu0 %v5949
    %7699 = vmatpush1.bf16.msra.mxu0 %v5948
    %7700 = vmatprep.subr.bf16.mxu0 %v5960
    %7701 = vmatpush1.bf16.msra.mxu0 %v5959
    %7702 = vmatprep.subr.bf16.mxu0 %v5971
    %7703 = vmatpush1.bf16.msra.mxu0 %v5970
    %7704 = vmatprep.subr.bf16.mxu0 %v5982
    %7705 = vmatpush1.bf16.msra.mxu0 %v5981
    %7706 = vmatprep.subr.bf16.mxu0 %v5993
    %7707 = vmatpush1.bf16.msra.mxu0 %v5992
    %7708 = vmatprep.subr.bf16.mxu0 %v6004
    %7709 = vmatpush1.bf16.msra.mxu0 %v6003
    %7710 = vmatprep.subr.bf16.mxu0 %v6015
    %7711 = vmatpush1.bf16.msra.mxu0 %v6014
    %7712 = vmatprep.subr.bf16.mxu0 %v6026
    %7713 = vmatpush1.bf16.msra.mxu0 %v6025
    %7714 = vmatprep.subr.bf16.mxu0 %v6037
    %7715 = vmatpush1.bf16.msra.mxu0 %v6036
    %7716 = vmatprep.subr.bf16.mxu0 %v6048
    %7717 = vmatpush1.bf16.msra.mxu0 %v6047
    %7718 = vmatprep.subr.bf16.mxu0 %v6059
    %7719 = vmatpush1.bf16.msra.mxu0 %v6058
    %7720 = vmatprep.subr.bf16.mxu0 %v6070
    %7721 = vmatpush1.bf16.msra.mxu0 %v6069
    %7722 = vmatprep.mubr.bf16.mxu0 %v2538
    %7723 = vmatmul.mubr.bf16.gmra.mrb[0].mxu0 %v2537
    %v7724 = vpop.f32.mrb[0].mxu0
    %v7725 = vadd.f32 %v7684, %v7724
    %v7726 = vpop.f32.mrb[0].mxu0
    %v7727 = vadd.f32 %v7686, %v7726
    %v7728 = vpop.f32.mrb[0].mxu0
    %v7729 = vpop.f32.mrb[0].mxu0
    %7730 = vdwg.mxu0
    %7731 = vmatprep.subr.bf16.mxu0 %v6081
    %7732 = vmatpush1.bf16.msra.mxu0 %v6080
    %7733 = vmatprep.subr.bf16.mxu0 %v6092
    %7734 = vmatpush1.bf16.msra.mxu0 %v6091
    %7735 = vmatprep.subr.bf16.mxu0 %v6103
    %7736 = vmatpush1.bf16.msra.mxu0 %v6102
    %7737 = vmatprep.subr.bf16.mxu0 %v6114
    %7738 = vmatpush1.bf16.msra.mxu0 %v6113
    %7739 = vmatprep.subr.bf16.mxu0 %v6125
    %7740 = vmatpush1.bf16.msra.mxu0 %v6124
    %7741 = vmatprep.subr.bf16.mxu0 %v6136
    %7742 = vmatpush1.bf16.msra.mxu0 %v6135
    %7743 = vmatprep.subr.bf16.mxu0 %v6147
    %7744 = vmatpush1.bf16.msra.mxu0 %v6146
    %7745 = vmatprep.subr.bf16.mxu0 %v6158
    %7746 = vmatpush1.bf16.msra.mxu0 %v6157
    %7747 = vmatprep.subr.bf16.mxu0 %v6169
    %7748 = vmatpush1.bf16.msra.mxu0 %v6168
    %7749 = vmatprep.subr.bf16.mxu0 %v6180
    %7750 = vmatpush1.bf16.msra.mxu0 %v6179
    %7751 = vmatprep.subr.bf16.mxu0 %v6191
    %7752 = vmatpush1.bf16.msra.mxu0 %v6190
    %7753 = vmatprep.subr.bf16.mxu0 %v6202
    %7754 = vmatpush1.bf16.msra.mxu0 %v6201
    %7755 = vmatprep.subr.bf16.mxu0 %v6213
    %7756 = vmatpush1.bf16.msra.mxu0 %v6212
    %7757 = vmatprep.subr.bf16.mxu0 %v6224
    %7758 = vmatpush1.bf16.msra.mxu0 %v6223
    %7759 = vmatprep.subr.bf16.mxu0 %v6235
    %7760 = vmatpush1.bf16.msra.mxu0 %v6234
    %7761 = vmatprep.subr.bf16.mxu0 %v6246
    %7762 = vmatpush1.bf16.msra.mxu0 %v6245
    %7763 = vmatprep.mubr.bf16.mxu0 %v2540
    %7764 = vmatmul.mubr.bf16.gmra.mrb[0].mxu0 %v2539
    %v7765 = vpop.f32.mrb[0].mxu0
    %v7766 = vadd.f32 %v7725, %v7765
    %v7767 = vpop.f32.mrb[0].mxu0
    %v7768 = vadd.f32 %v7727, %v7767
    %v7769 = vpop.f32.mrb[0].mxu0
    %v7770 = vpop.f32.mrb[0].mxu0
    %7771 = vdwg.mxu0
    %7772 = vmatprep.subr.bf16.mxu0 0
    %7773 = vmatpush1.bf16.msra.mxu0 %v5554
    %7774 = vmatprep.subr.bf16.mxu0 0
    %7775 = vmatpush1.bf16.msra.mxu0 %v5565
    %7776 = vmatprep.subr.bf16.mxu0 0
    %7777 = vmatpush1.bf16.msra.mxu0 %v5576
    %7778 = vmatprep.subr.bf16.mxu0 0
    %7779 = vmatpush1.bf16.msra.mxu0 %v5587
    %7780 = vmatprep.subr.bf16.mxu0 0
    %7781 = vmatpush1.bf16.msra.mxu0 %v5598
    %7782 = vmatprep.subr.bf16.mxu0 0
    %7783 = vmatpush1.bf16.msra.mxu0 %v5609
    %7784 = vmatprep.subr.bf16.mxu0 0
    %7785 = vmatpush1.bf16.msra.mxu0 %v5620
    %7786 = vmatprep.subr.bf16.mxu0 0
    %7787 = vmatpush1.bf16.msra.mxu0 %v5631
    %7788 = vmatprep.subr.bf16.mxu0 0
    %7789 = vmatpush1.bf16.msra.mxu0 %v5642
    %7790 = vmatprep.subr.bf16.mxu0 0
    %7791 = vmatpush1.bf16.msra.mxu0 %v5653
    %7792 = vmatprep.subr.bf16.mxu0 0
    %7793 = vmatpush1.bf16.msra.mxu0 %v5664
    %7794 = vmatprep.subr.bf16.mxu0 0
    %7795 = vmatpush1.bf16.msra.mxu0 %v5675
    %7796 = vmatprep.subr.bf16.mxu0 0
    %7797 = vmatpush1.bf16.msra.mxu0 %v5686
    %7798 = vmatprep.subr.bf16.mxu0 0
    %7799 = vmatpush1.bf16.msra.mxu0 %v5697
    %7800 = vmatprep.subr.bf16.mxu0 0
    %7801 = vmatpush1.bf16.msra.mxu0 %v5708
    %7802 = vmatprep.subr.bf16.mxu0 0
    %7803 = vmatpush1.bf16.msra.mxu0 %v5719
    %7804 = vmatprep.mubr.bf16.mxu0 %v2534
    %7805 = vmatmul.mubr.bf16.gmra.mrb[0].mxu0 %v2533
    %v7806 = vpop.f32.mrb[0].mxu0
    %v7807 = vadd.f32 %v3356, %v7806
    %v7808 = vpop.f32.mrb[0].mxu0
    %v7809 = vpop.f32.mrb[0].mxu0
    %v7810 = vpop.f32.mrb[0].mxu0
    %7811 = vdwg.mxu0
    %7812 = vmatprep.subr.bf16.mxu0 0
    %7813 = vmatpush1.bf16.msra.mxu0 %v5730
    %7814 = vmatprep.subr.bf16.mxu0 0
    %7815 = vmatpush1.bf16.msra.mxu0 %v5741
    %7816 = vmatprep.subr.bf16.mxu0 0
    %7817 = vmatpush1.bf16.msra.mxu0 %v5752
    %7818 = vmatprep.subr.bf16.mxu0 0
    %7819 = vmatpush1.bf16.msra.mxu0 %v5763
    %7820 = vmatprep.subr.bf16.mxu0 0
    %7821 = vmatpush1.bf16.msra.mxu0 %v5774
    %7822 = vmatprep.subr.bf16.mxu0 0
    %7823 = vmatpush1.bf16.msra.mxu0 %v5785
    %7824 = vmatprep.subr.bf16.mxu0 0
    %7825 = vmatpush1.bf16.msra.mxu0 %v5796
    %7826 = vmatprep.subr.bf16.mxu0 0
    %7827 = vmatpush1.bf16.msra.mxu0 %v5807
    %7828 = vmatprep.subr.bf16.mxu0 0
    %7829 = vmatpush1.bf16.msra.mxu0 %v5818
    %7830 = vmatprep.subr.bf16.mxu0 0
    %7831 = vmatpush1.bf16.msra.mxu0 %v5829
    %7832 = vmatprep.subr.bf16.mxu0 0
    %7833 = vmatpush1.bf16.msra.mxu0 %v5840
    %7834 = vmatprep.subr.bf16.mxu0 0
    %7835 = vmatpush1.bf16.msra.mxu0 %v5851
    %7836 = vmatprep.subr.bf16.mxu0 0
    %7837 = vmatpush1.bf16.msra.mxu0 %v5862
    %7838 = vmatprep.subr.bf16.mxu0 0
    %7839 = vmatpush1.bf16.msra.mxu0 %v5873
    %7840 = vmatprep.subr.bf16.mxu0 0
    %7841 = vmatpush1.bf16.msra.mxu0 %v5884
    %7842 = vmatprep.subr.bf16.mxu0 0
    %7843 = vmatpush1.bf16.msra.mxu0 %v5895
    %7844 = vmatprep.mubr.bf16.mxu0 %v2536
    %7845 = vmatmul.mubr.bf16.gmra.mrb[0].mxu0 %v2535
    %v7846 = vpop.f32.mrb[0].mxu0
    %v7847 = vadd.f32 %v7807, %v7846
    %v7848 = vpop.f32.mrb[0].mxu0
    %v7849 = vpop.f32.mrb[0].mxu0
    %v7850 = vpop.f32.mrb[0].mxu0
    %7851 = vdwg.mxu0
    %7852 = vmatprep.subr.bf16.mxu0 0
    %7853 = vmatpush1.bf16.msra.mxu0 %v5906
    %7854 = vmatprep.subr.bf16.mxu0 0
    %7855 = vmatpush1.bf16.msra.mxu0 %v5917
    %7856 = vmatprep.subr.bf16.mxu0 0
    %7857 = vmatpush1.bf16.msra.mxu0 %v5928
    %7858 = vmatprep.subr.bf16.mxu0 0
    %7859 = vmatpush1.bf16.msra.mxu0 %v5939
    %7860 = vmatprep.subr.bf16.mxu0 0
    %7861 = vmatpush1.bf16.msra.mxu0 %v5950
    %7862 = vmatprep.subr.bf16.mxu0 0
    %7863 = vmatpush1.bf16.msra.mxu0 %v5961
    %7864 = vmatprep.subr.bf16.mxu0 0
    %7865 = vmatpush1.bf16.msra.mxu0 %v5972
    %7866 = vmatprep.subr.bf16.mxu0 0
    %7867 = vmatpush1.bf16.msra.mxu0 %v5983
    %7868 = vmatprep.subr.bf16.mxu0 0
    %7869 = vmatpush1.bf16.msra.mxu0 %v5994
    %7870 = vmatprep.subr.bf16.mxu0 0
    %7871 = vmatpush1.bf16.msra.mxu0 %v6005
    %7872 = vmatprep.subr.bf16.mxu0 0
    %7873 = vmatpush1.bf16.msra.mxu0 %v6016
    %7874 = vmatprep.subr.bf16.mxu0 0
    %7875 = vmatpush1.bf16.msra.mxu0 %v6027
    %7876 = vmatprep.subr.bf16.mxu0 0
    %7877 = vmatpush1.bf16.msra.mxu0 %v6038
    %7878 = vmatprep.subr.bf16.mxu0 0
    %7879 = vmatpush1.bf16.msra.mxu0 %v6049
    %7880 = vmatprep.subr.bf16.mxu0 0
    %7881 = vmatpush1.bf16.msra.mxu0 %v6060
    %7882 = vmatprep.subr.bf16.mxu0 0
    %7883 = vmatpush1.bf16.msra.mxu0 %v6071
    %7884 = vmatprep.mubr.bf16.mxu0 %v2538
    %7885 = vmatmul.mubr.bf16.gmra.mrb[0].mxu0 %v2537
    %v7886 = vpop.f32.mrb[0].mxu0
    %v7887 = vadd.f32 %v7847, %v7886
    %v7888 = vpop.f32.mrb[0].mxu0
    %v7889 = vpop.f32.mrb[0].mxu0
    %v7890 = vpop.f32.mrb[0].mxu0
    %7891 = vdwg.mxu0
    %7892 = vmatprep.subr.bf16.mxu0 0
    %7893 = vmatpush1.bf16.msra.mxu0 %v6082
    %7894 = vmatprep.subr.bf16.mxu0 0
    %7895 = vmatpush1.bf16.msra.mxu0 %v6093
    %7896 = vmatprep.subr.bf16.mxu0 0
    %7897 = vmatpush1.bf16.msra.mxu0 %v6104
    %7898 = vmatprep.subr.bf16.mxu0 0
    %7899 = vmatpush1.bf16.msra.mxu0 %v6115
    %7900 = vmatprep.subr.bf16.mxu0 0
    %7901 = vmatpush1.bf16.msra.mxu0 %v6126
    %7902 = vmatprep.subr.bf16.mxu0 0
    %7903 = vmatpush1.bf16.msra.mxu0 %v6137
    %7904 = vmatprep.subr.bf16.mxu0 0
    %7905 = vmatpush1.bf16.msra.mxu0 %v6148
    %7906 = vmatprep.subr.bf16.mxu0 0
    %7907 = vmatpush1.bf16.msra.mxu0 %v6159
    %7908 = vmatprep.subr.bf16.mxu0 0
    %7909 = vmatpush1.bf16.msra.mxu0 %v6170
    %7910 = vmatprep.subr.bf16.mxu0 0
    %7911 = vmatpush1.bf16.msra.mxu0 %v6181
    %7912 = vmatprep.subr.bf16.mxu0 0
    %7913 = vmatpush1.bf16.msra.mxu0 %v6192
    %7914 = vmatprep.subr.bf16.mxu0 0
    %7915 = vmatpush1.bf16.msra.mxu0 %v6203
    %7916 = vmatprep.subr.bf16.mxu0 0
    %7917 = vmatpush1.bf16.msra.mxu0 %v6214
    %7918 = vmatprep.subr.bf16.mxu0 0
    %7919 = vmatpush1.bf16.msra.mxu0 %v6225
    %7920 = vmatprep.subr.bf16.mxu0 0
    %7921 = vmatpush1.bf16.msra.mxu0 %v6236
    %7922 = vmatprep.subr.bf16.mxu0 0
    %7923 = vmatpush1.bf16.msra.mxu0 %v6247
    %7924 = vmatprep.mubr.bf16.mxu0 %v2540
    %7925 = vmatmul.mubr.bf16.gmra.mrb[0].mxu0 %v2539
    %v7926 = vpop.f32.mrb[0].mxu0
    %v7927 = vadd.f32 %v7887, %v7926
    %v7928 = vpop.f32.mrb[0].mxu0
    %v7929 = vpop.f32.mrb[0].mxu0
    %v7930 = vpop.f32.mrb[0].mxu0
    %7931 = vdwg.mxu0
    %7932 = vst [vmem:[#allocation14] sm:$0xff] %v7110
    %7933 = vst [vmem:[#allocation14 + $0x8] sm:$0xff] %v7112
    %7934 = vst [vmem:[#allocation14 + $0x10] sm:$0xff] %v7274
    %7935 = vst [vmem:[#allocation14 + $0x18] sm:$0xff] %v7276
    %7936 = vst [vmem:[#allocation14 + $0x20] sm:$0xff] %v7438
    %7937 = vst [vmem:[#allocation14 + $0x28] sm:$0xff] %v7440
    %7938 = vst [vmem:[#allocation14 + $0x30] sm:$0xff] %v7602
    %7939 = vst [vmem:[#allocation14 + $0x38] sm:$0xff] %v7604
    %7940 = vst [vmem:[#allocation14 + $0x40] sm:$0xff] %v7766
    %7941 = vst [vmem:[#allocation14 + $0x48] sm:$0xff] %v7768
    %7942 = vst [vmem:[#allocation14 + $0x50] sm:$0xff] %v7927
    // Predicated region
    $region58: #{tpu_custom_call.1} parent=1 // pred_check
      _
    $region59: #{tpu_custom_call.1} parent=1 // pred_check_branch
      %7944 = sbr.rel (0) target = $region61
    $region60: #{tpu_custom_call.1} parent=1 // pred_region
      %s7946 = ssub.s32 1408, 1408
      %7947 = vsyncadd [#allocation4], %s7946
      %s7949 = sshll.u32 [#allocation14], 4
      %s7950 = int_to_ptr.vmem [resolvable:$true] %s7949
      %7952 = dma.vmem_to_hbm [thread:$0]  %s7950, 1408, %s7, [#allocation4]
    $region61: #{tpu_custom_call.1} parent=1 // pred_fallthru
      _
    // Predicated region
    $region62: #{tpu_custom_call.1} parent=1 // pred_check
      _
    $region63: #{tpu_custom_call.1} parent=1 // pred_check_branch
      %7954 = sbr.rel (0) target = $region65
    $region64: #{tpu_custom_call.1} parent=1 // pred_region
      %7955 = dma.done [#allocation4], 1408
    $region65: #{tpu_custom_call.1} parent=1 // pred_fallthru
      _
    %7956 = vsyncpa [#allocation3], 1
    %7957 = vsyncpa [#allocation6], 1
    %7958 = vsyncpa [#allocation9], 1
    %7959 = vsyncpa [#allocation12], 1
    %7960 = vsyncpa [#allocation4], 1

</llo_original>
